<compile_context>
chip_gen: v7x
topology: tpu7x:2x2x1
jax: 0.10.0
libtpu: 0.0.40
codegen_flags: <defaults>
</compile_context>

<pallas_src>
import jax
import jax.numpy as jnp
from jax import lax
from jax.experimental import pallas as pl
from jax.experimental.pallas import tpu as pltpu

L_IN = 16        # input sequence length (V.shape[0] in the PyTorch forward)
C_IN = 16        # input channels
HIDDEN = 32      # hidden_dim == C_out
L_OUT = 8        # length_out
NUM_HEADS = 3    # forward() hard-codes 3 heads
T_IN = 64        # target feature dim (nn.Linear(64, C_out))
LN_EPS = 1e-5
TB = 32          # samples per grid step -> matmul M-dim = TB * L_IN = 512 rows

# packed bf16 weight-slab row offsets (all multiples of 16 -> bf16-tile aligned)
_R_WV = 0                      # [C_IN, 3*HIDDEN]      linear_V (LN folded in)
_R_WK = _R_WV + C_IN           # [7*HIDDEN, 3*L_OUT]   fused dynamic kernels
_R_WT1 = _R_WK + 7 * HIDDEN    # [T_IN, HIDDEN]        target MLP layer 1
_R_WT2 = _R_WT1 + T_IN         # [HIDDEN, HIDDEN]      target MLP layer 2
_W_ROWS = _R_WT2 + HIDDEN      # 336
_W_COLS = 128

# f32 bias-slab rows (one (8,128) tile)
_B_BV, _B_BK, _B_WHC, _B_BHC, _B_BT1, _B_BT2 = 0, 1, 2, 3, 4, 5


def _block_roll(x, shift, block, r):
    """Circular roll by `shift` within each contiguous group of `block` rows.

    `r` is the precomputed (row % block) int32 iota mask with x's shape.
    Built from well-supported 2-D ops: two global rolls + a select (the global
    roll is wrong only on the |shift| wrap rows of each block)."""
    if shift >= 0:
        return jnp.where(r < shift,
                         jnp.roll(x, shift - block, axis=0),
                         jnp.roll(x, shift, axis=0))
    return jnp.where(r >= block + shift,
                     jnp.roll(x, shift + block, axis=0),
                     jnp.roll(x, shift, axis=0))


def tasab_kernel(x_ref, tgt_ref, w_ref, b_ref, out_ref):
    f32, bf16 = jnp.float32, jnp.bfloat16
    m = x_ref.shape[0]            # TB * L_IN rows
    tb = m // L_IN

    # ---- packed parameters: one resident bf16 weight DMA + one f32 bias DMA
    w_v = w_ref[_R_WV:_R_WV + C_IN, 0:NUM_HEADS * HIDDEN]          # [16, 96]
    w_k = w_ref[_R_WK:_R_WK + 7 * HIDDEN, 0:NUM_HEADS * L_OUT]     # [224, 24]
    w_t1 = w_ref[_R_WT1:_R_WT1 + T_IN, 0:HIDDEN]                   # [64, 32]
    w_t2 = w_ref[_R_WT2:_R_WT2 + HIDDEN, 0:HIDDEN]                 # [32, 32]

    bias = b_ref[...]                                              # [8, 128]
    b_v = bias[_B_BV:_B_BV + 1, 0:NUM_HEADS * HIDDEN]              # [1, 96]
    b_k = bias[_B_BK:_B_BK + 1, 0:NUM_HEADS * L_OUT]               # [1, 24]
    w_hc = bias[_B_WHC:_B_WHC + 1, 0:NUM_HEADS * L_OUT]            # [1, 24]
    b_hc = bias[_B_BHC:_B_BHC + 1, 0:HIDDEN]                       # [1, 32]
    b_t1 = bias[_B_BT1:_B_BT1 + 1, 0:HIDDEN]                       # [1, 32]
    b_t2 = bias[_B_BT2:_B_BT2 + 1, 0:HIDDEN]                       # [1, 32]

    # ---- LayerNorm over channels (affine folded into w_v/b_v), centered var
    x = x_ref[...]                                                 # [m, 16] f32
    mu = jnp.mean(x, axis=-1, keepdims=True)
    xc = x - mu
    var = jnp.mean(xc * xc, axis=-1, keepdims=True)
    xn = xc * lax.rsqrt(var + LN_EPS)

    # ---- linear_V + ReLU (the 3 heads live in the channel axis) ----
    vl = jnp.dot(xn.astype(bf16), w_v, preferred_element_type=f32) + b_v
    vl = jnp.maximum(vl, 0.0)                                      # [m, 96] f32
    vl16 = vl.astype(bf16)                                         # reused below

    # ---- all three dynamic kernels as ONE fused bf16 matmul ----
    # column blocks of lhs match the block-structured rows of w_k (pack time)
    V1 = vl[:, HIDDEN:2 * HIDDEN]                 # f32 for the sublane rolls
    V2 = vl[:, 2 * HIDDEN:3 * HIDDEN]
    r = lax.broadcasted_iota(jnp.int32, (m, HIDDEN), 0) % L_IN     # hoisted once
    lhs = jnp.concatenate(
        [vl16[:, 0:HIDDEN],                                        # head0: Linear
         _block_roll(V1, 1, L_IN, r).astype(bf16),                 # head1: k=3 d=1
         vl16[:, HIDDEN:2 * HIDDEN],
         _block_roll(V1, -1, L_IN, r).astype(bf16),
         _block_roll(V2, 2, L_IN, r).astype(bf16),                 # head2: k=3 d=2
         vl16[:, 2 * HIDDEN:3 * HIDDEN],
         _block_roll(V2, -2, L_IN, r).astype(bf16)],
        axis=1)                                                    # [m, 224] bf16
    k = jnp.dot(lhs, w_k, preferred_element_type=f32) + b_k
    ks = jnp.maximum(k, 0.0) * w_hc          # head_communicate weight folded in

    # ---- target MLP (bf16 input from HBM): Linear(64->H) ReLU, Linear(H->H) ReLU
    t = jnp.dot(tgt_ref[...], w_t1, preferred_element_type=f32) + b_t1
    t = jnp.maximum(t, 0.0)
    t = jnp.dot(t.astype(bf16), w_t2, preferred_element_type=f32) + b_t2
    t = jnp.maximum(t, 0.0)                                        # [tb*8, 32] f32

    # ---- batched head-combine: attn[b] = sum_h whc_h * (k_h[b]^T @ V_h[b])
    # one small batched transpose of ks, then 3 canonical batched bf16 matmuls
    ksT = jnp.swapaxes(ks.reshape(tb, L_IN, NUM_HEADS * L_OUT), 1, 2)  # [tb,24,16]
    vl3 = vl16.reshape(tb, L_IN, NUM_HEADS * HIDDEN)                   # [tb,16,96]
    acc = None
    for h in range(NUM_HEADS):                                     # 3 static iters
        part = jnp.einsum(
            'bki,bic->bkc',
            ksT[:, h * L_OUT:(h + 1) * L_OUT, :].astype(bf16),     # [tb, 8, 16]
            vl3[:, :, h * HIDDEN:(h + 1) * HIDDEN],                # [tb, 16, 32]
            preferred_element_type=f32)                            # [tb, 8, 32]
        acc = part if acc is None else acc + part
    attn = acc.reshape(tb * L_OUT, HIDDEN) + b_hc                  # [tb*8, 32]

    # ---- target gating + store ----
    out_ref[...] = (attn * t).astype(out_ref.dtype)


@jax.jit
def tasab_forward(x, target, w_packed, b_packed):
    """x: [B, L_IN, C_IN], target: [B, L_OUT, T_IN] -> [B, L_OUT, HIDDEN]."""
    B = x.shape[0]
    pad = (-B) % TB
    if pad:
        x = jnp.concatenate([x, jnp.zeros((pad,) + x.shape[1:], x.dtype)], 0)
        target = jnp.concatenate(
            [target, jnp.zeros((pad,) + target.shape[1:], target.dtype)], 0)
    Bp = B + pad

    xr = x.reshape(Bp * L_IN, C_IN).astype(jnp.float32)
    tr = target.reshape(Bp * L_OUT, T_IN).astype(jnp.bfloat16)     # MXU-only input

    flops = 2 * Bp * (L_IN * C_IN * NUM_HEADS * HIDDEN
                      + L_IN * 7 * HIDDEN * NUM_HEADS * L_OUT
                      + NUM_HEADS * L_IN * L_OUT * HIDDEN
                      + L_OUT * T_IN * HIDDEN
                      + L_OUT * HIDDEN * HIDDEN)
    bytes_accessed = (Bp * L_IN * C_IN * 4 + Bp * L_OUT * T_IN * 2
                      + Bp * L_OUT * HIDDEN * 4
                      + _W_ROWS * _W_COLS * 2 + 8 * 128 * 4)

    out = pl.pallas_call(
        tasab_kernel,
        out_shape=jax.ShapeDtypeStruct((Bp * L_OUT, HIDDEN), jnp.float32),
        grid=(Bp // TB,),
        in_specs=[
            pl.BlockSpec((TB * L_IN, C_IN), lambda i: (i, 0)),
            pl.BlockSpec((TB * L_OUT, T_IN), lambda i: (i, 0)),
            pl.BlockSpec((_W_ROWS, _W_COLS), lambda i: (0, 0)),    # resident
            pl.BlockSpec((8, 128), lambda i: (0, 0)),              # resident
        ],
        out_specs=pl.BlockSpec((TB * L_OUT, HIDDEN), lambda i: (i, 0)),
        compiler_params=pltpu.CompilerParams(
            dimension_semantics=("parallel",),
            vmem_limit_bytes=32 * 1024 * 1024),
        cost_estimate=pl.CostEstimate(
            flops=flops, transcendentals=Bp * L_IN,
            bytes_accessed=bytes_accessed),
    )(xr, tr, w_packed, b_packed)
    return out.reshape(Bp, L_OUT, HIDDEN)[:B]


def pack_params(p):
    """Fold LN affine + head_communicate and pack all params into one bf16
    weight slab and one f32 bias tile (2 parameter DMAs instead of 16)."""
    f32 = jnp.float32
    ln_w = p["ln_w"].reshape(C_IN)
    ln_b = p["ln_b"].reshape(1, C_IN)
    wv_f = ln_w[:, None] * p["wv"]                     # exact LN-affine fold
    bv_f = ln_b @ p["wv"] + p["bv"]

    wk = jnp.zeros((7 * HIDDEN, NUM_HEADS * L_OUT), f32)
    wk = wk.at[0 * HIDDEN:1 * HIDDEN, 0:8].set(p["w0"])       # V0
    wk = wk.at[1 * HIDDEN:2 * HIDDEN, 8:16].set(p["w1"][0])   # roll(V1,+1)
    wk = wk.at[2 * HIDDEN:3 * HIDDEN, 8:16].set(p["w1"][1])   # V1
    wk = wk.at[3 * HIDDEN:4 * HIDDEN, 8:16].set(p["w1"][2])   # roll(V1,-1)
    wk = wk.at[4 * HIDDEN:5 * HIDDEN, 16:24].set(p["w2"][0])  # roll(V2,+2)
    wk = wk.at[5 * HIDDEN:6 * HIDDEN, 16:24].set(p["w2"][1])  # V2
    wk = wk.at[6 * HIDDEN:7 * HIDDEN, 16:24].set(p["w2"][2])  # roll(V2,-2)
    bk = jnp.concatenate([p["b0"], p["b1"], p["b2"]], axis=1)  # [1, 24]
    whc24 = jnp.repeat(p["whc"], L_OUT, axis=1)                # [1, 24]

    W = jnp.zeros((_W_ROWS, _W_COLS), f32)
    W = W.at[_R_WV:_R_WV + C_IN, 0:NUM_HEADS * HIDDEN].set(wv_f)
    W = W.at[_R_WK:_R_WK + 7 * HIDDEN, 0:NUM_HEADS * L_OUT].set(wk)
    W = W.at[_R_WT1:_R_WT1 + T_IN, 0:HIDDEN].set(p["wt1"])
    W = W.at[_R_WT2:_R_WT2 + HIDDEN, 0:HIDDEN].set(p["wt2"])
    W = W.astype(jnp.bfloat16)

    Bt = jnp.zeros((8, 128), f32)
    Bt = Bt.at[_B_BV, 0:NUM_HEADS * HIDDEN].set(bv_f[0])
    Bt = Bt.at[_B_BK, 0:NUM_HEADS * L_OUT].set(bk[0])
    Bt = Bt.at[_B_WHC, 0:NUM_HEADS * L_OUT].set(whc24[0])
    Bt = Bt.at[_B_BHC, 0:HIDDEN].set(jnp.full((HIDDEN,), p["bhc"][0, 0], f32))
    Bt = Bt.at[_B_BT1, 0:HIDDEN].set(p["bt1"][0])
    Bt = Bt.at[_B_BT2, 0:HIDDEN].set(p["bt2"][0])
    return W, Bt


def tasab_reference(x, target, p):
    """Pure-JAX f32 unfused reference of the PyTorch forward (one sample)."""
    mu = x.mean(-1, keepdims=True)
    var = ((x - mu) ** 2).mean(-1, keepdims=True)
    xn = (x - mu) / jnp.sqrt(var + LN_EPS) * p["ln_w"] + p["ln_b"]
    vl = jnp.maximum(xn @ p["wv"] + p["bv"], 0.0)
    V = [vl[:, h * HIDDEN:(h + 1) * HIDDEN] for h in range(NUM_HEADS)]
    k0 = jnp.maximum(V[0] @ p["w0"] + p["b0"], 0.0)

    def circ_conv(v, w, b, d):
        return jnp.maximum(
            jnp.roll(v, d, 0) @ w[0] + v @ w[1] + jnp.roll(v, -d, 0) @ w[2] + b,
            0.0)

    k1 = circ_conv(V[1], p["w1"], p["b1"], 1)
    k2 = circ_conv(V[2], p["w2"], p["b2"], 2)
    o = [k0.T @ V[0], k1.T @ V[1], k2.T @ V[2]]
    attn = (p["whc"][0, 0] * o[0] + p["whc"][0, 1] * o[1]
            + p["whc"][0, 2] * o[2] + p["bhc"][0, 0])
    t = jnp.maximum(target @ p["wt1"] + p["bt1"], 0.0)
    t = jnp.maximum(t @ p["wt2"] + p["bt2"], 0.0)
    return attn * t


if __name__ == "__main__":
    key = jax.random.PRNGKey(0)
    keys = jax.random.split(key, 18)

    def n(k, shape, scale=0.1):
        return (scale * jax.random.normal(k, shape)).astype(jnp.float32)

    # Deterministic synthetic parameters (Linear/Conv weights stored
    # pre-transposed for [T, C] matmuls; conv weights are [tap, in, out]).
    params = {
        "ln_w": 1.0 + n(keys[16], (1, C_IN)),
        "ln_b": n(keys[17], (1, C_IN)),
        "wv":  n(keys[0], (C_IN, NUM_HEADS * HIDDEN)),   # linear_V
        "bv":  n(keys[1], (1, NUM_HEADS * HIDDEN)),
        "w0":  n(keys[2], (HIDDEN, L_OUT)),              # V_dynamic_0 Linear
        "b0":  n(keys[3], (1, L_OUT)),
        "w1":  n(keys[4], (3, HIDDEN, L_OUT)),           # Conv1d k=3 d=1
        "b1":  n(keys[5], (1, L_OUT)),
        "w2":  n(keys[6], (3, HIDDEN, L_OUT)),           # Conv1d k=3 d=2
        "b2":  n(keys[7], (1, L_OUT)),
        "whc": n(keys[8], (1, NUM_HEADS)),               # head_communicate
        "bhc": n(keys[9], (1, 1)),
        "wt1": n(keys[10], (T_IN, HIDDEN)),              # target_attention[0]
        "bt1": n(keys[11], (1, HIDDEN)),
        "wt2": n(keys[12], (HIDDEN, HIDDEN)),            # target_attention[2]
        "bt2": n(keys[13], (1, HIDDEN)),
    }

    B = 4 * TB   # 128 samples -> grid of 4 "parallel" batch tiles
    x = jax.random.normal(keys[14], (B, L_IN, C_IN), dtype=jnp.float32)
    target = jax.random.normal(keys[15], (B, L_OUT, T_IN), dtype=jnp.float32)

    w_packed, b_packed = pack_params(params)
    out = tasab_forward(x, target, w_packed, b_packed)
    jax.block_until_ready(out)
    assert out.shape == (B, L_OUT, HIDDEN) and out.dtype == jnp.float32

    # correctness vs. f32 unfused reference (bf16 MXU operands => small error)
    ref = jax.vmap(lambda xi, ti: tasab_reference(xi, ti, params))(x, target)
    rel = jnp.linalg.norm(out - ref) / (jnp.linalg.norm(ref) + 1e-12)
    assert float(rel) < 5e-2, f"mismatch vs reference: rel={float(rel)}"
    print("KERNEL_OK")
</pallas_src>

<mosaic_0001>
module attributes {stable_mosaic.version = 11 : i64} {
  func.func @tasab_kernel(%arg0: i32, %arg1: memref<512x16xf32, #tpu.memory_space<vmem>>, %arg2: memref<256x64xbf16, #tpu.memory_space<vmem>>, %arg3: memref<336x128xbf16, #tpu.memory_space<vmem>>, %arg4: memref<8x128xf32, #tpu.memory_space<vmem>>, %arg5: memref<256x32xf32, #tpu.memory_space<vmem>>) attributes {dimension_semantics = [#tpu.dimension_semantics<parallel>], iteration_bounds = array<i64: 4>, scalar_prefetch = 0 : i64, scratch_operands = 0 : i64, tpu.core_type = #tpu.core_type<tc>, window_params = [{transform_indices = @transform_0, window_bounds = array<i64: 512, 16>}, {transform_indices = @transform_1, window_bounds = array<i64: 256, 64>}, {pipeline_mode = #tpu.pipeline_mode<synchronous>, transform_indices = @transform_2, window_bounds = array<i64: 336, 128>}, {pipeline_mode = #tpu.pipeline_mode<synchronous>, transform_indices = @transform_3, window_bounds = array<i64: 8, 128>}, {transform_indices = @transform_4, window_bounds = array<i64: 256, 32>}]} {
    %c0 = arith.constant 0 : index
    %c0_0 = arith.constant 0 : index
    %0 = vector.load %arg3[%c0, %c0_0] : memref<336x128xbf16, #tpu.memory_space<vmem>>, vector<16x96xbf16>
    %c16 = arith.constant 16 : index
    %c0_1 = arith.constant 0 : index
    %1 = vector.load %arg3[%c16, %c0_1] : memref<336x128xbf16, #tpu.memory_space<vmem>>, vector<224x24xbf16>
    %c240 = arith.constant 240 : index
    %c0_2 = arith.constant 0 : index
    %2 = vector.load %arg3[%c240, %c0_2] : memref<336x128xbf16, #tpu.memory_space<vmem>>, vector<64x32xbf16>
    %c304 = arith.constant 304 : index
    %c0_3 = arith.constant 0 : index
    %3 = vector.load %arg3[%c304, %c0_3] : memref<336x128xbf16, #tpu.memory_space<vmem>>, vector<32x32xbf16>
    %c0_4 = arith.constant 0 : index
    %c0_5 = arith.constant 0 : index
    %4 = vector.load %arg4[%c0_4, %c0_5] : memref<8x128xf32, #tpu.memory_space<vmem>>, vector<8x128xf32>
    %5 = vector.extract_strided_slice %4 {offsets = [0, 0], sizes = [1, 96], strides = [1, 1]} : vector<8x128xf32> to vector<1x96xf32>
    %6 = vector.extract_strided_slice %4 {offsets = [1, 0], sizes = [1, 24], strides = [1, 1]} : vector<8x128xf32> to vector<1x24xf32>
    %7 = vector.extract_strided_slice %4 {offsets = [2, 0], sizes = [1, 24], strides = [1, 1]} : vector<8x128xf32> to vector<1x24xf32>
    %8 = vector.extract_strided_slice %4 {offsets = [3, 0], sizes = [1, 32], strides = [1, 1]} : vector<8x128xf32> to vector<1x32xf32>
    %9 = vector.extract_strided_slice %4 {offsets = [4, 0], sizes = [1, 32], strides = [1, 1]} : vector<8x128xf32> to vector<1x32xf32>
    %10 = vector.extract_strided_slice %4 {offsets = [5, 0], sizes = [1, 32], strides = [1, 1]} : vector<8x128xf32> to vector<1x32xf32>
    %c0_6 = arith.constant 0 : index
    %c0_7 = arith.constant 0 : index
    %11 = vector.load %arg1[%c0_6, %c0_7] : memref<512x16xf32, #tpu.memory_space<vmem>>, vector<512x16xf32>
    %cst = arith.constant dense<0.000000e+00> : vector<512xf32>
    %12 = vector.multi_reduction <add>, %11, %cst [1] : vector<512x16xf32> to vector<512xf32>
    %13 = vector.shape_cast %12 : vector<512xf32> to vector<512x1xf32>
    %cst_8 = arith.constant 1.600000e+01 : f32
    %14 = vector.broadcast %cst_8 : f32 to vector<512x1xf32>
    %15 = arith.divf %13, %14 : vector<512x1xf32>
    %16 = vector.broadcast %15 : vector<512x1xf32> to vector<512x16xf32>
    %17 = arith.subf %11, %16 : vector<512x16xf32>
    %18 = arith.mulf %17, %17 : vector<512x16xf32>
    %cst_9 = arith.constant dense<0.000000e+00> : vector<512xf32>
    %19 = vector.multi_reduction <add>, %18, %cst_9 [1] : vector<512x16xf32> to vector<512xf32>
    %20 = vector.shape_cast %19 : vector<512xf32> to vector<512x1xf32>
    %cst_10 = arith.constant 1.600000e+01 : f32
    %21 = vector.broadcast %cst_10 : f32 to vector<512x1xf32>
    %22 = arith.divf %20, %21 : vector<512x1xf32>
    %cst_11 = arith.constant 9.99999974E-6 : f32
    %23 = vector.broadcast %cst_11 : f32 to vector<512x1xf32>
    %24 = arith.addf %22, %23 : vector<512x1xf32>
    %25 = math.rsqrt %24 : vector<512x1xf32>
    %26 = vector.broadcast %25 : vector<512x1xf32> to vector<512x16xf32>
    %27 = arith.mulf %17, %26 : vector<512x16xf32>
    %28 = arith.truncf %27 : vector<512x16xf32> to vector<512x16xbf16>
    %cst_12 = arith.constant dense<0.000000e+00> : vector<512x96xf32>
    %29 = tpu.matmul %28, %0, %cst_12 {dimension_numbers = #tpu.dot_dimension_numbers<[1], [0], [0], [1], [0, 0, 1, 1], [], []>} : vector<512x16xbf16>, vector<16x96xbf16>, vector<512x96xf32> -> vector<512x96xf32>
    %30 = vector.broadcast %5 : vector<1x96xf32> to vector<512x96xf32>
    %31 = arith.addf %29, %30 : vector<512x96xf32>
    %cst_13 = arith.constant 0.000000e+00 : f32
    %32 = vector.broadcast %cst_13 : f32 to vector<512x96xf32>
    %33 = arith.maximumf %31, %32 : vector<512x96xf32>
    %34 = arith.truncf %33 : vector<512x96xf32> to vector<512x96xbf16>
    %35 = vector.extract_strided_slice %33 {offsets = [0, 32], sizes = [512, 32], strides = [1, 1]} : vector<512x96xf32> to vector<512x32xf32>
    %36 = vector.extract_strided_slice %33 {offsets = [0, 64], sizes = [512, 32], strides = [1, 1]} : vector<512x96xf32> to vector<512x32xf32>
    %37 = tpu.iota {dimensions = array<i32: 0>} : vector<512x32xi32>
    %c16_i32 = arith.constant 16 : i32
    %c0_i32 = arith.constant 0 : i32
    %38 = arith.cmpi eq, %c16_i32, %c0_i32 : i32
    %c1_i32 = arith.constant 1 : i32
    %39 = arith.select %38, %c1_i32, %c16_i32 : i32
    %40 = vector.broadcast %39 : i32 to vector<512x32xi32>
    %41 = arith.remsi %37, %40 : vector<512x32xi32>
    %c0_i32_14 = arith.constant 0 : i32
    %42 = vector.broadcast %c0_i32_14 : i32 to vector<512x32xi32>
    %43 = arith.cmpi ne, %41, %42 : vector<512x32xi32>
    %c0_i32_15 = arith.constant 0 : i32
    %44 = vector.broadcast %c0_i32_15 : i32 to vector<512x32xi32>
    %45 = arith.cmpi slt, %41, %44 : vector<512x32xi32>
    %c0_i32_16 = arith.constant 0 : i32
    %46 = arith.cmpi slt, %39, %c0_i32_16 : i32
    %47 = vector.broadcast %46 : i1 to vector<512x32xi1>
    %48 = vector.broadcast %47 : vector<512x32xi1> to vector<512x32xi1>
    %49 = arith.xori %45, %48 : vector<512x32xi1>
    %50 = arith.andi %49, %43 : vector<512x32xi1>
    %51 = vector.broadcast %39 : i32 to vector<512x32xi32>
    %52 = arith.addi %41, %51 : vector<512x32xi32>
    %53 = arith.select %50, %52, %41 : vector<512x32xi1>, vector<512x32xi32>
    %54 = vector.extract_strided_slice %34 {offsets = [0, 0], sizes = [512, 32], strides = [1, 1]} : vector<512x96xbf16> to vector<512x32xbf16>
    %c1_i32_17 = arith.constant 1 : i32
    %55 = vector.broadcast %c1_i32_17 : i32 to vector<512x32xi32>
    %56 = arith.cmpi slt, %53, %55 : vector<512x32xi32>
    %57 = vector.extract_strided_slice %35 {offsets = [15, 0], sizes = [497, 32], strides = [1, 1]} : vector<512x32xf32> to vector<497x32xf32>
    %58 = vector.extract_strided_slice %35 {offsets = [0, 0], sizes = [15, 32], strides = [1, 1]} : vector<512x32xf32> to vector<15x32xf32>
    %59 = tpu.concatenate %57, %58 in 0 : vector<497x32xf32>, vector<15x32xf32> -> vector<512x32xf32>
    %60 = vector.extract_strided_slice %35 {offsets = [511, 0], sizes = [1, 32], strides = [1, 1]} : vector<512x32xf32> to vector<1x32xf32>
    %61 = vector.extract_strided_slice %35 {offsets = [0, 0], sizes = [511, 32], strides = [1, 1]} : vector<512x32xf32> to vector<511x32xf32>
    %62 = tpu.concatenate %60, %61 in 0 : vector<1x32xf32>, vector<511x32xf32> -> vector<512x32xf32>
    %63 = arith.select %56, %59, %62 : vector<512x32xi1>, vector<512x32xf32>
    %64 = arith.truncf %63 : vector<512x32xf32> to vector<512x32xbf16>
    %65 = vector.extract_strided_slice %34 {offsets = [0, 32], sizes = [512, 32], strides = [1, 1]} : vector<512x96xbf16> to vector<512x32xbf16>
    %c15_i32 = arith.constant 15 : i32
    %66 = vector.broadcast %c15_i32 : i32 to vector<512x32xi32>
    %67 = arith.cmpi sge, %53, %66 : vector<512x32xi32>
    %68 = vector.extract_strided_slice %35 {offsets = [497, 0], sizes = [15, 32], strides = [1, 1]} : vector<512x32xf32> to vector<15x32xf32>
    %69 = vector.extract_strided_slice %35 {offsets = [0, 0], sizes = [497, 32], strides = [1, 1]} : vector<512x32xf32> to vector<497x32xf32>
    %70 = tpu.concatenate %68, %69 in 0 : vector<15x32xf32>, vector<497x32xf32> -> vector<512x32xf32>
    %71 = vector.extract_strided_slice %35 {offsets = [1, 0], sizes = [511, 32], strides = [1, 1]} : vector<512x32xf32> to vector<511x32xf32>
    %72 = vector.extract_strided_slice %35 {offsets = [0, 0], sizes = [1, 32], strides = [1, 1]} : vector<512x32xf32> to vector<1x32xf32>
    %73 = tpu.concatenate %71, %72 in 0 : vector<511x32xf32>, vector<1x32xf32> -> vector<512x32xf32>
    %74 = arith.select %67, %70, %73 : vector<512x32xi1>, vector<512x32xf32>
    %75 = arith.truncf %74 : vector<512x32xf32> to vector<512x32xbf16>
    %c2_i32 = arith.constant 2 : i32
    %76 = vector.broadcast %c2_i32 : i32 to vector<512x32xi32>
    %77 = arith.cmpi slt, %53, %76 : vector<512x32xi32>
    %78 = vector.extract_strided_slice %36 {offsets = [14, 0], sizes = [498, 32], strides = [1, 1]} : vector<512x32xf32> to vector<498x32xf32>
    %79 = vector.extract_strided_slice %36 {offsets = [0, 0], sizes = [14, 32], strides = [1, 1]} : vector<512x32xf32> to vector<14x32xf32>
    %80 = tpu.concatenate %78, %79 in 0 : vector<498x32xf32>, vector<14x32xf32> -> vector<512x32xf32>
    %81 = vector.extract_strided_slice %36 {offsets = [510, 0], sizes = [2, 32], strides = [1, 1]} : vector<512x32xf32> to vector<2x32xf32>
    %82 = vector.extract_strided_slice %36 {offsets = [0, 0], sizes = [510, 32], strides = [1, 1]} : vector<512x32xf32> to vector<510x32xf32>
    %83 = tpu.concatenate %81, %82 in 0 : vector<2x32xf32>, vector<510x32xf32> -> vector<512x32xf32>
    %84 = arith.select %77, %80, %83 : vector<512x32xi1>, vector<512x32xf32>
    %85 = arith.truncf %84 : vector<512x32xf32> to vector<512x32xbf16>
    %86 = vector.extract_strided_slice %34 {offsets = [0, 64], sizes = [512, 32], strides = [1, 1]} : vector<512x96xbf16> to vector<512x32xbf16>
    %c14_i32 = arith.constant 14 : i32
    %87 = vector.broadcast %c14_i32 : i32 to vector<512x32xi32>
    %88 = arith.cmpi sge, %53, %87 : vector<512x32xi32>
    %89 = vector.extract_strided_slice %36 {offsets = [498, 0], sizes = [14, 32], strides = [1, 1]} : vector<512x32xf32> to vector<14x32xf32>
    %90 = vector.extract_strided_slice %36 {offsets = [0, 0], sizes = [498, 32], strides = [1, 1]} : vector<512x32xf32> to vector<498x32xf32>
    %91 = tpu.concatenate %89, %90 in 0 : vector<14x32xf32>, vector<498x32xf32> -> vector<512x32xf32>
    %92 = vector.extract_strided_slice %36 {offsets = [2, 0], sizes = [510, 32], strides = [1, 1]} : vector<512x32xf32> to vector<510x32xf32>
    %93 = vector.extract_strided_slice %36 {offsets = [0, 0], sizes = [2, 32], strides = [1, 1]} : vector<512x32xf32> to vector<2x32xf32>
    %94 = tpu.concatenate %92, %93 in 0 : vector<510x32xf32>, vector<2x32xf32> -> vector<512x32xf32>
    %95 = arith.select %88, %91, %94 : vector<512x32xi1>, vector<512x32xf32>
    %96 = arith.truncf %95 : vector<512x32xf32> to vector<512x32xbf16>
    %97 = tpu.concatenate %54, %64, %65, %75, %85, %86, %96 in 1 : vector<512x32xbf16>, vector<512x32xbf16>, vector<512x32xbf16>, vector<512x32xbf16>, vector<512x32xbf16>, vector<512x32xbf16>, vector<512x32xbf16> -> vector<512x224xbf16>
    %cst_18 = arith.constant dense<0.000000e+00> : vector<512x24xf32>
    %98 = tpu.matmul %97, %1, %cst_18 {dimension_numbers = #tpu.dot_dimension_numbers<[1], [0], [0], [1], [0, 0, 1, 1], [], []>} : vector<512x224xbf16>, vector<224x24xbf16>, vector<512x24xf32> -> vector<512x24xf32>
    %99 = vector.broadcast %6 : vector<1x24xf32> to vector<512x24xf32>
    %100 = arith.addf %98, %99 : vector<512x24xf32>
    %cst_19 = arith.constant 0.000000e+00 : f32
    %101 = vector.broadcast %cst_19 : f32 to vector<512x24xf32>
    %102 = arith.maximumf %100, %101 : vector<512x24xf32>
    %103 = vector.broadcast %7 : vector<1x24xf32> to vector<512x24xf32>
    %104 = arith.mulf %102, %103 : vector<512x24xf32>
    %c0_20 = arith.constant 0 : index
    %c0_21 = arith.constant 0 : index
    %105 = vector.load %arg2[%c0_20, %c0_21] : memref<256x64xbf16, #tpu.memory_space<vmem>>, vector<256x64xbf16>
    %cst_22 = arith.constant dense<0.000000e+00> : vector<256x32xf32>
    %106 = tpu.matmul %105, %2, %cst_22 {dimension_numbers = #tpu.dot_dimension_numbers<[1], [0], [0], [1], [0, 0, 1, 1], [], []>} : vector<256x64xbf16>, vector<64x32xbf16>, vector<256x32xf32> -> vector<256x32xf32>
    %107 = vector.broadcast %9 : vector<1x32xf32> to vector<256x32xf32>
    %108 = arith.addf %106, %107 : vector<256x32xf32>
    %cst_23 = arith.constant 0.000000e+00 : f32
    %109 = vector.broadcast %cst_23 : f32 to vector<256x32xf32>
    %110 = arith.maximumf %108, %109 : vector<256x32xf32>
    %111 = arith.truncf %110 : vector<256x32xf32> to vector<256x32xbf16>
    %cst_24 = arith.constant dense<0.000000e+00> : vector<256x32xf32>
    %112 = tpu.matmul %111, %3, %cst_24 {dimension_numbers = #tpu.dot_dimension_numbers<[1], [0], [0], [1], [0, 0, 1, 1], [], []>} : vector<256x32xbf16>, vector<32x32xbf16>, vector<256x32xf32> -> vector<256x32xf32>
    %113 = vector.broadcast %10 : vector<1x32xf32> to vector<256x32xf32>
    %114 = arith.addf %112, %113 : vector<256x32xf32>
    %cst_25 = arith.constant 0.000000e+00 : f32
    %115 = vector.broadcast %cst_25 : f32 to vector<256x32xf32>
    %116 = arith.maximumf %114, %115 : vector<256x32xf32>
    %117 = vector.shape_cast %104 : vector<512x24xf32> to vector<32x16x24xf32>
    %118 = tpu.transpose %117, [0, 2, 1] : vector<32x16x24xf32> -> vector<32x24x16xf32>
    %119 = vector.shape_cast %34 : vector<512x96xbf16> to vector<32x16x96xbf16>
    %120 = vector.extract_strided_slice %118 {offsets = [0, 0, 0], sizes = [32, 8, 16], strides = [1, 1, 1]} : vector<32x24x16xf32> to vector<32x8x16xf32>
    %121 = arith.truncf %120 : vector<32x8x16xf32> to vector<32x8x16xbf16>
    %122 = vector.extract_strided_slice %119 {offsets = [0, 0, 0], sizes = [32, 16, 32], strides = [1, 1, 1]} : vector<32x16x96xbf16> to vector<32x16x32xbf16>
    "tpu.trace_start"() <{level = 10 : i32, message = "bki,bic->bkc"}> : () -> ()
    %cst_26 = arith.constant dense<0.000000e+00> : vector<32x8x32xf32>
    %123 = tpu.matmul %121, %122, %cst_26 {dimension_numbers = #tpu.dot_dimension_numbers<[2], [1], [1], [2], [0, 0, 0, 1, 1, 2], [0], [0]>} : vector<32x8x16xbf16>, vector<32x16x32xbf16>, vector<32x8x32xf32> -> vector<32x8x32xf32>
    "tpu.trace_stop"() : () -> ()
    %124 = vector.extract_strided_slice %118 {offsets = [0, 8, 0], sizes = [32, 8, 16], strides = [1, 1, 1]} : vector<32x24x16xf32> to vector<32x8x16xf32>
    %125 = arith.truncf %124 : vector<32x8x16xf32> to vector<32x8x16xbf16>
    %126 = vector.extract_strided_slice %119 {offsets = [0, 0, 32], sizes = [32, 16, 32], strides = [1, 1, 1]} : vector<32x16x96xbf16> to vector<32x16x32xbf16>
    "tpu.trace_start"() <{level = 10 : i32, message = "bki,bic->bkc"}> : () -> ()
    %cst_27 = arith.constant dense<0.000000e+00> : vector<32x8x32xf32>
    %127 = tpu.matmul %125, %126, %cst_27 {dimension_numbers = #tpu.dot_dimension_numbers<[2], [1], [1], [2], [0, 0, 0, 1, 1, 2], [0], [0]>} : vector<32x8x16xbf16>, vector<32x16x32xbf16>, vector<32x8x32xf32> -> vector<32x8x32xf32>
    "tpu.trace_stop"() : () -> ()
    %128 = arith.addf %123, %127 : vector<32x8x32xf32>
    %129 = vector.extract_strided_slice %118 {offsets = [0, 16, 0], sizes = [32, 8, 16], strides = [1, 1, 1]} : vector<32x24x16xf32> to vector<32x8x16xf32>
    %130 = arith.truncf %129 : vector<32x8x16xf32> to vector<32x8x16xbf16>
    %131 = vector.extract_strided_slice %119 {offsets = [0, 0, 64], sizes = [32, 16, 32], strides = [1, 1, 1]} : vector<32x16x96xbf16> to vector<32x16x32xbf16>
    "tpu.trace_start"() <{level = 10 : i32, message = "bki,bic->bkc"}> : () -> ()
    %cst_28 = arith.constant dense<0.000000e+00> : vector<32x8x32xf32>
    %132 = tpu.matmul %130, %131, %cst_28 {dimension_numbers = #tpu.dot_dimension_numbers<[2], [1], [1], [2], [0, 0, 0, 1, 1, 2], [0], [0]>} : vector<32x8x16xbf16>, vector<32x16x32xbf16>, vector<32x8x32xf32> -> vector<32x8x32xf32>
    "tpu.trace_stop"() : () -> ()
    %133 = arith.addf %128, %132 : vector<32x8x32xf32>
    %134 = vector.shape_cast %133 : vector<32x8x32xf32> to vector<256x32xf32>
    %135 = vector.broadcast %8 : vector<1x32xf32> to vector<256x32xf32>
    %136 = arith.addf %134, %135 : vector<256x32xf32>
    %137 = arith.mulf %136, %116 : vector<256x32xf32>
    %c0_29 = arith.constant 0 : index
    %c0_30 = arith.constant 0 : index
    %138 = vector.load %arg5[%c0_29, %c0_30] : memref<256x32xf32, #tpu.memory_space<vmem>>, vector<256x32xf32>
    tpu.vector_store %arg5[%c0_29, %c0_30], %137 {strides = array<i32>} : memref<256x32xf32, #tpu.memory_space<vmem>>, vector<256x32xf32>,
    return
  }
  func.func @transform_0(%arg0: i32) -> (i32, i32) {
    %c0_i32 = arith.constant 0 : i32
    %c0_i32_0 = arith.constant 0 : i32
    return %arg0, %c0_i32 : i32, i32
  }
  func.func @transform_1(%arg0: i32) -> (i32, i32) {
    %c0_i32 = arith.constant 0 : i32
    %c0_i32_0 = arith.constant 0 : i32
    return %arg0, %c0_i32 : i32, i32
  }
  func.func @transform_2(%arg0: i32) -> (i32, i32) {
    %c0_i32 = arith.constant 0 : i32
    %c0_i32_0 = arith.constant 0 : i32
    %c0_i32_1 = arith.constant 0 : i32
    return %c0_i32, %c0_i32_0 : i32, i32
  }
  func.func @transform_3(%arg0: i32) -> (i32, i32) {
    %c0_i32 = arith.constant 0 : i32
    %c0_i32_0 = arith.constant 0 : i32
    %c0_i32_1 = arith.constant 0 : i32
    return %c0_i32, %c0_i32_0 : i32, i32
  }
  func.func @transform_4(%arg0: i32) -> (i32, i32) {
    %c0_i32 = arith.constant 0 : i32
    %c0_i32_0 = arith.constant 0 : i32
    return %arg0, %c0_i32 : i32, i32
  }
}

</mosaic_0001>

<llo_original>
// kernel: tasab_forward.1
$region0: #{tasab_forward.1}
  #allocation0 [shape = 'u32[]', space=smem, size = 0x4, offset = 0x4, fixed_abs, tag = 'smem constant byte address 0x4 - core index']
  #allocation1 [shape = 'u32[144,128]{1,0:T(1,128)}', space=vmem, size = 0x12000, scoped, tag = 'internal scratch']
  %s0 = inlined_call_operand.vmem [shape: f32[2048,16], index: 0, kind: input, shape index: {}]
  %s1 = inlined_call_operand.vmem [shape: bf16[1024,64], index: 1, kind: input, shape index: {}]
  %s2 = inlined_call_operand.vmem [shape: bf16[336,128], index: 2, kind: input, shape index: {}]
  %s3 = inlined_call_operand.vmem [shape: f32[8,128], index: 3, kind: input, shape index: {}]
  %s4 = inlined_call_operand.vmem [shape: f32[1024,32], index: 4, kind: output, shape index: {}]
  %s5 = sld [smem:[#allocation0]]
  $region49: #{tasab_forward.1} parent=0
    _
  %s7 = ssub.s32 1, %s5
  %s8 = scalar_select 0, %s7, %s5
  loop: start=0, step=1, limit=6
  $region2: #{tasab_forward.1} parent=0 // loop_pre_header
    _
  $region3: #{tasab_forward.1} parent=0 // loop_header
    %s10 = sphi 0, %s14
    %p11 = scmp.ge.s32.totalorder %s10, 6
    %s20 = sphi 0, %s22
    %s23 = sphi 0, %s20
    %s24 = sphi 0, %s23
    %s40 = sphi 0, %s24
    %s46 = sphi 0, %s48
    %s49 = sphi 0, %s46
    %s50 = sphi 0, %s49
    %s66 = sphi 0, %s50
    %s70 = sphi 0, %s70
    %s72 = sphi 0, %s70
    %s73 = sphi 0, %s72
    %s87 = sphi 0, %s73
    %s91 = sphi 0, %s91
    %s93 = sphi 0, %s91
    %s94 = sphi 0, %s93
    %s108 = sphi 0, %s94
    %s114 = sphi 0, %s116
    %s117 = sphi 0, %s114
    %s118 = sphi 0, %s117
    %s134 = sphi 0, %s118
  $region4: #{tasab_forward.1} parent=0 // loop_header_branch
    %13 = sbr.rel (%p11) target = $region8
  $region5: #{tasab_forward.1} parent=0 // loop_body
    %s15 = ssub.s32 %s10, 1
    %s16 = ssub.s32 %s10, 2
    %s17 = sadd.s32 %s10, 1
    %s18 = ssub.s32 %s10, %s17
    %p19 = scmp.eq.s32.totalorder %s18, 0
    %s21 = sadd.s32 %s20, 1
    %s22 = scalar_select %p19, %s20, %s21
    %p25 = pneg %p19
    %p26 = scmp.eq.s32.totalorder %s10, 3
    %p27 = por %p25, %p26
    %p28 = scmp.ne.s32.totalorder %s20, %s23
    %p29 = scmp.eq.s32.totalorder %s10, 0
    %p30 = por %p28, %p29
    %p31 = scmp.ne.s32.totalorder %s20, %s23
    %p32 = scmp.eq.s32.totalorder %s15, 3
    %p33 = por %p31, %p32
    %p34 = scmp.ne.s32.totalorder %s23, %s24
    %p35 = scmp.eq.s32.totalorder %s15, 0
    %p36 = por %p34, %p35
    %p37 = scmp.ne.s32.totalorder %s23, %s24
    %p38 = scmp.eq.s32.totalorder %s16, 3
    %p39 = por %p37, %p38
    %p41 = scmp.ne.s32.totalorder %s24, %s40
    %p42 = scmp.eq.s32.totalorder %s16, 0
    %p43 = por %p41, %p42
    %s44 = ssub.s32 %s10, %s17
    %p45 = scmp.eq.s32.totalorder %s44, 0
    %s47 = sadd.s32 %s46, 1
    %s48 = scalar_select %p45, %s46, %s47
    %p51 = pneg %p45
    %p52 = scmp.eq.s32.totalorder %s10, 3
    %p53 = por %p51, %p52
    %p54 = scmp.ne.s32.totalorder %s46, %s49
    %p55 = scmp.eq.s32.totalorder %s10, 0
    %p56 = por %p54, %p55
    %p57 = scmp.ne.s32.totalorder %s46, %s49
    %p58 = scmp.eq.s32.totalorder %s15, 3
    %p59 = por %p57, %p58
    %p60 = scmp.ne.s32.totalorder %s49, %s50
    %p61 = scmp.eq.s32.totalorder %s15, 0
    %p62 = por %p60, %p61
    %p63 = scmp.ne.s32.totalorder %s49, %s50
    %p64 = scmp.eq.s32.totalorder %s16, 3
    %p65 = por %p63, %p64
    %p67 = scmp.ne.s32.totalorder %s50, %s66
    %p68 = scmp.eq.s32.totalorder %s16, 0
    %p69 = por %p67, %p68
    %s71 = sadd.s32 %s70, 1
    %p74 = scmp.eq.s32.totalorder %s10, 3
    %p75 = scmp.ne.s32.totalorder %s70, %s72
    %p76 = scmp.eq.s32.totalorder %s10, 0
    %p77 = por %p75, %p76
    %p78 = scmp.ne.s32.totalorder %s70, %s72
    %p79 = scmp.eq.s32.totalorder %s15, 3
    %p80 = por %p78, %p79
    %p81 = scmp.ne.s32.totalorder %s72, %s73
    %p82 = scmp.eq.s32.totalorder %s15, 0
    %p83 = por %p81, %p82
    %p84 = scmp.ne.s32.totalorder %s72, %s73
    %p85 = scmp.eq.s32.totalorder %s16, 3
    %p86 = por %p84, %p85
    %p88 = scmp.ne.s32.totalorder %s73, %s87
    %p89 = scmp.eq.s32.totalorder %s16, 0
    %p90 = por %p88, %p89
    %s92 = sadd.s32 %s91, 1
    %p95 = scmp.eq.s32.totalorder %s10, 3
    %p96 = scmp.ne.s32.totalorder %s91, %s93
    %p97 = scmp.eq.s32.totalorder %s10, 0
    %p98 = por %p96, %p97
    %p99 = scmp.ne.s32.totalorder %s91, %s93
    %p100 = scmp.eq.s32.totalorder %s15, 3
    %p101 = por %p99, %p100
    %p102 = scmp.ne.s32.totalorder %s93, %s94
    %p103 = scmp.eq.s32.totalorder %s15, 0
    %p104 = por %p102, %p103
    %p105 = scmp.ne.s32.totalorder %s93, %s94
    %p106 = scmp.eq.s32.totalorder %s16, 3
    %p107 = por %p105, %p106
    %p109 = scmp.ne.s32.totalorder %s94, %s108
    %p110 = scmp.eq.s32.totalorder %s16, 0
    %p111 = por %p109, %p110
    %s112 = ssub.s32 %s10, %s17
    %p113 = scmp.eq.s32.totalorder %s112, 0
    %s115 = sadd.s32 %s114, 1
    %s116 = scalar_select %p113, %s114, %s115
    %p119 = pneg %p113
    %p120 = scmp.eq.s32.totalorder %s10, 3
    %p121 = por %p119, %p120
    %p122 = scmp.ne.s32.totalorder %s114, %s117
    %p123 = scmp.eq.s32.totalorder %s10, 0
    %p124 = por %p122, %p123
    %p125 = scmp.ne.s32.totalorder %s114, %s117
    %p126 = scmp.eq.s32.totalorder %s15, 3
    %p127 = por %p125, %p126
    %p128 = scmp.ne.s32.totalorder %s117, %s118
    %p129 = scmp.eq.s32.totalorder %s15, 0
    %p130 = por %p128, %p129
    %p131 = scmp.ne.s32.totalorder %s117, %s118
    %p132 = scmp.eq.s32.totalorder %s16, 3
    %p133 = por %p131, %p132
    %p135 = scmp.ne.s32.totalorder %s118, %s134
    %p136 = scmp.eq.s32.totalorder %s16, 0
    %p137 = por %p135, %p136
    %p138 = scmp.le.s32.totalorder 1, %s10
    %p139 = scmp.lt.s32.totalorder %s10, 5
    %p140 = pnand %p138, %p139
    %p141 = pneg %p140
    // Predicated region
    $region9: #{tasab_forward.1} parent=5 // pred_check
      _
    $region10: #{tasab_forward.1} parent=5 // pred_check_branch
      %143 = sbr.rel (%p140) target = $region12
    $region11: #{tasab_forward.1} parent=5 // pred_region
      %s144 = ssub.s32 %s10, 1
      // Predicated region
      $region13: #{tasab_forward.1} parent=11 // pred_check
        %p145 = pneg %p83
      $region14: #{tasab_forward.1} parent=11 // pred_check_branch
        %147 = sbr.rel (%p145) target = $region16
      $region15: #{tasab_forward.1} parent=11 // pred_region
        _
      $region16: #{tasab_forward.1} parent=11 // pred_fallthru
        _
      // Predicated region
      $region17: #{tasab_forward.1} parent=11 // pred_check
        %p148 = pneg %p104
      $region18: #{tasab_forward.1} parent=11 // pred_check_branch
        %150 = sbr.rel (%p148) target = $region20
      $region19: #{tasab_forward.1} parent=11 // pred_region
        _
      $region20: #{tasab_forward.1} parent=11 // pred_fallthru
        _
    $region12: #{tasab_forward.1} parent=5 // pred_fallthru
      _
    %p151 = scmp.lt.s32.totalorder %s10, 4
    // Predicated region
    $region21: #{tasab_forward.1} parent=5 // pred_check
      %p152 = pneg %p151
    $region22: #{tasab_forward.1} parent=5 // pred_check_branch
      %154 = sbr.rel (%p152) target = $region24
    $region23: #{tasab_forward.1} parent=5 // pred_region
      // Predicated region
      $region25: #{tasab_forward.1} parent=23 // pred_check
        %p155 = pneg %p30
      $region26: #{tasab_forward.1} parent=23 // pred_check_branch
        %157 = sbr.rel (%p155) target = $region28
      $region27: #{tasab_forward.1} parent=23 // pred_region
        %s158 = smul.u32 64, %s10
        %p159 = scmp.lt.s32.totalorder %s158, 255
        %s160 = scalar_select %p159, %s158, 255
        %s161 = smul.addr %s160, 8
        %s162 = scalar_lea.vmem %s0, %s161
        %s163 = smul.u32 64, %s10
      $region28: #{tasab_forward.1} parent=23 // pred_fallthru
        _
      // Predicated region
      $region29: #{tasab_forward.1} parent=23 // pred_check
        %p164 = pneg %p56
      $region30: #{tasab_forward.1} parent=23 // pred_check_branch
        %166 = sbr.rel (%p164) target = $region32
      $region31: #{tasab_forward.1} parent=23 // pred_region
        %s167 = smul.u32 32, %s10
        %p168 = scmp.lt.s32.totalorder %s167, 127
        %s169 = scalar_select %p168, %s167, 127
        %s170 = smul.addr %s169, 4
        %s171 = scalar_lea.vmem %s1, %s170
        %s172 = smul.u32 32, %s10
      $region32: #{tasab_forward.1} parent=23 // pred_fallthru
        _
    $region24: #{tasab_forward.1} parent=5 // pred_fallthru
      _
    %p173 = scmp.le.s32.totalorder 1, %s10
    %p174 = scmp.lt.s32.totalorder %s10, 5
    %p175 = pnand %p173, %p174
    %p176 = pneg %p175
    // Predicated region
    $region33: #{tasab_forward.1} parent=5 // pred_check
      _
    $region34: #{tasab_forward.1} parent=5 // pred_check_branch
      %178 = sbr.rel (%p175) target = $region36
    $region35: #{tasab_forward.1} parent=5 // pred_region
      %s179 = ssub.s32 %s10, 1
      %s180 = smul.u32 64, %s15
      %p181 = scmp.lt.s32.totalorder %s180, 255
      %s182 = scalar_select %p181, %s180, 255
      %s183 = smul.addr %s182, 8
      %s184 = scalar_lea.vmem %s0, %s183
      %p185 = pneg %p36
      %p186 = pneg %p33
      %s187 = smul.u32 32, %s15
      %p188 = scmp.lt.s32.totalorder %s187, 127
      %s189 = scalar_select %p188, %s187, 127
      %s190 = smul.addr %s189, 4
      %s191 = scalar_lea.vmem %s1, %s190
      %p192 = pneg %p62
      %p193 = pneg %p59
      %p194 = pneg %p83
      %p195 = pneg %p80
      %p196 = pneg %p104
      %p197 = pneg %p101
      %p198 = pneg %p130
      %p199 = pneg %p127
      %s200 = smul.u32 32, %s15
      %p201 = scmp.lt.s32.totalorder %s200, 127
      %s202 = scalar_select %p201, %s200, 127
      %s203 = smul.addr %s202, 8
      %s204 = scalar_lea.vmem %s4, %s203
      %s205 = smul.u32 64, %s15
      %p206 = scmp.lt.s32.totalorder %s205, 255
      %s207 = scalar_select %p206, %s205, 255
      %s208 = smul.addr %s207, 8
      %s209 = scalar_lea.vmem %s0, %s208
      %s210 = smul.u32 64, %s15
      %s211 = smul.u32 32, %s15
      %p212 = scmp.lt.s32.totalorder %s211, 127
      %s213 = scalar_select %p212, %s211, 127
      %s214 = smul.addr %s213, 4
      %s215 = scalar_lea.vmem %s1, %s214
      %s216 = smul.u32 32, %s15
      %s217 = smul.u32 32, %s15
      %p218 = scmp.lt.s32.totalorder %s217, 127
      %s219 = scalar_select %p218, %s217, 127
      %s220 = smul.addr %s219, 8
      %s221 = scalar_lea.vmem %s4, %s220
      %s222 = smul.u32 32, %s15
      %v224 = vld [vmem:[%s2] sm:$0xf]
      %v225 = vld [vmem:[%s2 + $0x4] sm:$0xf]
      %v226 = vld [vmem:[%s2 + $0x8] sm:$0xf]
      %v227 = vld [vmem:[%s2 + $0xc] sm:$0xf]
      %v228 = vld [vmem:[%s2 + $0x10] sm:$0xf]
      %v229 = vld [vmem:[%s2 + $0x14] sm:$0xf]
      %v230 = vld [vmem:[%s2 + $0x18] sm:$0xf]
      %v231 = vld [vmem:[%s2 + $0x1c] sm:$0xf]
      %v232 = vld [vmem:[%s2 + $0x20] sm:$0xf]
      %v233 = vld [vmem:[%s2 + $0x24] sm:$0xf]
      %v234 = vld [vmem:[%s2 + $0x28] sm:$0xf]
      %v235 = vld [vmem:[%s2 + $0x2c] sm:$0xf]
      %v236 = vld [vmem:[%s2 + $0x30] sm:$0xf]
      %v237 = vld [vmem:[%s2 + $0x34] sm:$0xf]
      %v238 = vld [vmem:[%s2 + $0x38] sm:$0xf]
      %v239 = vld [vmem:[%s2 + $0x3c] sm:$0xf]
      %v240 = vld [vmem:[%s2 + $0x40] sm:$0xf]
      %v241 = vld [vmem:[%s2 + $0x44] sm:$0xf]
      %v242 = vld [vmem:[%s2 + $0x48] sm:$0xf]
      %v243 = vld [vmem:[%s2 + $0x4c] sm:$0xf]
      %v244 = vld [vmem:[%s2 + $0x50] sm:$0xf]
      %v245 = vld [vmem:[%s2 + $0x54] sm:$0xf]
      %v246 = vld [vmem:[%s2 + $0x58] sm:$0xf]
      %v247 = vld [vmem:[%s2 + $0x5c] sm:$0xf]
      %v248 = vld [vmem:[%s2 + $0x60] sm:$0xf]
      %v249 = vld [vmem:[%s2 + $0x64] sm:$0xf]
      %v250 = vld [vmem:[%s2 + $0x68] sm:$0xf]
      %v251 = vld [vmem:[%s2 + $0x6c] sm:$0xf]
      %v252 = vld [vmem:[%s2 + $0x70] sm:$0xf]
      %v253 = vld [vmem:[%s2 + $0x74] sm:$0xf]
      %v254 = vld [vmem:[%s2 + $0x78] sm:$0xf]
      %v255 = vld [vmem:[%s2 + $0x7c] sm:$0xf]
      %v256 = vld [vmem:[%s2 + $0x80] sm:$0xf]
      %v257 = vld [vmem:[%s2 + $0x84] sm:$0xf]
      %v258 = vld [vmem:[%s2 + $0x88] sm:$0xf]
      %v259 = vld [vmem:[%s2 + $0x8c] sm:$0xf]
      %v260 = vld [vmem:[%s2 + $0x90] sm:$0xf]
      %v261 = vld [vmem:[%s2 + $0x94] sm:$0xf]
      %v262 = vld [vmem:[%s2 + $0x98] sm:$0xf]
      %v263 = vld [vmem:[%s2 + $0x9c] sm:$0xf]
      %v264 = vld [vmem:[%s2 + $0xa0] sm:$0xf]
      %v265 = vld [vmem:[%s2 + $0xa4] sm:$0xf]
      %v266 = vld [vmem:[%s3] sm:$0xff]
      %v267 = vld [vmem:[%s209] sm:$0xff]
      %v268 = vld [vmem:[%s209 + $0x8] sm:$0xff]
      %v269 = vld [vmem:[%s209 + $0x10] sm:$0xff]
      %v270 = vld [vmem:[%s209 + $0x18] sm:$0xff]
      %v271 = vld [vmem:[%s209 + $0x20] sm:$0xff]
      %v272 = vld [vmem:[%s209 + $0x28] sm:$0xff]
      %v273 = vld [vmem:[%s209 + $0x30] sm:$0xff]
      %v274 = vld [vmem:[%s209 + $0x38] sm:$0xff]
      %v275 = vld [vmem:[%s209 + $0x40] sm:$0xff]
      %v276 = vld [vmem:[%s209 + $0x48] sm:$0xff]
      %v277 = vld [vmem:[%s209 + $0x50] sm:$0xff]
      %v278 = vld [vmem:[%s209 + $0x58] sm:$0xff]
      %v279 = vld [vmem:[%s209 + $0x60] sm:$0xff]
      %v280 = vld [vmem:[%s209 + $0x68] sm:$0xff]
      %v281 = vld [vmem:[%s209 + $0x70] sm:$0xff]
      %v282 = vld [vmem:[%s209 + $0x78] sm:$0xff]
      %v283 = vld [vmem:[%s209 + $0x80] sm:$0xff]
      %v284 = vld [vmem:[%s209 + $0x88] sm:$0xff]
      %v285 = vld [vmem:[%s209 + $0x90] sm:$0xff]
      %v286 = vld [vmem:[%s209 + $0x98] sm:$0xff]
      %v287 = vld [vmem:[%s209 + $0xa0] sm:$0xff]
      %v288 = vld [vmem:[%s209 + $0xa8] sm:$0xff]
      %v289 = vld [vmem:[%s209 + $0xb0] sm:$0xff]
      %v290 = vld [vmem:[%s209 + $0xb8] sm:$0xff]
      %v291 = vld [vmem:[%s209 + $0xc0] sm:$0xff]
      %v292 = vld [vmem:[%s209 + $0xc8] sm:$0xff]
      %v293 = vld [vmem:[%s209 + $0xd0] sm:$0xff]
      %v294 = vld [vmem:[%s209 + $0xd8] sm:$0xff]
      %v295 = vld [vmem:[%s209 + $0xe0] sm:$0xff]
      %v296 = vld [vmem:[%s209 + $0xe8] sm:$0xff]
      %v297 = vld [vmem:[%s209 + $0xf0] sm:$0xff]
      %v298 = vld [vmem:[%s209 + $0xf8] sm:$0xff]
      %v299 = vld [vmem:[%s209 + $0x100] sm:$0xff]
      %v300 = vld [vmem:[%s209 + $0x108] sm:$0xff]
      %v301 = vld [vmem:[%s209 + $0x110] sm:$0xff]
      %v302 = vld [vmem:[%s209 + $0x118] sm:$0xff]
      %v303 = vld [vmem:[%s209 + $0x120] sm:$0xff]
      %v304 = vld [vmem:[%s209 + $0x128] sm:$0xff]
      %v305 = vld [vmem:[%s209 + $0x130] sm:$0xff]
      %v306 = vld [vmem:[%s209 + $0x138] sm:$0xff]
      %v307 = vld [vmem:[%s209 + $0x140] sm:$0xff]
      %v308 = vld [vmem:[%s209 + $0x148] sm:$0xff]
      %v309 = vld [vmem:[%s209 + $0x150] sm:$0xff]
      %v310 = vld [vmem:[%s209 + $0x158] sm:$0xff]
      %v311 = vld [vmem:[%s209 + $0x160] sm:$0xff]
      %v312 = vld [vmem:[%s209 + $0x168] sm:$0xff]
      %v313 = vld [vmem:[%s209 + $0x170] sm:$0xff]
      %v314 = vld [vmem:[%s209 + $0x178] sm:$0xff]
      %v315 = vld [vmem:[%s209 + $0x180] sm:$0xff]
      %v316 = vld [vmem:[%s209 + $0x188] sm:$0xff]
      %v317 = vld [vmem:[%s209 + $0x190] sm:$0xff]
      %v318 = vld [vmem:[%s209 + $0x198] sm:$0xff]
      %v319 = vld [vmem:[%s209 + $0x1a0] sm:$0xff]
      %v320 = vld [vmem:[%s209 + $0x1a8] sm:$0xff]
      %v321 = vld [vmem:[%s209 + $0x1b0] sm:$0xff]
      %v322 = vld [vmem:[%s209 + $0x1b8] sm:$0xff]
      %v323 = vld [vmem:[%s209 + $0x1c0] sm:$0xff]
      %v324 = vld [vmem:[%s209 + $0x1c8] sm:$0xff]
      %v325 = vld [vmem:[%s209 + $0x1d0] sm:$0xff]
      %v326 = vld [vmem:[%s209 + $0x1d8] sm:$0xff]
      %v327 = vld [vmem:[%s209 + $0x1e0] sm:$0xff]
      %v328 = vld [vmem:[%s209 + $0x1e8] sm:$0xff]
      %v329 = vld [vmem:[%s209 + $0x1f0] sm:$0xff]
      %v330 = vld [vmem:[%s209 + $0x1f8] sm:$0xff]
      %vm331 = vcmask 130048
      %v332 = vsel %vm331, %v267, 0.0
      %333 = vadd.xlane.f32.xlu0 %v332
      %v334 = vpop.xlane.xlu0 %333
      %v335 = vsel %vm331, %v268, 0.0
      %336 = vadd.xlane.f32.xlu0 %v335
      %v337 = vpop.xlane.xlu0 %336
      %v338 = vsel %vm331, %v269, 0.0
      %339 = vadd.xlane.f32.xlu0 %v338
      %v340 = vpop.xlane.xlu0 %339
      %v341 = vsel %vm331, %v270, 0.0
      %342 = vadd.xlane.f32.xlu0 %v341
      %v343 = vpop.xlane.xlu0 %342
      %v344 = vsel %vm331, %v271, 0.0
      %345 = vadd.xlane.f32.xlu0 %v344
      %v346 = vpop.xlane.xlu0 %345
      %v347 = vsel %vm331, %v272, 0.0
      %348 = vadd.xlane.f32.xlu0 %v347
      %v349 = vpop.xlane.xlu0 %348
      %v350 = vsel %vm331, %v273, 0.0
      %351 = vadd.xlane.f32.xlu0 %v350
      %v352 = vpop.xlane.xlu0 %351
      %v353 = vsel %vm331, %v274, 0.0
      %354 = vadd.xlane.f32.xlu0 %v353
      %v355 = vpop.xlane.xlu0 %354
      %v356 = vsel %vm331, %v275, 0.0
      %357 = vadd.xlane.f32.xlu0 %v356
      %v358 = vpop.xlane.xlu0 %357
      %v359 = vsel %vm331, %v276, 0.0
      %360 = vadd.xlane.f32.xlu0 %v359
      %v361 = vpop.xlane.xlu0 %360
      %v362 = vsel %vm331, %v277, 0.0
      %363 = vadd.xlane.f32.xlu0 %v362
      %v364 = vpop.xlane.xlu0 %363
      %v365 = vsel %vm331, %v278, 0.0
      %366 = vadd.xlane.f32.xlu0 %v365
      %v367 = vpop.xlane.xlu0 %366
      %v368 = vsel %vm331, %v279, 0.0
      %369 = vadd.xlane.f32.xlu0 %v368
      %v370 = vpop.xlane.xlu0 %369
      %v371 = vsel %vm331, %v280, 0.0
      %372 = vadd.xlane.f32.xlu0 %v371
      %v373 = vpop.xlane.xlu0 %372
      %v374 = vsel %vm331, %v281, 0.0
      %375 = vadd.xlane.f32.xlu0 %v374
      %v376 = vpop.xlane.xlu0 %375
      %v377 = vsel %vm331, %v282, 0.0
      %378 = vadd.xlane.f32.xlu0 %v377
      %v379 = vpop.xlane.xlu0 %378
      %v380 = vsel %vm331, %v283, 0.0
      %381 = vadd.xlane.f32.xlu0 %v380
      %v382 = vpop.xlane.xlu0 %381
      %v383 = vsel %vm331, %v284, 0.0
      %384 = vadd.xlane.f32.xlu0 %v383
      %v385 = vpop.xlane.xlu0 %384
      %v386 = vsel %vm331, %v285, 0.0
      %387 = vadd.xlane.f32.xlu0 %v386
      %v388 = vpop.xlane.xlu0 %387
      %v389 = vsel %vm331, %v286, 0.0
      %390 = vadd.xlane.f32.xlu0 %v389
      %v391 = vpop.xlane.xlu0 %390
      %v392 = vsel %vm331, %v287, 0.0
      %393 = vadd.xlane.f32.xlu0 %v392
      %v394 = vpop.xlane.xlu0 %393
      %v395 = vsel %vm331, %v288, 0.0
      %396 = vadd.xlane.f32.xlu0 %v395
      %v397 = vpop.xlane.xlu0 %396
      %v398 = vsel %vm331, %v289, 0.0
      %399 = vadd.xlane.f32.xlu0 %v398
      %v400 = vpop.xlane.xlu0 %399
      %v401 = vsel %vm331, %v290, 0.0
      %402 = vadd.xlane.f32.xlu0 %v401
      %v403 = vpop.xlane.xlu0 %402
      %v404 = vsel %vm331, %v291, 0.0
      %405 = vadd.xlane.f32.xlu0 %v404
      %v406 = vpop.xlane.xlu0 %405
      %v407 = vsel %vm331, %v292, 0.0
      %408 = vadd.xlane.f32.xlu0 %v407
      %v409 = vpop.xlane.xlu0 %408
      %v410 = vsel %vm331, %v293, 0.0
      %411 = vadd.xlane.f32.xlu0 %v410
      %v412 = vpop.xlane.xlu0 %411
      %v413 = vsel %vm331, %v294, 0.0
      %414 = vadd.xlane.f32.xlu0 %v413
      %v415 = vpop.xlane.xlu0 %414
      %v416 = vsel %vm331, %v295, 0.0
      %417 = vadd.xlane.f32.xlu0 %v416
      %v418 = vpop.xlane.xlu0 %417
      %v419 = vsel %vm331, %v296, 0.0
      %420 = vadd.xlane.f32.xlu0 %v419
      %v421 = vpop.xlane.xlu0 %420
      %v422 = vsel %vm331, %v297, 0.0
      %423 = vadd.xlane.f32.xlu0 %v422
      %v424 = vpop.xlane.xlu0 %423
      %v425 = vsel %vm331, %v298, 0.0
      %426 = vadd.xlane.f32.xlu0 %v425
      %v427 = vpop.xlane.xlu0 %426
      %v428 = vsel %vm331, %v299, 0.0
      %429 = vadd.xlane.f32.xlu0 %v428
      %v430 = vpop.xlane.xlu0 %429
      %v431 = vsel %vm331, %v300, 0.0
      %432 = vadd.xlane.f32.xlu0 %v431
      %v433 = vpop.xlane.xlu0 %432
      %v434 = vsel %vm331, %v301, 0.0
      %435 = vadd.xlane.f32.xlu0 %v434
      %v436 = vpop.xlane.xlu0 %435
      %v437 = vsel %vm331, %v302, 0.0
      %438 = vadd.xlane.f32.xlu0 %v437
      %v439 = vpop.xlane.xlu0 %438
      %v440 = vsel %vm331, %v303, 0.0
      %441 = vadd.xlane.f32.xlu0 %v440
      %v442 = vpop.xlane.xlu0 %441
      %v443 = vsel %vm331, %v304, 0.0
      %444 = vadd.xlane.f32.xlu0 %v443
      %v445 = vpop.xlane.xlu0 %444
      %v446 = vsel %vm331, %v305, 0.0
      %447 = vadd.xlane.f32.xlu0 %v446
      %v448 = vpop.xlane.xlu0 %447
      %v449 = vsel %vm331, %v306, 0.0
      %450 = vadd.xlane.f32.xlu0 %v449
      %v451 = vpop.xlane.xlu0 %450
      %v452 = vsel %vm331, %v307, 0.0
      %453 = vadd.xlane.f32.xlu0 %v452
      %v454 = vpop.xlane.xlu0 %453
      %v455 = vsel %vm331, %v308, 0.0
      %456 = vadd.xlane.f32.xlu0 %v455
      %v457 = vpop.xlane.xlu0 %456
      %v458 = vsel %vm331, %v309, 0.0
      %459 = vadd.xlane.f32.xlu0 %v458
      %v460 = vpop.xlane.xlu0 %459
      %v461 = vsel %vm331, %v310, 0.0
      %462 = vadd.xlane.f32.xlu0 %v461
      %v463 = vpop.xlane.xlu0 %462
      %v464 = vsel %vm331, %v311, 0.0
      %465 = vadd.xlane.f32.xlu0 %v464
      %v466 = vpop.xlane.xlu0 %465
      %v467 = vsel %vm331, %v312, 0.0
      %468 = vadd.xlane.f32.xlu0 %v467
      %v469 = vpop.xlane.xlu0 %468
      %v470 = vsel %vm331, %v313, 0.0
      %471 = vadd.xlane.f32.xlu0 %v470
      %v472 = vpop.xlane.xlu0 %471
      %v473 = vsel %vm331, %v314, 0.0
      %474 = vadd.xlane.f32.xlu0 %v473
      %v475 = vpop.xlane.xlu0 %474
      %v476 = vsel %vm331, %v315, 0.0
      %477 = vadd.xlane.f32.xlu0 %v476
      %v478 = vpop.xlane.xlu0 %477
      %v479 = vsel %vm331, %v316, 0.0
      %480 = vadd.xlane.f32.xlu0 %v479
      %v481 = vpop.xlane.xlu0 %480
      %v482 = vsel %vm331, %v317, 0.0
      %483 = vadd.xlane.f32.xlu0 %v482
      %v484 = vpop.xlane.xlu0 %483
      %v485 = vsel %vm331, %v318, 0.0
      %486 = vadd.xlane.f32.xlu0 %v485
      %v487 = vpop.xlane.xlu0 %486
      %v488 = vsel %vm331, %v319, 0.0
      %489 = vadd.xlane.f32.xlu0 %v488
      %v490 = vpop.xlane.xlu0 %489
      %v491 = vsel %vm331, %v320, 0.0
      %492 = vadd.xlane.f32.xlu0 %v491
      %v493 = vpop.xlane.xlu0 %492
      %v494 = vsel %vm331, %v321, 0.0
      %495 = vadd.xlane.f32.xlu0 %v494
      %v496 = vpop.xlane.xlu0 %495
      %v497 = vsel %vm331, %v322, 0.0
      %498 = vadd.xlane.f32.xlu0 %v497
      %v499 = vpop.xlane.xlu0 %498
      %v500 = vsel %vm331, %v323, 0.0
      %501 = vadd.xlane.f32.xlu0 %v500
      %v502 = vpop.xlane.xlu0 %501
      %v503 = vsel %vm331, %v324, 0.0
      %504 = vadd.xlane.f32.xlu0 %v503
      %v505 = vpop.xlane.xlu0 %504
      %v506 = vsel %vm331, %v325, 0.0
      %507 = vadd.xlane.f32.xlu0 %v506
      %v508 = vpop.xlane.xlu0 %507
      %v509 = vsel %vm331, %v326, 0.0
      %510 = vadd.xlane.f32.xlu0 %v509
      %v511 = vpop.xlane.xlu0 %510
      %v512 = vsel %vm331, %v327, 0.0
      %513 = vadd.xlane.f32.xlu0 %v512
      %v514 = vpop.xlane.xlu0 %513
      %v515 = vsel %vm331, %v328, 0.0
      %516 = vadd.xlane.f32.xlu0 %v515
      %v517 = vpop.xlane.xlu0 %516
      %v518 = vsel %vm331, %v329, 0.0
      %519 = vadd.xlane.f32.xlu0 %v518
      %v520 = vpop.xlane.xlu0 %519
      %v521 = vsel %vm331, %v330, 0.0
      %522 = vadd.xlane.f32.xlu0 %v521
      %v523 = vpop.xlane.xlu0 %522
      %v524 = vrcp.pop 16.0
      %v525 = vmul.f32 %v334, %v524
      %v526 = vmul.f32 %v337, %v524
      %v527 = vmul.f32 %v340, %v524
      %v528 = vmul.f32 %v343, %v524
      %v529 = vmul.f32 %v346, %v524
      %v530 = vmul.f32 %v349, %v524
      %v531 = vmul.f32 %v352, %v524
      %v532 = vmul.f32 %v355, %v524
      %v533 = vmul.f32 %v358, %v524
      %v534 = vmul.f32 %v361, %v524
      %v535 = vmul.f32 %v364, %v524
      %v536 = vmul.f32 %v367, %v524
      %v537 = vmul.f32 %v370, %v524
      %v538 = vmul.f32 %v373, %v524
      %v539 = vmul.f32 %v376, %v524
      %v540 = vmul.f32 %v379, %v524
      %v541 = vmul.f32 %v382, %v524
      %v542 = vmul.f32 %v385, %v524
      %v543 = vmul.f32 %v388, %v524
      %v544 = vmul.f32 %v391, %v524
      %v545 = vmul.f32 %v394, %v524
      %v546 = vmul.f32 %v397, %v524
      %v547 = vmul.f32 %v400, %v524
      %v548 = vmul.f32 %v403, %v524
      %v549 = vmul.f32 %v406, %v524
      %v550 = vmul.f32 %v409, %v524
      %v551 = vmul.f32 %v412, %v524
      %v552 = vmul.f32 %v415, %v524
      %v553 = vmul.f32 %v418, %v524
      %v554 = vmul.f32 %v421, %v524
      %v555 = vmul.f32 %v424, %v524
      %v556 = vmul.f32 %v427, %v524
      %v557 = vmul.f32 %v430, %v524
      %v558 = vmul.f32 %v433, %v524
      %v559 = vmul.f32 %v436, %v524
      %v560 = vmul.f32 %v439, %v524
      %v561 = vmul.f32 %v442, %v524
      %v562 = vmul.f32 %v445, %v524
      %v563 = vmul.f32 %v448, %v524
      %v564 = vmul.f32 %v451, %v524
      %v565 = vmul.f32 %v454, %v524
      %v566 = vmul.f32 %v457, %v524
      %v567 = vmul.f32 %v460, %v524
      %v568 = vmul.f32 %v463, %v524
      %v569 = vmul.f32 %v466, %v524
      %v570 = vmul.f32 %v469, %v524
      %v571 = vmul.f32 %v472, %v524
      %v572 = vmul.f32 %v475, %v524
      %v573 = vmul.f32 %v478, %v524
      %v574 = vmul.f32 %v481, %v524
      %v575 = vmul.f32 %v484, %v524
      %v576 = vmul.f32 %v487, %v524
      %v577 = vmul.f32 %v490, %v524
      %v578 = vmul.f32 %v493, %v524
      %v579 = vmul.f32 %v496, %v524
      %v580 = vmul.f32 %v499, %v524
      %v581 = vmul.f32 %v502, %v524
      %v582 = vmul.f32 %v505, %v524
      %v583 = vmul.f32 %v508, %v524
      %v584 = vmul.f32 %v511, %v524
      %v585 = vmul.f32 %v514, %v524
      %v586 = vmul.f32 %v517, %v524
      %v587 = vmul.f32 %v520, %v524
      %v588 = vmul.f32 %v523, %v524
      %v589 = vsub.f32 %v267, %v525
      %v590 = vsub.f32 %v268, %v526
      %v591 = vsub.f32 %v269, %v527
      %v592 = vsub.f32 %v270, %v528
      %v593 = vsub.f32 %v271, %v529
      %v594 = vsub.f32 %v272, %v530
      %v595 = vsub.f32 %v273, %v531
      %v596 = vsub.f32 %v274, %v532
      %v597 = vsub.f32 %v275, %v533
      %v598 = vsub.f32 %v276, %v534
      %v599 = vsub.f32 %v277, %v535
      %v600 = vsub.f32 %v278, %v536
      %v601 = vsub.f32 %v279, %v537
      %v602 = vsub.f32 %v280, %v538
      %v603 = vsub.f32 %v281, %v539
      %v604 = vsub.f32 %v282, %v540
      %v605 = vsub.f32 %v283, %v541
      %v606 = vsub.f32 %v284, %v542
      %v607 = vsub.f32 %v285, %v543
      %v608 = vsub.f32 %v286, %v544
      %v609 = vsub.f32 %v287, %v545
      %v610 = vsub.f32 %v288, %v546
      %v611 = vsub.f32 %v289, %v547
      %v612 = vsub.f32 %v290, %v548
      %v613 = vsub.f32 %v291, %v549
      %v614 = vsub.f32 %v292, %v550
      %v615 = vsub.f32 %v293, %v551
      %v616 = vsub.f32 %v294, %v552
      %v617 = vsub.f32 %v295, %v553
      %v618 = vsub.f32 %v296, %v554
      %v619 = vsub.f32 %v297, %v555
      %v620 = vsub.f32 %v298, %v556
      %v621 = vsub.f32 %v299, %v557
      %v622 = vsub.f32 %v300, %v558
      %v623 = vsub.f32 %v301, %v559
      %v624 = vsub.f32 %v302, %v560
      %v625 = vsub.f32 %v303, %v561
      %v626 = vsub.f32 %v304, %v562
      %v627 = vsub.f32 %v305, %v563
      %v628 = vsub.f32 %v306, %v564
      %v629 = vsub.f32 %v307, %v565
      %v630 = vsub.f32 %v308, %v566
      %v631 = vsub.f32 %v309, %v567
      %v632 = vsub.f32 %v310, %v568
      %v633 = vsub.f32 %v311, %v569
      %v634 = vsub.f32 %v312, %v570
      %v635 = vsub.f32 %v313, %v571
      %v636 = vsub.f32 %v314, %v572
      %v637 = vsub.f32 %v315, %v573
      %v638 = vsub.f32 %v316, %v574
      %v639 = vsub.f32 %v317, %v575
      %v640 = vsub.f32 %v318, %v576
      %v641 = vsub.f32 %v319, %v577
      %v642 = vsub.f32 %v320, %v578
      %v643 = vsub.f32 %v321, %v579
      %v644 = vsub.f32 %v322, %v580
      %v645 = vsub.f32 %v323, %v581
      %v646 = vsub.f32 %v324, %v582
      %v647 = vsub.f32 %v325, %v583
      %v648 = vsub.f32 %v326, %v584
      %v649 = vsub.f32 %v327, %v585
      %v650 = vsub.f32 %v328, %v586
      %v651 = vsub.f32 %v329, %v587
      %v652 = vsub.f32 %v330, %v588
      %v653 = vmul.f32 %v589, %v589
      %v654 = vmul.f32 %v590, %v590
      %v655 = vmul.f32 %v591, %v591
      %v656 = vmul.f32 %v592, %v592
      %v657 = vmul.f32 %v593, %v593
      %v658 = vmul.f32 %v594, %v594
      %v659 = vmul.f32 %v595, %v595
      %v660 = vmul.f32 %v596, %v596
      %v661 = vmul.f32 %v597, %v597
      %v662 = vmul.f32 %v598, %v598
      %v663 = vmul.f32 %v599, %v599
      %v664 = vmul.f32 %v600, %v600
      %v665 = vmul.f32 %v601, %v601
      %v666 = vmul.f32 %v602, %v602
      %v667 = vmul.f32 %v603, %v603
      %v668 = vmul.f32 %v604, %v604
      %v669 = vmul.f32 %v605, %v605
      %v670 = vmul.f32 %v606, %v606
      %v671 = vmul.f32 %v607, %v607
      %v672 = vmul.f32 %v608, %v608
      %v673 = vmul.f32 %v609, %v609
      %v674 = vmul.f32 %v610, %v610
      %v675 = vmul.f32 %v611, %v611
      %v676 = vmul.f32 %v612, %v612
      %v677 = vmul.f32 %v613, %v613
      %v678 = vmul.f32 %v614, %v614
      %v679 = vmul.f32 %v615, %v615
      %v680 = vmul.f32 %v616, %v616
      %v681 = vmul.f32 %v617, %v617
      %v682 = vmul.f32 %v618, %v618
      %v683 = vmul.f32 %v619, %v619
      %v684 = vmul.f32 %v620, %v620
      %v685 = vmul.f32 %v621, %v621
      %v686 = vmul.f32 %v622, %v622
      %v687 = vmul.f32 %v623, %v623
      %v688 = vmul.f32 %v624, %v624
      %v689 = vmul.f32 %v625, %v625
      %v690 = vmul.f32 %v626, %v626
      %v691 = vmul.f32 %v627, %v627
      %v692 = vmul.f32 %v628, %v628
      %v693 = vmul.f32 %v629, %v629
      %v694 = vmul.f32 %v630, %v630
      %v695 = vmul.f32 %v631, %v631
      %v696 = vmul.f32 %v632, %v632
      %v697 = vmul.f32 %v633, %v633
      %v698 = vmul.f32 %v634, %v634
      %v699 = vmul.f32 %v635, %v635
      %v700 = vmul.f32 %v636, %v636
      %v701 = vmul.f32 %v637, %v637
      %v702 = vmul.f32 %v638, %v638
      %v703 = vmul.f32 %v639, %v639
      %v704 = vmul.f32 %v640, %v640
      %v705 = vmul.f32 %v641, %v641
      %v706 = vmul.f32 %v642, %v642
      %v707 = vmul.f32 %v643, %v643
      %v708 = vmul.f32 %v644, %v644
      %v709 = vmul.f32 %v645, %v645
      %v710 = vmul.f32 %v646, %v646
      %v711 = vmul.f32 %v647, %v647
      %v712 = vmul.f32 %v648, %v648
      %v713 = vmul.f32 %v649, %v649
      %v714 = vmul.f32 %v650, %v650
      %v715 = vmul.f32 %v651, %v651
      %v716 = vmul.f32 %v652, %v652
      %v717 = vsel %vm331, %v653, 0.0
      %718 = vadd.xlane.f32.xlu0 %v717
      %v719 = vpop.xlane.xlu0 %718
      %v720 = vsel %vm331, %v654, 0.0
      %721 = vadd.xlane.f32.xlu0 %v720
      %v722 = vpop.xlane.xlu0 %721
      %v723 = vsel %vm331, %v655, 0.0
      %724 = vadd.xlane.f32.xlu0 %v723
      %v725 = vpop.xlane.xlu0 %724
      %v726 = vsel %vm331, %v656, 0.0
      %727 = vadd.xlane.f32.xlu0 %v726
      %v728 = vpop.xlane.xlu0 %727
      %v729 = vsel %vm331, %v657, 0.0
      %730 = vadd.xlane.f32.xlu0 %v729
      %v731 = vpop.xlane.xlu0 %730
      %v732 = vsel %vm331, %v658, 0.0
      %733 = vadd.xlane.f32.xlu0 %v732
      %v734 = vpop.xlane.xlu0 %733
      %v735 = vsel %vm331, %v659, 0.0
      %736 = vadd.xlane.f32.xlu0 %v735
      %v737 = vpop.xlane.xlu0 %736
      %v738 = vsel %vm331, %v660, 0.0
      %739 = vadd.xlane.f32.xlu0 %v738
      %v740 = vpop.xlane.xlu0 %739
      %v741 = vsel %vm331, %v661, 0.0
      %742 = vadd.xlane.f32.xlu0 %v741
      %v743 = vpop.xlane.xlu0 %742
      %v744 = vsel %vm331, %v662, 0.0
      %745 = vadd.xlane.f32.xlu0 %v744
      %v746 = vpop.xlane.xlu0 %745
      %v747 = vsel %vm331, %v663, 0.0
      %748 = vadd.xlane.f32.xlu0 %v747
      %v749 = vpop.xlane.xlu0 %748
      %v750 = vsel %vm331, %v664, 0.0
      %751 = vadd.xlane.f32.xlu0 %v750
      %v752 = vpop.xlane.xlu0 %751
      %v753 = vsel %vm331, %v665, 0.0
      %754 = vadd.xlane.f32.xlu0 %v753
      %v755 = vpop.xlane.xlu0 %754
      %v756 = vsel %vm331, %v666, 0.0
      %757 = vadd.xlane.f32.xlu0 %v756
      %v758 = vpop.xlane.xlu0 %757
      %v759 = vsel %vm331, %v667, 0.0
      %760 = vadd.xlane.f32.xlu0 %v759
      %v761 = vpop.xlane.xlu0 %760
      %v762 = vsel %vm331, %v668, 0.0
      %763 = vadd.xlane.f32.xlu0 %v762
      %v764 = vpop.xlane.xlu0 %763
      %v765 = vsel %vm331, %v669, 0.0
      %766 = vadd.xlane.f32.xlu0 %v765
      %v767 = vpop.xlane.xlu0 %766
      %v768 = vsel %vm331, %v670, 0.0
      %769 = vadd.xlane.f32.xlu0 %v768
      %v770 = vpop.xlane.xlu0 %769
      %v771 = vsel %vm331, %v671, 0.0
      %772 = vadd.xlane.f32.xlu0 %v771
      %v773 = vpop.xlane.xlu0 %772
      %v774 = vsel %vm331, %v672, 0.0
      %775 = vadd.xlane.f32.xlu0 %v774
      %v776 = vpop.xlane.xlu0 %775
      %v777 = vsel %vm331, %v673, 0.0
      %778 = vadd.xlane.f32.xlu0 %v777
      %v779 = vpop.xlane.xlu0 %778
      %v780 = vsel %vm331, %v674, 0.0
      %781 = vadd.xlane.f32.xlu0 %v780
      %v782 = vpop.xlane.xlu0 %781
      %v783 = vsel %vm331, %v675, 0.0
      %784 = vadd.xlane.f32.xlu0 %v783
      %v785 = vpop.xlane.xlu0 %784
      %v786 = vsel %vm331, %v676, 0.0
      %787 = vadd.xlane.f32.xlu0 %v786
      %v788 = vpop.xlane.xlu0 %787
      %v789 = vsel %vm331, %v677, 0.0
      %790 = vadd.xlane.f32.xlu0 %v789
      %v791 = vpop.xlane.xlu0 %790
      %v792 = vsel %vm331, %v678, 0.0
      %793 = vadd.xlane.f32.xlu0 %v792
      %v794 = vpop.xlane.xlu0 %793
      %v795 = vsel %vm331, %v679, 0.0
      %796 = vadd.xlane.f32.xlu0 %v795
      %v797 = vpop.xlane.xlu0 %796
      %v798 = vsel %vm331, %v680, 0.0
      %799 = vadd.xlane.f32.xlu0 %v798
      %v800 = vpop.xlane.xlu0 %799
      %v801 = vsel %vm331, %v681, 0.0
      %802 = vadd.xlane.f32.xlu0 %v801
      %v803 = vpop.xlane.xlu0 %802
      %v804 = vsel %vm331, %v682, 0.0
      %805 = vadd.xlane.f32.xlu0 %v804
      %v806 = vpop.xlane.xlu0 %805
      %v807 = vsel %vm331, %v683, 0.0
      %808 = vadd.xlane.f32.xlu0 %v807
      %v809 = vpop.xlane.xlu0 %808
      %v810 = vsel %vm331, %v684, 0.0
      %811 = vadd.xlane.f32.xlu0 %v810
      %v812 = vpop.xlane.xlu0 %811
      %v813 = vsel %vm331, %v685, 0.0
      %814 = vadd.xlane.f32.xlu0 %v813
      %v815 = vpop.xlane.xlu0 %814
      %v816 = vsel %vm331, %v686, 0.0
      %817 = vadd.xlane.f32.xlu0 %v816
      %v818 = vpop.xlane.xlu0 %817
      %v819 = vsel %vm331, %v687, 0.0
      %820 = vadd.xlane.f32.xlu0 %v819
      %v821 = vpop.xlane.xlu0 %820
      %v822 = vsel %vm331, %v688, 0.0
      %823 = vadd.xlane.f32.xlu0 %v822
      %v824 = vpop.xlane.xlu0 %823
      %v825 = vsel %vm331, %v689, 0.0
      %826 = vadd.xlane.f32.xlu0 %v825
      %v827 = vpop.xlane.xlu0 %826
      %v828 = vsel %vm331, %v690, 0.0
      %829 = vadd.xlane.f32.xlu0 %v828
      %v830 = vpop.xlane.xlu0 %829
      %v831 = vsel %vm331, %v691, 0.0
      %832 = vadd.xlane.f32.xlu0 %v831
      %v833 = vpop.xlane.xlu0 %832
      %v834 = vsel %vm331, %v692, 0.0
      %835 = vadd.xlane.f32.xlu0 %v834
      %v836 = vpop.xlane.xlu0 %835
      %v837 = vsel %vm331, %v693, 0.0
      %838 = vadd.xlane.f32.xlu0 %v837
      %v839 = vpop.xlane.xlu0 %838
      %v840 = vsel %vm331, %v694, 0.0
      %841 = vadd.xlane.f32.xlu0 %v840
      %v842 = vpop.xlane.xlu0 %841
      %v843 = vsel %vm331, %v695, 0.0
      %844 = vadd.xlane.f32.xlu0 %v843
      %v845 = vpop.xlane.xlu0 %844
      %v846 = vsel %vm331, %v696, 0.0
      %847 = vadd.xlane.f32.xlu0 %v846
      %v848 = vpop.xlane.xlu0 %847
      %v849 = vsel %vm331, %v697, 0.0
      %850 = vadd.xlane.f32.xlu0 %v849
      %v851 = vpop.xlane.xlu0 %850
      %v852 = vsel %vm331, %v698, 0.0
      %853 = vadd.xlane.f32.xlu0 %v852
      %v854 = vpop.xlane.xlu0 %853
      %v855 = vsel %vm331, %v699, 0.0
      %856 = vadd.xlane.f32.xlu0 %v855
      %v857 = vpop.xlane.xlu0 %856
      %v858 = vsel %vm331, %v700, 0.0
      %859 = vadd.xlane.f32.xlu0 %v858
      %v860 = vpop.xlane.xlu0 %859
      %v861 = vsel %vm331, %v701, 0.0
      %862 = vadd.xlane.f32.xlu0 %v861
      %v863 = vpop.xlane.xlu0 %862
      %v864 = vsel %vm331, %v702, 0.0
      %865 = vadd.xlane.f32.xlu0 %v864
      %v866 = vpop.xlane.xlu0 %865
      %v867 = vsel %vm331, %v703, 0.0
      %868 = vadd.xlane.f32.xlu0 %v867
      %v869 = vpop.xlane.xlu0 %868
      %v870 = vsel %vm331, %v704, 0.0
      %871 = vadd.xlane.f32.xlu0 %v870
      %v872 = vpop.xlane.xlu0 %871
      %v873 = vsel %vm331, %v705, 0.0
      %874 = vadd.xlane.f32.xlu0 %v873
      %v875 = vpop.xlane.xlu0 %874
      %v876 = vsel %vm331, %v706, 0.0
      %877 = vadd.xlane.f32.xlu0 %v876
      %v878 = vpop.xlane.xlu0 %877
      %v879 = vsel %vm331, %v707, 0.0
      %880 = vadd.xlane.f32.xlu0 %v879
      %v881 = vpop.xlane.xlu0 %880
      %v882 = vsel %vm331, %v708, 0.0
      %883 = vadd.xlane.f32.xlu0 %v882
      %v884 = vpop.xlane.xlu0 %883
      %v885 = vsel %vm331, %v709, 0.0
      %886 = vadd.xlane.f32.xlu0 %v885
      %v887 = vpop.xlane.xlu0 %886
      %v888 = vsel %vm331, %v710, 0.0
      %889 = vadd.xlane.f32.xlu0 %v888
      %v890 = vpop.xlane.xlu0 %889
      %v891 = vsel %vm331, %v711, 0.0
      %892 = vadd.xlane.f32.xlu0 %v891
      %v893 = vpop.xlane.xlu0 %892
      %v894 = vsel %vm331, %v712, 0.0
      %895 = vadd.xlane.f32.xlu0 %v894
      %v896 = vpop.xlane.xlu0 %895
      %v897 = vsel %vm331, %v713, 0.0
      %898 = vadd.xlane.f32.xlu0 %v897
      %v899 = vpop.xlane.xlu0 %898
      %v900 = vsel %vm331, %v714, 0.0
      %901 = vadd.xlane.f32.xlu0 %v900
      %v902 = vpop.xlane.xlu0 %901
      %v903 = vsel %vm331, %v715, 0.0
      %904 = vadd.xlane.f32.xlu0 %v903
      %v905 = vpop.xlane.xlu0 %904
      %v906 = vsel %vm331, %v716, 0.0
      %907 = vadd.xlane.f32.xlu0 %v906
      %v908 = vpop.xlane.xlu0 %907
      %v909 = vmul.f32 %v719, %v524
      %v910 = vmul.f32 %v722, %v524
      %v911 = vmul.f32 %v725, %v524
      %v912 = vmul.f32 %v728, %v524
      %v913 = vmul.f32 %v731, %v524
      %v914 = vmul.f32 %v734, %v524
      %v915 = vmul.f32 %v737, %v524
      %v916 = vmul.f32 %v740, %v524
      %v917 = vmul.f32 %v743, %v524
      %v918 = vmul.f32 %v746, %v524
      %v919 = vmul.f32 %v749, %v524
      %v920 = vmul.f32 %v752, %v524
      %v921 = vmul.f32 %v755, %v524
      %v922 = vmul.f32 %v758, %v524
      %v923 = vmul.f32 %v761, %v524
      %v924 = vmul.f32 %v764, %v524
      %v925 = vmul.f32 %v767, %v524
      %v926 = vmul.f32 %v770, %v524
      %v927 = vmul.f32 %v773, %v524
      %v928 = vmul.f32 %v776, %v524
      %v929 = vmul.f32 %v779, %v524
      %v930 = vmul.f32 %v782, %v524
      %v931 = vmul.f32 %v785, %v524
      %v932 = vmul.f32 %v788, %v524
      %v933 = vmul.f32 %v791, %v524
      %v934 = vmul.f32 %v794, %v524
      %v935 = vmul.f32 %v797, %v524
      %v936 = vmul.f32 %v800, %v524
      %v937 = vmul.f32 %v803, %v524
      %v938 = vmul.f32 %v806, %v524
      %v939 = vmul.f32 %v809, %v524
      %v940 = vmul.f32 %v812, %v524
      %v941 = vmul.f32 %v815, %v524
      %v942 = vmul.f32 %v818, %v524
      %v943 = vmul.f32 %v821, %v524
      %v944 = vmul.f32 %v824, %v524
      %v945 = vmul.f32 %v827, %v524
      %v946 = vmul.f32 %v830, %v524
      %v947 = vmul.f32 %v833, %v524
      %v948 = vmul.f32 %v836, %v524
      %v949 = vmul.f32 %v839, %v524
      %v950 = vmul.f32 %v842, %v524
      %v951 = vmul.f32 %v845, %v524
      %v952 = vmul.f32 %v848, %v524
      %v953 = vmul.f32 %v851, %v524
      %v954 = vmul.f32 %v854, %v524
      %v955 = vmul.f32 %v857, %v524
      %v956 = vmul.f32 %v860, %v524
      %v957 = vmul.f32 %v863, %v524
      %v958 = vmul.f32 %v866, %v524
      %v959 = vmul.f32 %v869, %v524
      %v960 = vmul.f32 %v872, %v524
      %v961 = vmul.f32 %v875, %v524
      %v962 = vmul.f32 %v878, %v524
      %v963 = vmul.f32 %v881, %v524
      %v964 = vmul.f32 %v884, %v524
      %v965 = vmul.f32 %v887, %v524
      %v966 = vmul.f32 %v890, %v524
      %v967 = vmul.f32 %v893, %v524
      %v968 = vmul.f32 %v896, %v524
      %v969 = vmul.f32 %v899, %v524
      %v970 = vmul.f32 %v902, %v524
      %v971 = vmul.f32 %v905, %v524
      %v972 = vmul.f32 %v908, %v524
      %v973 = vadd.f32 %v909, 1e-05
      %v974 = vadd.f32 %v910, 1e-05
      %v975 = vadd.f32 %v911, 1e-05
      %v976 = vadd.f32 %v912, 1e-05
      %v977 = vadd.f32 %v913, 1e-05
      %v978 = vadd.f32 %v914, 1e-05
      %v979 = vadd.f32 %v915, 1e-05
      %v980 = vadd.f32 %v916, 1e-05
      %v981 = vadd.f32 %v917, 1e-05
      %v982 = vadd.f32 %v918, 1e-05
      %v983 = vadd.f32 %v919, 1e-05
      %v984 = vadd.f32 %v920, 1e-05
      %v985 = vadd.f32 %v921, 1e-05
      %v986 = vadd.f32 %v922, 1e-05
      %v987 = vadd.f32 %v923, 1e-05
      %v988 = vadd.f32 %v924, 1e-05
      %v989 = vadd.f32 %v925, 1e-05
      %v990 = vadd.f32 %v926, 1e-05
      %v991 = vadd.f32 %v927, 1e-05
      %v992 = vadd.f32 %v928, 1e-05
      %v993 = vadd.f32 %v929, 1e-05
      %v994 = vadd.f32 %v930, 1e-05
      %v995 = vadd.f32 %v931, 1e-05
      %v996 = vadd.f32 %v932, 1e-05
      %v997 = vadd.f32 %v933, 1e-05
      %v998 = vadd.f32 %v934, 1e-05
      %v999 = vadd.f32 %v935, 1e-05
      %v1000 = vadd.f32 %v936, 1e-05
      %v1001 = vadd.f32 %v937, 1e-05
      %v1002 = vadd.f32 %v938, 1e-05
      %v1003 = vadd.f32 %v939, 1e-05
      %v1004 = vadd.f32 %v940, 1e-05
      %v1005 = vadd.f32 %v941, 1e-05
      %v1006 = vadd.f32 %v942, 1e-05
      %v1007 = vadd.f32 %v943, 1e-05
      %v1008 = vadd.f32 %v944, 1e-05
      %v1009 = vadd.f32 %v945, 1e-05
      %v1010 = vadd.f32 %v946, 1e-05
      %v1011 = vadd.f32 %v947, 1e-05
      %v1012 = vadd.f32 %v948, 1e-05
      %v1013 = vadd.f32 %v949, 1e-05
      %v1014 = vadd.f32 %v950, 1e-05
      %v1015 = vadd.f32 %v951, 1e-05
      %v1016 = vadd.f32 %v952, 1e-05
      %v1017 = vadd.f32 %v953, 1e-05
      %v1018 = vadd.f32 %v954, 1e-05
      %v1019 = vadd.f32 %v955, 1e-05
      %v1020 = vadd.f32 %v956, 1e-05
      %v1021 = vadd.f32 %v957, 1e-05
      %v1022 = vadd.f32 %v958, 1e-05
      %v1023 = vadd.f32 %v959, 1e-05
      %v1024 = vadd.f32 %v960, 1e-05
      %v1025 = vadd.f32 %v961, 1e-05
      %v1026 = vadd.f32 %v962, 1e-05
      %v1027 = vadd.f32 %v963, 1e-05
      %v1028 = vadd.f32 %v964, 1e-05
      %v1029 = vadd.f32 %v965, 1e-05
      %v1030 = vadd.f32 %v966, 1e-05
      %v1031 = vadd.f32 %v967, 1e-05
      %v1032 = vadd.f32 %v968, 1e-05
      %v1033 = vadd.f32 %v969, 1e-05
      %v1034 = vadd.f32 %v970, 1e-05
      %v1035 = vadd.f32 %v971, 1e-05
      %v1036 = vadd.f32 %v972, 1e-05
      %v1037 = vrsqrt.pop %v973
      %v1038 = vrsqrt.pop %v974
      %v1039 = vrsqrt.pop %v975
      %v1040 = vrsqrt.pop %v976
      %v1041 = vrsqrt.pop %v977
      %v1042 = vrsqrt.pop %v978
      %v1043 = vrsqrt.pop %v979
      %v1044 = vrsqrt.pop %v980
      %v1045 = vrsqrt.pop %v981
      %v1046 = vrsqrt.pop %v982
      %v1047 = vrsqrt.pop %v983
      %v1048 = vrsqrt.pop %v984
      %v1049 = vrsqrt.pop %v985
      %v1050 = vrsqrt.pop %v986
      %v1051 = vrsqrt.pop %v987
      %v1052 = vrsqrt.pop %v988
      %v1053 = vrsqrt.pop %v989
      %v1054 = vrsqrt.pop %v990
      %v1055 = vrsqrt.pop %v991
      %v1056 = vrsqrt.pop %v992
      %v1057 = vrsqrt.pop %v993
      %v1058 = vrsqrt.pop %v994
      %v1059 = vrsqrt.pop %v995
      %v1060 = vrsqrt.pop %v996
      %v1061 = vrsqrt.pop %v997
      %v1062 = vrsqrt.pop %v998
      %v1063 = vrsqrt.pop %v999
      %v1064 = vrsqrt.pop %v1000
      %v1065 = vrsqrt.pop %v1001
      %v1066 = vrsqrt.pop %v1002
      %v1067 = vrsqrt.pop %v1003
      %v1068 = vrsqrt.pop %v1004
      %v1069 = vrsqrt.pop %v1005
      %v1070 = vrsqrt.pop %v1006
      %v1071 = vrsqrt.pop %v1007
      %v1072 = vrsqrt.pop %v1008
      %v1073 = vrsqrt.pop %v1009
      %v1074 = vrsqrt.pop %v1010
      %v1075 = vrsqrt.pop %v1011
      %v1076 = vrsqrt.pop %v1012
      %v1077 = vrsqrt.pop %v1013
      %v1078 = vrsqrt.pop %v1014
      %v1079 = vrsqrt.pop %v1015
      %v1080 = vrsqrt.pop %v1016
      %v1081 = vrsqrt.pop %v1017
      %v1082 = vrsqrt.pop %v1018
      %v1083 = vrsqrt.pop %v1019
      %v1084 = vrsqrt.pop %v1020
      %v1085 = vrsqrt.pop %v1021
      %v1086 = vrsqrt.pop %v1022
      %v1087 = vrsqrt.pop %v1023
      %v1088 = vrsqrt.pop %v1024
      %v1089 = vrsqrt.pop %v1025
      %v1090 = vrsqrt.pop %v1026
      %v1091 = vrsqrt.pop %v1027
      %v1092 = vrsqrt.pop %v1028
      %v1093 = vrsqrt.pop %v1029
      %v1094 = vrsqrt.pop %v1030
      %v1095 = vrsqrt.pop %v1031
      %v1096 = vrsqrt.pop %v1032
      %v1097 = vrsqrt.pop %v1033
      %v1098 = vrsqrt.pop %v1034
      %v1099 = vrsqrt.pop %v1035
      %v1100 = vrsqrt.pop %v1036
      %v1101 = vmul.f32 %v589, %v1037
      %v1102 = vmul.f32 %v590, %v1038
      %v1103 = vmul.f32 %v591, %v1039
      %v1104 = vmul.f32 %v592, %v1040
      %v1105 = vmul.f32 %v593, %v1041
      %v1106 = vmul.f32 %v594, %v1042
      %v1107 = vmul.f32 %v595, %v1043
      %v1108 = vmul.f32 %v596, %v1044
      %v1109 = vmul.f32 %v597, %v1045
      %v1110 = vmul.f32 %v598, %v1046
      %v1111 = vmul.f32 %v599, %v1047
      %v1112 = vmul.f32 %v600, %v1048
      %v1113 = vmul.f32 %v601, %v1049
      %v1114 = vmul.f32 %v602, %v1050
      %v1115 = vmul.f32 %v603, %v1051
      %v1116 = vmul.f32 %v604, %v1052
      %v1117 = vmul.f32 %v605, %v1053
      %v1118 = vmul.f32 %v606, %v1054
      %v1119 = vmul.f32 %v607, %v1055
      %v1120 = vmul.f32 %v608, %v1056
      %v1121 = vmul.f32 %v609, %v1057
      %v1122 = vmul.f32 %v610, %v1058
      %v1123 = vmul.f32 %v611, %v1059
      %v1124 = vmul.f32 %v612, %v1060
      %v1125 = vmul.f32 %v613, %v1061
      %v1126 = vmul.f32 %v614, %v1062
      %v1127 = vmul.f32 %v615, %v1063
      %v1128 = vmul.f32 %v616, %v1064
      %v1129 = vmul.f32 %v617, %v1065
      %v1130 = vmul.f32 %v618, %v1066
      %v1131 = vmul.f32 %v619, %v1067
      %v1132 = vmul.f32 %v620, %v1068
      %v1133 = vmul.f32 %v621, %v1069
      %v1134 = vmul.f32 %v622, %v1070
      %v1135 = vmul.f32 %v623, %v1071
      %v1136 = vmul.f32 %v624, %v1072
      %v1137 = vmul.f32 %v625, %v1073
      %v1138 = vmul.f32 %v626, %v1074
      %v1139 = vmul.f32 %v627, %v1075
      %v1140 = vmul.f32 %v628, %v1076
      %v1141 = vmul.f32 %v629, %v1077
      %v1142 = vmul.f32 %v630, %v1078
      %v1143 = vmul.f32 %v631, %v1079
      %v1144 = vmul.f32 %v632, %v1080
      %v1145 = vmul.f32 %v633, %v1081
      %v1146 = vmul.f32 %v634, %v1082
      %v1147 = vmul.f32 %v635, %v1083
      %v1148 = vmul.f32 %v636, %v1084
      %v1149 = vmul.f32 %v637, %v1085
      %v1150 = vmul.f32 %v638, %v1086
      %v1151 = vmul.f32 %v639, %v1087
      %v1152 = vmul.f32 %v640, %v1088
      %v1153 = vmul.f32 %v641, %v1089
      %v1154 = vmul.f32 %v642, %v1090
      %v1155 = vmul.f32 %v643, %v1091
      %v1156 = vmul.f32 %v644, %v1092
      %v1157 = vmul.f32 %v645, %v1093
      %v1158 = vmul.f32 %v646, %v1094
      %v1159 = vmul.f32 %v647, %v1095
      %v1160 = vmul.f32 %v648, %v1096
      %v1161 = vmul.f32 %v649, %v1097
      %v1162 = vmul.f32 %v650, %v1098
      %v1163 = vmul.f32 %v651, %v1099
      %v1164 = vmul.f32 %v652, %v1100
      %v1165 = vpack.c.bf16 %v1102, %v1101
      %v1166 = vpack.c.bf16 %v1104, %v1103
      %v1167 = vpack.c.bf16 %v1106, %v1105
      %v1168 = vpack.c.bf16 %v1108, %v1107
      %v1169 = vpack.c.bf16 %v1110, %v1109
      %v1170 = vpack.c.bf16 %v1112, %v1111
      %v1171 = vpack.c.bf16 %v1114, %v1113
      %v1172 = vpack.c.bf16 %v1116, %v1115
      %v1173 = vpack.c.bf16 %v1118, %v1117
      %v1174 = vpack.c.bf16 %v1120, %v1119
      %v1175 = vpack.c.bf16 %v1122, %v1121
      %v1176 = vpack.c.bf16 %v1124, %v1123
      %v1177 = vpack.c.bf16 %v1126, %v1125
      %v1178 = vpack.c.bf16 %v1128, %v1127
      %v1179 = vpack.c.bf16 %v1130, %v1129
      %v1180 = vpack.c.bf16 %v1132, %v1131
      %v1181 = vpack.c.bf16 %v1134, %v1133
      %v1182 = vpack.c.bf16 %v1136, %v1135
      %v1183 = vpack.c.bf16 %v1138, %v1137
      %v1184 = vpack.c.bf16 %v1140, %v1139
      %v1185 = vpack.c.bf16 %v1142, %v1141
      %v1186 = vpack.c.bf16 %v1144, %v1143
      %v1187 = vpack.c.bf16 %v1146, %v1145
      %v1188 = vpack.c.bf16 %v1148, %v1147
      %v1189 = vpack.c.bf16 %v1150, %v1149
      %v1190 = vpack.c.bf16 %v1152, %v1151
      %v1191 = vpack.c.bf16 %v1154, %v1153
      %v1192 = vpack.c.bf16 %v1156, %v1155
      %v1193 = vpack.c.bf16 %v1158, %v1157
      %v1194 = vpack.c.bf16 %v1160, %v1159
      %v1195 = vpack.c.bf16 %v1162, %v1161
      %v1196 = vpack.c.bf16 %v1164, %v1163
      %v1197 = vlaneseq
      %v1198 = vshrl.u32 %v1197, 7
      %v1199 = vsub.s32 0, %v1198
      %v1200 = vrot.slane %v266, %v1199
      %v1203 = vunpack.c.l.b16 %v224
      %v1204 = vunpack.c.l.b16 %v225
      %v1205 = vpack.c.b16 %v1204, %v1203
      %v1208 = vsel %vm331, %v1165, 0
      %v1211 = vsel %vm331, %v1166, 0
      %v1214 = vsel %vm331, %v1167, 0
      %v1217 = vsel %vm331, %v1168, 0
      %v1220 = vsel %vm331, %v1169, 0
      %v1223 = vsel %vm331, %v1170, 0
      %v1226 = vsel %vm331, %v1171, 0
      %v1229 = vsel %vm331, %v1172, 0
      %v1232 = vsel %vm331, %v1173, 0
      %v1235 = vsel %vm331, %v1174, 0
      %v1238 = vsel %vm331, %v1175, 0
      %v1241 = vsel %vm331, %v1176, 0
      %v1244 = vsel %vm331, %v1177, 0
      %v1247 = vsel %vm331, %v1178, 0
      %v1250 = vsel %vm331, %v1179, 0
      %v1253 = vsel %vm331, %v1180, 0
      %v1256 = vsel %vm331, %v1181, 0
      %v1259 = vsel %vm331, %v1182, 0
      %v1262 = vsel %vm331, %v1183, 0
      %v1265 = vsel %vm331, %v1184, 0
      %v1268 = vsel %vm331, %v1185, 0
      %v1271 = vsel %vm331, %v1186, 0
      %v1274 = vsel %vm331, %v1187, 0
      %v1277 = vsel %vm331, %v1188, 0
      %v1280 = vsel %vm331, %v1189, 0
      %v1283 = vsel %vm331, %v1190, 0
      %v1286 = vsel %vm331, %v1191, 0
      %v1289 = vsel %vm331, %v1192, 0
      %v1292 = vsel %vm331, %v1193, 0
      %v1295 = vsel %vm331, %v1194, 0
      %v1298 = vsel %vm331, %v1195, 0
      %v1301 = vsel %vm331, %v1196, 0
      %1303 = vmatprep.subr.bf16.mxu0 0
      %1304 = vmatpush1.bf16.msra.mxu0 %v1205
      %1305 = vmatprep.subr.bf16.mxu0 0
      %1306 = vmatpush1.bf16.msra.mxu0 0
      %1307 = vmatprep.subr.bf16.mxu0 0
      %1308 = vmatpush1.bf16.msra.mxu0 0
      %1309 = vmatprep.subr.bf16.mxu0 0
      %1310 = vmatpush1.bf16.msra.mxu0 0
      %1311 = vmatprep.subr.bf16.mxu0 0
      %1312 = vmatpush1.bf16.msra.mxu0 0
      %1313 = vmatprep.subr.bf16.mxu0 0
      %1314 = vmatpush1.bf16.msra.mxu0 0
      %1315 = vmatprep.subr.bf16.mxu0 0
      %1316 = vmatpush1.bf16.msra.mxu0 0
      %1317 = vmatprep.subr.bf16.mxu0 0
      %1318 = vmatpush1.bf16.msra.mxu0 0
      %1319 = vmatprep.subr.bf16.mxu0 0
      %1320 = vmatpush1.bf16.msra.mxu0 0
      %1321 = vmatprep.subr.bf16.mxu0 0
      %1322 = vmatpush1.bf16.msra.mxu0 0
      %1323 = vmatprep.subr.bf16.mxu0 0
      %1324 = vmatpush1.bf16.msra.mxu0 0
      %1325 = vmatprep.subr.bf16.mxu0 0
      %1326 = vmatpush1.bf16.msra.mxu0 0
      %1327 = vmatprep.subr.bf16.mxu0 0
      %1328 = vmatpush1.bf16.msra.mxu0 0
      %1329 = vmatprep.subr.bf16.mxu0 0
      %1330 = vmatpush1.bf16.msra.mxu0 0
      %1331 = vmatprep.subr.bf16.mxu0 0
      %1332 = vmatpush1.bf16.msra.mxu0 0
      %1333 = vmatprep.subr.bf16.mxu0 0
      %1334 = vmatpush1.bf16.msra.mxu0 0
      %1335 = vmatprep.mubr.bf16.mxu0 0
      %1336 = vmatmul.mubr.bf16.gmra.mrb[0].mxu0 %v1208
      %v1337 = vpop.f32.mrb[0].mxu0
      %v1338 = vadd.f32 %v1200, %v1337
      %v1339 = vpop.f32.mrb[0].mxu0
      %v1340 = vpop.f32.mrb[0].mxu0
      %v1341 = vadd.f32 %v1200, %v1340
      %v1342 = vpop.f32.mrb[0].mxu0
      %1343 = vmatprep.mubr.bf16.mxu0 0
      %1344 = vmatmul.mubr.bf16.gmra.mrb[0].mxu0 %v1211
      %v1345 = vpop.f32.mrb[0].mxu0
      %v1346 = vadd.f32 %v1200, %v1345
      %v1347 = vpop.f32.mrb[0].mxu0
      %v1348 = vpop.f32.mrb[0].mxu0
      %v1349 = vadd.f32 %v1200, %v1348
      %v1350 = vpop.f32.mrb[0].mxu0
      %1351 = vmatprep.mubr.bf16.mxu0 0
      %1352 = vmatmul.mubr.bf16.gmra.mrb[0].mxu0 %v1214
      %v1353 = vpop.f32.mrb[0].mxu0
      %v1354 = vadd.f32 %v1200, %v1353
      %v1355 = vpop.f32.mrb[0].mxu0
      %v1356 = vpop.f32.mrb[0].mxu0
      %v1357 = vadd.f32 %v1200, %v1356
      %v1358 = vpop.f32.mrb[0].mxu0
      %1359 = vmatprep.mubr.bf16.mxu0 0
      %1360 = vmatmul.mubr.bf16.gmra.mrb[0].mxu0 %v1217
      %v1361 = vpop.f32.mrb[0].mxu0
      %v1362 = vadd.f32 %v1200, %v1361
      %v1363 = vpop.f32.mrb[0].mxu0
      %v1364 = vpop.f32.mrb[0].mxu0
      %v1365 = vadd.f32 %v1200, %v1364
      %v1366 = vpop.f32.mrb[0].mxu0
      %1367 = vmatprep.mubr.bf16.mxu0 0
      %1368 = vmatmul.mubr.bf16.gmra.mrb[0].mxu0 %v1220
      %v1369 = vpop.f32.mrb[0].mxu0
      %v1370 = vadd.f32 %v1200, %v1369
      %v1371 = vpop.f32.mrb[0].mxu0
      %v1372 = vpop.f32.mrb[0].mxu0
      %v1373 = vadd.f32 %v1200, %v1372
      %v1374 = vpop.f32.mrb[0].mxu0
      %1375 = vmatprep.mubr.bf16.mxu0 0
      %1376 = vmatmul.mubr.bf16.gmra.mrb[0].mxu0 %v1223
      %v1377 = vpop.f32.mrb[0].mxu0
      %v1378 = vadd.f32 %v1200, %v1377
      %v1379 = vpop.f32.mrb[0].mxu0
      %v1380 = vpop.f32.mrb[0].mxu0
      %v1381 = vadd.f32 %v1200, %v1380
      %v1382 = vpop.f32.mrb[0].mxu0
      %1383 = vmatprep.mubr.bf16.mxu0 0
      %1384 = vmatmul.mubr.bf16.gmra.mrb[0].mxu0 %v1226
      %v1385 = vpop.f32.mrb[0].mxu0
      %v1386 = vadd.f32 %v1200, %v1385
      %v1387 = vpop.f32.mrb[0].mxu0
      %v1388 = vpop.f32.mrb[0].mxu0
      %v1389 = vadd.f32 %v1200, %v1388
      %v1390 = vpop.f32.mrb[0].mxu0
      %1391 = vmatprep.mubr.bf16.mxu0 0
      %1392 = vmatmul.mubr.bf16.gmra.mrb[0].mxu0 %v1229
      %v1393 = vpop.f32.mrb[0].mxu0
      %v1394 = vadd.f32 %v1200, %v1393
      %v1395 = vpop.f32.mrb[0].mxu0
      %v1396 = vpop.f32.mrb[0].mxu0
      %v1397 = vadd.f32 %v1200, %v1396
      %v1398 = vpop.f32.mrb[0].mxu0
      %1399 = vmatprep.mubr.bf16.mxu0 0
      %1400 = vmatmul.mubr.bf16.gmra.mrb[0].mxu0 %v1232
      %v1401 = vpop.f32.mrb[0].mxu0
      %v1402 = vadd.f32 %v1200, %v1401
      %v1403 = vpop.f32.mrb[0].mxu0
      %v1404 = vpop.f32.mrb[0].mxu0
      %v1405 = vadd.f32 %v1200, %v1404
      %v1406 = vpop.f32.mrb[0].mxu0
      %1407 = vmatprep.mubr.bf16.mxu0 0
      %1408 = vmatmul.mubr.bf16.gmra.mrb[0].mxu0 %v1235
      %v1409 = vpop.f32.mrb[0].mxu0
      %v1410 = vadd.f32 %v1200, %v1409
      %v1411 = vpop.f32.mrb[0].mxu0
      %v1412 = vpop.f32.mrb[0].mxu0
      %v1413 = vadd.f32 %v1200, %v1412
      %v1414 = vpop.f32.mrb[0].mxu0
      %1415 = vmatprep.mubr.bf16.mxu0 0
      %1416 = vmatmul.mubr.bf16.gmra.mrb[0].mxu0 %v1238
      %v1417 = vpop.f32.mrb[0].mxu0
      %v1418 = vadd.f32 %v1200, %v1417
      %v1419 = vpop.f32.mrb[0].mxu0
      %v1420 = vpop.f32.mrb[0].mxu0
      %v1421 = vadd.f32 %v1200, %v1420
      %v1422 = vpop.f32.mrb[0].mxu0
      %1423 = vmatprep.mubr.bf16.mxu0 0
      %1424 = vmatmul.mubr.bf16.gmra.mrb[0].mxu0 %v1241
      %v1425 = vpop.f32.mrb[0].mxu0
      %v1426 = vadd.f32 %v1200, %v1425
      %v1427 = vpop.f32.mrb[0].mxu0
      %v1428 = vpop.f32.mrb[0].mxu0
      %v1429 = vadd.f32 %v1200, %v1428
      %v1430 = vpop.f32.mrb[0].mxu0
      %1431 = vmatprep.mubr.bf16.mxu0 0
      %1432 = vmatmul.mubr.bf16.gmra.mrb[0].mxu0 %v1244
      %v1433 = vpop.f32.mrb[0].mxu0
      %v1434 = vadd.f32 %v1200, %v1433
      %v1435 = vpop.f32.mrb[0].mxu0
      %v1436 = vpop.f32.mrb[0].mxu0
      %v1437 = vadd.f32 %v1200, %v1436
      %v1438 = vpop.f32.mrb[0].mxu0
      %1439 = vmatprep.mubr.bf16.mxu0 0
      %1440 = vmatmul.mubr.bf16.gmra.mrb[0].mxu0 %v1247
      %v1441 = vpop.f32.mrb[0].mxu0
      %v1442 = vadd.f32 %v1200, %v1441
      %v1443 = vpop.f32.mrb[0].mxu0
      %v1444 = vpop.f32.mrb[0].mxu0
      %v1445 = vadd.f32 %v1200, %v1444
      %v1446 = vpop.f32.mrb[0].mxu0
      %1447 = vmatprep.mubr.bf16.mxu0 0
      %1448 = vmatmul.mubr.bf16.gmra.mrb[0].mxu0 %v1250
      %v1449 = vpop.f32.mrb[0].mxu0
      %v1450 = vadd.f32 %v1200, %v1449
      %v1451 = vpop.f32.mrb[0].mxu0
      %v1452 = vpop.f32.mrb[0].mxu0
      %v1453 = vadd.f32 %v1200, %v1452
      %v1454 = vpop.f32.mrb[0].mxu0
      %1455 = vmatprep.mubr.bf16.mxu0 0
      %1456 = vmatmul.mubr.bf16.gmra.mrb[0].mxu0 %v1253
      %v1457 = vpop.f32.mrb[0].mxu0
      %v1458 = vadd.f32 %v1200, %v1457
      %v1459 = vpop.f32.mrb[0].mxu0
      %v1460 = vpop.f32.mrb[0].mxu0
      %v1461 = vadd.f32 %v1200, %v1460
      %v1462 = vpop.f32.mrb[0].mxu0
      %1463 = vmatprep.mubr.bf16.mxu0 0
      %1464 = vmatmul.mubr.bf16.gmra.mrb[0].mxu0 %v1256
      %v1465 = vpop.f32.mrb[0].mxu0
      %v1466 = vadd.f32 %v1200, %v1465
      %v1467 = vpop.f32.mrb[0].mxu0
      %v1468 = vpop.f32.mrb[0].mxu0
      %v1469 = vadd.f32 %v1200, %v1468
      %v1470 = vpop.f32.mrb[0].mxu0
      %1471 = vmatprep.mubr.bf16.mxu0 0
      %1472 = vmatmul.mubr.bf16.gmra.mrb[0].mxu0 %v1259
      %v1473 = vpop.f32.mrb[0].mxu0
      %v1474 = vadd.f32 %v1200, %v1473
      %v1475 = vpop.f32.mrb[0].mxu0
      %v1476 = vpop.f32.mrb[0].mxu0
      %v1477 = vadd.f32 %v1200, %v1476
      %v1478 = vpop.f32.mrb[0].mxu0
      %1479 = vmatprep.mubr.bf16.mxu0 0
      %1480 = vmatmul.mubr.bf16.gmra.mrb[0].mxu0 %v1262
      %v1481 = vpop.f32.mrb[0].mxu0
      %v1482 = vadd.f32 %v1200, %v1481
      %v1483 = vpop.f32.mrb[0].mxu0
      %v1484 = vpop.f32.mrb[0].mxu0
      %v1485 = vadd.f32 %v1200, %v1484
      %v1486 = vpop.f32.mrb[0].mxu0
      %1487 = vmatprep.mubr.bf16.mxu0 0
      %1488 = vmatmul.mubr.bf16.gmra.mrb[0].mxu0 %v1265
      %v1489 = vpop.f32.mrb[0].mxu0
      %v1490 = vadd.f32 %v1200, %v1489
      %v1491 = vpop.f32.mrb[0].mxu0
      %v1492 = vpop.f32.mrb[0].mxu0
      %v1493 = vadd.f32 %v1200, %v1492
      %v1494 = vpop.f32.mrb[0].mxu0
      %1495 = vmatprep.mubr.bf16.mxu0 0
      %1496 = vmatmul.mubr.bf16.gmra.mrb[0].mxu0 %v1268
      %v1497 = vpop.f32.mrb[0].mxu0
      %v1498 = vadd.f32 %v1200, %v1497
      %v1499 = vpop.f32.mrb[0].mxu0
      %v1500 = vpop.f32.mrb[0].mxu0
      %v1501 = vadd.f32 %v1200, %v1500
      %v1502 = vpop.f32.mrb[0].mxu0
      %1503 = vmatprep.mubr.bf16.mxu0 0
      %1504 = vmatmul.mubr.bf16.gmra.mrb[0].mxu0 %v1271
      %v1505 = vpop.f32.mrb[0].mxu0
      %v1506 = vadd.f32 %v1200, %v1505
      %v1507 = vpop.f32.mrb[0].mxu0
      %v1508 = vpop.f32.mrb[0].mxu0
      %v1509 = vadd.f32 %v1200, %v1508
      %v1510 = vpop.f32.mrb[0].mxu0
      %1511 = vmatprep.mubr.bf16.mxu0 0
      %1512 = vmatmul.mubr.bf16.gmra.mrb[0].mxu0 %v1274
      %v1513 = vpop.f32.mrb[0].mxu0
      %v1514 = vadd.f32 %v1200, %v1513
      %v1515 = vpop.f32.mrb[0].mxu0
      %v1516 = vpop.f32.mrb[0].mxu0
      %v1517 = vadd.f32 %v1200, %v1516
      %v1518 = vpop.f32.mrb[0].mxu0
      %1519 = vmatprep.mubr.bf16.mxu0 0
      %1520 = vmatmul.mubr.bf16.gmra.mrb[0].mxu0 %v1277
      %v1521 = vpop.f32.mrb[0].mxu0
      %v1522 = vadd.f32 %v1200, %v1521
      %v1523 = vpop.f32.mrb[0].mxu0
      %v1524 = vpop.f32.mrb[0].mxu0
      %v1525 = vadd.f32 %v1200, %v1524
      %v1526 = vpop.f32.mrb[0].mxu0
      %1527 = vmatprep.mubr.bf16.mxu0 0
      %1528 = vmatmul.mubr.bf16.gmra.mrb[0].mxu0 %v1280
      %v1529 = vpop.f32.mrb[0].mxu0
      %v1530 = vadd.f32 %v1200, %v1529
      %v1531 = vpop.f32.mrb[0].mxu0
      %v1532 = vpop.f32.mrb[0].mxu0
      %v1533 = vadd.f32 %v1200, %v1532
      %v1534 = vpop.f32.mrb[0].mxu0
      %1535 = vmatprep.mubr.bf16.mxu0 0
      %1536 = vmatmul.mubr.bf16.gmra.mrb[0].mxu0 %v1283
      %v1537 = vpop.f32.mrb[0].mxu0
      %v1538 = vadd.f32 %v1200, %v1537
      %v1539 = vpop.f32.mrb[0].mxu0
      %v1540 = vpop.f32.mrb[0].mxu0
      %v1541 = vadd.f32 %v1200, %v1540
      %v1542 = vpop.f32.mrb[0].mxu0
      %1543 = vmatprep.mubr.bf16.mxu0 0
      %1544 = vmatmul.mubr.bf16.gmra.mrb[0].mxu0 %v1286
      %v1545 = vpop.f32.mrb[0].mxu0
      %v1546 = vadd.f32 %v1200, %v1545
      %v1547 = vpop.f32.mrb[0].mxu0
      %v1548 = vpop.f32.mrb[0].mxu0
      %v1549 = vadd.f32 %v1200, %v1548
      %v1550 = vpop.f32.mrb[0].mxu0
      %1551 = vmatprep.mubr.bf16.mxu0 0
      %1552 = vmatmul.mubr.bf16.gmra.mrb[0].mxu0 %v1289
      %v1553 = vpop.f32.mrb[0].mxu0
      %v1554 = vadd.f32 %v1200, %v1553
      %v1555 = vpop.f32.mrb[0].mxu0
      %v1556 = vpop.f32.mrb[0].mxu0
      %v1557 = vadd.f32 %v1200, %v1556
      %v1558 = vpop.f32.mrb[0].mxu0
      %1559 = vmatprep.mubr.bf16.mxu0 0
      %1560 = vmatmul.mubr.bf16.gmra.mrb[0].mxu0 %v1292
      %v1561 = vpop.f32.mrb[0].mxu0
      %v1562 = vadd.f32 %v1200, %v1561
      %v1563 = vpop.f32.mrb[0].mxu0
      %v1564 = vpop.f32.mrb[0].mxu0
      %v1565 = vadd.f32 %v1200, %v1564
      %v1566 = vpop.f32.mrb[0].mxu0
      %1567 = vmatprep.mubr.bf16.mxu0 0
      %1568 = vmatmul.mubr.bf16.gmra.mrb[0].mxu0 %v1295
      %v1569 = vpop.f32.mrb[0].mxu0
      %v1570 = vadd.f32 %v1200, %v1569
      %v1571 = vpop.f32.mrb[0].mxu0
      %v1572 = vpop.f32.mrb[0].mxu0
      %v1573 = vadd.f32 %v1200, %v1572
      %v1574 = vpop.f32.mrb[0].mxu0
      %1575 = vmatprep.mubr.bf16.mxu0 0
      %1576 = vmatmul.mubr.bf16.gmra.mrb[0].mxu0 %v1298
      %v1577 = vpop.f32.mrb[0].mxu0
      %v1578 = vadd.f32 %v1200, %v1577
      %v1579 = vpop.f32.mrb[0].mxu0
      %v1580 = vpop.f32.mrb[0].mxu0
      %v1581 = vadd.f32 %v1200, %v1580
      %v1582 = vpop.f32.mrb[0].mxu0
      %1583 = vmatprep.mubr.bf16.mxu0 0
      %1584 = vmatmul.mubr.bf16.gmra.mrb[0].mxu0 %v1301
      %v1585 = vpop.f32.mrb[0].mxu0
      %v1586 = vadd.f32 %v1200, %v1585
      %v1587 = vpop.f32.mrb[0].mxu0
      %v1588 = vpop.f32.mrb[0].mxu0
      %v1589 = vadd.f32 %v1200, %v1588
      %v1590 = vpop.f32.mrb[0].mxu0
      %1591 = vdwg.mxu0
      %v1592 = vmax.f32 %v1338, 0.0
      %v1593 = vmax.f32 %v1341, 0.0
      %v1594 = vmax.f32 %v1346, 0.0
      %v1595 = vmax.f32 %v1349, 0.0
      %v1596 = vmax.f32 %v1354, 0.0
      %v1597 = vmax.f32 %v1357, 0.0
      %v1598 = vmax.f32 %v1362, 0.0
      %v1599 = vmax.f32 %v1365, 0.0
      %v1600 = vmax.f32 %v1370, 0.0
      %v1601 = vmax.f32 %v1373, 0.0
      %v1602 = vmax.f32 %v1378, 0.0
      %v1603 = vmax.f32 %v1381, 0.0
      %v1604 = vmax.f32 %v1386, 0.0
      %v1605 = vmax.f32 %v1389, 0.0
      %v1606 = vmax.f32 %v1394, 0.0
      %v1607 = vmax.f32 %v1397, 0.0
      %v1608 = vmax.f32 %v1402, 0.0
      %v1609 = vmax.f32 %v1405, 0.0
      %v1610 = vmax.f32 %v1410, 0.0
      %v1611 = vmax.f32 %v1413, 0.0
      %v1612 = vmax.f32 %v1418, 0.0
      %v1613 = vmax.f32 %v1421, 0.0
      %v1614 = vmax.f32 %v1426, 0.0
      %v1615 = vmax.f32 %v1429, 0.0
      %v1616 = vmax.f32 %v1434, 0.0
      %v1617 = vmax.f32 %v1437, 0.0
      %v1618 = vmax.f32 %v1442, 0.0
      %v1619 = vmax.f32 %v1445, 0.0
      %v1620 = vmax.f32 %v1450, 0.0
      %v1621 = vmax.f32 %v1453, 0.0
      %v1622 = vmax.f32 %v1458, 0.0
      %v1623 = vmax.f32 %v1461, 0.0
      %v1624 = vmax.f32 %v1466, 0.0
      %v1625 = vmax.f32 %v1469, 0.0
      %v1626 = vmax.f32 %v1474, 0.0
      %v1627 = vmax.f32 %v1477, 0.0
      %v1628 = vmax.f32 %v1482, 0.0
      %v1629 = vmax.f32 %v1485, 0.0
      %v1630 = vmax.f32 %v1490, 0.0
      %v1631 = vmax.f32 %v1493, 0.0
      %v1632 = vmax.f32 %v1498, 0.0
      %v1633 = vmax.f32 %v1501, 0.0
      %v1634 = vmax.f32 %v1506, 0.0
      %v1635 = vmax.f32 %v1509, 0.0
      %v1636 = vmax.f32 %v1514, 0.0
      %v1637 = vmax.f32 %v1517, 0.0
      %v1638 = vmax.f32 %v1522, 0.0
      %v1639 = vmax.f32 %v1525, 0.0
      %v1640 = vmax.f32 %v1530, 0.0
      %v1641 = vmax.f32 %v1533, 0.0
      %v1642 = vmax.f32 %v1538, 0.0
      %v1643 = vmax.f32 %v1541, 0.0
      %v1644 = vmax.f32 %v1546, 0.0
      %v1645 = vmax.f32 %v1549, 0.0
      %v1646 = vmax.f32 %v1554, 0.0
      %v1647 = vmax.f32 %v1557, 0.0
      %v1648 = vmax.f32 %v1562, 0.0
      %v1649 = vmax.f32 %v1565, 0.0
      %v1650 = vmax.f32 %v1570, 0.0
      %v1651 = vmax.f32 %v1573, 0.0
      %v1652 = vmax.f32 %v1578, 0.0
      %v1653 = vmax.f32 %v1581, 0.0
      %v1654 = vmax.f32 %v1586, 0.0
      %v1655 = vmax.f32 %v1589, 0.0
      %v1656 = vpack.c.bf16 %v1593, %v1592
      %v1657 = vpack.c.bf16 %v1595, %v1594
      %v1658 = vpack.c.bf16 %v1597, %v1596
      %v1659 = vpack.c.bf16 %v1599, %v1598
      %v1660 = vpack.c.bf16 %v1601, %v1600
      %v1661 = vpack.c.bf16 %v1603, %v1602
      %v1662 = vpack.c.bf16 %v1605, %v1604
      %v1663 = vpack.c.bf16 %v1607, %v1606
      %v1664 = vpack.c.bf16 %v1609, %v1608
      %v1665 = vpack.c.bf16 %v1611, %v1610
      %v1666 = vpack.c.bf16 %v1613, %v1612
      %v1667 = vpack.c.bf16 %v1615, %v1614
      %v1668 = vpack.c.bf16 %v1617, %v1616
      %v1669 = vpack.c.bf16 %v1619, %v1618
      %v1670 = vpack.c.bf16 %v1621, %v1620
      %v1671 = vpack.c.bf16 %v1623, %v1622
      %v1672 = vpack.c.bf16 %v1625, %v1624
      %v1673 = vpack.c.bf16 %v1627, %v1626
      %v1674 = vpack.c.bf16 %v1629, %v1628
      %v1675 = vpack.c.bf16 %v1631, %v1630
      %v1676 = vpack.c.bf16 %v1633, %v1632
      %v1677 = vpack.c.bf16 %v1635, %v1634
      %v1678 = vpack.c.bf16 %v1637, %v1636
      %v1679 = vpack.c.bf16 %v1639, %v1638
      %v1680 = vpack.c.bf16 %v1641, %v1640
      %v1681 = vpack.c.bf16 %v1643, %v1642
      %v1682 = vpack.c.bf16 %v1645, %v1644
      %v1683 = vpack.c.bf16 %v1647, %v1646
      %v1684 = vpack.c.bf16 %v1649, %v1648
      %v1685 = vpack.c.bf16 %v1651, %v1650
      %v1686 = vpack.c.bf16 %v1653, %v1652
      %v1687 = vpack.c.bf16 %v1655, %v1654
      %v1688 = vlaneseq
      %v1689 = vshrl.u32 %v1688, 7
      %v1690 = vadd.s32 %v1689, 8
      %v1691 = vadd.s32 %v1689, 16
      %v1692 = vadd.s32 %v1689, 24
      %v1693 = vadd.s32 %v1689, 32
      %v1694 = vadd.s32 %v1689, 40
      %v1695 = vadd.s32 %v1689, 48
      %v1696 = vadd.s32 %v1689, 56
      %v1697 = vadd.s32 %v1689, 64
      %v1698 = vadd.s32 %v1689, 72
      %v1699 = vadd.s32 %v1689, 80
      %v1700 = vadd.s32 %v1689, 88
      %v1701 = vadd.s32 %v1689, 96
      %v1702 = vadd.s32 %v1689, 104
      %v1703 = vadd.s32 %v1689, 112
      %v1704 = vadd.s32 %v1689, 120
      %v1705 = vadd.s32 %v1689, 128
      %v1706 = vadd.s32 %v1689, 136
      %v1707 = vadd.s32 %v1689, 144
      %v1708 = vadd.s32 %v1689, 152
      %v1709 = vadd.s32 %v1689, 160
      %v1710 = vadd.s32 %v1689, 168
      %v1711 = vadd.s32 %v1689, 176
      %v1712 = vadd.s32 %v1689, 184
      %v1713 = vadd.s32 %v1689, 192
      %v1714 = vadd.s32 %v1689, 200
      %v1715 = vadd.s32 %v1689, 208
      %v1716 = vadd.s32 %v1689, 216
      %v1717 = vadd.s32 %v1689, 224
      %v1718 = vadd.s32 %v1689, 232
      %v1719 = vadd.s32 %v1689, 240
      %v1720 = vadd.s32 %v1689, 248
      %v1721 = vadd.s32 %v1689, 256
      %v1722 = vadd.s32 %v1689, 264
      %v1723 = vadd.s32 %v1689, 272
      %v1724 = vadd.s32 %v1689, 280
      %v1725 = vadd.s32 %v1689, 288
      %v1726 = vadd.s32 %v1689, 296
      %v1727 = vadd.s32 %v1689, 304
      %v1728 = vadd.s32 %v1689, 312
      %v1729 = vadd.s32 %v1689, 320
      %v1730 = vadd.s32 %v1689, 328
      %v1731 = vadd.s32 %v1689, 336
      %v1732 = vadd.s32 %v1689, 344
      %v1733 = vadd.s32 %v1689, 352
      %v1734 = vadd.s32 %v1689, 360
      %v1735 = vadd.s32 %v1689, 368
      %v1736 = vadd.s32 %v1689, 376
      %v1737 = vadd.s32 %v1689, 384
      %v1738 = vadd.s32 %v1689, 392
      %v1739 = vadd.s32 %v1689, 400
      %v1740 = vadd.s32 %v1689, 408
      %v1741 = vadd.s32 %v1689, 416
      %v1742 = vadd.s32 %v1689, 424
      %v1743 = vadd.s32 %v1689, 432
      %v1744 = vadd.s32 %v1689, 440
      %v1745 = vadd.s32 %v1689, 448
      %v1746 = vadd.s32 %v1689, 456
      %v1747 = vadd.s32 %v1689, 464
      %v1748 = vadd.s32 %v1689, 472
      %v1749 = vadd.s32 %v1689, 480
      %v1750 = vadd.s32 %v1689, 488
      %v1751 = vadd.s32 %v1689, 496
      %v1752 = vadd.s32 %v1689, 504
      %vm1753 = vcmp.lt.s32.totalorder %v1689, 0
      %v1754 = vsub.s32 0, %v1689
      %v1755 = vsel %vm1753, %v1754, %v1689
      %v1756 = vshrl.u32 %v1755, 4
      %v1757 = vand.u32 %v1755, 15
      %v1758 = vsub.s32 0, %v1757
      %v1759 = vsel %vm1753, %v1758, %v1757
      %vm1760 = vcmp.lt.s32.totalorder %v1690, 0
      %v1761 = vsub.s32 0, %v1690
      %v1762 = vsel %vm1760, %v1761, %v1690
      %v1763 = vshrl.u32 %v1762, 4
      %v1764 = vand.u32 %v1762, 15
      %v1765 = vsub.s32 0, %v1764
      %v1766 = vsel %vm1760, %v1765, %v1764
      %vm1767 = vcmp.lt.s32.totalorder %v1691, 0
      %v1768 = vsub.s32 0, %v1691
      %v1769 = vsel %vm1767, %v1768, %v1691
      %v1770 = vshrl.u32 %v1769, 4
      %v1771 = vand.u32 %v1769, 15
      %v1772 = vsub.s32 0, %v1771
      %v1773 = vsel %vm1767, %v1772, %v1771
      %vm1774 = vcmp.lt.s32.totalorder %v1692, 0
      %v1775 = vsub.s32 0, %v1692
      %v1776 = vsel %vm1774, %v1775, %v1692
      %v1777 = vshrl.u32 %v1776, 4
      %v1778 = vand.u32 %v1776, 15
      %v1779 = vsub.s32 0, %v1778
      %v1780 = vsel %vm1774, %v1779, %v1778
      %vm1781 = vcmp.lt.s32.totalorder %v1693, 0
      %v1782 = vsub.s32 0, %v1693
      %v1783 = vsel %vm1781, %v1782, %v1693
      %v1784 = vshrl.u32 %v1783, 4
      %v1785 = vand.u32 %v1783, 15
      %v1786 = vsub.s32 0, %v1785
      %v1787 = vsel %vm1781, %v1786, %v1785
      %vm1788 = vcmp.lt.s32.totalorder %v1694, 0
      %v1789 = vsub.s32 0, %v1694
      %v1790 = vsel %vm1788, %v1789, %v1694
      %v1791 = vshrl.u32 %v1790, 4
      %v1792 = vand.u32 %v1790, 15
      %v1793 = vsub.s32 0, %v1792
      %v1794 = vsel %vm1788, %v1793, %v1792
      %vm1795 = vcmp.lt.s32.totalorder %v1695, 0
      %v1796 = vsub.s32 0, %v1695
      %v1797 = vsel %vm1795, %v1796, %v1695
      %v1798 = vshrl.u32 %v1797, 4
      %v1799 = vand.u32 %v1797, 15
      %v1800 = vsub.s32 0, %v1799
      %v1801 = vsel %vm1795, %v1800, %v1799
      %vm1802 = vcmp.lt.s32.totalorder %v1696, 0
      %v1803 = vsub.s32 0, %v1696
      %v1804 = vsel %vm1802, %v1803, %v1696
      %v1805 = vshrl.u32 %v1804, 4
      %v1806 = vand.u32 %v1804, 15
      %v1807 = vsub.s32 0, %v1806
      %v1808 = vsel %vm1802, %v1807, %v1806
      %vm1809 = vcmp.lt.s32.totalorder %v1697, 0
      %v1810 = vsub.s32 0, %v1697
      %v1811 = vsel %vm1809, %v1810, %v1697
      %v1812 = vshrl.u32 %v1811, 4
      %v1813 = vand.u32 %v1811, 15
      %v1814 = vsub.s32 0, %v1813
      %v1815 = vsel %vm1809, %v1814, %v1813
      %vm1816 = vcmp.lt.s32.totalorder %v1698, 0
      %v1817 = vsub.s32 0, %v1698
      %v1818 = vsel %vm1816, %v1817, %v1698
      %v1819 = vshrl.u32 %v1818, 4
      %v1820 = vand.u32 %v1818, 15
      %v1821 = vsub.s32 0, %v1820
      %v1822 = vsel %vm1816, %v1821, %v1820
      %vm1823 = vcmp.lt.s32.totalorder %v1699, 0
      %v1824 = vsub.s32 0, %v1699
      %v1825 = vsel %vm1823, %v1824, %v1699
      %v1826 = vshrl.u32 %v1825, 4
      %v1827 = vand.u32 %v1825, 15
      %v1828 = vsub.s32 0, %v1827
      %v1829 = vsel %vm1823, %v1828, %v1827
      %vm1830 = vcmp.lt.s32.totalorder %v1700, 0
      %v1831 = vsub.s32 0, %v1700
      %v1832 = vsel %vm1830, %v1831, %v1700
      %v1833 = vshrl.u32 %v1832, 4
      %v1834 = vand.u32 %v1832, 15
      %v1835 = vsub.s32 0, %v1834
      %v1836 = vsel %vm1830, %v1835, %v1834
      %vm1837 = vcmp.lt.s32.totalorder %v1701, 0
      %v1838 = vsub.s32 0, %v1701
      %v1839 = vsel %vm1837, %v1838, %v1701
      %v1840 = vshrl.u32 %v1839, 4
      %v1841 = vand.u32 %v1839, 15
      %v1842 = vsub.s32 0, %v1841
      %v1843 = vsel %vm1837, %v1842, %v1841
      %vm1844 = vcmp.lt.s32.totalorder %v1702, 0
      %v1845 = vsub.s32 0, %v1702
      %v1846 = vsel %vm1844, %v1845, %v1702
      %v1847 = vshrl.u32 %v1846, 4
      %v1848 = vand.u32 %v1846, 15
      %v1849 = vsub.s32 0, %v1848
      %v1850 = vsel %vm1844, %v1849, %v1848
      %vm1851 = vcmp.lt.s32.totalorder %v1703, 0
      %v1852 = vsub.s32 0, %v1703
      %v1853 = vsel %vm1851, %v1852, %v1703
      %v1854 = vshrl.u32 %v1853, 4
      %v1855 = vand.u32 %v1853, 15
      %v1856 = vsub.s32 0, %v1855
      %v1857 = vsel %vm1851, %v1856, %v1855
      %vm1858 = vcmp.lt.s32.totalorder %v1704, 0
      %v1859 = vsub.s32 0, %v1704
      %v1860 = vsel %vm1858, %v1859, %v1704
      %v1861 = vshrl.u32 %v1860, 4
      %v1862 = vand.u32 %v1860, 15
      %v1863 = vsub.s32 0, %v1862
      %v1864 = vsel %vm1858, %v1863, %v1862
      %vm1865 = vcmp.lt.s32.totalorder %v1705, 0
      %v1866 = vsub.s32 0, %v1705
      %v1867 = vsel %vm1865, %v1866, %v1705
      %v1868 = vshrl.u32 %v1867, 4
      %v1869 = vand.u32 %v1867, 15
      %v1870 = vsub.s32 0, %v1869
      %v1871 = vsel %vm1865, %v1870, %v1869
      %vm1872 = vcmp.lt.s32.totalorder %v1706, 0
      %v1873 = vsub.s32 0, %v1706
      %v1874 = vsel %vm1872, %v1873, %v1706
      %v1875 = vshrl.u32 %v1874, 4
      %v1876 = vand.u32 %v1874, 15
      %v1877 = vsub.s32 0, %v1876
      %v1878 = vsel %vm1872, %v1877, %v1876
      %vm1879 = vcmp.lt.s32.totalorder %v1707, 0
      %v1880 = vsub.s32 0, %v1707
      %v1881 = vsel %vm1879, %v1880, %v1707
      %v1882 = vshrl.u32 %v1881, 4
      %v1883 = vand.u32 %v1881, 15
      %v1884 = vsub.s32 0, %v1883
      %v1885 = vsel %vm1879, %v1884, %v1883
      %vm1886 = vcmp.lt.s32.totalorder %v1708, 0
      %v1887 = vsub.s32 0, %v1708
      %v1888 = vsel %vm1886, %v1887, %v1708
      %v1889 = vshrl.u32 %v1888, 4
      %v1890 = vand.u32 %v1888, 15
      %v1891 = vsub.s32 0, %v1890
      %v1892 = vsel %vm1886, %v1891, %v1890
      %vm1893 = vcmp.lt.s32.totalorder %v1709, 0
      %v1894 = vsub.s32 0, %v1709
      %v1895 = vsel %vm1893, %v1894, %v1709
      %v1896 = vshrl.u32 %v1895, 4
      %v1897 = vand.u32 %v1895, 15
      %v1898 = vsub.s32 0, %v1897
      %v1899 = vsel %vm1893, %v1898, %v1897
      %vm1900 = vcmp.lt.s32.totalorder %v1710, 0
      %v1901 = vsub.s32 0, %v1710
      %v1902 = vsel %vm1900, %v1901, %v1710
      %v1903 = vshrl.u32 %v1902, 4
      %v1904 = vand.u32 %v1902, 15
      %v1905 = vsub.s32 0, %v1904
      %v1906 = vsel %vm1900, %v1905, %v1904
      %vm1907 = vcmp.lt.s32.totalorder %v1711, 0
      %v1908 = vsub.s32 0, %v1711
      %v1909 = vsel %vm1907, %v1908, %v1711
      %v1910 = vshrl.u32 %v1909, 4
      %v1911 = vand.u32 %v1909, 15
      %v1912 = vsub.s32 0, %v1911
      %v1913 = vsel %vm1907, %v1912, %v1911
      %vm1914 = vcmp.lt.s32.totalorder %v1712, 0
      %v1915 = vsub.s32 0, %v1712
      %v1916 = vsel %vm1914, %v1915, %v1712
      %v1917 = vshrl.u32 %v1916, 4
      %v1918 = vand.u32 %v1916, 15
      %v1919 = vsub.s32 0, %v1918
      %v1920 = vsel %vm1914, %v1919, %v1918
      %vm1921 = vcmp.lt.s32.totalorder %v1713, 0
      %v1922 = vsub.s32 0, %v1713
      %v1923 = vsel %vm1921, %v1922, %v1713
      %v1924 = vshrl.u32 %v1923, 4
      %v1925 = vand.u32 %v1923, 15
      %v1926 = vsub.s32 0, %v1925
      %v1927 = vsel %vm1921, %v1926, %v1925
      %vm1928 = vcmp.lt.s32.totalorder %v1714, 0
      %v1929 = vsub.s32 0, %v1714
      %v1930 = vsel %vm1928, %v1929, %v1714
      %v1931 = vshrl.u32 %v1930, 4
      %v1932 = vand.u32 %v1930, 15
      %v1933 = vsub.s32 0, %v1932
      %v1934 = vsel %vm1928, %v1933, %v1932
      %vm1935 = vcmp.lt.s32.totalorder %v1715, 0
      %v1936 = vsub.s32 0, %v1715
      %v1937 = vsel %vm1935, %v1936, %v1715
      %v1938 = vshrl.u32 %v1937, 4
      %v1939 = vand.u32 %v1937, 15
      %v1940 = vsub.s32 0, %v1939
      %v1941 = vsel %vm1935, %v1940, %v1939
      %vm1942 = vcmp.lt.s32.totalorder %v1716, 0
      %v1943 = vsub.s32 0, %v1716
      %v1944 = vsel %vm1942, %v1943, %v1716
      %v1945 = vshrl.u32 %v1944, 4
      %v1946 = vand.u32 %v1944, 15
      %v1947 = vsub.s32 0, %v1946
      %v1948 = vsel %vm1942, %v1947, %v1946
      %vm1949 = vcmp.lt.s32.totalorder %v1717, 0
      %v1950 = vsub.s32 0, %v1717
      %v1951 = vsel %vm1949, %v1950, %v1717
      %v1952 = vshrl.u32 %v1951, 4
      %v1953 = vand.u32 %v1951, 15
      %v1954 = vsub.s32 0, %v1953
      %v1955 = vsel %vm1949, %v1954, %v1953
      %vm1956 = vcmp.lt.s32.totalorder %v1718, 0
      %v1957 = vsub.s32 0, %v1718
      %v1958 = vsel %vm1956, %v1957, %v1718
      %v1959 = vshrl.u32 %v1958, 4
      %v1960 = vand.u32 %v1958, 15
      %v1961 = vsub.s32 0, %v1960
      %v1962 = vsel %vm1956, %v1961, %v1960
      %vm1963 = vcmp.lt.s32.totalorder %v1719, 0
      %v1964 = vsub.s32 0, %v1719
      %v1965 = vsel %vm1963, %v1964, %v1719
      %v1966 = vshrl.u32 %v1965, 4
      %v1967 = vand.u32 %v1965, 15
      %v1968 = vsub.s32 0, %v1967
      %v1969 = vsel %vm1963, %v1968, %v1967
      %vm1970 = vcmp.lt.s32.totalorder %v1720, 0
      %v1971 = vsub.s32 0, %v1720
      %v1972 = vsel %vm1970, %v1971, %v1720
      %v1973 = vshrl.u32 %v1972, 4
      %v1974 = vand.u32 %v1972, 15
      %v1975 = vsub.s32 0, %v1974
      %v1976 = vsel %vm1970, %v1975, %v1974
      %vm1977 = vcmp.lt.s32.totalorder %v1721, 0
      %v1978 = vsub.s32 0, %v1721
      %v1979 = vsel %vm1977, %v1978, %v1721
      %v1980 = vshrl.u32 %v1979, 4
      %v1981 = vand.u32 %v1979, 15
      %v1982 = vsub.s32 0, %v1981
      %v1983 = vsel %vm1977, %v1982, %v1981
      %vm1984 = vcmp.lt.s32.totalorder %v1722, 0
      %v1985 = vsub.s32 0, %v1722
      %v1986 = vsel %vm1984, %v1985, %v1722
      %v1987 = vshrl.u32 %v1986, 4
      %v1988 = vand.u32 %v1986, 15
      %v1989 = vsub.s32 0, %v1988
      %v1990 = vsel %vm1984, %v1989, %v1988
      %vm1991 = vcmp.lt.s32.totalorder %v1723, 0
      %v1992 = vsub.s32 0, %v1723
      %v1993 = vsel %vm1991, %v1992, %v1723
      %v1994 = vshrl.u32 %v1993, 4
      %v1995 = vand.u32 %v1993, 15
      %v1996 = vsub.s32 0, %v1995
      %v1997 = vsel %vm1991, %v1996, %v1995
      %vm1998 = vcmp.lt.s32.totalorder %v1724, 0
      %v1999 = vsub.s32 0, %v1724
      %v2000 = vsel %vm1998, %v1999, %v1724
      %v2001 = vshrl.u32 %v2000, 4
      %v2002 = vand.u32 %v2000, 15
      %v2003 = vsub.s32 0, %v2002
      %v2004 = vsel %vm1998, %v2003, %v2002
      %vm2005 = vcmp.lt.s32.totalorder %v1725, 0
      %v2006 = vsub.s32 0, %v1725
      %v2007 = vsel %vm2005, %v2006, %v1725
      %v2008 = vshrl.u32 %v2007, 4
      %v2009 = vand.u32 %v2007, 15
      %v2010 = vsub.s32 0, %v2009
      %v2011 = vsel %vm2005, %v2010, %v2009
      %vm2012 = vcmp.lt.s32.totalorder %v1726, 0
      %v2013 = vsub.s32 0, %v1726
      %v2014 = vsel %vm2012, %v2013, %v1726
      %v2015 = vshrl.u32 %v2014, 4
      %v2016 = vand.u32 %v2014, 15
      %v2017 = vsub.s32 0, %v2016
      %v2018 = vsel %vm2012, %v2017, %v2016
      %vm2019 = vcmp.lt.s32.totalorder %v1727, 0
      %v2020 = vsub.s32 0, %v1727
      %v2021 = vsel %vm2019, %v2020, %v1727
      %v2022 = vshrl.u32 %v2021, 4
      %v2023 = vand.u32 %v2021, 15
      %v2024 = vsub.s32 0, %v2023
      %v2025 = vsel %vm2019, %v2024, %v2023
      %vm2026 = vcmp.lt.s32.totalorder %v1728, 0
      %v2027 = vsub.s32 0, %v1728
      %v2028 = vsel %vm2026, %v2027, %v1728
      %v2029 = vshrl.u32 %v2028, 4
      %v2030 = vand.u32 %v2028, 15
      %v2031 = vsub.s32 0, %v2030
      %v2032 = vsel %vm2026, %v2031, %v2030
      %vm2033 = vcmp.lt.s32.totalorder %v1729, 0
      %v2034 = vsub.s32 0, %v1729
      %v2035 = vsel %vm2033, %v2034, %v1729
      %v2036 = vshrl.u32 %v2035, 4
      %v2037 = vand.u32 %v2035, 15
      %v2038 = vsub.s32 0, %v2037
      %v2039 = vsel %vm2033, %v2038, %v2037
      %vm2040 = vcmp.lt.s32.totalorder %v1730, 0
      %v2041 = vsub.s32 0, %v1730
      %v2042 = vsel %vm2040, %v2041, %v1730
      %v2043 = vshrl.u32 %v2042, 4
      %v2044 = vand.u32 %v2042, 15
      %v2045 = vsub.s32 0, %v2044
      %v2046 = vsel %vm2040, %v2045, %v2044
      %vm2047 = vcmp.lt.s32.totalorder %v1731, 0
      %v2048 = vsub.s32 0, %v1731
      %v2049 = vsel %vm2047, %v2048, %v1731
      %v2050 = vshrl.u32 %v2049, 4
      %v2051 = vand.u32 %v2049, 15
      %v2052 = vsub.s32 0, %v2051
      %v2053 = vsel %vm2047, %v2052, %v2051
      %vm2054 = vcmp.lt.s32.totalorder %v1732, 0
      %v2055 = vsub.s32 0, %v1732
      %v2056 = vsel %vm2054, %v2055, %v1732
      %v2057 = vshrl.u32 %v2056, 4
      %v2058 = vand.u32 %v2056, 15
      %v2059 = vsub.s32 0, %v2058
      %v2060 = vsel %vm2054, %v2059, %v2058
      %vm2061 = vcmp.lt.s32.totalorder %v1733, 0
      %v2062 = vsub.s32 0, %v1733
      %v2063 = vsel %vm2061, %v2062, %v1733
      %v2064 = vshrl.u32 %v2063, 4
      %v2065 = vand.u32 %v2063, 15
      %v2066 = vsub.s32 0, %v2065
      %v2067 = vsel %vm2061, %v2066, %v2065
      %vm2068 = vcmp.lt.s32.totalorder %v1734, 0
      %v2069 = vsub.s32 0, %v1734
      %v2070 = vsel %vm2068, %v2069, %v1734
      %v2071 = vshrl.u32 %v2070, 4
      %v2072 = vand.u32 %v2070, 15
      %v2073 = vsub.s32 0, %v2072
      %v2074 = vsel %vm2068, %v2073, %v2072
      %vm2075 = vcmp.lt.s32.totalorder %v1735, 0
      %v2076 = vsub.s32 0, %v1735
      %v2077 = vsel %vm2075, %v2076, %v1735
      %v2078 = vshrl.u32 %v2077, 4
      %v2079 = vand.u32 %v2077, 15
      %v2080 = vsub.s32 0, %v2079
      %v2081 = vsel %vm2075, %v2080, %v2079
      %vm2082 = vcmp.lt.s32.totalorder %v1736, 0
      %v2083 = vsub.s32 0, %v1736
      %v2084 = vsel %vm2082, %v2083, %v1736
      %v2085 = vshrl.u32 %v2084, 4
      %v2086 = vand.u32 %v2084, 15
      %v2087 = vsub.s32 0, %v2086
      %v2088 = vsel %vm2082, %v2087, %v2086
      %vm2089 = vcmp.lt.s32.totalorder %v1737, 0
      %v2090 = vsub.s32 0, %v1737
      %v2091 = vsel %vm2089, %v2090, %v1737
      %v2092 = vshrl.u32 %v2091, 4
      %v2093 = vand.u32 %v2091, 15
      %v2094 = vsub.s32 0, %v2093
      %v2095 = vsel %vm2089, %v2094, %v2093
      %vm2096 = vcmp.lt.s32.totalorder %v1738, 0
      %v2097 = vsub.s32 0, %v1738
      %v2098 = vsel %vm2096, %v2097, %v1738
      %v2099 = vshrl.u32 %v2098, 4
      %v2100 = vand.u32 %v2098, 15
      %v2101 = vsub.s32 0, %v2100
      %v2102 = vsel %vm2096, %v2101, %v2100
      %vm2103 = vcmp.lt.s32.totalorder %v1739, 0
      %v2104 = vsub.s32 0, %v1739
      %v2105 = vsel %vm2103, %v2104, %v1739
      %v2106 = vshrl.u32 %v2105, 4
      %v2107 = vand.u32 %v2105, 15
      %v2108 = vsub.s32 0, %v2107
      %v2109 = vsel %vm2103, %v2108, %v2107
      %vm2110 = vcmp.lt.s32.totalorder %v1740, 0
      %v2111 = vsub.s32 0, %v1740
      %v2112 = vsel %vm2110, %v2111, %v1740
      %v2113 = vshrl.u32 %v2112, 4
      %v2114 = vand.u32 %v2112, 15
      %v2115 = vsub.s32 0, %v2114
      %v2116 = vsel %vm2110, %v2115, %v2114
      %vm2117 = vcmp.lt.s32.totalorder %v1741, 0
      %v2118 = vsub.s32 0, %v1741
      %v2119 = vsel %vm2117, %v2118, %v1741
      %v2120 = vshrl.u32 %v2119, 4
      %v2121 = vand.u32 %v2119, 15
      %v2122 = vsub.s32 0, %v2121
      %v2123 = vsel %vm2117, %v2122, %v2121
      %vm2124 = vcmp.lt.s32.totalorder %v1742, 0
      %v2125 = vsub.s32 0, %v1742
      %v2126 = vsel %vm2124, %v2125, %v1742
      %v2127 = vshrl.u32 %v2126, 4
      %v2128 = vand.u32 %v2126, 15
      %v2129 = vsub.s32 0, %v2128
      %v2130 = vsel %vm2124, %v2129, %v2128
      %vm2131 = vcmp.lt.s32.totalorder %v1743, 0
      %v2132 = vsub.s32 0, %v1743
      %v2133 = vsel %vm2131, %v2132, %v1743
      %v2134 = vshrl.u32 %v2133, 4
      %v2135 = vand.u32 %v2133, 15
      %v2136 = vsub.s32 0, %v2135
      %v2137 = vsel %vm2131, %v2136, %v2135
      %vm2138 = vcmp.lt.s32.totalorder %v1744, 0
      %v2139 = vsub.s32 0, %v1744
      %v2140 = vsel %vm2138, %v2139, %v1744
      %v2141 = vshrl.u32 %v2140, 4
      %v2142 = vand.u32 %v2140, 15
      %v2143 = vsub.s32 0, %v2142
      %v2144 = vsel %vm2138, %v2143, %v2142
      %vm2145 = vcmp.lt.s32.totalorder %v1745, 0
      %v2146 = vsub.s32 0, %v1745
      %v2147 = vsel %vm2145, %v2146, %v1745
      %v2148 = vshrl.u32 %v2147, 4
      %v2149 = vand.u32 %v2147, 15
      %v2150 = vsub.s32 0, %v2149
      %v2151 = vsel %vm2145, %v2150, %v2149
      %vm2152 = vcmp.lt.s32.totalorder %v1746, 0
      %v2153 = vsub.s32 0, %v1746
      %v2154 = vsel %vm2152, %v2153, %v1746
      %v2155 = vshrl.u32 %v2154, 4
      %v2156 = vand.u32 %v2154, 15
      %v2157 = vsub.s32 0, %v2156
      %v2158 = vsel %vm2152, %v2157, %v2156
      %vm2159 = vcmp.lt.s32.totalorder %v1747, 0
      %v2160 = vsub.s32 0, %v1747
      %v2161 = vsel %vm2159, %v2160, %v1747
      %v2162 = vshrl.u32 %v2161, 4
      %v2163 = vand.u32 %v2161, 15
      %v2164 = vsub.s32 0, %v2163
      %v2165 = vsel %vm2159, %v2164, %v2163
      %vm2166 = vcmp.lt.s32.totalorder %v1748, 0
      %v2167 = vsub.s32 0, %v1748
      %v2168 = vsel %vm2166, %v2167, %v1748
      %v2169 = vshrl.u32 %v2168, 4
      %v2170 = vand.u32 %v2168, 15
      %v2171 = vsub.s32 0, %v2170
      %v2172 = vsel %vm2166, %v2171, %v2170
      %vm2173 = vcmp.lt.s32.totalorder %v1749, 0
      %v2174 = vsub.s32 0, %v1749
      %v2175 = vsel %vm2173, %v2174, %v1749
      %v2176 = vshrl.u32 %v2175, 4
      %v2177 = vand.u32 %v2175, 15
      %v2178 = vsub.s32 0, %v2177
      %v2179 = vsel %vm2173, %v2178, %v2177
      %vm2180 = vcmp.lt.s32.totalorder %v1750, 0
      %v2181 = vsub.s32 0, %v1750
      %v2182 = vsel %vm2180, %v2181, %v1750
      %v2183 = vshrl.u32 %v2182, 4
      %v2184 = vand.u32 %v2182, 15
      %v2185 = vsub.s32 0, %v2184
      %v2186 = vsel %vm2180, %v2185, %v2184
      %vm2187 = vcmp.lt.s32.totalorder %v1751, 0
      %v2188 = vsub.s32 0, %v1751
      %v2189 = vsel %vm2187, %v2188, %v1751
      %v2190 = vshrl.u32 %v2189, 4
      %v2191 = vand.u32 %v2189, 15
      %v2192 = vsub.s32 0, %v2191
      %v2193 = vsel %vm2187, %v2192, %v2191
      %vm2194 = vcmp.lt.s32.totalorder %v1752, 0
      %v2195 = vsub.s32 0, %v1752
      %v2196 = vsel %vm2194, %v2195, %v1752
      %v2197 = vshrl.u32 %v2196, 4
      %v2198 = vand.u32 %v2196, 15
      %v2199 = vsub.s32 0, %v2198
      %v2200 = vsel %vm2194, %v2199, %v2198
      %vm2201 = vcmp.ne.s32.totalorder %v1759, 0
      %vm2202 = vcmp.ne.s32.totalorder %v1766, 0
      %vm2203 = vcmp.ne.s32.totalorder %v1773, 0
      %vm2204 = vcmp.ne.s32.totalorder %v1780, 0
      %vm2205 = vcmp.ne.s32.totalorder %v1787, 0
      %vm2206 = vcmp.ne.s32.totalorder %v1794, 0
      %vm2207 = vcmp.ne.s32.totalorder %v1801, 0
      %vm2208 = vcmp.ne.s32.totalorder %v1808, 0
      %vm2209 = vcmp.ne.s32.totalorder %v1815, 0
      %vm2210 = vcmp.ne.s32.totalorder %v1822, 0
      %vm2211 = vcmp.ne.s32.totalorder %v1829, 0
      %vm2212 = vcmp.ne.s32.totalorder %v1836, 0
      %vm2213 = vcmp.ne.s32.totalorder %v1843, 0
      %vm2214 = vcmp.ne.s32.totalorder %v1850, 0
      %vm2215 = vcmp.ne.s32.totalorder %v1857, 0
      %vm2216 = vcmp.ne.s32.totalorder %v1864, 0
      %vm2217 = vcmp.ne.s32.totalorder %v1871, 0
      %vm2218 = vcmp.ne.s32.totalorder %v1878, 0
      %vm2219 = vcmp.ne.s32.totalorder %v1885, 0
      %vm2220 = vcmp.ne.s32.totalorder %v1892, 0
      %vm2221 = vcmp.ne.s32.totalorder %v1899, 0
      %vm2222 = vcmp.ne.s32.totalorder %v1906, 0
      %vm2223 = vcmp.ne.s32.totalorder %v1913, 0
      %vm2224 = vcmp.ne.s32.totalorder %v1920, 0
      %vm2225 = vcmp.ne.s32.totalorder %v1927, 0
      %vm2226 = vcmp.ne.s32.totalorder %v1934, 0
      %vm2227 = vcmp.ne.s32.totalorder %v1941, 0
      %vm2228 = vcmp.ne.s32.totalorder %v1948, 0
      %vm2229 = vcmp.ne.s32.totalorder %v1955, 0
      %vm2230 = vcmp.ne.s32.totalorder %v1962, 0
      %vm2231 = vcmp.ne.s32.totalorder %v1969, 0
      %vm2232 = vcmp.ne.s32.totalorder %v1976, 0
      %vm2233 = vcmp.ne.s32.totalorder %v1983, 0
      %vm2234 = vcmp.ne.s32.totalorder %v1990, 0
      %vm2235 = vcmp.ne.s32.totalorder %v1997, 0
      %vm2236 = vcmp.ne.s32.totalorder %v2004, 0
      %vm2237 = vcmp.ne.s32.totalorder %v2011, 0
      %vm2238 = vcmp.ne.s32.totalorder %v2018, 0
      %vm2239 = vcmp.ne.s32.totalorder %v2025, 0
      %vm2240 = vcmp.ne.s32.totalorder %v2032, 0
      %vm2241 = vcmp.ne.s32.totalorder %v2039, 0
      %vm2242 = vcmp.ne.s32.totalorder %v2046, 0
      %vm2243 = vcmp.ne.s32.totalorder %v2053, 0
      %vm2244 = vcmp.ne.s32.totalorder %v2060, 0
      %vm2245 = vcmp.ne.s32.totalorder %v2067, 0
      %vm2246 = vcmp.ne.s32.totalorder %v2074, 0
      %vm2247 = vcmp.ne.s32.totalorder %v2081, 0
      %vm2248 = vcmp.ne.s32.totalorder %v2088, 0
      %vm2249 = vcmp.ne.s32.totalorder %v2095, 0
      %vm2250 = vcmp.ne.s32.totalorder %v2102, 0
      %vm2251 = vcmp.ne.s32.totalorder %v2109, 0
      %vm2252 = vcmp.ne.s32.totalorder %v2116, 0
      %vm2253 = vcmp.ne.s32.totalorder %v2123, 0
      %vm2254 = vcmp.ne.s32.totalorder %v2130, 0
      %vm2255 = vcmp.ne.s32.totalorder %v2137, 0
      %vm2256 = vcmp.ne.s32.totalorder %v2144, 0
      %vm2257 = vcmp.ne.s32.totalorder %v2151, 0
      %vm2258 = vcmp.ne.s32.totalorder %v2158, 0
      %vm2259 = vcmp.ne.s32.totalorder %v2165, 0
      %vm2260 = vcmp.ne.s32.totalorder %v2172, 0
      %vm2261 = vcmp.ne.s32.totalorder %v2179, 0
      %vm2262 = vcmp.ne.s32.totalorder %v2186, 0
      %vm2263 = vcmp.ne.s32.totalorder %v2193, 0
      %vm2264 = vcmp.ne.s32.totalorder %v2200, 0
      %vm2265 = vcmp.lt.s32.totalorder %v1759, 0
      %vm2266 = vcmp.lt.s32.totalorder %v1766, 0
      %vm2267 = vcmp.lt.s32.totalorder %v1773, 0
      %vm2268 = vcmp.lt.s32.totalorder %v1780, 0
      %vm2269 = vcmp.lt.s32.totalorder %v1787, 0
      %vm2270 = vcmp.lt.s32.totalorder %v1794, 0
      %vm2271 = vcmp.lt.s32.totalorder %v1801, 0
      %vm2272 = vcmp.lt.s32.totalorder %v1808, 0
      %vm2273 = vcmp.lt.s32.totalorder %v1815, 0
      %vm2274 = vcmp.lt.s32.totalorder %v1822, 0
      %vm2275 = vcmp.lt.s32.totalorder %v1829, 0
      %vm2276 = vcmp.lt.s32.totalorder %v1836, 0
      %vm2277 = vcmp.lt.s32.totalorder %v1843, 0
      %vm2278 = vcmp.lt.s32.totalorder %v1850, 0
      %vm2279 = vcmp.lt.s32.totalorder %v1857, 0
      %vm2280 = vcmp.lt.s32.totalorder %v1864, 0
      %vm2281 = vcmp.lt.s32.totalorder %v1871, 0
      %vm2282 = vcmp.lt.s32.totalorder %v1878, 0
      %vm2283 = vcmp.lt.s32.totalorder %v1885, 0
      %vm2284 = vcmp.lt.s32.totalorder %v1892, 0
      %vm2285 = vcmp.lt.s32.totalorder %v1899, 0
      %vm2286 = vcmp.lt.s32.totalorder %v1906, 0
      %vm2287 = vcmp.lt.s32.totalorder %v1913, 0
      %vm2288 = vcmp.lt.s32.totalorder %v1920, 0
      %vm2289 = vcmp.lt.s32.totalorder %v1927, 0
      %vm2290 = vcmp.lt.s32.totalorder %v1934, 0
      %vm2291 = vcmp.lt.s32.totalorder %v1941, 0
      %vm2292 = vcmp.lt.s32.totalorder %v1948, 0
      %vm2293 = vcmp.lt.s32.totalorder %v1955, 0
      %vm2294 = vcmp.lt.s32.totalorder %v1962, 0
      %vm2295 = vcmp.lt.s32.totalorder %v1969, 0
      %vm2296 = vcmp.lt.s32.totalorder %v1976, 0
      %vm2297 = vcmp.lt.s32.totalorder %v1983, 0
      %vm2298 = vcmp.lt.s32.totalorder %v1990, 0
      %vm2299 = vcmp.lt.s32.totalorder %v1997, 0
      %vm2300 = vcmp.lt.s32.totalorder %v2004, 0
      %vm2301 = vcmp.lt.s32.totalorder %v2011, 0
      %vm2302 = vcmp.lt.s32.totalorder %v2018, 0
      %vm2303 = vcmp.lt.s32.totalorder %v2025, 0
      %vm2304 = vcmp.lt.s32.totalorder %v2032, 0
      %vm2305 = vcmp.lt.s32.totalorder %v2039, 0
      %vm2306 = vcmp.lt.s32.totalorder %v2046, 0
      %vm2307 = vcmp.lt.s32.totalorder %v2053, 0
      %vm2308 = vcmp.lt.s32.totalorder %v2060, 0
      %vm2309 = vcmp.lt.s32.totalorder %v2067, 0
      %vm2310 = vcmp.lt.s32.totalorder %v2074, 0
      %vm2311 = vcmp.lt.s32.totalorder %v2081, 0
      %vm2312 = vcmp.lt.s32.totalorder %v2088, 0
      %vm2313 = vcmp.lt.s32.totalorder %v2095, 0
      %vm2314 = vcmp.lt.s32.totalorder %v2102, 0
      %vm2315 = vcmp.lt.s32.totalorder %v2109, 0
      %vm2316 = vcmp.lt.s32.totalorder %v2116, 0
      %vm2317 = vcmp.lt.s32.totalorder %v2123, 0
      %vm2318 = vcmp.lt.s32.totalorder %v2130, 0
      %vm2319 = vcmp.lt.s32.totalorder %v2137, 0
      %vm2320 = vcmp.lt.s32.totalorder %v2144, 0
      %vm2321 = vcmp.lt.s32.totalorder %v2151, 0
      %vm2322 = vcmp.lt.s32.totalorder %v2158, 0
      %vm2323 = vcmp.lt.s32.totalorder %v2165, 0
      %vm2324 = vcmp.lt.s32.totalorder %v2172, 0
      %vm2325 = vcmp.lt.s32.totalorder %v2179, 0
      %vm2326 = vcmp.lt.s32.totalorder %v2186, 0
      %vm2327 = vcmp.lt.s32.totalorder %v2193, 0
      %vm2328 = vcmp.lt.s32.totalorder %v2200, 0
      %vm2329 = vmand %vm2265, %vm2201
      %vm2330 = vmand %vm2266, %vm2202
      %vm2331 = vmand %vm2267, %vm2203
      %vm2332 = vmand %vm2268, %vm2204
      %vm2333 = vmand %vm2269, %vm2205
      %vm2334 = vmand %vm2270, %vm2206
      %vm2335 = vmand %vm2271, %vm2207
      %vm2336 = vmand %vm2272, %vm2208
      %vm2337 = vmand %vm2273, %vm2209
      %vm2338 = vmand %vm2274, %vm2210
      %vm2339 = vmand %vm2275, %vm2211
      %vm2340 = vmand %vm2276, %vm2212
      %vm2341 = vmand %vm2277, %vm2213
      %vm2342 = vmand %vm2278, %vm2214
      %vm2343 = vmand %vm2279, %vm2215
      %vm2344 = vmand %vm2280, %vm2216
      %vm2345 = vmand %vm2281, %vm2217
      %vm2346 = vmand %vm2282, %vm2218
      %vm2347 = vmand %vm2283, %vm2219
      %vm2348 = vmand %vm2284, %vm2220
      %vm2349 = vmand %vm2285, %vm2221
      %vm2350 = vmand %vm2286, %vm2222
      %vm2351 = vmand %vm2287, %vm2223
      %vm2352 = vmand %vm2288, %vm2224
      %vm2353 = vmand %vm2289, %vm2225
      %vm2354 = vmand %vm2290, %vm2226
      %vm2355 = vmand %vm2291, %vm2227
      %vm2356 = vmand %vm2292, %vm2228
      %vm2357 = vmand %vm2293, %vm2229
      %vm2358 = vmand %vm2294, %vm2230
      %vm2359 = vmand %vm2295, %vm2231
      %vm2360 = vmand %vm2296, %vm2232
      %vm2361 = vmand %vm2297, %vm2233
      %vm2362 = vmand %vm2298, %vm2234
      %vm2363 = vmand %vm2299, %vm2235
      %vm2364 = vmand %vm2300, %vm2236
      %vm2365 = vmand %vm2301, %vm2237
      %vm2366 = vmand %vm2302, %vm2238
      %vm2367 = vmand %vm2303, %vm2239
      %vm2368 = vmand %vm2304, %vm2240
      %vm2369 = vmand %vm2305, %vm2241
      %vm2370 = vmand %vm2306, %vm2242
      %vm2371 = vmand %vm2307, %vm2243
      %vm2372 = vmand %vm2308, %vm2244
      %vm2373 = vmand %vm2309, %vm2245
      %vm2374 = vmand %vm2310, %vm2246
      %vm2375 = vmand %vm2311, %vm2247
      %vm2376 = vmand %vm2312, %vm2248
      %vm2377 = vmand %vm2313, %vm2249
      %vm2378 = vmand %vm2314, %vm2250
      %vm2379 = vmand %vm2315, %vm2251
      %vm2380 = vmand %vm2316, %vm2252
      %vm2381 = vmand %vm2317, %vm2253
      %vm2382 = vmand %vm2318, %vm2254
      %vm2383 = vmand %vm2319, %vm2255
      %vm2384 = vmand %vm2320, %vm2256
      %vm2385 = vmand %vm2321, %vm2257
      %vm2386 = vmand %vm2322, %vm2258
      %vm2387 = vmand %vm2323, %vm2259
      %vm2388 = vmand %vm2324, %vm2260
      %vm2389 = vmand %vm2325, %vm2261
      %vm2390 = vmand %vm2326, %vm2262
      %vm2391 = vmand %vm2327, %vm2263
      %vm2392 = vmand %vm2328, %vm2264
      %v2393 = vadd.s32 %v1759, 16
      %v2394 = vadd.s32 %v1766, 16
      %v2395 = vadd.s32 %v1773, 16
      %v2396 = vadd.s32 %v1780, 16
      %v2397 = vadd.s32 %v1787, 16
      %v2398 = vadd.s32 %v1794, 16
      %v2399 = vadd.s32 %v1801, 16
      %v2400 = vadd.s32 %v1808, 16
      %v2401 = vadd.s32 %v1815, 16
      %v2402 = vadd.s32 %v1822, 16
      %v2403 = vadd.s32 %v1829, 16
      %v2404 = vadd.s32 %v1836, 16
      %v2405 = vadd.s32 %v1843, 16
      %v2406 = vadd.s32 %v1850, 16
      %v2407 = vadd.s32 %v1857, 16
      %v2408 = vadd.s32 %v1864, 16
      %v2409 = vadd.s32 %v1871, 16
      %v2410 = vadd.s32 %v1878, 16
      %v2411 = vadd.s32 %v1885, 16
      %v2412 = vadd.s32 %v1892, 16
      %v2413 = vadd.s32 %v1899, 16
      %v2414 = vadd.s32 %v1906, 16
      %v2415 = vadd.s32 %v1913, 16
      %v2416 = vadd.s32 %v1920, 16
      %v2417 = vadd.s32 %v1927, 16
      %v2418 = vadd.s32 %v1934, 16
      %v2419 = vadd.s32 %v1941, 16
      %v2420 = vadd.s32 %v1948, 16
      %v2421 = vadd.s32 %v1955, 16
      %v2422 = vadd.s32 %v1962, 16
      %v2423 = vadd.s32 %v1969, 16
      %v2424 = vadd.s32 %v1976, 16
      %v2425 = vadd.s32 %v1983, 16
      %v2426 = vadd.s32 %v1990, 16
      %v2427 = vadd.s32 %v1997, 16
      %v2428 = vadd.s32 %v2004, 16
      %v2429 = vadd.s32 %v2011, 16
      %v2430 = vadd.s32 %v2018, 16
      %v2431 = vadd.s32 %v2025, 16
      %v2432 = vadd.s32 %v2032, 16
      %v2433 = vadd.s32 %v2039, 16
      %v2434 = vadd.s32 %v2046, 16
      %v2435 = vadd.s32 %v2053, 16
      %v2436 = vadd.s32 %v2060, 16
      %v2437 = vadd.s32 %v2067, 16
      %v2438 = vadd.s32 %v2074, 16
      %v2439 = vadd.s32 %v2081, 16
      %v2440 = vadd.s32 %v2088, 16
      %v2441 = vadd.s32 %v2095, 16
      %v2442 = vadd.s32 %v2102, 16
      %v2443 = vadd.s32 %v2109, 16
      %v2444 = vadd.s32 %v2116, 16
      %v2445 = vadd.s32 %v2123, 16
      %v2446 = vadd.s32 %v2130, 16
      %v2447 = vadd.s32 %v2137, 16
      %v2448 = vadd.s32 %v2144, 16
      %v2449 = vadd.s32 %v2151, 16
      %v2450 = vadd.s32 %v2158, 16
      %v2451 = vadd.s32 %v2165, 16
      %v2452 = vadd.s32 %v2172, 16
      %v2453 = vadd.s32 %v2179, 16
      %v2454 = vadd.s32 %v2186, 16
      %v2455 = vadd.s32 %v2193, 16
      %v2456 = vadd.s32 %v2200, 16
      %v2457 = vsel %vm2329, %v2393, %v1759
      %v2458 = vsel %vm2330, %v2394, %v1766
      %v2459 = vsel %vm2331, %v2395, %v1773
      %v2460 = vsel %vm2332, %v2396, %v1780
      %v2461 = vsel %vm2333, %v2397, %v1787
      %v2462 = vsel %vm2334, %v2398, %v1794
      %v2463 = vsel %vm2335, %v2399, %v1801
      %v2464 = vsel %vm2336, %v2400, %v1808
      %v2465 = vsel %vm2337, %v2401, %v1815
      %v2466 = vsel %vm2338, %v2402, %v1822
      %v2467 = vsel %vm2339, %v2403, %v1829
      %v2468 = vsel %vm2340, %v2404, %v1836
      %v2469 = vsel %vm2341, %v2405, %v1843
      %v2470 = vsel %vm2342, %v2406, %v1850
      %v2471 = vsel %vm2343, %v2407, %v1857
      %v2472 = vsel %vm2344, %v2408, %v1864
      %v2473 = vsel %vm2345, %v2409, %v1871
      %v2474 = vsel %vm2346, %v2410, %v1878
      %v2475 = vsel %vm2347, %v2411, %v1885
      %v2476 = vsel %vm2348, %v2412, %v1892
      %v2477 = vsel %vm2349, %v2413, %v1899
      %v2478 = vsel %vm2350, %v2414, %v1906
      %v2479 = vsel %vm2351, %v2415, %v1913
      %v2480 = vsel %vm2352, %v2416, %v1920
      %v2481 = vsel %vm2353, %v2417, %v1927
      %v2482 = vsel %vm2354, %v2418, %v1934
      %v2483 = vsel %vm2355, %v2419, %v1941
      %v2484 = vsel %vm2356, %v2420, %v1948
      %v2485 = vsel %vm2357, %v2421, %v1955
      %v2486 = vsel %vm2358, %v2422, %v1962
      %v2487 = vsel %vm2359, %v2423, %v1969
      %v2488 = vsel %vm2360, %v2424, %v1976
      %v2489 = vsel %vm2361, %v2425, %v1983
      %v2490 = vsel %vm2362, %v2426, %v1990
      %v2491 = vsel %vm2363, %v2427, %v1997
      %v2492 = vsel %vm2364, %v2428, %v2004
      %v2493 = vsel %vm2365, %v2429, %v2011
      %v2494 = vsel %vm2366, %v2430, %v2018
      %v2495 = vsel %vm2367, %v2431, %v2025
      %v2496 = vsel %vm2368, %v2432, %v2032
      %v2497 = vsel %vm2369, %v2433, %v2039
      %v2498 = vsel %vm2370, %v2434, %v2046
      %v2499 = vsel %vm2371, %v2435, %v2053
      %v2500 = vsel %vm2372, %v2436, %v2060
      %v2501 = vsel %vm2373, %v2437, %v2067
      %v2502 = vsel %vm2374, %v2438, %v2074
      %v2503 = vsel %vm2375, %v2439, %v2081
      %v2504 = vsel %vm2376, %v2440, %v2088
      %v2505 = vsel %vm2377, %v2441, %v2095
      %v2506 = vsel %vm2378, %v2442, %v2102
      %v2507 = vsel %vm2379, %v2443, %v2109
      %v2508 = vsel %vm2380, %v2444, %v2116
      %v2509 = vsel %vm2381, %v2445, %v2123
      %v2510 = vsel %vm2382, %v2446, %v2130
      %v2511 = vsel %vm2383, %v2447, %v2137
      %v2512 = vsel %vm2384, %v2448, %v2144
      %v2513 = vsel %vm2385, %v2449, %v2151
      %v2514 = vsel %vm2386, %v2450, %v2158
      %v2515 = vsel %vm2387, %v2451, %v2165
      %v2516 = vsel %vm2388, %v2452, %v2172
      %v2517 = vsel %vm2389, %v2453, %v2179
      %v2518 = vsel %vm2390, %v2454, %v2186
      %v2519 = vsel %vm2391, %v2455, %v2193
      %v2520 = vsel %vm2392, %v2456, %v2200
      %vm2521 = vcmp.lt.s32.totalorder %v2457, 1
      %vm2522 = vcmp.lt.s32.totalorder %v2458, 1
      %vm2523 = vcmp.lt.s32.totalorder %v2459, 1
      %vm2524 = vcmp.lt.s32.totalorder %v2460, 1
      %vm2525 = vcmp.lt.s32.totalorder %v2461, 1
      %vm2526 = vcmp.lt.s32.totalorder %v2462, 1
      %vm2527 = vcmp.lt.s32.totalorder %v2463, 1
      %vm2528 = vcmp.lt.s32.totalorder %v2464, 1
      %vm2529 = vcmp.lt.s32.totalorder %v2465, 1
      %vm2530 = vcmp.lt.s32.totalorder %v2466, 1
      %vm2531 = vcmp.lt.s32.totalorder %v2467, 1
      %vm2532 = vcmp.lt.s32.totalorder %v2468, 1
      %vm2533 = vcmp.lt.s32.totalorder %v2469, 1
      %vm2534 = vcmp.lt.s32.totalorder %v2470, 1
      %vm2535 = vcmp.lt.s32.totalorder %v2471, 1
      %vm2536 = vcmp.lt.s32.totalorder %v2472, 1
      %vm2537 = vcmp.lt.s32.totalorder %v2473, 1
      %vm2538 = vcmp.lt.s32.totalorder %v2474, 1
      %vm2539 = vcmp.lt.s32.totalorder %v2475, 1
      %vm2540 = vcmp.lt.s32.totalorder %v2476, 1
      %vm2541 = vcmp.lt.s32.totalorder %v2477, 1
      %vm2542 = vcmp.lt.s32.totalorder %v2478, 1
      %vm2543 = vcmp.lt.s32.totalorder %v2479, 1
      %vm2544 = vcmp.lt.s32.totalorder %v2480, 1
      %vm2545 = vcmp.lt.s32.totalorder %v2481, 1
      %vm2546 = vcmp.lt.s32.totalorder %v2482, 1
      %vm2547 = vcmp.lt.s32.totalorder %v2483, 1
      %vm2548 = vcmp.lt.s32.totalorder %v2484, 1
      %vm2549 = vcmp.lt.s32.totalorder %v2485, 1
      %vm2550 = vcmp.lt.s32.totalorder %v2486, 1
      %vm2551 = vcmp.lt.s32.totalorder %v2487, 1
      %vm2552 = vcmp.lt.s32.totalorder %v2488, 1
      %vm2553 = vcmp.lt.s32.totalorder %v2489, 1
      %vm2554 = vcmp.lt.s32.totalorder %v2490, 1
      %vm2555 = vcmp.lt.s32.totalorder %v2491, 1
      %vm2556 = vcmp.lt.s32.totalorder %v2492, 1
      %vm2557 = vcmp.lt.s32.totalorder %v2493, 1
      %vm2558 = vcmp.lt.s32.totalorder %v2494, 1
      %vm2559 = vcmp.lt.s32.totalorder %v2495, 1
      %vm2560 = vcmp.lt.s32.totalorder %v2496, 1
      %vm2561 = vcmp.lt.s32.totalorder %v2497, 1
      %vm2562 = vcmp.lt.s32.totalorder %v2498, 1
      %vm2563 = vcmp.lt.s32.totalorder %v2499, 1
      %vm2564 = vcmp.lt.s32.totalorder %v2500, 1
      %vm2565 = vcmp.lt.s32.totalorder %v2501, 1
      %vm2566 = vcmp.lt.s32.totalorder %v2502, 1
      %vm2567 = vcmp.lt.s32.totalorder %v2503, 1
      %vm2568 = vcmp.lt.s32.totalorder %v2504, 1
      %vm2569 = vcmp.lt.s32.totalorder %v2505, 1
      %vm2570 = vcmp.lt.s32.totalorder %v2506, 1
      %vm2571 = vcmp.lt.s32.totalorder %v2507, 1
      %vm2572 = vcmp.lt.s32.totalorder %v2508, 1
      %vm2573 = vcmp.lt.s32.totalorder %v2509, 1
      %vm2574 = vcmp.lt.s32.totalorder %v2510, 1
      %vm2575 = vcmp.lt.s32.totalorder %v2511, 1
      %vm2576 = vcmp.lt.s32.totalorder %v2512, 1
      %vm2577 = vcmp.lt.s32.totalorder %v2513, 1
      %vm2578 = vcmp.lt.s32.totalorder %v2514, 1
      %vm2579 = vcmp.lt.s32.totalorder %v2515, 1
      %vm2580 = vcmp.lt.s32.totalorder %v2516, 1
      %vm2581 = vcmp.lt.s32.totalorder %v2517, 1
      %vm2582 = vcmp.lt.s32.totalorder %v2518, 1
      %vm2583 = vcmp.lt.s32.totalorder %v2519, 1
      %vm2584 = vcmp.lt.s32.totalorder %v2520, 1
      %vm2648 = vcmask 1040384
      %v2649 = vrot.slane %v1593, 7
      %v2650 = vrot.slane %v1594, 7
      %v2651 = vsel %vm2648, %v2649, %v2650
      %v2652 = vrot.slane %v1595, 7
      %v2653 = vsel %vm2648, %v2650, %v2652
      %v2654 = vrot.slane %v1596, 7
      %v2655 = vsel %vm2648, %v2652, %v2654
      %v2656 = vrot.slane %v1597, 7
      %v2657 = vsel %vm2648, %v2654, %v2656
      %v2658 = vrot.slane %v1598, 7
      %v2659 = vsel %vm2648, %v2656, %v2658
      %v2660 = vrot.slane %v1599, 7
      %v2661 = vsel %vm2648, %v2658, %v2660
      %v2662 = vrot.slane %v1600, 7
      %v2663 = vsel %vm2648, %v2660, %v2662
      %v2664 = vrot.slane %v1601, 7
      %v2665 = vsel %vm2648, %v2662, %v2664
      %v2666 = vrot.slane %v1602, 7
      %v2667 = vsel %vm2648, %v2664, %v2666
      %v2668 = vrot.slane %v1603, 7
      %v2669 = vsel %vm2648, %v2666, %v2668
      %v2670 = vrot.slane %v1604, 7
      %v2671 = vsel %vm2648, %v2668, %v2670
      %v2672 = vrot.slane %v1605, 7
      %v2673 = vsel %vm2648, %v2670, %v2672
      %v2674 = vrot.slane %v1606, 7
      %v2675 = vsel %vm2648, %v2672, %v2674
      %v2676 = vrot.slane %v1607, 7
      %v2677 = vsel %vm2648, %v2674, %v2676
      %v2678 = vrot.slane %v1608, 7
      %v2679 = vsel %vm2648, %v2676, %v2678
      %v2680 = vrot.slane %v1609, 7
      %v2681 = vsel %vm2648, %v2678, %v2680
      %v2682 = vrot.slane %v1610, 7
      %v2683 = vsel %vm2648, %v2680, %v2682
      %v2684 = vrot.slane %v1611, 7
      %v2685 = vsel %vm2648, %v2682, %v2684
      %v2686 = vrot.slane %v1612, 7
      %v2687 = vsel %vm2648, %v2684, %v2686
      %v2688 = vrot.slane %v1613, 7
      %v2689 = vsel %vm2648, %v2686, %v2688
      %v2690 = vrot.slane %v1614, 7
      %v2691 = vsel %vm2648, %v2688, %v2690
      %v2692 = vrot.slane %v1615, 7
      %v2693 = vsel %vm2648, %v2690, %v2692
      %v2694 = vrot.slane %v1616, 7
      %v2695 = vsel %vm2648, %v2692, %v2694
      %v2696 = vrot.slane %v1617, 7
      %v2697 = vsel %vm2648, %v2694, %v2696
      %v2698 = vrot.slane %v1618, 7
      %v2699 = vsel %vm2648, %v2696, %v2698
      %v2700 = vrot.slane %v1619, 7
      %v2701 = vsel %vm2648, %v2698, %v2700
      %v2702 = vrot.slane %v1620, 7
      %v2703 = vsel %vm2648, %v2700, %v2702
      %v2704 = vrot.slane %v1621, 7
      %v2705 = vsel %vm2648, %v2702, %v2704
      %v2706 = vrot.slane %v1622, 7
      %v2707 = vsel %vm2648, %v2704, %v2706
      %v2708 = vrot.slane %v1623, 7
      %v2709 = vsel %vm2648, %v2706, %v2708
      %v2710 = vrot.slane %v1624, 7
      %v2711 = vsel %vm2648, %v2708, %v2710
      %v2712 = vrot.slane %v1625, 7
      %v2713 = vsel %vm2648, %v2710, %v2712
      %v2714 = vrot.slane %v1626, 7
      %v2715 = vsel %vm2648, %v2712, %v2714
      %v2716 = vrot.slane %v1627, 7
      %v2717 = vsel %vm2648, %v2714, %v2716
      %v2718 = vrot.slane %v1628, 7
      %v2719 = vsel %vm2648, %v2716, %v2718
      %v2720 = vrot.slane %v1629, 7
      %v2721 = vsel %vm2648, %v2718, %v2720
      %v2722 = vrot.slane %v1630, 7
      %v2723 = vsel %vm2648, %v2720, %v2722
      %v2724 = vrot.slane %v1631, 7
      %v2725 = vsel %vm2648, %v2722, %v2724
      %v2726 = vrot.slane %v1632, 7
      %v2727 = vsel %vm2648, %v2724, %v2726
      %v2728 = vrot.slane %v1633, 7
      %v2729 = vsel %vm2648, %v2726, %v2728
      %v2730 = vrot.slane %v1634, 7
      %v2731 = vsel %vm2648, %v2728, %v2730
      %v2732 = vrot.slane %v1635, 7
      %v2733 = vsel %vm2648, %v2730, %v2732
      %v2734 = vrot.slane %v1636, 7
      %v2735 = vsel %vm2648, %v2732, %v2734
      %v2736 = vrot.slane %v1637, 7
      %v2737 = vsel %vm2648, %v2734, %v2736
      %v2738 = vrot.slane %v1638, 7
      %v2739 = vsel %vm2648, %v2736, %v2738
      %v2740 = vrot.slane %v1639, 7
      %v2741 = vsel %vm2648, %v2738, %v2740
      %v2742 = vrot.slane %v1640, 7
      %v2743 = vsel %vm2648, %v2740, %v2742
      %v2744 = vrot.slane %v1641, 7
      %v2745 = vsel %vm2648, %v2742, %v2744
      %v2746 = vrot.slane %v1642, 7
      %v2747 = vsel %vm2648, %v2744, %v2746
      %v2748 = vrot.slane %v1643, 7
      %v2749 = vsel %vm2648, %v2746, %v2748
      %v2750 = vrot.slane %v1644, 7
      %v2751 = vsel %vm2648, %v2748, %v2750
      %v2752 = vrot.slane %v1645, 7
      %v2753 = vsel %vm2648, %v2750, %v2752
      %v2754 = vrot.slane %v1646, 7
      %v2755 = vsel %vm2648, %v2752, %v2754
      %v2756 = vrot.slane %v1647, 7
      %v2757 = vsel %vm2648, %v2754, %v2756
      %v2758 = vrot.slane %v1648, 7
      %v2759 = vsel %vm2648, %v2756, %v2758
      %v2760 = vrot.slane %v1649, 7
      %v2761 = vsel %vm2648, %v2758, %v2760
      %v2762 = vrot.slane %v1650, 7
      %v2763 = vsel %vm2648, %v2760, %v2762
      %v2764 = vrot.slane %v1651, 7
      %v2765 = vsel %vm2648, %v2762, %v2764
      %v2766 = vrot.slane %v1652, 7
      %v2767 = vsel %vm2648, %v2764, %v2766
      %v2768 = vrot.slane %v1653, 7
      %v2769 = vsel %vm2648, %v2766, %v2768
      %v2770 = vrot.slane %v1654, 7
      %v2771 = vsel %vm2648, %v2768, %v2770
      %v2772 = vrot.slane %v1655, 7
      %v2773 = vsel %vm2648, %v2770, %v2772
      %v2838 = vrot.slane %v1592, 7
      %v2839 = vsel %vm2648, %v2838, %v2649
      %v2842 = vsel %vm2648, %v2772, %v2838
      %v2843 = vsel %vm2521, %v2651, %v2842
      %v2844 = vsel %vm2522, %v2653, %v2839
      %v2845 = vsel %vm2523, %v2655, %v2651
      %v2846 = vsel %vm2524, %v2657, %v2653
      %v2847 = vsel %vm2525, %v2659, %v2655
      %v2848 = vsel %vm2526, %v2661, %v2657
      %v2849 = vsel %vm2527, %v2663, %v2659
      %v2850 = vsel %vm2528, %v2665, %v2661
      %v2851 = vsel %vm2529, %v2667, %v2663
      %v2852 = vsel %vm2530, %v2669, %v2665
      %v2853 = vsel %vm2531, %v2671, %v2667
      %v2854 = vsel %vm2532, %v2673, %v2669
      %v2855 = vsel %vm2533, %v2675, %v2671
      %v2856 = vsel %vm2534, %v2677, %v2673
      %v2857 = vsel %vm2535, %v2679, %v2675
      %v2858 = vsel %vm2536, %v2681, %v2677
      %v2859 = vsel %vm2537, %v2683, %v2679
      %v2860 = vsel %vm2538, %v2685, %v2681
      %v2861 = vsel %vm2539, %v2687, %v2683
      %v2862 = vsel %vm2540, %v2689, %v2685
      %v2863 = vsel %vm2541, %v2691, %v2687
      %v2864 = vsel %vm2542, %v2693, %v2689
      %v2865 = vsel %vm2543, %v2695, %v2691
      %v2866 = vsel %vm2544, %v2697, %v2693
      %v2867 = vsel %vm2545, %v2699, %v2695
      %v2868 = vsel %vm2546, %v2701, %v2697
      %v2869 = vsel %vm2547, %v2703, %v2699
      %v2870 = vsel %vm2548, %v2705, %v2701
      %v2871 = vsel %vm2549, %v2707, %v2703
      %v2872 = vsel %vm2550, %v2709, %v2705
      %v2873 = vsel %vm2551, %v2711, %v2707
      %v2874 = vsel %vm2552, %v2713, %v2709
      %v2875 = vsel %vm2553, %v2715, %v2711
      %v2876 = vsel %vm2554, %v2717, %v2713
      %v2877 = vsel %vm2555, %v2719, %v2715
      %v2878 = vsel %vm2556, %v2721, %v2717
      %v2879 = vsel %vm2557, %v2723, %v2719
      %v2880 = vsel %vm2558, %v2725, %v2721
      %v2881 = vsel %vm2559, %v2727, %v2723
      %v2882 = vsel %vm2560, %v2729, %v2725
      %v2883 = vsel %vm2561, %v2731, %v2727
      %v2884 = vsel %vm2562, %v2733, %v2729
      %v2885 = vsel %vm2563, %v2735, %v2731
      %v2886 = vsel %vm2564, %v2737, %v2733
      %v2887 = vsel %vm2565, %v2739, %v2735
      %v2888 = vsel %vm2566, %v2741, %v2737
      %v2889 = vsel %vm2567, %v2743, %v2739
      %v2890 = vsel %vm2568, %v2745, %v2741
      %v2891 = vsel %vm2569, %v2747, %v2743
      %v2892 = vsel %vm2570, %v2749, %v2745
      %v2893 = vsel %vm2571, %v2751, %v2747
      %v2894 = vsel %vm2572, %v2753, %v2749
      %v2895 = vsel %vm2573, %v2755, %v2751
      %v2896 = vsel %vm2574, %v2757, %v2753
      %v2897 = vsel %vm2575, %v2759, %v2755
      %v2898 = vsel %vm2576, %v2761, %v2757
      %v2899 = vsel %vm2577, %v2763, %v2759
      %v2900 = vsel %vm2578, %v2765, %v2761
      %v2901 = vsel %vm2579, %v2767, %v2763
      %v2902 = vsel %vm2580, %v2769, %v2765
      %v2903 = vsel %vm2581, %v2771, %v2767
      %v2904 = vsel %vm2582, %v2773, %v2769
      %v2905 = vsel %vm2583, %v2842, %v2771
      %v2906 = vsel %vm2584, %v2839, %v2773
      %v2907 = vpack.c.bf16 %v2844, %v2843
      %v2908 = vpack.c.bf16 %v2846, %v2845
      %v2909 = vpack.c.bf16 %v2848, %v2847
      %v2910 = vpack.c.bf16 %v2850, %v2849
      %v2911 = vpack.c.bf16 %v2852, %v2851
      %v2912 = vpack.c.bf16 %v2854, %v2853
      %v2913 = vpack.c.bf16 %v2856, %v2855
      %v2914 = vpack.c.bf16 %v2858, %v2857
      %v2915 = vpack.c.bf16 %v2860, %v2859
      %v2916 = vpack.c.bf16 %v2862, %v2861
      %v2917 = vpack.c.bf16 %v2864, %v2863
      %v2918 = vpack.c.bf16 %v2866, %v2865
      %v2919 = vpack.c.bf16 %v2868, %v2867
      %v2920 = vpack.c.bf16 %v2870, %v2869
      %v2921 = vpack.c.bf16 %v2872, %v2871
      %v2922 = vpack.c.bf16 %v2874, %v2873
      %v2923 = vpack.c.bf16 %v2876, %v2875
      %v2924 = vpack.c.bf16 %v2878, %v2877
      %v2925 = vpack.c.bf16 %v2880, %v2879
      %v2926 = vpack.c.bf16 %v2882, %v2881
      %v2927 = vpack.c.bf16 %v2884, %v2883
      %v2928 = vpack.c.bf16 %v2886, %v2885
      %v2929 = vpack.c.bf16 %v2888, %v2887
      %v2930 = vpack.c.bf16 %v2890, %v2889
      %v2931 = vpack.c.bf16 %v2892, %v2891
      %v2932 = vpack.c.bf16 %v2894, %v2893
      %v2933 = vpack.c.bf16 %v2896, %v2895
      %v2934 = vpack.c.bf16 %v2898, %v2897
      %v2935 = vpack.c.bf16 %v2900, %v2899
      %v2936 = vpack.c.bf16 %v2902, %v2901
      %v2937 = vpack.c.bf16 %v2904, %v2903
      %v2938 = vpack.c.bf16 %v2906, %v2905
      %vm2939 = vcmp.ge.s32.totalorder %v2457, 15
      %vm2940 = vcmp.ge.s32.totalorder %v2458, 15
      %vm2941 = vcmp.ge.s32.totalorder %v2459, 15
      %vm2942 = vcmp.ge.s32.totalorder %v2460, 15
      %vm2943 = vcmp.ge.s32.totalorder %v2461, 15
      %vm2944 = vcmp.ge.s32.totalorder %v2462, 15
      %vm2945 = vcmp.ge.s32.totalorder %v2463, 15
      %vm2946 = vcmp.ge.s32.totalorder %v2464, 15
      %vm2947 = vcmp.ge.s32.totalorder %v2465, 15
      %vm2948 = vcmp.ge.s32.totalorder %v2466, 15
      %vm2949 = vcmp.ge.s32.totalorder %v2467, 15
      %vm2950 = vcmp.ge.s32.totalorder %v2468, 15
      %vm2951 = vcmp.ge.s32.totalorder %v2469, 15
      %vm2952 = vcmp.ge.s32.totalorder %v2470, 15
      %vm2953 = vcmp.ge.s32.totalorder %v2471, 15
      %vm2954 = vcmp.ge.s32.totalorder %v2472, 15
      %vm2955 = vcmp.ge.s32.totalorder %v2473, 15
      %vm2956 = vcmp.ge.s32.totalorder %v2474, 15
      %vm2957 = vcmp.ge.s32.totalorder %v2475, 15
      %vm2958 = vcmp.ge.s32.totalorder %v2476, 15
      %vm2959 = vcmp.ge.s32.totalorder %v2477, 15
      %vm2960 = vcmp.ge.s32.totalorder %v2478, 15
      %vm2961 = vcmp.ge.s32.totalorder %v2479, 15
      %vm2962 = vcmp.ge.s32.totalorder %v2480, 15
      %vm2963 = vcmp.ge.s32.totalorder %v2481, 15
      %vm2964 = vcmp.ge.s32.totalorder %v2482, 15
      %vm2965 = vcmp.ge.s32.totalorder %v2483, 15
      %vm2966 = vcmp.ge.s32.totalorder %v2484, 15
      %vm2967 = vcmp.ge.s32.totalorder %v2485, 15
      %vm2968 = vcmp.ge.s32.totalorder %v2486, 15
      %vm2969 = vcmp.ge.s32.totalorder %v2487, 15
      %vm2970 = vcmp.ge.s32.totalorder %v2488, 15
      %vm2971 = vcmp.ge.s32.totalorder %v2489, 15
      %vm2972 = vcmp.ge.s32.totalorder %v2490, 15
      %vm2973 = vcmp.ge.s32.totalorder %v2491, 15
      %vm2974 = vcmp.ge.s32.totalorder %v2492, 15
      %vm2975 = vcmp.ge.s32.totalorder %v2493, 15
      %vm2976 = vcmp.ge.s32.totalorder %v2494, 15
      %vm2977 = vcmp.ge.s32.totalorder %v2495, 15
      %vm2978 = vcmp.ge.s32.totalorder %v2496, 15
      %vm2979 = vcmp.ge.s32.totalorder %v2497, 15
      %vm2980 = vcmp.ge.s32.totalorder %v2498, 15
      %vm2981 = vcmp.ge.s32.totalorder %v2499, 15
      %vm2982 = vcmp.ge.s32.totalorder %v2500, 15
      %vm2983 = vcmp.ge.s32.totalorder %v2501, 15
      %vm2984 = vcmp.ge.s32.totalorder %v2502, 15
      %vm2985 = vcmp.ge.s32.totalorder %v2503, 15
      %vm2986 = vcmp.ge.s32.totalorder %v2504, 15
      %vm2987 = vcmp.ge.s32.totalorder %v2505, 15
      %vm2988 = vcmp.ge.s32.totalorder %v2506, 15
      %vm2989 = vcmp.ge.s32.totalorder %v2507, 15
      %vm2990 = vcmp.ge.s32.totalorder %v2508, 15
      %vm2991 = vcmp.ge.s32.totalorder %v2509, 15
      %vm2992 = vcmp.ge.s32.totalorder %v2510, 15
      %vm2993 = vcmp.ge.s32.totalorder %v2511, 15
      %vm2994 = vcmp.ge.s32.totalorder %v2512, 15
      %vm2995 = vcmp.ge.s32.totalorder %v2513, 15
      %vm2996 = vcmp.ge.s32.totalorder %v2514, 15
      %vm2997 = vcmp.ge.s32.totalorder %v2515, 15
      %vm2998 = vcmp.ge.s32.totalorder %v2516, 15
      %vm2999 = vcmp.ge.s32.totalorder %v2517, 15
      %vm3000 = vcmp.ge.s32.totalorder %v2518, 15
      %vm3001 = vcmp.ge.s32.totalorder %v2519, 15
      %vm3002 = vcmp.ge.s32.totalorder %v2520, 15
      %vm3003 = vcmask 1046528
      %v3004 = vrot.slane %v1654, 1
      %v3005 = vrot.slane %v1655, 1
      %v3006 = vsel %vm3003, %v3004, %v3005
      %v3009 = vrot.slane %v1592, 1
      %v3010 = vrot.slane %v1593, 1
      %v3011 = vsel %vm3003, %v3009, %v3010
      %v3012 = vrot.slane %v1594, 1
      %v3013 = vsel %vm3003, %v3010, %v3012
      %v3014 = vrot.slane %v1595, 1
      %v3015 = vsel %vm3003, %v3012, %v3014
      %v3016 = vrot.slane %v1596, 1
      %v3017 = vsel %vm3003, %v3014, %v3016
      %v3018 = vrot.slane %v1597, 1
      %v3019 = vsel %vm3003, %v3016, %v3018
      %v3020 = vrot.slane %v1598, 1
      %v3021 = vsel %vm3003, %v3018, %v3020
      %v3022 = vrot.slane %v1599, 1
      %v3023 = vsel %vm3003, %v3020, %v3022
      %v3024 = vrot.slane %v1600, 1
      %v3025 = vsel %vm3003, %v3022, %v3024
      %v3026 = vrot.slane %v1601, 1
      %v3027 = vsel %vm3003, %v3024, %v3026
      %v3028 = vrot.slane %v1602, 1
      %v3029 = vsel %vm3003, %v3026, %v3028
      %v3030 = vrot.slane %v1603, 1
      %v3031 = vsel %vm3003, %v3028, %v3030
      %v3032 = vrot.slane %v1604, 1
      %v3033 = vsel %vm3003, %v3030, %v3032
      %v3034 = vrot.slane %v1605, 1
      %v3035 = vsel %vm3003, %v3032, %v3034
      %v3036 = vrot.slane %v1606, 1
      %v3037 = vsel %vm3003, %v3034, %v3036
      %v3038 = vrot.slane %v1607, 1
      %v3039 = vsel %vm3003, %v3036, %v3038
      %v3040 = vrot.slane %v1608, 1
      %v3041 = vsel %vm3003, %v3038, %v3040
      %v3042 = vrot.slane %v1609, 1
      %v3043 = vsel %vm3003, %v3040, %v3042
      %v3044 = vrot.slane %v1610, 1
      %v3045 = vsel %vm3003, %v3042, %v3044
      %v3046 = vrot.slane %v1611, 1
      %v3047 = vsel %vm3003, %v3044, %v3046
      %v3048 = vrot.slane %v1612, 1
      %v3049 = vsel %vm3003, %v3046, %v3048
      %v3050 = vrot.slane %v1613, 1
      %v3051 = vsel %vm3003, %v3048, %v3050
      %v3052 = vrot.slane %v1614, 1
      %v3053 = vsel %vm3003, %v3050, %v3052
      %v3054 = vrot.slane %v1615, 1
      %v3055 = vsel %vm3003, %v3052, %v3054
      %v3056 = vrot.slane %v1616, 1
      %v3057 = vsel %vm3003, %v3054, %v3056
      %v3058 = vrot.slane %v1617, 1
      %v3059 = vsel %vm3003, %v3056, %v3058
      %v3060 = vrot.slane %v1618, 1
      %v3061 = vsel %vm3003, %v3058, %v3060
      %v3062 = vrot.slane %v1619, 1
      %v3063 = vsel %vm3003, %v3060, %v3062
      %v3064 = vrot.slane %v1620, 1
      %v3065 = vsel %vm3003, %v3062, %v3064
      %v3066 = vrot.slane %v1621, 1
      %v3067 = vsel %vm3003, %v3064, %v3066
      %v3068 = vrot.slane %v1622, 1
      %v3069 = vsel %vm3003, %v3066, %v3068
      %v3070 = vrot.slane %v1623, 1
      %v3071 = vsel %vm3003, %v3068, %v3070
      %v3072 = vrot.slane %v1624, 1
      %v3073 = vsel %vm3003, %v3070, %v3072
      %v3074 = vrot.slane %v1625, 1
      %v3075 = vsel %vm3003, %v3072, %v3074
      %v3076 = vrot.slane %v1626, 1
      %v3077 = vsel %vm3003, %v3074, %v3076
      %v3078 = vrot.slane %v1627, 1
      %v3079 = vsel %vm3003, %v3076, %v3078
      %v3080 = vrot.slane %v1628, 1
      %v3081 = vsel %vm3003, %v3078, %v3080
      %v3082 = vrot.slane %v1629, 1
      %v3083 = vsel %vm3003, %v3080, %v3082
      %v3084 = vrot.slane %v1630, 1
      %v3085 = vsel %vm3003, %v3082, %v3084
      %v3086 = vrot.slane %v1631, 1
      %v3087 = vsel %vm3003, %v3084, %v3086
      %v3088 = vrot.slane %v1632, 1
      %v3089 = vsel %vm3003, %v3086, %v3088
      %v3090 = vrot.slane %v1633, 1
      %v3091 = vsel %vm3003, %v3088, %v3090
      %v3092 = vrot.slane %v1634, 1
      %v3093 = vsel %vm3003, %v3090, %v3092
      %v3094 = vrot.slane %v1635, 1
      %v3095 = vsel %vm3003, %v3092, %v3094
      %v3096 = vrot.slane %v1636, 1
      %v3097 = vsel %vm3003, %v3094, %v3096
      %v3098 = vrot.slane %v1637, 1
      %v3099 = vsel %vm3003, %v3096, %v3098
      %v3100 = vrot.slane %v1638, 1
      %v3101 = vsel %vm3003, %v3098, %v3100
      %v3102 = vrot.slane %v1639, 1
      %v3103 = vsel %vm3003, %v3100, %v3102
      %v3104 = vrot.slane %v1640, 1
      %v3105 = vsel %vm3003, %v3102, %v3104
      %v3106 = vrot.slane %v1641, 1
      %v3107 = vsel %vm3003, %v3104, %v3106
      %v3108 = vrot.slane %v1642, 1
      %v3109 = vsel %vm3003, %v3106, %v3108
      %v3110 = vrot.slane %v1643, 1
      %v3111 = vsel %vm3003, %v3108, %v3110
      %v3112 = vrot.slane %v1644, 1
      %v3113 = vsel %vm3003, %v3110, %v3112
      %v3114 = vrot.slane %v1645, 1
      %v3115 = vsel %vm3003, %v3112, %v3114
      %v3116 = vrot.slane %v1646, 1
      %v3117 = vsel %vm3003, %v3114, %v3116
      %v3118 = vrot.slane %v1647, 1
      %v3119 = vsel %vm3003, %v3116, %v3118
      %v3120 = vrot.slane %v1648, 1
      %v3121 = vsel %vm3003, %v3118, %v3120
      %v3122 = vrot.slane %v1649, 1
      %v3123 = vsel %vm3003, %v3120, %v3122
      %v3124 = vrot.slane %v1650, 1
      %v3125 = vsel %vm3003, %v3122, %v3124
      %v3126 = vrot.slane %v1651, 1
      %v3127 = vsel %vm3003, %v3124, %v3126
      %v3128 = vrot.slane %v1652, 1
      %v3129 = vsel %vm3003, %v3126, %v3128
      %v3130 = vrot.slane %v1653, 1
      %v3131 = vsel %vm3003, %v3128, %v3130
      %v3132 = vsel %vm3003, %v3130, %v3004
      %v3196 = vsel %vm3003, %v3005, %v3009
      %v3197 = vsel %vm2939, %v3006, %v3011
      %v3198 = vsel %vm2940, %v3196, %v3013
      %v3199 = vsel %vm2941, %v3011, %v3015
      %v3200 = vsel %vm2942, %v3013, %v3017
      %v3201 = vsel %vm2943, %v3015, %v3019
      %v3202 = vsel %vm2944, %v3017, %v3021
      %v3203 = vsel %vm2945, %v3019, %v3023
      %v3204 = vsel %vm2946, %v3021, %v3025
      %v3205 = vsel %vm2947, %v3023, %v3027
      %v3206 = vsel %vm2948, %v3025, %v3029
      %v3207 = vsel %vm2949, %v3027, %v3031
      %v3208 = vsel %vm2950, %v3029, %v3033
      %v3209 = vsel %vm2951, %v3031, %v3035
      %v3210 = vsel %vm2952, %v3033, %v3037
      %v3211 = vsel %vm2953, %v3035, %v3039
      %v3212 = vsel %vm2954, %v3037, %v3041
      %v3213 = vsel %vm2955, %v3039, %v3043
      %v3214 = vsel %vm2956, %v3041, %v3045
      %v3215 = vsel %vm2957, %v3043, %v3047
      %v3216 = vsel %vm2958, %v3045, %v3049
      %v3217 = vsel %vm2959, %v3047, %v3051
      %v3218 = vsel %vm2960, %v3049, %v3053
      %v3219 = vsel %vm2961, %v3051, %v3055
      %v3220 = vsel %vm2962, %v3053, %v3057
      %v3221 = vsel %vm2963, %v3055, %v3059
      %v3222 = vsel %vm2964, %v3057, %v3061
      %v3223 = vsel %vm2965, %v3059, %v3063
      %v3224 = vsel %vm2966, %v3061, %v3065
      %v3225 = vsel %vm2967, %v3063, %v3067
      %v3226 = vsel %vm2968, %v3065, %v3069
      %v3227 = vsel %vm2969, %v3067, %v3071
      %v3228 = vsel %vm2970, %v3069, %v3073
      %v3229 = vsel %vm2971, %v3071, %v3075
      %v3230 = vsel %vm2972, %v3073, %v3077
      %v3231 = vsel %vm2973, %v3075, %v3079
      %v3232 = vsel %vm2974, %v3077, %v3081
      %v3233 = vsel %vm2975, %v3079, %v3083
      %v3234 = vsel %vm2976, %v3081, %v3085
      %v3235 = vsel %vm2977, %v3083, %v3087
      %v3236 = vsel %vm2978, %v3085, %v3089
      %v3237 = vsel %vm2979, %v3087, %v3091
      %v3238 = vsel %vm2980, %v3089, %v3093
      %v3239 = vsel %vm2981, %v3091, %v3095
      %v3240 = vsel %vm2982, %v3093, %v3097
      %v3241 = vsel %vm2983, %v3095, %v3099
      %v3242 = vsel %vm2984, %v3097, %v3101
      %v3243 = vsel %vm2985, %v3099, %v3103
      %v3244 = vsel %vm2986, %v3101, %v3105
      %v3245 = vsel %vm2987, %v3103, %v3107
      %v3246 = vsel %vm2988, %v3105, %v3109
      %v3247 = vsel %vm2989, %v3107, %v3111
      %v3248 = vsel %vm2990, %v3109, %v3113
      %v3249 = vsel %vm2991, %v3111, %v3115
      %v3250 = vsel %vm2992, %v3113, %v3117
      %v3251 = vsel %vm2993, %v3115, %v3119
      %v3252 = vsel %vm2994, %v3117, %v3121
      %v3253 = vsel %vm2995, %v3119, %v3123
      %v3254 = vsel %vm2996, %v3121, %v3125
      %v3255 = vsel %vm2997, %v3123, %v3127
      %v3256 = vsel %vm2998, %v3125, %v3129
      %v3257 = vsel %vm2999, %v3127, %v3131
      %v3258 = vsel %vm3000, %v3129, %v3132
      %v3259 = vsel %vm3001, %v3131, %v3006
      %v3260 = vsel %vm3002, %v3132, %v3196
      %v3261 = vpack.c.bf16 %v3198, %v3197
      %v3262 = vpack.c.bf16 %v3200, %v3199
      %v3263 = vpack.c.bf16 %v3202, %v3201
      %v3264 = vpack.c.bf16 %v3204, %v3203
      %v3265 = vpack.c.bf16 %v3206, %v3205
      %v3266 = vpack.c.bf16 %v3208, %v3207
      %v3267 = vpack.c.bf16 %v3210, %v3209
      %v3268 = vpack.c.bf16 %v3212, %v3211
      %v3269 = vpack.c.bf16 %v3214, %v3213
      %v3270 = vpack.c.bf16 %v3216, %v3215
      %v3271 = vpack.c.bf16 %v3218, %v3217
      %v3272 = vpack.c.bf16 %v3220, %v3219
      %v3273 = vpack.c.bf16 %v3222, %v3221
      %v3274 = vpack.c.bf16 %v3224, %v3223
      %v3275 = vpack.c.bf16 %v3226, %v3225
      %v3276 = vpack.c.bf16 %v3228, %v3227
      %v3277 = vpack.c.bf16 %v3230, %v3229
      %v3278 = vpack.c.bf16 %v3232, %v3231
      %v3279 = vpack.c.bf16 %v3234, %v3233
      %v3280 = vpack.c.bf16 %v3236, %v3235
      %v3281 = vpack.c.bf16 %v3238, %v3237
      %v3282 = vpack.c.bf16 %v3240, %v3239
      %v3283 = vpack.c.bf16 %v3242, %v3241
      %v3284 = vpack.c.bf16 %v3244, %v3243
      %v3285 = vpack.c.bf16 %v3246, %v3245
      %v3286 = vpack.c.bf16 %v3248, %v3247
      %v3287 = vpack.c.bf16 %v3250, %v3249
      %v3288 = vpack.c.bf16 %v3252, %v3251
      %v3289 = vpack.c.bf16 %v3254, %v3253
      %v3290 = vpack.c.bf16 %v3256, %v3255
      %v3291 = vpack.c.bf16 %v3258, %v3257
      %v3292 = vpack.c.bf16 %v3260, %v3259
      %vm3293 = vcmp.lt.s32.totalorder %v2457, 2
      %vm3294 = vcmp.lt.s32.totalorder %v2458, 2
      %vm3295 = vcmp.lt.s32.totalorder %v2459, 2
      %vm3296 = vcmp.lt.s32.totalorder %v2460, 2
      %vm3297 = vcmp.lt.s32.totalorder %v2461, 2
      %vm3298 = vcmp.lt.s32.totalorder %v2462, 2
      %vm3299 = vcmp.lt.s32.totalorder %v2463, 2
      %vm3300 = vcmp.lt.s32.totalorder %v2464, 2
      %vm3301 = vcmp.lt.s32.totalorder %v2465, 2
      %vm3302 = vcmp.lt.s32.totalorder %v2466, 2
      %vm3303 = vcmp.lt.s32.totalorder %v2467, 2
      %vm3304 = vcmp.lt.s32.totalorder %v2468, 2
      %vm3305 = vcmp.lt.s32.totalorder %v2469, 2
      %vm3306 = vcmp.lt.s32.totalorder %v2470, 2
      %vm3307 = vcmp.lt.s32.totalorder %v2471, 2
      %vm3308 = vcmp.lt.s32.totalorder %v2472, 2
      %vm3309 = vcmp.lt.s32.totalorder %v2473, 2
      %vm3310 = vcmp.lt.s32.totalorder %v2474, 2
      %vm3311 = vcmp.lt.s32.totalorder %v2475, 2
      %vm3312 = vcmp.lt.s32.totalorder %v2476, 2
      %vm3313 = vcmp.lt.s32.totalorder %v2477, 2
      %vm3314 = vcmp.lt.s32.totalorder %v2478, 2
      %vm3315 = vcmp.lt.s32.totalorder %v2479, 2
      %vm3316 = vcmp.lt.s32.totalorder %v2480, 2
      %vm3317 = vcmp.lt.s32.totalorder %v2481, 2
      %vm3318 = vcmp.lt.s32.totalorder %v2482, 2
      %vm3319 = vcmp.lt.s32.totalorder %v2483, 2
      %vm3320 = vcmp.lt.s32.totalorder %v2484, 2
      %vm3321 = vcmp.lt.s32.totalorder %v2485, 2
      %vm3322 = vcmp.lt.s32.totalorder %v2486, 2
      %vm3323 = vcmp.lt.s32.totalorder %v2487, 2
      %vm3324 = vcmp.lt.s32.totalorder %v2488, 2
      %vm3325 = vcmp.lt.s32.totalorder %v2489, 2
      %vm3326 = vcmp.lt.s32.totalorder %v2490, 2
      %vm3327 = vcmp.lt.s32.totalorder %v2491, 2
      %vm3328 = vcmp.lt.s32.totalorder %v2492, 2
      %vm3329 = vcmp.lt.s32.totalorder %v2493, 2
      %vm3330 = vcmp.lt.s32.totalorder %v2494, 2
      %vm3331 = vcmp.lt.s32.totalorder %v2495, 2
      %vm3332 = vcmp.lt.s32.totalorder %v2496, 2
      %vm3333 = vcmp.lt.s32.totalorder %v2497, 2
      %vm3334 = vcmp.lt.s32.totalorder %v2498, 2
      %vm3335 = vcmp.lt.s32.totalorder %v2499, 2
      %vm3336 = vcmp.lt.s32.totalorder %v2500, 2
      %vm3337 = vcmp.lt.s32.totalorder %v2501, 2
      %vm3338 = vcmp.lt.s32.totalorder %v2502, 2
      %vm3339 = vcmp.lt.s32.totalorder %v2503, 2
      %vm3340 = vcmp.lt.s32.totalorder %v2504, 2
      %vm3341 = vcmp.lt.s32.totalorder %v2505, 2
      %vm3342 = vcmp.lt.s32.totalorder %v2506, 2
      %vm3343 = vcmp.lt.s32.totalorder %v2507, 2
      %vm3344 = vcmp.lt.s32.totalorder %v2508, 2
      %vm3345 = vcmp.lt.s32.totalorder %v2509, 2
      %vm3346 = vcmp.lt.s32.totalorder %v2510, 2
      %vm3347 = vcmp.lt.s32.totalorder %v2511, 2
      %vm3348 = vcmp.lt.s32.totalorder %v2512, 2
      %vm3349 = vcmp.lt.s32.totalorder %v2513, 2
      %vm3350 = vcmp.lt.s32.totalorder %v2514, 2
      %vm3351 = vcmp.lt.s32.totalorder %v2515, 2
      %vm3352 = vcmp.lt.s32.totalorder %v2516, 2
      %vm3353 = vcmp.lt.s32.totalorder %v2517, 2
      %vm3354 = vcmp.lt.s32.totalorder %v2518, 2
      %vm3355 = vcmp.lt.s32.totalorder %v2519, 2
      %vm3356 = vcmp.lt.s32.totalorder %v2520, 2
      %vm3357 = vcmask 1041408
      %v3358 = vrot.slane %v1593, 6
      %v3359 = vrot.slane %v1594, 6
      %v3360 = vsel %vm3357, %v3358, %v3359
      %v3361 = vrot.slane %v1595, 6
      %v3362 = vsel %vm3357, %v3359, %v3361
      %v3363 = vrot.slane %v1596, 6
      %v3364 = vsel %vm3357, %v3361, %v3363
      %v3365 = vrot.slane %v1597, 6
      %v3366 = vsel %vm3357, %v3363, %v3365
      %v3367 = vrot.slane %v1598, 6
      %v3368 = vsel %vm3357, %v3365, %v3367
      %v3369 = vrot.slane %v1599, 6
      %v3370 = vsel %vm3357, %v3367, %v3369
      %v3371 = vrot.slane %v1600, 6
      %v3372 = vsel %vm3357, %v3369, %v3371
      %v3373 = vrot.slane %v1601, 6
      %v3374 = vsel %vm3357, %v3371, %v3373
      %v3375 = vrot.slane %v1602, 6
      %v3376 = vsel %vm3357, %v3373, %v3375
      %v3377 = vrot.slane %v1603, 6
      %v3378 = vsel %vm3357, %v3375, %v3377
      %v3379 = vrot.slane %v1604, 6
      %v3380 = vsel %vm3357, %v3377, %v3379
      %v3381 = vrot.slane %v1605, 6
      %v3382 = vsel %vm3357, %v3379, %v3381
      %v3383 = vrot.slane %v1606, 6
      %v3384 = vsel %vm3357, %v3381, %v3383
      %v3385 = vrot.slane %v1607, 6
      %v3386 = vsel %vm3357, %v3383, %v3385
      %v3387 = vrot.slane %v1608, 6
      %v3388 = vsel %vm3357, %v3385, %v3387
      %v3389 = vrot.slane %v1609, 6
      %v3390 = vsel %vm3357, %v3387, %v3389
      %v3391 = vrot.slane %v1610, 6
      %v3392 = vsel %vm3357, %v3389, %v3391
      %v3393 = vrot.slane %v1611, 6
      %v3394 = vsel %vm3357, %v3391, %v3393
      %v3395 = vrot.slane %v1612, 6
      %v3396 = vsel %vm3357, %v3393, %v3395
      %v3397 = vrot.slane %v1613, 6
      %v3398 = vsel %vm3357, %v3395, %v3397
      %v3399 = vrot.slane %v1614, 6
      %v3400 = vsel %vm3357, %v3397, %v3399
      %v3401 = vrot.slane %v1615, 6
      %v3402 = vsel %vm3357, %v3399, %v3401
      %v3403 = vrot.slane %v1616, 6
      %v3404 = vsel %vm3357, %v3401, %v3403
      %v3405 = vrot.slane %v1617, 6
      %v3406 = vsel %vm3357, %v3403, %v3405
      %v3407 = vrot.slane %v1618, 6
      %v3408 = vsel %vm3357, %v3405, %v3407
      %v3409 = vrot.slane %v1619, 6
      %v3410 = vsel %vm3357, %v3407, %v3409
      %v3411 = vrot.slane %v1620, 6
      %v3412 = vsel %vm3357, %v3409, %v3411
      %v3413 = vrot.slane %v1621, 6
      %v3414 = vsel %vm3357, %v3411, %v3413
      %v3415 = vrot.slane %v1622, 6
      %v3416 = vsel %vm3357, %v3413, %v3415
      %v3417 = vrot.slane %v1623, 6
      %v3418 = vsel %vm3357, %v3415, %v3417
      %v3419 = vrot.slane %v1624, 6
      %v3420 = vsel %vm3357, %v3417, %v3419
      %v3421 = vrot.slane %v1625, 6
      %v3422 = vsel %vm3357, %v3419, %v3421
      %v3423 = vrot.slane %v1626, 6
      %v3424 = vsel %vm3357, %v3421, %v3423
      %v3425 = vrot.slane %v1627, 6
      %v3426 = vsel %vm3357, %v3423, %v3425
      %v3427 = vrot.slane %v1628, 6
      %v3428 = vsel %vm3357, %v3425, %v3427
      %v3429 = vrot.slane %v1629, 6
      %v3430 = vsel %vm3357, %v3427, %v3429
      %v3431 = vrot.slane %v1630, 6
      %v3432 = vsel %vm3357, %v3429, %v3431
      %v3433 = vrot.slane %v1631, 6
      %v3434 = vsel %vm3357, %v3431, %v3433
      %v3435 = vrot.slane %v1632, 6
      %v3436 = vsel %vm3357, %v3433, %v3435
      %v3437 = vrot.slane %v1633, 6
      %v3438 = vsel %vm3357, %v3435, %v3437
      %v3439 = vrot.slane %v1634, 6
      %v3440 = vsel %vm3357, %v3437, %v3439
      %v3441 = vrot.slane %v1635, 6
      %v3442 = vsel %vm3357, %v3439, %v3441
      %v3443 = vrot.slane %v1636, 6
      %v3444 = vsel %vm3357, %v3441, %v3443
      %v3445 = vrot.slane %v1637, 6
      %v3446 = vsel %vm3357, %v3443, %v3445
      %v3447 = vrot.slane %v1638, 6
      %v3448 = vsel %vm3357, %v3445, %v3447
      %v3449 = vrot.slane %v1639, 6
      %v3450 = vsel %vm3357, %v3447, %v3449
      %v3451 = vrot.slane %v1640, 6
      %v3452 = vsel %vm3357, %v3449, %v3451
      %v3453 = vrot.slane %v1641, 6
      %v3454 = vsel %vm3357, %v3451, %v3453
      %v3455 = vrot.slane %v1642, 6
      %v3456 = vsel %vm3357, %v3453, %v3455
      %v3457 = vrot.slane %v1643, 6
      %v3458 = vsel %vm3357, %v3455, %v3457
      %v3459 = vrot.slane %v1644, 6
      %v3460 = vsel %vm3357, %v3457, %v3459
      %v3461 = vrot.slane %v1645, 6
      %v3462 = vsel %vm3357, %v3459, %v3461
      %v3463 = vrot.slane %v1646, 6
      %v3464 = vsel %vm3357, %v3461, %v3463
      %v3465 = vrot.slane %v1647, 6
      %v3466 = vsel %vm3357, %v3463, %v3465
      %v3467 = vrot.slane %v1648, 6
      %v3468 = vsel %vm3357, %v3465, %v3467
      %v3469 = vrot.slane %v1649, 6
      %v3470 = vsel %vm3357, %v3467, %v3469
      %v3471 = vrot.slane %v1650, 6
      %v3472 = vsel %vm3357, %v3469, %v3471
      %v3473 = vrot.slane %v1651, 6
      %v3474 = vsel %vm3357, %v3471, %v3473
      %v3475 = vrot.slane %v1652, 6
      %v3476 = vsel %vm3357, %v3473, %v3475
      %v3477 = vrot.slane %v1653, 6
      %v3478 = vsel %vm3357, %v3475, %v3477
      %v3479 = vrot.slane %v1654, 6
      %v3480 = vsel %vm3357, %v3477, %v3479
      %v3481 = vrot.slane %v1655, 6
      %v3482 = vsel %vm3357, %v3479, %v3481
      %v3546 = vrot.slane %v1592, 6
      %v3547 = vsel %vm3357, %v3546, %v3358
      %v3550 = vsel %vm3357, %v3481, %v3546
      %v3551 = vsel %vm3293, %v3360, %v3550
      %v3552 = vsel %vm3294, %v3362, %v3547
      %v3553 = vsel %vm3295, %v3364, %v3360
      %v3554 = vsel %vm3296, %v3366, %v3362
      %v3555 = vsel %vm3297, %v3368, %v3364
      %v3556 = vsel %vm3298, %v3370, %v3366
      %v3557 = vsel %vm3299, %v3372, %v3368
      %v3558 = vsel %vm3300, %v3374, %v3370
      %v3559 = vsel %vm3301, %v3376, %v3372
      %v3560 = vsel %vm3302, %v3378, %v3374
      %v3561 = vsel %vm3303, %v3380, %v3376
      %v3562 = vsel %vm3304, %v3382, %v3378
      %v3563 = vsel %vm3305, %v3384, %v3380
      %v3564 = vsel %vm3306, %v3386, %v3382
      %v3565 = vsel %vm3307, %v3388, %v3384
      %v3566 = vsel %vm3308, %v3390, %v3386
      %v3567 = vsel %vm3309, %v3392, %v3388
      %v3568 = vsel %vm3310, %v3394, %v3390
      %v3569 = vsel %vm3311, %v3396, %v3392
      %v3570 = vsel %vm3312, %v3398, %v3394
      %v3571 = vsel %vm3313, %v3400, %v3396
      %v3572 = vsel %vm3314, %v3402, %v3398
      %v3573 = vsel %vm3315, %v3404, %v3400
      %v3574 = vsel %vm3316, %v3406, %v3402
      %v3575 = vsel %vm3317, %v3408, %v3404
      %v3576 = vsel %vm3318, %v3410, %v3406
      %v3577 = vsel %vm3319, %v3412, %v3408
      %v3578 = vsel %vm3320, %v3414, %v3410
      %v3579 = vsel %vm3321, %v3416, %v3412
      %v3580 = vsel %vm3322, %v3418, %v3414
      %v3581 = vsel %vm3323, %v3420, %v3416
      %v3582 = vsel %vm3324, %v3422, %v3418
      %v3583 = vsel %vm3325, %v3424, %v3420
      %v3584 = vsel %vm3326, %v3426, %v3422
      %v3585 = vsel %vm3327, %v3428, %v3424
      %v3586 = vsel %vm3328, %v3430, %v3426
      %v3587 = vsel %vm3329, %v3432, %v3428
      %v3588 = vsel %vm3330, %v3434, %v3430
      %v3589 = vsel %vm3331, %v3436, %v3432
      %v3590 = vsel %vm3332, %v3438, %v3434
      %v3591 = vsel %vm3333, %v3440, %v3436
      %v3592 = vsel %vm3334, %v3442, %v3438
      %v3593 = vsel %vm3335, %v3444, %v3440
      %v3594 = vsel %vm3336, %v3446, %v3442
      %v3595 = vsel %vm3337, %v3448, %v3444
      %v3596 = vsel %vm3338, %v3450, %v3446
      %v3597 = vsel %vm3339, %v3452, %v3448
      %v3598 = vsel %vm3340, %v3454, %v3450
      %v3599 = vsel %vm3341, %v3456, %v3452
      %v3600 = vsel %vm3342, %v3458, %v3454
      %v3601 = vsel %vm3343, %v3460, %v3456
      %v3602 = vsel %vm3344, %v3462, %v3458
      %v3603 = vsel %vm3345, %v3464, %v3460
      %v3604 = vsel %vm3346, %v3466, %v3462
      %v3605 = vsel %vm3347, %v3468, %v3464
      %v3606 = vsel %vm3348, %v3470, %v3466
      %v3607 = vsel %vm3349, %v3472, %v3468
      %v3608 = vsel %vm3350, %v3474, %v3470
      %v3609 = vsel %vm3351, %v3476, %v3472
      %v3610 = vsel %vm3352, %v3478, %v3474
      %v3611 = vsel %vm3353, %v3480, %v3476
      %v3612 = vsel %vm3354, %v3482, %v3478
      %v3613 = vsel %vm3355, %v3550, %v3480
      %v3614 = vsel %vm3356, %v3547, %v3482
      %v3615 = vpack.c.bf16 %v3552, %v3551
      %v3616 = vpack.c.bf16 %v3554, %v3553
      %v3617 = vpack.c.bf16 %v3556, %v3555
      %v3618 = vpack.c.bf16 %v3558, %v3557
      %v3619 = vpack.c.bf16 %v3560, %v3559
      %v3620 = vpack.c.bf16 %v3562, %v3561
      %v3621 = vpack.c.bf16 %v3564, %v3563
      %v3622 = vpack.c.bf16 %v3566, %v3565
      %v3623 = vpack.c.bf16 %v3568, %v3567
      %v3624 = vpack.c.bf16 %v3570, %v3569
      %v3625 = vpack.c.bf16 %v3572, %v3571
      %v3626 = vpack.c.bf16 %v3574, %v3573
      %v3627 = vpack.c.bf16 %v3576, %v3575
      %v3628 = vpack.c.bf16 %v3578, %v3577
      %v3629 = vpack.c.bf16 %v3580, %v3579
      %v3630 = vpack.c.bf16 %v3582, %v3581
      %v3631 = vpack.c.bf16 %v3584, %v3583
      %v3632 = vpack.c.bf16 %v3586, %v3585
      %v3633 = vpack.c.bf16 %v3588, %v3587
      %v3634 = vpack.c.bf16 %v3590, %v3589
      %v3635 = vpack.c.bf16 %v3592, %v3591
      %v3636 = vpack.c.bf16 %v3594, %v3593
      %v3637 = vpack.c.bf16 %v3596, %v3595
      %v3638 = vpack.c.bf16 %v3598, %v3597
      %v3639 = vpack.c.bf16 %v3600, %v3599
      %v3640 = vpack.c.bf16 %v3602, %v3601
      %v3641 = vpack.c.bf16 %v3604, %v3603
      %v3642 = vpack.c.bf16 %v3606, %v3605
      %v3643 = vpack.c.bf16 %v3608, %v3607
      %v3644 = vpack.c.bf16 %v3610, %v3609
      %v3645 = vpack.c.bf16 %v3612, %v3611
      %v3646 = vpack.c.bf16 %v3614, %v3613
      %vm3647 = vcmp.ge.s32.totalorder %v2457, 14
      %vm3648 = vcmp.ge.s32.totalorder %v2458, 14
      %vm3649 = vcmp.ge.s32.totalorder %v2459, 14
      %vm3650 = vcmp.ge.s32.totalorder %v2460, 14
      %vm3651 = vcmp.ge.s32.totalorder %v2461, 14
      %vm3652 = vcmp.ge.s32.totalorder %v2462, 14
      %vm3653 = vcmp.ge.s32.totalorder %v2463, 14
      %vm3654 = vcmp.ge.s32.totalorder %v2464, 14
      %vm3655 = vcmp.ge.s32.totalorder %v2465, 14
      %vm3656 = vcmp.ge.s32.totalorder %v2466, 14
      %vm3657 = vcmp.ge.s32.totalorder %v2467, 14
      %vm3658 = vcmp.ge.s32.totalorder %v2468, 14
      %vm3659 = vcmp.ge.s32.totalorder %v2469, 14
      %vm3660 = vcmp.ge.s32.totalorder %v2470, 14
      %vm3661 = vcmp.ge.s32.totalorder %v2471, 14
      %vm3662 = vcmp.ge.s32.totalorder %v2472, 14
      %vm3663 = vcmp.ge.s32.totalorder %v2473, 14
      %vm3664 = vcmp.ge.s32.totalorder %v2474, 14
      %vm3665 = vcmp.ge.s32.totalorder %v2475, 14
      %vm3666 = vcmp.ge.s32.totalorder %v2476, 14
      %vm3667 = vcmp.ge.s32.totalorder %v2477, 14
      %vm3668 = vcmp.ge.s32.totalorder %v2478, 14
      %vm3669 = vcmp.ge.s32.totalorder %v2479, 14
      %vm3670 = vcmp.ge.s32.totalorder %v2480, 14
      %vm3671 = vcmp.ge.s32.totalorder %v2481, 14
      %vm3672 = vcmp.ge.s32.totalorder %v2482, 14
      %vm3673 = vcmp.ge.s32.totalorder %v2483, 14
      %vm3674 = vcmp.ge.s32.totalorder %v2484, 14
      %vm3675 = vcmp.ge.s32.totalorder %v2485, 14
      %vm3676 = vcmp.ge.s32.totalorder %v2486, 14
      %vm3677 = vcmp.ge.s32.totalorder %v2487, 14
      %vm3678 = vcmp.ge.s32.totalorder %v2488, 14
      %vm3679 = vcmp.ge.s32.totalorder %v2489, 14
      %vm3680 = vcmp.ge.s32.totalorder %v2490, 14
      %vm3681 = vcmp.ge.s32.totalorder %v2491, 14
      %vm3682 = vcmp.ge.s32.totalorder %v2492, 14
      %vm3683 = vcmp.ge.s32.totalorder %v2493, 14
      %vm3684 = vcmp.ge.s32.totalorder %v2494, 14
      %vm3685 = vcmp.ge.s32.totalorder %v2495, 14
      %vm3686 = vcmp.ge.s32.totalorder %v2496, 14
      %vm3687 = vcmp.ge.s32.totalorder %v2497, 14
      %vm3688 = vcmp.ge.s32.totalorder %v2498, 14
      %vm3689 = vcmp.ge.s32.totalorder %v2499, 14
      %vm3690 = vcmp.ge.s32.totalorder %v2500, 14
      %vm3691 = vcmp.ge.s32.totalorder %v2501, 14
      %vm3692 = vcmp.ge.s32.totalorder %v2502, 14
      %vm3693 = vcmp.ge.s32.totalorder %v2503, 14
      %vm3694 = vcmp.ge.s32.totalorder %v2504, 14
      %vm3695 = vcmp.ge.s32.totalorder %v2505, 14
      %vm3696 = vcmp.ge.s32.totalorder %v2506, 14
      %vm3697 = vcmp.ge.s32.totalorder %v2507, 14
      %vm3698 = vcmp.ge.s32.totalorder %v2508, 14
      %vm3699 = vcmp.ge.s32.totalorder %v2509, 14
      %vm3700 = vcmp.ge.s32.totalorder %v2510, 14
      %vm3701 = vcmp.ge.s32.totalorder %v2511, 14
      %vm3702 = vcmp.ge.s32.totalorder %v2512, 14
      %vm3703 = vcmp.ge.s32.totalorder %v2513, 14
      %vm3704 = vcmp.ge.s32.totalorder %v2514, 14
      %vm3705 = vcmp.ge.s32.totalorder %v2515, 14
      %vm3706 = vcmp.ge.s32.totalorder %v2516, 14
      %vm3707 = vcmp.ge.s32.totalorder %v2517, 14
      %vm3708 = vcmp.ge.s32.totalorder %v2518, 14
      %vm3709 = vcmp.ge.s32.totalorder %v2519, 14
      %vm3710 = vcmp.ge.s32.totalorder %v2520, 14
      %vm3711 = vcmask 1045504
      %v3712 = vrot.slane %v1654, 2
      %v3713 = vrot.slane %v1655, 2
      %v3714 = vsel %vm3711, %v3712, %v3713
      %v3717 = vrot.slane %v1592, 2
      %v3718 = vrot.slane %v1593, 2
      %v3719 = vsel %vm3711, %v3717, %v3718
      %v3720 = vrot.slane %v1594, 2
      %v3721 = vsel %vm3711, %v3718, %v3720
      %v3722 = vrot.slane %v1595, 2
      %v3723 = vsel %vm3711, %v3720, %v3722
      %v3724 = vrot.slane %v1596, 2
      %v3725 = vsel %vm3711, %v3722, %v3724
      %v3726 = vrot.slane %v1597, 2
      %v3727 = vsel %vm3711, %v3724, %v3726
      %v3728 = vrot.slane %v1598, 2
      %v3729 = vsel %vm3711, %v3726, %v3728
      %v3730 = vrot.slane %v1599, 2
      %v3731 = vsel %vm3711, %v3728, %v3730
      %v3732 = vrot.slane %v1600, 2
      %v3733 = vsel %vm3711, %v3730, %v3732
      %v3734 = vrot.slane %v1601, 2
      %v3735 = vsel %vm3711, %v3732, %v3734
      %v3736 = vrot.slane %v1602, 2
      %v3737 = vsel %vm3711, %v3734, %v3736
      %v3738 = vrot.slane %v1603, 2
      %v3739 = vsel %vm3711, %v3736, %v3738
      %v3740 = vrot.slane %v1604, 2
      %v3741 = vsel %vm3711, %v3738, %v3740
      %v3742 = vrot.slane %v1605, 2
      %v3743 = vsel %vm3711, %v3740, %v3742
      %v3744 = vrot.slane %v1606, 2
      %v3745 = vsel %vm3711, %v3742, %v3744
      %v3746 = vrot.slane %v1607, 2
      %v3747 = vsel %vm3711, %v3744, %v3746
      %v3748 = vrot.slane %v1608, 2
      %v3749 = vsel %vm3711, %v3746, %v3748
      %v3750 = vrot.slane %v1609, 2
      %v3751 = vsel %vm3711, %v3748, %v3750
      %v3752 = vrot.slane %v1610, 2
      %v3753 = vsel %vm3711, %v3750, %v3752
      %v3754 = vrot.slane %v1611, 2
      %v3755 = vsel %vm3711, %v3752, %v3754
      %v3756 = vrot.slane %v1612, 2
      %v3757 = vsel %vm3711, %v3754, %v3756
      %v3758 = vrot.slane %v1613, 2
      %v3759 = vsel %vm3711, %v3756, %v3758
      %v3760 = vrot.slane %v1614, 2
      %v3761 = vsel %vm3711, %v3758, %v3760
      %v3762 = vrot.slane %v1615, 2
      %v3763 = vsel %vm3711, %v3760, %v3762
      %v3764 = vrot.slane %v1616, 2
      %v3765 = vsel %vm3711, %v3762, %v3764
      %v3766 = vrot.slane %v1617, 2
      %v3767 = vsel %vm3711, %v3764, %v3766
      %v3768 = vrot.slane %v1618, 2
      %v3769 = vsel %vm3711, %v3766, %v3768
      %v3770 = vrot.slane %v1619, 2
      %v3771 = vsel %vm3711, %v3768, %v3770
      %v3772 = vrot.slane %v1620, 2
      %v3773 = vsel %vm3711, %v3770, %v3772
      %v3774 = vrot.slane %v1621, 2
      %v3775 = vsel %vm3711, %v3772, %v3774
      %v3776 = vrot.slane %v1622, 2
      %v3777 = vsel %vm3711, %v3774, %v3776
      %v3778 = vrot.slane %v1623, 2
      %v3779 = vsel %vm3711, %v3776, %v3778
      %v3780 = vrot.slane %v1624, 2
      %v3781 = vsel %vm3711, %v3778, %v3780
      %v3782 = vrot.slane %v1625, 2
      %v3783 = vsel %vm3711, %v3780, %v3782
      %v3784 = vrot.slane %v1626, 2
      %v3785 = vsel %vm3711, %v3782, %v3784
      %v3786 = vrot.slane %v1627, 2
      %v3787 = vsel %vm3711, %v3784, %v3786
      %v3788 = vrot.slane %v1628, 2
      %v3789 = vsel %vm3711, %v3786, %v3788
      %v3790 = vrot.slane %v1629, 2
      %v3791 = vsel %vm3711, %v3788, %v3790
      %v3792 = vrot.slane %v1630, 2
      %v3793 = vsel %vm3711, %v3790, %v3792
      %v3794 = vrot.slane %v1631, 2
      %v3795 = vsel %vm3711, %v3792, %v3794
      %v3796 = vrot.slane %v1632, 2
      %v3797 = vsel %vm3711, %v3794, %v3796
      %v3798 = vrot.slane %v1633, 2
      %v3799 = vsel %vm3711, %v3796, %v3798
      %v3800 = vrot.slane %v1634, 2
      %v3801 = vsel %vm3711, %v3798, %v3800
      %v3802 = vrot.slane %v1635, 2
      %v3803 = vsel %vm3711, %v3800, %v3802
      %v3804 = vrot.slane %v1636, 2
      %v3805 = vsel %vm3711, %v3802, %v3804
      %v3806 = vrot.slane %v1637, 2
      %v3807 = vsel %vm3711, %v3804, %v3806
      %v3808 = vrot.slane %v1638, 2
      %v3809 = vsel %vm3711, %v3806, %v3808
      %v3810 = vrot.slane %v1639, 2
      %v3811 = vsel %vm3711, %v3808, %v3810
      %v3812 = vrot.slane %v1640, 2
      %v3813 = vsel %vm3711, %v3810, %v3812
      %v3814 = vrot.slane %v1641, 2
      %v3815 = vsel %vm3711, %v3812, %v3814
      %v3816 = vrot.slane %v1642, 2
      %v3817 = vsel %vm3711, %v3814, %v3816
      %v3818 = vrot.slane %v1643, 2
      %v3819 = vsel %vm3711, %v3816, %v3818
      %v3820 = vrot.slane %v1644, 2
      %v3821 = vsel %vm3711, %v3818, %v3820
      %v3822 = vrot.slane %v1645, 2
      %v3823 = vsel %vm3711, %v3820, %v3822
      %v3824 = vrot.slane %v1646, 2
      %v3825 = vsel %vm3711, %v3822, %v3824
      %v3826 = vrot.slane %v1647, 2
      %v3827 = vsel %vm3711, %v3824, %v3826
      %v3828 = vrot.slane %v1648, 2
      %v3829 = vsel %vm3711, %v3826, %v3828
      %v3830 = vrot.slane %v1649, 2
      %v3831 = vsel %vm3711, %v3828, %v3830
      %v3832 = vrot.slane %v1650, 2
      %v3833 = vsel %vm3711, %v3830, %v3832
      %v3834 = vrot.slane %v1651, 2
      %v3835 = vsel %vm3711, %v3832, %v3834
      %v3836 = vrot.slane %v1652, 2
      %v3837 = vsel %vm3711, %v3834, %v3836
      %v3838 = vrot.slane %v1653, 2
      %v3839 = vsel %vm3711, %v3836, %v3838
      %v3840 = vsel %vm3711, %v3838, %v3712
      %v3904 = vsel %vm3711, %v3713, %v3717
      %v3905 = vsel %vm3647, %v3714, %v3719
      %v3906 = vsel %vm3648, %v3904, %v3721
      %v3907 = vsel %vm3649, %v3719, %v3723
      %v3908 = vsel %vm3650, %v3721, %v3725
      %v3909 = vsel %vm3651, %v3723, %v3727
      %v3910 = vsel %vm3652, %v3725, %v3729
      %v3911 = vsel %vm3653, %v3727, %v3731
      %v3912 = vsel %vm3654, %v3729, %v3733
      %v3913 = vsel %vm3655, %v3731, %v3735
      %v3914 = vsel %vm3656, %v3733, %v3737
      %v3915 = vsel %vm3657, %v3735, %v3739
      %v3916 = vsel %vm3658, %v3737, %v3741
      %v3917 = vsel %vm3659, %v3739, %v3743
      %v3918 = vsel %vm3660, %v3741, %v3745
      %v3919 = vsel %vm3661, %v3743, %v3747
      %v3920 = vsel %vm3662, %v3745, %v3749
      %v3921 = vsel %vm3663, %v3747, %v3751
      %v3922 = vsel %vm3664, %v3749, %v3753
      %v3923 = vsel %vm3665, %v3751, %v3755
      %v3924 = vsel %vm3666, %v3753, %v3757
      %v3925 = vsel %vm3667, %v3755, %v3759
      %v3926 = vsel %vm3668, %v3757, %v3761
      %v3927 = vsel %vm3669, %v3759, %v3763
      %v3928 = vsel %vm3670, %v3761, %v3765
      %v3929 = vsel %vm3671, %v3763, %v3767
      %v3930 = vsel %vm3672, %v3765, %v3769
      %v3931 = vsel %vm3673, %v3767, %v3771
      %v3932 = vsel %vm3674, %v3769, %v3773
      %v3933 = vsel %vm3675, %v3771, %v3775
      %v3934 = vsel %vm3676, %v3773, %v3777
      %v3935 = vsel %vm3677, %v3775, %v3779
      %v3936 = vsel %vm3678, %v3777, %v3781
      %v3937 = vsel %vm3679, %v3779, %v3783
      %v3938 = vsel %vm3680, %v3781, %v3785
      %v3939 = vsel %vm3681, %v3783, %v3787
      %v3940 = vsel %vm3682, %v3785, %v3789
      %v3941 = vsel %vm3683, %v3787, %v3791
      %v3942 = vsel %vm3684, %v3789, %v3793
      %v3943 = vsel %vm3685, %v3791, %v3795
      %v3944 = vsel %vm3686, %v3793, %v3797
      %v3945 = vsel %vm3687, %v3795, %v3799
      %v3946 = vsel %vm3688, %v3797, %v3801
      %v3947 = vsel %vm3689, %v3799, %v3803
      %v3948 = vsel %vm3690, %v3801, %v3805
      %v3949 = vsel %vm3691, %v3803, %v3807
      %v3950 = vsel %vm3692, %v3805, %v3809
      %v3951 = vsel %vm3693, %v3807, %v3811
      %v3952 = vsel %vm3694, %v3809, %v3813
      %v3953 = vsel %vm3695, %v3811, %v3815
      %v3954 = vsel %vm3696, %v3813, %v3817
      %v3955 = vsel %vm3697, %v3815, %v3819
      %v3956 = vsel %vm3698, %v3817, %v3821
      %v3957 = vsel %vm3699, %v3819, %v3823
      %v3958 = vsel %vm3700, %v3821, %v3825
      %v3959 = vsel %vm3701, %v3823, %v3827
      %v3960 = vsel %vm3702, %v3825, %v3829
      %v3961 = vsel %vm3703, %v3827, %v3831
      %v3962 = vsel %vm3704, %v3829, %v3833
      %v3963 = vsel %vm3705, %v3831, %v3835
      %v3964 = vsel %vm3706, %v3833, %v3837
      %v3965 = vsel %vm3707, %v3835, %v3839
      %v3966 = vsel %vm3708, %v3837, %v3840
      %v3967 = vsel %vm3709, %v3839, %v3714
      %v3968 = vsel %vm3710, %v3840, %v3904
      %v3969 = vpack.c.bf16 %v3906, %v3905
      %v3970 = vpack.c.bf16 %v3908, %v3907
      %v3971 = vpack.c.bf16 %v3910, %v3909
      %v3972 = vpack.c.bf16 %v3912, %v3911
      %v3973 = vpack.c.bf16 %v3914, %v3913
      %v3974 = vpack.c.bf16 %v3916, %v3915
      %v3975 = vpack.c.bf16 %v3918, %v3917
      %v3976 = vpack.c.bf16 %v3920, %v3919
      %v3977 = vpack.c.bf16 %v3922, %v3921
      %v3978 = vpack.c.bf16 %v3924, %v3923
      %v3979 = vpack.c.bf16 %v3926, %v3925
      %v3980 = vpack.c.bf16 %v3928, %v3927
      %v3981 = vpack.c.bf16 %v3930, %v3929
      %v3982 = vpack.c.bf16 %v3932, %v3931
      %v3983 = vpack.c.bf16 %v3934, %v3933
      %v3984 = vpack.c.bf16 %v3936, %v3935
      %v3985 = vpack.c.bf16 %v3938, %v3937
      %v3986 = vpack.c.bf16 %v3940, %v3939
      %v3987 = vpack.c.bf16 %v3942, %v3941
      %v3988 = vpack.c.bf16 %v3944, %v3943
      %v3989 = vpack.c.bf16 %v3946, %v3945
      %v3990 = vpack.c.bf16 %v3948, %v3947
      %v3991 = vpack.c.bf16 %v3950, %v3949
      %v3992 = vpack.c.bf16 %v3952, %v3951
      %v3993 = vpack.c.bf16 %v3954, %v3953
      %v3994 = vpack.c.bf16 %v3956, %v3955
      %v3995 = vpack.c.bf16 %v3958, %v3957
      %v3996 = vpack.c.bf16 %v3960, %v3959
      %v3997 = vpack.c.bf16 %v3962, %v3961
      %v3998 = vpack.c.bf16 %v3964, %v3963
      %v3999 = vpack.c.bf16 %v3966, %v3965
      %v4000 = vpack.c.bf16 %v3968, %v3967
      %4033 = vrot.lane.b32.xlu0 %v1656, 32
      %v4034 = vpop.permute.xlu0 %4033
      %4035 = vrot.lane.b32.xlu0 %v1657, 32
      %v4036 = vpop.permute.xlu0 %4035
      %4037 = vrot.lane.b32.xlu0 %v1658, 32
      %v4038 = vpop.permute.xlu0 %4037
      %4039 = vrot.lane.b32.xlu0 %v1659, 32
      %v4040 = vpop.permute.xlu0 %4039
      %4041 = vrot.lane.b32.xlu0 %v1660, 32
      %v4042 = vpop.permute.xlu0 %4041
      %4043 = vrot.lane.b32.xlu0 %v1661, 32
      %v4044 = vpop.permute.xlu0 %4043
      %4045 = vrot.lane.b32.xlu0 %v1662, 32
      %v4046 = vpop.permute.xlu0 %4045
      %4047 = vrot.lane.b32.xlu0 %v1663, 32
      %v4048 = vpop.permute.xlu0 %4047
      %4049 = vrot.lane.b32.xlu0 %v1664, 32
      %v4050 = vpop.permute.xlu0 %4049
      %4051 = vrot.lane.b32.xlu0 %v1665, 32
      %v4052 = vpop.permute.xlu0 %4051
      %4053 = vrot.lane.b32.xlu0 %v1666, 32
      %v4054 = vpop.permute.xlu0 %4053
      %4055 = vrot.lane.b32.xlu0 %v1667, 32
      %v4056 = vpop.permute.xlu0 %4055
      %4057 = vrot.lane.b32.xlu0 %v1668, 32
      %v4058 = vpop.permute.xlu0 %4057
      %4059 = vrot.lane.b32.xlu0 %v1669, 32
      %v4060 = vpop.permute.xlu0 %4059
      %4061 = vrot.lane.b32.xlu0 %v1670, 32
      %v4062 = vpop.permute.xlu0 %4061
      %4063 = vrot.lane.b32.xlu0 %v1671, 32
      %v4064 = vpop.permute.xlu0 %4063
      %4065 = vrot.lane.b32.xlu0 %v1672, 32
      %v4066 = vpop.permute.xlu0 %4065
      %4067 = vrot.lane.b32.xlu0 %v1673, 32
      %v4068 = vpop.permute.xlu0 %4067
      %4069 = vrot.lane.b32.xlu0 %v1674, 32
      %v4070 = vpop.permute.xlu0 %4069
      %4071 = vrot.lane.b32.xlu0 %v1675, 32
      %v4072 = vpop.permute.xlu0 %4071
      %4073 = vrot.lane.b32.xlu0 %v1676, 32
      %v4074 = vpop.permute.xlu0 %4073
      %4075 = vrot.lane.b32.xlu0 %v1677, 32
      %v4076 = vpop.permute.xlu0 %4075
      %4077 = vrot.lane.b32.xlu0 %v1678, 32
      %v4078 = vpop.permute.xlu0 %4077
      %4079 = vrot.lane.b32.xlu0 %v1679, 32
      %v4080 = vpop.permute.xlu0 %4079
      %4081 = vrot.lane.b32.xlu0 %v1680, 32
      %v4082 = vpop.permute.xlu0 %4081
      %4083 = vrot.lane.b32.xlu0 %v1681, 32
      %v4084 = vpop.permute.xlu0 %4083
      %4085 = vrot.lane.b32.xlu0 %v1682, 32
      %v4086 = vpop.permute.xlu0 %4085
      %4087 = vrot.lane.b32.xlu0 %v1683, 32
      %v4088 = vpop.permute.xlu0 %4087
      %4089 = vrot.lane.b32.xlu0 %v1684, 32
      %v4090 = vpop.permute.xlu0 %4089
      %4091 = vrot.lane.b32.xlu0 %v1685, 32
      %v4092 = vpop.permute.xlu0 %4091
      %4093 = vrot.lane.b32.xlu0 %v1686, 32
      %v4094 = vpop.permute.xlu0 %4093
      %4095 = vrot.lane.b32.xlu0 %v1687, 32
      %v4096 = vpop.permute.xlu0 %4095
      %4129 = vrot.lane.b32.xlu0 %v3261, 64
      %v4130 = vpop.permute.xlu0 %4129
      %4131 = vrot.lane.b32.xlu0 %v3262, 64
      %v4132 = vpop.permute.xlu0 %4131
      %4133 = vrot.lane.b32.xlu0 %v3263, 64
      %v4134 = vpop.permute.xlu0 %4133
      %4135 = vrot.lane.b32.xlu0 %v3264, 64
      %v4136 = vpop.permute.xlu0 %4135
      %4137 = vrot.lane.b32.xlu0 %v3265, 64
      %v4138 = vpop.permute.xlu0 %4137
      %4139 = vrot.lane.b32.xlu0 %v3266, 64
      %v4140 = vpop.permute.xlu0 %4139
      %4141 = vrot.lane.b32.xlu0 %v3267, 64
      %v4142 = vpop.permute.xlu0 %4141
      %4143 = vrot.lane.b32.xlu0 %v3268, 64
      %v4144 = vpop.permute.xlu0 %4143
      %4145 = vrot.lane.b32.xlu0 %v3269, 64
      %v4146 = vpop.permute.xlu0 %4145
      %4147 = vrot.lane.b32.xlu0 %v3270, 64
      %v4148 = vpop.permute.xlu0 %4147
      %4149 = vrot.lane.b32.xlu0 %v3271, 64
      %v4150 = vpop.permute.xlu0 %4149
      %4151 = vrot.lane.b32.xlu0 %v3272, 64
      %v4152 = vpop.permute.xlu0 %4151
      %4153 = vrot.lane.b32.xlu0 %v3273, 64
      %v4154 = vpop.permute.xlu0 %4153
      %4155 = vrot.lane.b32.xlu0 %v3274, 64
      %v4156 = vpop.permute.xlu0 %4155
      %4157 = vrot.lane.b32.xlu0 %v3275, 64
      %v4158 = vpop.permute.xlu0 %4157
      %4159 = vrot.lane.b32.xlu0 %v3276, 64
      %v4160 = vpop.permute.xlu0 %4159
      %4161 = vrot.lane.b32.xlu0 %v3277, 64
      %v4162 = vpop.permute.xlu0 %4161
      %4163 = vrot.lane.b32.xlu0 %v3278, 64
      %v4164 = vpop.permute.xlu0 %4163
      %4165 = vrot.lane.b32.xlu0 %v3279, 64
      %v4166 = vpop.permute.xlu0 %4165
      %4167 = vrot.lane.b32.xlu0 %v3280, 64
      %v4168 = vpop.permute.xlu0 %4167
      %4169 = vrot.lane.b32.xlu0 %v3281, 64
      %v4170 = vpop.permute.xlu0 %4169
      %4171 = vrot.lane.b32.xlu0 %v3282, 64
      %v4172 = vpop.permute.xlu0 %4171
      %4173 = vrot.lane.b32.xlu0 %v3283, 64
      %v4174 = vpop.permute.xlu0 %4173
      %4175 = vrot.lane.b32.xlu0 %v3284, 64
      %v4176 = vpop.permute.xlu0 %4175
      %4177 = vrot.lane.b32.xlu0 %v3285, 64
      %v4178 = vpop.permute.xlu0 %4177
      %4179 = vrot.lane.b32.xlu0 %v3286, 64
      %v4180 = vpop.permute.xlu0 %4179
      %4181 = vrot.lane.b32.xlu0 %v3287, 64
      %v4182 = vpop.permute.xlu0 %4181
      %4183 = vrot.lane.b32.xlu0 %v3288, 64
      %v4184 = vpop.permute.xlu0 %4183
      %4185 = vrot.lane.b32.xlu0 %v3289, 64
      %v4186 = vpop.permute.xlu0 %4185
      %4187 = vrot.lane.b32.xlu0 %v3290, 64
      %v4188 = vpop.permute.xlu0 %4187
      %4189 = vrot.lane.b32.xlu0 %v3291, 64
      %v4190 = vpop.permute.xlu0 %4189
      %4191 = vrot.lane.b32.xlu0 %v3292, 64
      %v4192 = vpop.permute.xlu0 %4191
      %4225 = vrot.lane.b32.xlu0 %v3615, 64
      %v4226 = vpop.permute.xlu0 %4225
      %4227 = vrot.lane.b32.xlu0 %v3616, 64
      %v4228 = vpop.permute.xlu0 %4227
      %4229 = vrot.lane.b32.xlu0 %v3617, 64
      %v4230 = vpop.permute.xlu0 %4229
      %4231 = vrot.lane.b32.xlu0 %v3618, 64
      %v4232 = vpop.permute.xlu0 %4231
      %4233 = vrot.lane.b32.xlu0 %v3619, 64
      %v4234 = vpop.permute.xlu0 %4233
      %4235 = vrot.lane.b32.xlu0 %v3620, 64
      %v4236 = vpop.permute.xlu0 %4235
      %4237 = vrot.lane.b32.xlu0 %v3621, 64
      %v4238 = vpop.permute.xlu0 %4237
      %4239 = vrot.lane.b32.xlu0 %v3622, 64
      %v4240 = vpop.permute.xlu0 %4239
      %4241 = vrot.lane.b32.xlu0 %v3623, 64
      %v4242 = vpop.permute.xlu0 %4241
      %4243 = vrot.lane.b32.xlu0 %v3624, 64
      %v4244 = vpop.permute.xlu0 %4243
      %4245 = vrot.lane.b32.xlu0 %v3625, 64
      %v4246 = vpop.permute.xlu0 %4245
      %4247 = vrot.lane.b32.xlu0 %v3626, 64
      %v4248 = vpop.permute.xlu0 %4247
      %4249 = vrot.lane.b32.xlu0 %v3627, 64
      %v4250 = vpop.permute.xlu0 %4249
      %4251 = vrot.lane.b32.xlu0 %v3628, 64
      %v4252 = vpop.permute.xlu0 %4251
      %4253 = vrot.lane.b32.xlu0 %v3629, 64
      %v4254 = vpop.permute.xlu0 %4253
      %4255 = vrot.lane.b32.xlu0 %v3630, 64
      %v4256 = vpop.permute.xlu0 %4255
      %4257 = vrot.lane.b32.xlu0 %v3631, 64
      %v4258 = vpop.permute.xlu0 %4257
      %4259 = vrot.lane.b32.xlu0 %v3632, 64
      %v4260 = vpop.permute.xlu0 %4259
      %4261 = vrot.lane.b32.xlu0 %v3633, 64
      %v4262 = vpop.permute.xlu0 %4261
      %4263 = vrot.lane.b32.xlu0 %v3634, 64
      %v4264 = vpop.permute.xlu0 %4263
      %4265 = vrot.lane.b32.xlu0 %v3635, 64
      %v4266 = vpop.permute.xlu0 %4265
      %4267 = vrot.lane.b32.xlu0 %v3636, 64
      %v4268 = vpop.permute.xlu0 %4267
      %4269 = vrot.lane.b32.xlu0 %v3637, 64
      %v4270 = vpop.permute.xlu0 %4269
      %4271 = vrot.lane.b32.xlu0 %v3638, 64
      %v4272 = vpop.permute.xlu0 %4271
      %4273 = vrot.lane.b32.xlu0 %v3639, 64
      %v4274 = vpop.permute.xlu0 %4273
      %4275 = vrot.lane.b32.xlu0 %v3640, 64
      %v4276 = vpop.permute.xlu0 %4275
      %4277 = vrot.lane.b32.xlu0 %v3641, 64
      %v4278 = vpop.permute.xlu0 %4277
      %4279 = vrot.lane.b32.xlu0 %v3642, 64
      %v4280 = vpop.permute.xlu0 %4279
      %4281 = vrot.lane.b32.xlu0 %v3643, 64
      %v4282 = vpop.permute.xlu0 %4281
      %4283 = vrot.lane.b32.xlu0 %v3644, 64
      %v4284 = vpop.permute.xlu0 %4283
      %4285 = vrot.lane.b32.xlu0 %v3645, 64
      %v4286 = vpop.permute.xlu0 %4285
      %4287 = vrot.lane.b32.xlu0 %v3646, 64
      %v4288 = vpop.permute.xlu0 %4287
      %4289 = vrot.lane.b32.xlu0 %v1656, 96
      %v4290 = vpop.permute.xlu0 %4289
      %4291 = vrot.lane.b32.xlu0 %v1657, 96
      %v4292 = vpop.permute.xlu0 %4291
      %4293 = vrot.lane.b32.xlu0 %v1658, 96
      %v4294 = vpop.permute.xlu0 %4293
      %4295 = vrot.lane.b32.xlu0 %v1659, 96
      %v4296 = vpop.permute.xlu0 %4295
      %4297 = vrot.lane.b32.xlu0 %v1660, 96
      %v4298 = vpop.permute.xlu0 %4297
      %4299 = vrot.lane.b32.xlu0 %v1661, 96
      %v4300 = vpop.permute.xlu0 %4299
      %4301 = vrot.lane.b32.xlu0 %v1662, 96
      %v4302 = vpop.permute.xlu0 %4301
      %4303 = vrot.lane.b32.xlu0 %v1663, 96
      %v4304 = vpop.permute.xlu0 %4303
      %4305 = vrot.lane.b32.xlu0 %v1664, 96
      %v4306 = vpop.permute.xlu0 %4305
      %4307 = vrot.lane.b32.xlu0 %v1665, 96
      %v4308 = vpop.permute.xlu0 %4307
      %4309 = vrot.lane.b32.xlu0 %v1666, 96
      %v4310 = vpop.permute.xlu0 %4309
      %4311 = vrot.lane.b32.xlu0 %v1667, 96
      %v4312 = vpop.permute.xlu0 %4311
      %4313 = vrot.lane.b32.xlu0 %v1668, 96
      %v4314 = vpop.permute.xlu0 %4313
      %4315 = vrot.lane.b32.xlu0 %v1669, 96
      %v4316 = vpop.permute.xlu0 %4315
      %4317 = vrot.lane.b32.xlu0 %v1670, 96
      %v4318 = vpop.permute.xlu0 %4317
      %4319 = vrot.lane.b32.xlu0 %v1671, 96
      %v4320 = vpop.permute.xlu0 %4319
      %4321 = vrot.lane.b32.xlu0 %v1672, 96
      %v4322 = vpop.permute.xlu0 %4321
      %4323 = vrot.lane.b32.xlu0 %v1673, 96
      %v4324 = vpop.permute.xlu0 %4323
      %4325 = vrot.lane.b32.xlu0 %v1674, 96
      %v4326 = vpop.permute.xlu0 %4325
      %4327 = vrot.lane.b32.xlu0 %v1675, 96
      %v4328 = vpop.permute.xlu0 %4327
      %4329 = vrot.lane.b32.xlu0 %v1676, 96
      %v4330 = vpop.permute.xlu0 %4329
      %4331 = vrot.lane.b32.xlu0 %v1677, 96
      %v4332 = vpop.permute.xlu0 %4331
      %4333 = vrot.lane.b32.xlu0 %v1678, 96
      %v4334 = vpop.permute.xlu0 %4333
      %4335 = vrot.lane.b32.xlu0 %v1679, 96
      %v4336 = vpop.permute.xlu0 %4335
      %4337 = vrot.lane.b32.xlu0 %v1680, 96
      %v4338 = vpop.permute.xlu0 %4337
      %4339 = vrot.lane.b32.xlu0 %v1681, 96
      %v4340 = vpop.permute.xlu0 %4339
      %4341 = vrot.lane.b32.xlu0 %v1682, 96
      %v4342 = vpop.permute.xlu0 %4341
      %4343 = vrot.lane.b32.xlu0 %v1683, 96
      %v4344 = vpop.permute.xlu0 %4343
      %4345 = vrot.lane.b32.xlu0 %v1684, 96
      %v4346 = vpop.permute.xlu0 %4345
      %4347 = vrot.lane.b32.xlu0 %v1685, 96
      %v4348 = vpop.permute.xlu0 %4347
      %4349 = vrot.lane.b32.xlu0 %v1686, 96
      %v4350 = vpop.permute.xlu0 %4349
      %4351 = vrot.lane.b32.xlu0 %v1687, 96
      %v4352 = vpop.permute.xlu0 %4351
      %vm4353 = vcmask 261120
      %v4356 = vsel %vm4353, %v1656, %v2907
      %v4359 = vsel %vm4353, %v1657, %v2908
      %v4362 = vsel %vm4353, %v1658, %v2909
      %v4365 = vsel %vm4353, %v1659, %v2910
      %v4368 = vsel %vm4353, %v1660, %v2911
      %v4371 = vsel %vm4353, %v1661, %v2912
      %v4374 = vsel %vm4353, %v1662, %v2913
      %v4377 = vsel %vm4353, %v1663, %v2914
      %v4380 = vsel %vm4353, %v1664, %v2915
      %v4383 = vsel %vm4353, %v1665, %v2916
      %v4386 = vsel %vm4353, %v1666, %v2917
      %v4389 = vsel %vm4353, %v1667, %v2918
      %v4392 = vsel %vm4353, %v1668, %v2919
      %v4395 = vsel %vm4353, %v1669, %v2920
      %v4398 = vsel %vm4353, %v1670, %v2921
      %v4401 = vsel %vm4353, %v1671, %v2922
      %v4404 = vsel %vm4353, %v1672, %v2923
      %v4407 = vsel %vm4353, %v1673, %v2924
      %v4410 = vsel %vm4353, %v1674, %v2925
      %v4413 = vsel %vm4353, %v1675, %v2926
      %v4416 = vsel %vm4353, %v1676, %v2927
      %v4419 = vsel %vm4353, %v1677, %v2928
      %v4422 = vsel %vm4353, %v1678, %v2929
      %v4425 = vsel %vm4353, %v1679, %v2930
      %v4428 = vsel %vm4353, %v1680, %v2931
      %v4431 = vsel %vm4353, %v1681, %v2932
      %v4434 = vsel %vm4353, %v1682, %v2933
      %v4437 = vsel %vm4353, %v1683, %v2934
      %v4440 = vsel %vm4353, %v1684, %v2935
      %v4443 = vsel %vm4353, %v1685, %v2936
      %v4446 = vsel %vm4353, %v1686, %v2937
      %v4449 = vsel %vm4353, %v1687, %v2938
      %vm4450 = vcmask 523264
      %v4452 = vsel %vm4450, %v4356, %v4034
      %v4454 = vsel %vm4450, %v4359, %v4036
      %v4456 = vsel %vm4450, %v4362, %v4038
      %v4458 = vsel %vm4450, %v4365, %v4040
      %v4460 = vsel %vm4450, %v4368, %v4042
      %v4462 = vsel %vm4450, %v4371, %v4044
      %v4464 = vsel %vm4450, %v4374, %v4046
      %v4466 = vsel %vm4450, %v4377, %v4048
      %v4468 = vsel %vm4450, %v4380, %v4050
      %v4470 = vsel %vm4450, %v4383, %v4052
      %v4472 = vsel %vm4450, %v4386, %v4054
      %v4474 = vsel %vm4450, %v4389, %v4056
      %v4476 = vsel %vm4450, %v4392, %v4058
      %v4478 = vsel %vm4450, %v4395, %v4060
      %v4480 = vsel %vm4450, %v4398, %v4062
      %v4482 = vsel %vm4450, %v4401, %v4064
      %v4484 = vsel %vm4450, %v4404, %v4066
      %v4486 = vsel %vm4450, %v4407, %v4068
      %v4488 = vsel %vm4450, %v4410, %v4070
      %v4490 = vsel %vm4450, %v4413, %v4072
      %v4492 = vsel %vm4450, %v4416, %v4074
      %v4494 = vsel %vm4450, %v4419, %v4076
      %v4496 = vsel %vm4450, %v4422, %v4078
      %v4498 = vsel %vm4450, %v4425, %v4080
      %v4500 = vsel %vm4450, %v4428, %v4082
      %v4502 = vsel %vm4450, %v4431, %v4084
      %v4504 = vsel %vm4450, %v4434, %v4086
      %v4506 = vsel %vm4450, %v4437, %v4088
      %v4508 = vsel %vm4450, %v4440, %v4090
      %v4510 = vsel %vm4450, %v4443, %v4092
      %v4512 = vsel %vm4450, %v4446, %v4094
      %v4514 = vsel %vm4450, %v4449, %v4096
      %vm4515 = vcmask 785408
      %v4517 = vsel %vm4515, %v4452, %v4130
      %v4520 = vsel %vm4515, %v4454, %v4132
      %v4523 = vsel %vm4515, %v4456, %v4134
      %v4526 = vsel %vm4515, %v4458, %v4136
      %v4529 = vsel %vm4515, %v4460, %v4138
      %v4532 = vsel %vm4515, %v4462, %v4140
      %v4535 = vsel %vm4515, %v4464, %v4142
      %v4538 = vsel %vm4515, %v4466, %v4144
      %v4541 = vsel %vm4515, %v4468, %v4146
      %v4544 = vsel %vm4515, %v4470, %v4148
      %v4547 = vsel %vm4515, %v4472, %v4150
      %v4550 = vsel %vm4515, %v4474, %v4152
      %v4553 = vsel %vm4515, %v4476, %v4154
      %v4556 = vsel %vm4515, %v4478, %v4156
      %v4559 = vsel %vm4515, %v4480, %v4158
      %v4562 = vsel %vm4515, %v4482, %v4160
      %v4565 = vsel %vm4515, %v4484, %v4162
      %v4568 = vsel %vm4515, %v4486, %v4164
      %v4571 = vsel %vm4515, %v4488, %v4166
      %v4574 = vsel %vm4515, %v4490, %v4168
      %v4577 = vsel %vm4515, %v4492, %v4170
      %v4580 = vsel %vm4515, %v4494, %v4172
      %v4583 = vsel %vm4515, %v4496, %v4174
      %v4586 = vsel %vm4515, %v4498, %v4176
      %v4589 = vsel %vm4515, %v4500, %v4178
      %v4592 = vsel %vm4515, %v4502, %v4180
      %v4595 = vsel %vm4515, %v4504, %v4182
      %v4598 = vsel %vm4515, %v4506, %v4184
      %v4601 = vsel %vm4515, %v4508, %v4186
      %v4604 = vsel %vm4515, %v4510, %v4188
      %v4607 = vsel %vm4515, %v4512, %v4190
      %v4610 = vsel %vm4515, %v4514, %v4192
      %v4614 = vsel %vm4353, %v4226, %v4290
      %v4617 = vsel %vm4353, %v4228, %v4292
      %v4620 = vsel %vm4353, %v4230, %v4294
      %v4623 = vsel %vm4353, %v4232, %v4296
      %v4626 = vsel %vm4353, %v4234, %v4298
      %v4629 = vsel %vm4353, %v4236, %v4300
      %v4632 = vsel %vm4353, %v4238, %v4302
      %v4635 = vsel %vm4353, %v4240, %v4304
      %v4638 = vsel %vm4353, %v4242, %v4306
      %v4641 = vsel %vm4353, %v4244, %v4308
      %v4644 = vsel %vm4353, %v4246, %v4310
      %v4647 = vsel %vm4353, %v4248, %v4312
      %v4650 = vsel %vm4353, %v4250, %v4314
      %v4653 = vsel %vm4353, %v4252, %v4316
      %v4656 = vsel %vm4353, %v4254, %v4318
      %v4659 = vsel %vm4353, %v4256, %v4320
      %v4662 = vsel %vm4353, %v4258, %v4322
      %v4665 = vsel %vm4353, %v4260, %v4324
      %v4668 = vsel %vm4353, %v4262, %v4326
      %v4671 = vsel %vm4353, %v4264, %v4328
      %v4674 = vsel %vm4353, %v4266, %v4330
      %v4677 = vsel %vm4353, %v4268, %v4332
      %v4680 = vsel %vm4353, %v4270, %v4334
      %v4683 = vsel %vm4353, %v4272, %v4336
      %v4686 = vsel %vm4353, %v4274, %v4338
      %v4689 = vsel %vm4353, %v4276, %v4340
      %v4692 = vsel %vm4353, %v4278, %v4342
      %v4695 = vsel %vm4353, %v4280, %v4344
      %v4698 = vsel %vm4353, %v4282, %v4346
      %v4701 = vsel %vm4353, %v4284, %v4348
      %v4704 = vsel %vm4353, %v4286, %v4350
      %v4707 = vsel %vm4353, %v4288, %v4352
      %v4709 = vsel %vm4450, %v4614, %v3969
      %v4711 = vsel %vm4450, %v4617, %v3970
      %v4713 = vsel %vm4450, %v4620, %v3971
      %v4715 = vsel %vm4450, %v4623, %v3972
      %v4717 = vsel %vm4450, %v4626, %v3973
      %v4719 = vsel %vm4450, %v4629, %v3974
      %v4721 = vsel %vm4450, %v4632, %v3975
      %v4723 = vsel %vm4450, %v4635, %v3976
      %v4725 = vsel %vm4450, %v4638, %v3977
      %v4727 = vsel %vm4450, %v4641, %v3978
      %v4729 = vsel %vm4450, %v4644, %v3979
      %v4731 = vsel %vm4450, %v4647, %v3980
      %v4733 = vsel %vm4450, %v4650, %v3981
      %v4735 = vsel %vm4450, %v4653, %v3982
      %v4737 = vsel %vm4450, %v4656, %v3983
      %v4739 = vsel %vm4450, %v4659, %v3984
      %v4741 = vsel %vm4450, %v4662, %v3985
      %v4743 = vsel %vm4450, %v4665, %v3986
      %v4745 = vsel %vm4450, %v4668, %v3987
      %v4747 = vsel %vm4450, %v4671, %v3988
      %v4749 = vsel %vm4450, %v4674, %v3989
      %v4751 = vsel %vm4450, %v4677, %v3990
      %v4753 = vsel %vm4450, %v4680, %v3991
      %v4755 = vsel %vm4450, %v4683, %v3992
      %v4757 = vsel %vm4450, %v4686, %v3993
      %v4759 = vsel %vm4450, %v4689, %v3994
      %v4761 = vsel %vm4450, %v4692, %v3995
      %v4763 = vsel %vm4450, %v4695, %v3996
      %v4765 = vsel %vm4450, %v4698, %v3997
      %v4767 = vsel %vm4450, %v4701, %v3998
      %v4769 = vsel %vm4450, %v4704, %v3999
      %v4771 = vsel %vm4450, %v4707, %v4000
      %v4772 = vlaneseq
      %v4773 = vshrl.u32 %v4772, 7
      %v4774 = vsub.s32 1, %v4773
      %v4775 = vrot.slane %v266, %v4774
      %v4804 = vunpack.c.l.b16 %v226
      %v4805 = vunpack.c.l.b16 %v227
      %v4806 = vunpack.c.l.b16 %v228
      %v4807 = vunpack.c.l.b16 %v229
      %v4808 = vunpack.c.l.b16 %v230
      %v4809 = vunpack.c.l.b16 %v231
      %v4810 = vunpack.c.l.b16 %v232
      %v4811 = vunpack.c.l.b16 %v233
      %v4812 = vunpack.c.l.b16 %v234
      %v4813 = vunpack.c.l.b16 %v235
      %v4814 = vunpack.c.l.b16 %v236
      %v4815 = vunpack.c.l.b16 %v237
      %v4816 = vunpack.c.l.b16 %v238
      %v4817 = vunpack.c.l.b16 %v239
      %v4818 = vunpack.c.l.b16 %v240
      %v4819 = vunpack.c.l.b16 %v241
      %v4820 = vunpack.c.l.b16 %v242
      %v4821 = vunpack.c.l.b16 %v243
      %v4822 = vunpack.c.l.b16 %v244
      %v4823 = vunpack.c.l.b16 %v245
      %v4824 = vunpack.c.l.b16 %v246
      %v4825 = vunpack.c.l.b16 %v247
      %v4826 = vunpack.c.l.b16 %v248
      %v4827 = vunpack.c.l.b16 %v249
      %v4828 = vunpack.c.l.b16 %v250
      %v4829 = vunpack.c.l.b16 %v251
      %v4830 = vunpack.c.l.b16 %v252
      %v4831 = vunpack.c.l.b16 %v253
      %v4832 = vpack.c.b16 %v4805, %v4804
      %v4833 = vpack.c.b16 %v4807, %v4806
      %v4834 = vpack.c.b16 %v4809, %v4808
      %v4835 = vpack.c.b16 %v4811, %v4810
      %v4836 = vpack.c.b16 %v4813, %v4812
      %v4837 = vpack.c.b16 %v4815, %v4814
      %v4838 = vpack.c.b16 %v4817, %v4816
      %v4839 = vpack.c.b16 %v4819, %v4818
      %v4840 = vpack.c.b16 %v4821, %v4820
      %v4841 = vpack.c.b16 %v4823, %v4822
      %v4842 = vpack.c.b16 %v4825, %v4824
      %v4843 = vpack.c.b16 %v4827, %v4826
      %v4844 = vpack.c.b16 %v4829, %v4828
      %v4845 = vpack.c.b16 %v4831, %v4830
      %v4860 = vsel %vm4515, %v4709, 0
      %v4862 = vsel %vm4515, %v4711, 0
      %v4864 = vsel %vm4515, %v4713, 0
      %v4866 = vsel %vm4515, %v4715, 0
      %v4868 = vsel %vm4515, %v4717, 0
      %v4870 = vsel %vm4515, %v4719, 0
      %v4872 = vsel %vm4515, %v4721, 0
      %v4874 = vsel %vm4515, %v4723, 0
      %v4876 = vsel %vm4515, %v4725, 0
      %v4878 = vsel %vm4515, %v4727, 0
      %v4880 = vsel %vm4515, %v4729, 0
      %v4882 = vsel %vm4515, %v4731, 0
      %v4884 = vsel %vm4515, %v4733, 0
      %v4886 = vsel %vm4515, %v4735, 0
      %v4888 = vsel %vm4515, %v4737, 0
      %v4890 = vsel %vm4515, %v4739, 0
      %v4892 = vsel %vm4515, %v4741, 0
      %v4894 = vsel %vm4515, %v4743, 0
      %v4896 = vsel %vm4515, %v4745, 0
      %v4898 = vsel %vm4515, %v4747, 0
      %v4900 = vsel %vm4515, %v4749, 0
      %v4902 = vsel %vm4515, %v4751, 0
      %v4904 = vsel %vm4515, %v4753, 0
      %v4906 = vsel %vm4515, %v4755, 0
      %v4908 = vsel %vm4515, %v4757, 0
      %v4910 = vsel %vm4515, %v4759, 0
      %v4912 = vsel %vm4515, %v4761, 0
      %v4914 = vsel %vm4515, %v4763, 0
      %v4916 = vsel %vm4515, %v4765, 0
      %v4918 = vsel %vm4515, %v4767, 0
      %v4920 = vsel %vm4515, %v4769, 0
      %v4922 = vsel %vm4515, %v4771, 0
      %4924 = vmatprep.subr.bf16.mxu0 0
      %4925 = vmatpush1.bf16.msra.mxu0 %v4832
      %4926 = vmatprep.subr.bf16.mxu0 0
      %4927 = vmatpush1.bf16.msra.mxu0 %v4833
      %4928 = vmatprep.subr.bf16.mxu0 0
      %4929 = vmatpush1.bf16.msra.mxu0 %v4834
      %4930 = vmatprep.subr.bf16.mxu0 0
      %4931 = vmatpush1.bf16.msra.mxu0 %v4835
      %4932 = vmatprep.subr.bf16.mxu0 0
      %4933 = vmatpush1.bf16.msra.mxu0 %v4836
      %4934 = vmatprep.subr.bf16.mxu0 0
      %4935 = vmatpush1.bf16.msra.mxu0 %v4837
      %4936 = vmatprep.subr.bf16.mxu0 0
      %4937 = vmatpush1.bf16.msra.mxu0 %v4838
      %4938 = vmatprep.subr.bf16.mxu0 0
      %4939 = vmatpush1.bf16.msra.mxu0 %v4839
      %4940 = vmatprep.subr.bf16.mxu0 0
      %4941 = vmatpush1.bf16.msra.mxu0 %v4840
      %4942 = vmatprep.subr.bf16.mxu0 0
      %4943 = vmatpush1.bf16.msra.mxu0 %v4841
      %4944 = vmatprep.subr.bf16.mxu0 0
      %4945 = vmatpush1.bf16.msra.mxu0 %v4842
      %4946 = vmatprep.subr.bf16.mxu0 0
      %4947 = vmatpush1.bf16.msra.mxu0 %v4843
      %4948 = vmatprep.subr.bf16.mxu0 0
      %4949 = vmatpush1.bf16.msra.mxu0 %v4844
      %4950 = vmatprep.subr.bf16.mxu0 0
      %4951 = vmatpush1.bf16.msra.mxu0 %v4845
      %4952 = vmatprep.subr.bf16.mxu0 0
      %4953 = vmatpush1.bf16.msra.mxu0 0
      %4954 = vmatprep.subr.bf16.mxu0 0
      %4955 = vmatpush1.bf16.msra.mxu0 0
      %4956 = vmatprep.mubr.bf16.mxu0 %v4860
      %4957 = vmatmul.mubr.bf16.gmra.mrb[0].mxu0 %v4517
      %v4958 = vpop.f32.mrb[0].mxu0
      %v4959 = vadd.f32 %v4775, %v4958
      %v4960 = vpop.f32.mrb[0].mxu0
      %v4961 = vpop.f32.mrb[0].mxu0
      %v4962 = vadd.f32 %v4775, %v4961
      %v4963 = vpop.f32.mrb[0].mxu0
      %4964 = vmatprep.mubr.bf16.mxu0 %v4862
      %4965 = vmatmul.mubr.bf16.gmra.mrb[0].mxu0 %v4520
      %v4966 = vpop.f32.mrb[0].mxu0
      %v4967 = vadd.f32 %v4775, %v4966
      %v4968 = vpop.f32.mrb[0].mxu0
      %v4969 = vpop.f32.mrb[0].mxu0
      %v4970 = vadd.f32 %v4775, %v4969
      %v4971 = vpop.f32.mrb[0].mxu0
      %4972 = vmatprep.mubr.bf16.mxu0 %v4864
      %4973 = vmatmul.mubr.bf16.gmra.mrb[0].mxu0 %v4523
      %v4974 = vpop.f32.mrb[0].mxu0
      %v4975 = vadd.f32 %v4775, %v4974
      %v4976 = vpop.f32.mrb[0].mxu0
      %v4977 = vpop.f32.mrb[0].mxu0
      %v4978 = vadd.f32 %v4775, %v4977
      %v4979 = vpop.f32.mrb[0].mxu0
      %4980 = vmatprep.mubr.bf16.mxu0 %v4866
      %4981 = vmatmul.mubr.bf16.gmra.mrb[0].mxu0 %v4526
      %v4982 = vpop.f32.mrb[0].mxu0
      %v4983 = vadd.f32 %v4775, %v4982
      %v4984 = vpop.f32.mrb[0].mxu0
      %v4985 = vpop.f32.mrb[0].mxu0
      %v4986 = vadd.f32 %v4775, %v4985
      %v4987 = vpop.f32.mrb[0].mxu0
      %4988 = vmatprep.mubr.bf16.mxu0 %v4868
      %4989 = vmatmul.mubr.bf16.gmra.mrb[0].mxu0 %v4529
      %v4990 = vpop.f32.mrb[0].mxu0
      %v4991 = vadd.f32 %v4775, %v4990
      %v4992 = vpop.f32.mrb[0].mxu0
      %v4993 = vpop.f32.mrb[0].mxu0
      %v4994 = vadd.f32 %v4775, %v4993
      %v4995 = vpop.f32.mrb[0].mxu0
      %4996 = vmatprep.mubr.bf16.mxu0 %v4870
      %4997 = vmatmul.mubr.bf16.gmra.mrb[0].mxu0 %v4532
      %v4998 = vpop.f32.mrb[0].mxu0
      %v4999 = vadd.f32 %v4775, %v4998
      %v5000 = vpop.f32.mrb[0].mxu0
      %v5001 = vpop.f32.mrb[0].mxu0
      %v5002 = vadd.f32 %v4775, %v5001
      %v5003 = vpop.f32.mrb[0].mxu0
      %5004 = vmatprep.mubr.bf16.mxu0 %v4872
      %5005 = vmatmul.mubr.bf16.gmra.mrb[0].mxu0 %v4535
      %v5006 = vpop.f32.mrb[0].mxu0
      %v5007 = vadd.f32 %v4775, %v5006
      %v5008 = vpop.f32.mrb[0].mxu0
      %v5009 = vpop.f32.mrb[0].mxu0
      %v5010 = vadd.f32 %v4775, %v5009
      %v5011 = vpop.f32.mrb[0].mxu0
      %5012 = vmatprep.mubr.bf16.mxu0 %v4874
      %5013 = vmatmul.mubr.bf16.gmra.mrb[0].mxu0 %v4538
      %v5014 = vpop.f32.mrb[0].mxu0
      %v5015 = vadd.f32 %v4775, %v5014
      %v5016 = vpop.f32.mrb[0].mxu0
      %v5017 = vpop.f32.mrb[0].mxu0
      %v5018 = vadd.f32 %v4775, %v5017
      %v5019 = vpop.f32.mrb[0].mxu0
      %5020 = vmatprep.mubr.bf16.mxu0 %v4876
      %5021 = vmatmul.mubr.bf16.gmra.mrb[0].mxu0 %v4541
      %v5022 = vpop.f32.mrb[0].mxu0
      %v5023 = vadd.f32 %v4775, %v5022
      %v5024 = vpop.f32.mrb[0].mxu0
      %v5025 = vpop.f32.mrb[0].mxu0
      %v5026 = vadd.f32 %v4775, %v5025
      %v5027 = vpop.f32.mrb[0].mxu0
      %5028 = vmatprep.mubr.bf16.mxu0 %v4878
      %5029 = vmatmul.mubr.bf16.gmra.mrb[0].mxu0 %v4544
      %v5030 = vpop.f32.mrb[0].mxu0
      %v5031 = vadd.f32 %v4775, %v5030
      %v5032 = vpop.f32.mrb[0].mxu0
      %v5033 = vpop.f32.mrb[0].mxu0
      %v5034 = vadd.f32 %v4775, %v5033
      %v5035 = vpop.f32.mrb[0].mxu0
      %5036 = vmatprep.mubr.bf16.mxu0 %v4880
      %5037 = vmatmul.mubr.bf16.gmra.mrb[0].mxu0 %v4547
      %v5038 = vpop.f32.mrb[0].mxu0
      %v5039 = vadd.f32 %v4775, %v5038
      %v5040 = vpop.f32.mrb[0].mxu0
      %v5041 = vpop.f32.mrb[0].mxu0
      %v5042 = vadd.f32 %v4775, %v5041
      %v5043 = vpop.f32.mrb[0].mxu0
      %5044 = vmatprep.mubr.bf16.mxu0 %v4882
      %5045 = vmatmul.mubr.bf16.gmra.mrb[0].mxu0 %v4550
      %v5046 = vpop.f32.mrb[0].mxu0
      %v5047 = vadd.f32 %v4775, %v5046
      %v5048 = vpop.f32.mrb[0].mxu0
      %v5049 = vpop.f32.mrb[0].mxu0
      %v5050 = vadd.f32 %v4775, %v5049
      %v5051 = vpop.f32.mrb[0].mxu0
      %5052 = vmatprep.mubr.bf16.mxu0 %v4884
      %5053 = vmatmul.mubr.bf16.gmra.mrb[0].mxu0 %v4553
      %v5054 = vpop.f32.mrb[0].mxu0
      %v5055 = vadd.f32 %v4775, %v5054
      %v5056 = vpop.f32.mrb[0].mxu0
      %v5057 = vpop.f32.mrb[0].mxu0
      %v5058 = vadd.f32 %v4775, %v5057
      %v5059 = vpop.f32.mrb[0].mxu0
      %5060 = vmatprep.mubr.bf16.mxu0 %v4886
      %5061 = vmatmul.mubr.bf16.gmra.mrb[0].mxu0 %v4556
      %v5062 = vpop.f32.mrb[0].mxu0
      %v5063 = vadd.f32 %v4775, %v5062
      %v5064 = vpop.f32.mrb[0].mxu0
      %v5065 = vpop.f32.mrb[0].mxu0
      %v5066 = vadd.f32 %v4775, %v5065
      %v5067 = vpop.f32.mrb[0].mxu0
      %5068 = vmatprep.mubr.bf16.mxu0 %v4888
      %5069 = vmatmul.mubr.bf16.gmra.mrb[0].mxu0 %v4559
      %v5070 = vpop.f32.mrb[0].mxu0
      %v5071 = vadd.f32 %v4775, %v5070
      %v5072 = vpop.f32.mrb[0].mxu0
      %v5073 = vpop.f32.mrb[0].mxu0
      %v5074 = vadd.f32 %v4775, %v5073
      %v5075 = vpop.f32.mrb[0].mxu0
      %5076 = vmatprep.mubr.bf16.mxu0 %v4890
      %5077 = vmatmul.mubr.bf16.gmra.mrb[0].mxu0 %v4562
      %v5078 = vpop.f32.mrb[0].mxu0
      %v5079 = vadd.f32 %v4775, %v5078
      %v5080 = vpop.f32.mrb[0].mxu0
      %v5081 = vpop.f32.mrb[0].mxu0
      %v5082 = vadd.f32 %v4775, %v5081
      %v5083 = vpop.f32.mrb[0].mxu0
      %5084 = vmatprep.mubr.bf16.mxu0 %v4892
      %5085 = vmatmul.mubr.bf16.gmra.mrb[0].mxu0 %v4565
      %v5086 = vpop.f32.mrb[0].mxu0
      %v5087 = vadd.f32 %v4775, %v5086
      %v5088 = vpop.f32.mrb[0].mxu0
      %v5089 = vpop.f32.mrb[0].mxu0
      %v5090 = vadd.f32 %v4775, %v5089
      %v5091 = vpop.f32.mrb[0].mxu0
      %5092 = vmatprep.mubr.bf16.mxu0 %v4894
      %5093 = vmatmul.mubr.bf16.gmra.mrb[0].mxu0 %v4568
      %v5094 = vpop.f32.mrb[0].mxu0
      %v5095 = vadd.f32 %v4775, %v5094
      %v5096 = vpop.f32.mrb[0].mxu0
      %v5097 = vpop.f32.mrb[0].mxu0
      %v5098 = vadd.f32 %v4775, %v5097
      %v5099 = vpop.f32.mrb[0].mxu0
      %5100 = vmatprep.mubr.bf16.mxu0 %v4896
      %5101 = vmatmul.mubr.bf16.gmra.mrb[0].mxu0 %v4571
      %v5102 = vpop.f32.mrb[0].mxu0
      %v5103 = vadd.f32 %v4775, %v5102
      %v5104 = vpop.f32.mrb[0].mxu0
      %v5105 = vpop.f32.mrb[0].mxu0
      %v5106 = vadd.f32 %v4775, %v5105
      %v5107 = vpop.f32.mrb[0].mxu0
      %5108 = vmatprep.mubr.bf16.mxu0 %v4898
      %5109 = vmatmul.mubr.bf16.gmra.mrb[0].mxu0 %v4574
      %v5110 = vpop.f32.mrb[0].mxu0
      %v5111 = vadd.f32 %v4775, %v5110
      %v5112 = vpop.f32.mrb[0].mxu0
      %v5113 = vpop.f32.mrb[0].mxu0
      %v5114 = vadd.f32 %v4775, %v5113
      %v5115 = vpop.f32.mrb[0].mxu0
      %5116 = vmatprep.mubr.bf16.mxu0 %v4900
      %5117 = vmatmul.mubr.bf16.gmra.mrb[0].mxu0 %v4577
      %v5118 = vpop.f32.mrb[0].mxu0
      %v5119 = vadd.f32 %v4775, %v5118
      %v5120 = vpop.f32.mrb[0].mxu0
      %v5121 = vpop.f32.mrb[0].mxu0
      %v5122 = vadd.f32 %v4775, %v5121
      %v5123 = vpop.f32.mrb[0].mxu0
      %5124 = vmatprep.mubr.bf16.mxu0 %v4902
      %5125 = vmatmul.mubr.bf16.gmra.mrb[0].mxu0 %v4580
      %v5126 = vpop.f32.mrb[0].mxu0
      %v5127 = vadd.f32 %v4775, %v5126
      %v5128 = vpop.f32.mrb[0].mxu0
      %v5129 = vpop.f32.mrb[0].mxu0
      %v5130 = vadd.f32 %v4775, %v5129
      %v5131 = vpop.f32.mrb[0].mxu0
      %5132 = vmatprep.mubr.bf16.mxu0 %v4904
      %5133 = vmatmul.mubr.bf16.gmra.mrb[0].mxu0 %v4583
      %v5134 = vpop.f32.mrb[0].mxu0
      %v5135 = vadd.f32 %v4775, %v5134
      %v5136 = vpop.f32.mrb[0].mxu0
      %v5137 = vpop.f32.mrb[0].mxu0
      %v5138 = vadd.f32 %v4775, %v5137
      %v5139 = vpop.f32.mrb[0].mxu0
      %5140 = vmatprep.mubr.bf16.mxu0 %v4906
      %5141 = vmatmul.mubr.bf16.gmra.mrb[0].mxu0 %v4586
      %v5142 = vpop.f32.mrb[0].mxu0
      %v5143 = vadd.f32 %v4775, %v5142
      %v5144 = vpop.f32.mrb[0].mxu0
      %v5145 = vpop.f32.mrb[0].mxu0
      %v5146 = vadd.f32 %v4775, %v5145
      %v5147 = vpop.f32.mrb[0].mxu0
      %5148 = vmatprep.mubr.bf16.mxu0 %v4908
      %5149 = vmatmul.mubr.bf16.gmra.mrb[0].mxu0 %v4589
      %v5150 = vpop.f32.mrb[0].mxu0
      %v5151 = vadd.f32 %v4775, %v5150
      %v5152 = vpop.f32.mrb[0].mxu0
      %v5153 = vpop.f32.mrb[0].mxu0
      %v5154 = vadd.f32 %v4775, %v5153
      %v5155 = vpop.f32.mrb[0].mxu0
      %5156 = vmatprep.mubr.bf16.mxu0 %v4910
      %5157 = vmatmul.mubr.bf16.gmra.mrb[0].mxu0 %v4592
      %v5158 = vpop.f32.mrb[0].mxu0
      %v5159 = vadd.f32 %v4775, %v5158
      %v5160 = vpop.f32.mrb[0].mxu0
      %v5161 = vpop.f32.mrb[0].mxu0
      %v5162 = vadd.f32 %v4775, %v5161
      %v5163 = vpop.f32.mrb[0].mxu0
      %5164 = vmatprep.mubr.bf16.mxu0 %v4912
      %5165 = vmatmul.mubr.bf16.gmra.mrb[0].mxu0 %v4595
      %v5166 = vpop.f32.mrb[0].mxu0
      %v5167 = vadd.f32 %v4775, %v5166
      %v5168 = vpop.f32.mrb[0].mxu0
      %v5169 = vpop.f32.mrb[0].mxu0
      %v5170 = vadd.f32 %v4775, %v5169
      %v5171 = vpop.f32.mrb[0].mxu0
      %5172 = vmatprep.mubr.bf16.mxu0 %v4914
      %5173 = vmatmul.mubr.bf16.gmra.mrb[0].mxu0 %v4598
      %v5174 = vpop.f32.mrb[0].mxu0
      %v5175 = vadd.f32 %v4775, %v5174
      %v5176 = vpop.f32.mrb[0].mxu0
      %v5177 = vpop.f32.mrb[0].mxu0
      %v5178 = vadd.f32 %v4775, %v5177
      %v5179 = vpop.f32.mrb[0].mxu0
      %5180 = vmatprep.mubr.bf16.mxu0 %v4916
      %5181 = vmatmul.mubr.bf16.gmra.mrb[0].mxu0 %v4601
      %v5182 = vpop.f32.mrb[0].mxu0
      %v5183 = vadd.f32 %v4775, %v5182
      %v5184 = vpop.f32.mrb[0].mxu0
      %v5185 = vpop.f32.mrb[0].mxu0
      %v5186 = vadd.f32 %v4775, %v5185
      %v5187 = vpop.f32.mrb[0].mxu0
      %5188 = vmatprep.mubr.bf16.mxu0 %v4918
      %5189 = vmatmul.mubr.bf16.gmra.mrb[0].mxu0 %v4604
      %v5190 = vpop.f32.mrb[0].mxu0
      %v5191 = vadd.f32 %v4775, %v5190
      %v5192 = vpop.f32.mrb[0].mxu0
      %v5193 = vpop.f32.mrb[0].mxu0
      %v5194 = vadd.f32 %v4775, %v5193
      %v5195 = vpop.f32.mrb[0].mxu0
      %5196 = vmatprep.mubr.bf16.mxu0 %v4920
      %5197 = vmatmul.mubr.bf16.gmra.mrb[0].mxu0 %v4607
      %v5198 = vpop.f32.mrb[0].mxu0
      %v5199 = vadd.f32 %v4775, %v5198
      %v5200 = vpop.f32.mrb[0].mxu0
      %v5201 = vpop.f32.mrb[0].mxu0
      %v5202 = vadd.f32 %v4775, %v5201
      %v5203 = vpop.f32.mrb[0].mxu0
      %5204 = vmatprep.mubr.bf16.mxu0 %v4922
      %5205 = vmatmul.mubr.bf16.gmra.mrb[0].mxu0 %v4610
      %v5206 = vpop.f32.mrb[0].mxu0
      %v5207 = vadd.f32 %v4775, %v5206
      %v5208 = vpop.f32.mrb[0].mxu0
      %v5209 = vpop.f32.mrb[0].mxu0
      %v5210 = vadd.f32 %v4775, %v5209
      %v5211 = vpop.f32.mrb[0].mxu0
      %5212 = vdwg.mxu0
      %v5213 = vmax.f32 %v4959, 0.0
      %v5214 = vmax.f32 %v4962, 0.0
      %v5215 = vmax.f32 %v4967, 0.0
      %v5216 = vmax.f32 %v4970, 0.0
      %v5217 = vmax.f32 %v4975, 0.0
      %v5218 = vmax.f32 %v4978, 0.0
      %v5219 = vmax.f32 %v4983, 0.0
      %v5220 = vmax.f32 %v4986, 0.0
      %v5221 = vmax.f32 %v4991, 0.0
      %v5222 = vmax.f32 %v4994, 0.0
      %v5223 = vmax.f32 %v4999, 0.0
      %v5224 = vmax.f32 %v5002, 0.0
      %v5225 = vmax.f32 %v5007, 0.0
      %v5226 = vmax.f32 %v5010, 0.0
      %v5227 = vmax.f32 %v5015, 0.0
      %v5228 = vmax.f32 %v5018, 0.0
      %v5229 = vmax.f32 %v5023, 0.0
      %v5230 = vmax.f32 %v5026, 0.0
      %v5231 = vmax.f32 %v5031, 0.0
      %v5232 = vmax.f32 %v5034, 0.0
      %v5233 = vmax.f32 %v5039, 0.0
      %v5234 = vmax.f32 %v5042, 0.0
      %v5235 = vmax.f32 %v5047, 0.0
      %v5236 = vmax.f32 %v5050, 0.0
      %v5237 = vmax.f32 %v5055, 0.0
      %v5238 = vmax.f32 %v5058, 0.0
      %v5239 = vmax.f32 %v5063, 0.0
      %v5240 = vmax.f32 %v5066, 0.0
      %v5241 = vmax.f32 %v5071, 0.0
      %v5242 = vmax.f32 %v5074, 0.0
      %v5243 = vmax.f32 %v5079, 0.0
      %v5244 = vmax.f32 %v5082, 0.0
      %v5245 = vmax.f32 %v5087, 0.0
      %v5246 = vmax.f32 %v5090, 0.0
      %v5247 = vmax.f32 %v5095, 0.0
      %v5248 = vmax.f32 %v5098, 0.0
      %v5249 = vmax.f32 %v5103, 0.0
      %v5250 = vmax.f32 %v5106, 0.0
      %v5251 = vmax.f32 %v5111, 0.0
      %v5252 = vmax.f32 %v5114, 0.0
      %v5253 = vmax.f32 %v5119, 0.0
      %v5254 = vmax.f32 %v5122, 0.0
      %v5255 = vmax.f32 %v5127, 0.0
      %v5256 = vmax.f32 %v5130, 0.0
      %v5257 = vmax.f32 %v5135, 0.0
      %v5258 = vmax.f32 %v5138, 0.0
      %v5259 = vmax.f32 %v5143, 0.0
      %v5260 = vmax.f32 %v5146, 0.0
      %v5261 = vmax.f32 %v5151, 0.0
      %v5262 = vmax.f32 %v5154, 0.0
      %v5263 = vmax.f32 %v5159, 0.0
      %v5264 = vmax.f32 %v5162, 0.0
      %v5265 = vmax.f32 %v5167, 0.0
      %v5266 = vmax.f32 %v5170, 0.0
      %v5267 = vmax.f32 %v5175, 0.0
      %v5268 = vmax.f32 %v5178, 0.0
      %v5269 = vmax.f32 %v5183, 0.0
      %v5270 = vmax.f32 %v5186, 0.0
      %v5271 = vmax.f32 %v5191, 0.0
      %v5272 = vmax.f32 %v5194, 0.0
      %v5273 = vmax.f32 %v5199, 0.0
      %v5274 = vmax.f32 %v5202, 0.0
      %v5275 = vmax.f32 %v5207, 0.0
      %v5276 = vmax.f32 %v5210, 0.0
      %v5277 = vlaneseq
      %v5278 = vshrl.u32 %v5277, 7
      %v5279 = vsub.s32 2, %v5278
      %v5280 = vrot.slane %v266, %v5279
      %v5281 = vmul.f32 %v5213, %v5280
      %v5282 = vmul.f32 %v5214, %v5280
      %v5283 = vmul.f32 %v5215, %v5280
      %v5284 = vmul.f32 %v5216, %v5280
      %v5285 = vmul.f32 %v5217, %v5280
      %v5286 = vmul.f32 %v5218, %v5280
      %v5287 = vmul.f32 %v5219, %v5280
      %v5288 = vmul.f32 %v5220, %v5280
      %v5289 = vmul.f32 %v5221, %v5280
      %v5290 = vmul.f32 %v5222, %v5280
      %v5291 = vmul.f32 %v5223, %v5280
      %v5292 = vmul.f32 %v5224, %v5280
      %v5293 = vmul.f32 %v5225, %v5280
      %v5294 = vmul.f32 %v5226, %v5280
      %v5295 = vmul.f32 %v5227, %v5280
      %v5296 = vmul.f32 %v5228, %v5280
      %v5297 = vmul.f32 %v5229, %v5280
      %v5298 = vmul.f32 %v5230, %v5280
      %v5299 = vmul.f32 %v5231, %v5280
      %v5300 = vmul.f32 %v5232, %v5280
      %v5301 = vmul.f32 %v5233, %v5280
      %v5302 = vmul.f32 %v5234, %v5280
      %v5303 = vmul.f32 %v5235, %v5280
      %v5304 = vmul.f32 %v5236, %v5280
      %v5305 = vmul.f32 %v5237, %v5280
      %v5306 = vmul.f32 %v5238, %v5280
      %v5307 = vmul.f32 %v5239, %v5280
      %v5308 = vmul.f32 %v5240, %v5280
      %v5309 = vmul.f32 %v5241, %v5280
      %v5310 = vmul.f32 %v5242, %v5280
      %v5311 = vmul.f32 %v5243, %v5280
      %v5312 = vmul.f32 %v5244, %v5280
      %v5313 = vmul.f32 %v5245, %v5280
      %v5314 = vmul.f32 %v5246, %v5280
      %v5315 = vmul.f32 %v5247, %v5280
      %v5316 = vmul.f32 %v5248, %v5280
      %v5317 = vmul.f32 %v5249, %v5280
      %v5318 = vmul.f32 %v5250, %v5280
      %v5319 = vmul.f32 %v5251, %v5280
      %v5320 = vmul.f32 %v5252, %v5280
      %v5321 = vmul.f32 %v5253, %v5280
      %v5322 = vmul.f32 %v5254, %v5280
      %v5323 = vmul.f32 %v5255, %v5280
      %v5324 = vmul.f32 %v5256, %v5280
      %v5325 = vmul.f32 %v5257, %v5280
      %v5326 = vmul.f32 %v5258, %v5280
      %v5327 = vmul.f32 %v5259, %v5280
      %v5328 = vmul.f32 %v5260, %v5280
      %v5329 = vmul.f32 %v5261, %v5280
      %v5330 = vmul.f32 %v5262, %v5280
      %v5331 = vmul.f32 %v5263, %v5280
      %v5332 = vmul.f32 %v5264, %v5280
      %v5333 = vmul.f32 %v5265, %v5280
      %v5334 = vmul.f32 %v5266, %v5280
      %v5335 = vmul.f32 %v5267, %v5280
      %v5336 = vmul.f32 %v5268, %v5280
      %v5337 = vmul.f32 %v5269, %v5280
      %v5338 = vmul.f32 %v5270, %v5280
      %v5339 = vmul.f32 %v5271, %v5280
      %v5340 = vmul.f32 %v5272, %v5280
      %v5341 = vmul.f32 %v5273, %v5280
      %v5342 = vmul.f32 %v5274, %v5280
      %v5343 = vmul.f32 %v5275, %v5280
      %v5344 = vmul.f32 %v5276, %v5280
      %v5345 = vld [vmem:[%s215] sm:$0xf]
      %v5346 = vld [vmem:[%s215 + $0x4] sm:$0xf]
      %v5347 = vld [vmem:[%s215 + $0x8] sm:$0xf]
      %v5348 = vld [vmem:[%s215 + $0xc] sm:$0xf]
      %v5349 = vld [vmem:[%s215 + $0x10] sm:$0xf]
      %v5350 = vld [vmem:[%s215 + $0x14] sm:$0xf]
      %v5351 = vld [vmem:[%s215 + $0x18] sm:$0xf]
      %v5352 = vld [vmem:[%s215 + $0x1c] sm:$0xf]
      %v5353 = vld [vmem:[%s215 + $0x20] sm:$0xf]
      %v5354 = vld [vmem:[%s215 + $0x24] sm:$0xf]
      %v5355 = vld [vmem:[%s215 + $0x28] sm:$0xf]
      %v5356 = vld [vmem:[%s215 + $0x2c] sm:$0xf]
      %v5357 = vld [vmem:[%s215 + $0x30] sm:$0xf]
      %v5358 = vld [vmem:[%s215 + $0x34] sm:$0xf]
      %v5359 = vld [vmem:[%s215 + $0x38] sm:$0xf]
      %v5360 = vld [vmem:[%s215 + $0x3c] sm:$0xf]
      %v5361 = vld [vmem:[%s215 + $0x40] sm:$0xf]
      %v5362 = vld [vmem:[%s215 + $0x44] sm:$0xf]
      %v5363 = vld [vmem:[%s215 + $0x48] sm:$0xf]
      %v5364 = vld [vmem:[%s215 + $0x4c] sm:$0xf]
      %v5365 = vld [vmem:[%s215 + $0x50] sm:$0xf]
      %v5366 = vld [vmem:[%s215 + $0x54] sm:$0xf]
      %v5367 = vld [vmem:[%s215 + $0x58] sm:$0xf]
      %v5368 = vld [vmem:[%s215 + $0x5c] sm:$0xf]
      %v5369 = vld [vmem:[%s215 + $0x60] sm:$0xf]
      %v5370 = vld [vmem:[%s215 + $0x64] sm:$0xf]
      %v5371 = vld [vmem:[%s215 + $0x68] sm:$0xf]
      %v5372 = vld [vmem:[%s215 + $0x6c] sm:$0xf]
      %v5373 = vld [vmem:[%s215 + $0x70] sm:$0xf]
      %v5374 = vld [vmem:[%s215 + $0x74] sm:$0xf]
      %v5375 = vld [vmem:[%s215 + $0x78] sm:$0xf]
      %v5376 = vld [vmem:[%s215 + $0x7c] sm:$0xf]
      %v5377 = vlaneseq
      %v5378 = vshrl.u32 %v5377, 7
      %v5379 = vsub.s32 4, %v5378
      %v5380 = vrot.slane %v266, %v5379
      %v5413 = vunpack.c.l.b16 %v5345
      %v5414 = vunpack.c.l.b16 %v5346
      %v5415 = vunpack.c.l.b16 %v5347
      %v5416 = vunpack.c.l.b16 %v5348
      %v5417 = vunpack.c.l.b16 %v5349
      %v5418 = vunpack.c.l.b16 %v5350
      %v5419 = vunpack.c.l.b16 %v5351
      %v5420 = vunpack.c.l.b16 %v5352
      %v5421 = vunpack.c.l.b16 %v5353
      %v5422 = vunpack.c.l.b16 %v5354
      %v5423 = vunpack.c.l.b16 %v5355
      %v5424 = vunpack.c.l.b16 %v5356
      %v5425 = vunpack.c.l.b16 %v5357
      %v5426 = vunpack.c.l.b16 %v5358
      %v5427 = vunpack.c.l.b16 %v5359
      %v5428 = vunpack.c.l.b16 %v5360
      %v5429 = vunpack.c.l.b16 %v5361
      %v5430 = vunpack.c.l.b16 %v5362
      %v5431 = vunpack.c.l.b16 %v5363
      %v5432 = vunpack.c.l.b16 %v5364
      %v5433 = vunpack.c.l.b16 %v5365
      %v5434 = vunpack.c.l.b16 %v5366
      %v5435 = vunpack.c.l.b16 %v5367
      %v5436 = vunpack.c.l.b16 %v5368
      %v5437 = vunpack.c.l.b16 %v5369
      %v5438 = vunpack.c.l.b16 %v5370
      %v5439 = vunpack.c.l.b16 %v5371
      %v5440 = vunpack.c.l.b16 %v5372
      %v5441 = vunpack.c.l.b16 %v5373
      %v5442 = vunpack.c.l.b16 %v5374
      %v5443 = vunpack.c.l.b16 %v5375
      %v5444 = vunpack.c.l.b16 %v5376
      %v5445 = vpack.c.b16 %v5414, %v5413
      %v5446 = vpack.c.b16 %v5416, %v5415
      %v5447 = vpack.c.b16 %v5418, %v5417
      %v5448 = vpack.c.b16 %v5420, %v5419
      %v5449 = vpack.c.b16 %v5422, %v5421
      %v5450 = vpack.c.b16 %v5424, %v5423
      %v5451 = vpack.c.b16 %v5426, %v5425
      %v5452 = vpack.c.b16 %v5428, %v5427
      %v5453 = vpack.c.b16 %v5430, %v5429
      %v5454 = vpack.c.b16 %v5432, %v5431
      %v5455 = vpack.c.b16 %v5434, %v5433
      %v5456 = vpack.c.b16 %v5436, %v5435
      %v5457 = vpack.c.b16 %v5438, %v5437
      %v5458 = vpack.c.b16 %v5440, %v5439
      %v5459 = vpack.c.b16 %v5442, %v5441
      %v5460 = vpack.c.b16 %v5444, %v5443
      %v5469 = vunpack.c.l.b16 %v254
      %v5470 = vunpack.c.l.b16 %v255
      %v5471 = vunpack.c.l.b16 %v256
      %v5472 = vunpack.c.l.b16 %v257
      %v5473 = vunpack.c.l.b16 %v258
      %v5474 = vunpack.c.l.b16 %v259
      %v5475 = vunpack.c.l.b16 %v260
      %v5476 = vunpack.c.l.b16 %v261
      %v5477 = vpack.c.b16 %v5470, %v5469
      %v5478 = vpack.c.b16 %v5472, %v5471
      %v5479 = vpack.c.b16 %v5474, %v5473
      %v5480 = vpack.c.b16 %v5476, %v5475
      %v5486 = vsel %vm4450, %v5445, 0
      %v5489 = vsel %vm4450, %v5446, 0
      %v5492 = vsel %vm4450, %v5447, 0
      %v5495 = vsel %vm4450, %v5448, 0
      %v5498 = vsel %vm4450, %v5449, 0
      %v5501 = vsel %vm4450, %v5450, 0
      %v5504 = vsel %vm4450, %v5451, 0
      %v5507 = vsel %vm4450, %v5452, 0
      %v5510 = vsel %vm4450, %v5453, 0
      %v5513 = vsel %vm4450, %v5454, 0
      %v5516 = vsel %vm4450, %v5455, 0
      %v5519 = vsel %vm4450, %v5456, 0
      %v5522 = vsel %vm4450, %v5457, 0
      %v5525 = vsel %vm4450, %v5458, 0
      %v5528 = vsel %vm4450, %v5459, 0
      %v5531 = vsel %vm4450, %v5460, 0
      %5533 = vmatprep.subr.bf16.mxu0 0
      %5534 = vmatpush1.bf16.msra.mxu0 %v5477
      %5535 = vmatprep.subr.bf16.mxu0 0
      %5536 = vmatpush1.bf16.msra.mxu0 %v5478
      %5537 = vmatprep.subr.bf16.mxu0 0
      %5538 = vmatpush1.bf16.msra.mxu0 %v5479
      %5539 = vmatprep.subr.bf16.mxu0 0
      %5540 = vmatpush1.bf16.msra.mxu0 %v5480
      %5541 = vmatprep.subr.bf16.mxu0 0
      %5542 = vmatpush1.bf16.msra.mxu0 0
      %5543 = vmatprep.subr.bf16.mxu0 0
      %5544 = vmatpush1.bf16.msra.mxu0 0
      %5545 = vmatprep.subr.bf16.mxu0 0
      %5546 = vmatpush1.bf16.msra.mxu0 0
      %5547 = vmatprep.subr.bf16.mxu0 0
      %5548 = vmatpush1.bf16.msra.mxu0 0
      %5549 = vmatprep.subr.bf16.mxu0 0
      %5550 = vmatpush1.bf16.msra.mxu0 0
      %5551 = vmatprep.subr.bf16.mxu0 0
      %5552 = vmatpush1.bf16.msra.mxu0 0
      %5553 = vmatprep.subr.bf16.mxu0 0
      %5554 = vmatpush1.bf16.msra.mxu0 0
      %5555 = vmatprep.subr.bf16.mxu0 0
      %5556 = vmatpush1.bf16.msra.mxu0 0
      %5557 = vmatprep.subr.bf16.mxu0 0
      %5558 = vmatpush1.bf16.msra.mxu0 0
      %5559 = vmatprep.subr.bf16.mxu0 0
      %5560 = vmatpush1.bf16.msra.mxu0 0
      %5561 = vmatprep.subr.bf16.mxu0 0
      %5562 = vmatpush1.bf16.msra.mxu0 0
      %5563 = vmatprep.subr.bf16.mxu0 0
      %5564 = vmatpush1.bf16.msra.mxu0 0
      %5565 = vmatprep.mubr.bf16.mxu0 0
      %5566 = vmatmul.mubr.bf16.gmra.mrb[0].mxu0 %v5486
      %v5567 = vpop.f32.mrb[0].mxu0
      %v5568 = vadd.f32 %v5380, %v5567
      %v5569 = vpop.f32.mrb[0].mxu0
      %v5570 = vpop.f32.mrb[0].mxu0
      %v5571 = vadd.f32 %v5380, %v5570
      %v5572 = vpop.f32.mrb[0].mxu0
      %5573 = vmatprep.mubr.bf16.mxu0 0
      %5574 = vmatmul.mubr.bf16.gmra.mrb[0].mxu0 %v5489
      %v5575 = vpop.f32.mrb[0].mxu0
      %v5576 = vadd.f32 %v5380, %v5575
      %v5577 = vpop.f32.mrb[0].mxu0
      %v5578 = vpop.f32.mrb[0].mxu0
      %v5579 = vadd.f32 %v5380, %v5578
      %v5580 = vpop.f32.mrb[0].mxu0
      %5581 = vmatprep.mubr.bf16.mxu0 0
      %5582 = vmatmul.mubr.bf16.gmra.mrb[0].mxu0 %v5492
      %v5583 = vpop.f32.mrb[0].mxu0
      %v5584 = vadd.f32 %v5380, %v5583
      %v5585 = vpop.f32.mrb[0].mxu0
      %v5586 = vpop.f32.mrb[0].mxu0
      %v5587 = vadd.f32 %v5380, %v5586
      %v5588 = vpop.f32.mrb[0].mxu0
      %5589 = vmatprep.mubr.bf16.mxu0 0
      %5590 = vmatmul.mubr.bf16.gmra.mrb[0].mxu0 %v5495
      %v5591 = vpop.f32.mrb[0].mxu0
      %v5592 = vadd.f32 %v5380, %v5591
      %v5593 = vpop.f32.mrb[0].mxu0
      %v5594 = vpop.f32.mrb[0].mxu0
      %v5595 = vadd.f32 %v5380, %v5594
      %v5596 = vpop.f32.mrb[0].mxu0
      %5597 = vmatprep.mubr.bf16.mxu0 0
      %5598 = vmatmul.mubr.bf16.gmra.mrb[0].mxu0 %v5498
      %v5599 = vpop.f32.mrb[0].mxu0
      %v5600 = vadd.f32 %v5380, %v5599
      %v5601 = vpop.f32.mrb[0].mxu0
      %v5602 = vpop.f32.mrb[0].mxu0
      %v5603 = vadd.f32 %v5380, %v5602
      %v5604 = vpop.f32.mrb[0].mxu0
      %5605 = vmatprep.mubr.bf16.mxu0 0
      %5606 = vmatmul.mubr.bf16.gmra.mrb[0].mxu0 %v5501
      %v5607 = vpop.f32.mrb[0].mxu0
      %v5608 = vadd.f32 %v5380, %v5607
      %v5609 = vpop.f32.mrb[0].mxu0
      %v5610 = vpop.f32.mrb[0].mxu0
      %v5611 = vadd.f32 %v5380, %v5610
      %v5612 = vpop.f32.mrb[0].mxu0
      %5613 = vmatprep.mubr.bf16.mxu0 0
      %5614 = vmatmul.mubr.bf16.gmra.mrb[0].mxu0 %v5504
      %v5615 = vpop.f32.mrb[0].mxu0
      %v5616 = vadd.f32 %v5380, %v5615
      %v5617 = vpop.f32.mrb[0].mxu0
      %v5618 = vpop.f32.mrb[0].mxu0
      %v5619 = vadd.f32 %v5380, %v5618
      %v5620 = vpop.f32.mrb[0].mxu0
      %5621 = vmatprep.mubr.bf16.mxu0 0
      %5622 = vmatmul.mubr.bf16.gmra.mrb[0].mxu0 %v5507
      %v5623 = vpop.f32.mrb[0].mxu0
      %v5624 = vadd.f32 %v5380, %v5623
      %v5625 = vpop.f32.mrb[0].mxu0
      %v5626 = vpop.f32.mrb[0].mxu0
      %v5627 = vadd.f32 %v5380, %v5626
      %v5628 = vpop.f32.mrb[0].mxu0
      %5629 = vmatprep.mubr.bf16.mxu0 0
      %5630 = vmatmul.mubr.bf16.gmra.mrb[0].mxu0 %v5510
      %v5631 = vpop.f32.mrb[0].mxu0
      %v5632 = vadd.f32 %v5380, %v5631
      %v5633 = vpop.f32.mrb[0].mxu0
      %v5634 = vpop.f32.mrb[0].mxu0
      %v5635 = vadd.f32 %v5380, %v5634
      %v5636 = vpop.f32.mrb[0].mxu0
      %5637 = vmatprep.mubr.bf16.mxu0 0
      %5638 = vmatmul.mubr.bf16.gmra.mrb[0].mxu0 %v5513
      %v5639 = vpop.f32.mrb[0].mxu0
      %v5640 = vadd.f32 %v5380, %v5639
      %v5641 = vpop.f32.mrb[0].mxu0
      %v5642 = vpop.f32.mrb[0].mxu0
      %v5643 = vadd.f32 %v5380, %v5642
      %v5644 = vpop.f32.mrb[0].mxu0
      %5645 = vmatprep.mubr.bf16.mxu0 0
      %5646 = vmatmul.mubr.bf16.gmra.mrb[0].mxu0 %v5516
      %v5647 = vpop.f32.mrb[0].mxu0
      %v5648 = vadd.f32 %v5380, %v5647
      %v5649 = vpop.f32.mrb[0].mxu0
      %v5650 = vpop.f32.mrb[0].mxu0
      %v5651 = vadd.f32 %v5380, %v5650
      %v5652 = vpop.f32.mrb[0].mxu0
      %5653 = vmatprep.mubr.bf16.mxu0 0
      %5654 = vmatmul.mubr.bf16.gmra.mrb[0].mxu0 %v5519
      %v5655 = vpop.f32.mrb[0].mxu0
      %v5656 = vadd.f32 %v5380, %v5655
      %v5657 = vpop.f32.mrb[0].mxu0
      %v5658 = vpop.f32.mrb[0].mxu0
      %v5659 = vadd.f32 %v5380, %v5658
      %v5660 = vpop.f32.mrb[0].mxu0
      %5661 = vmatprep.mubr.bf16.mxu0 0
      %5662 = vmatmul.mubr.bf16.gmra.mrb[0].mxu0 %v5522
      %v5663 = vpop.f32.mrb[0].mxu0
      %v5664 = vadd.f32 %v5380, %v5663
      %v5665 = vpop.f32.mrb[0].mxu0
      %v5666 = vpop.f32.mrb[0].mxu0
      %v5667 = vadd.f32 %v5380, %v5666
      %v5668 = vpop.f32.mrb[0].mxu0
      %5669 = vmatprep.mubr.bf16.mxu0 0
      %5670 = vmatmul.mubr.bf16.gmra.mrb[0].mxu0 %v5525
      %v5671 = vpop.f32.mrb[0].mxu0
      %v5672 = vadd.f32 %v5380, %v5671
      %v5673 = vpop.f32.mrb[0].mxu0
      %v5674 = vpop.f32.mrb[0].mxu0
      %v5675 = vadd.f32 %v5380, %v5674
      %v5676 = vpop.f32.mrb[0].mxu0
      %5677 = vmatprep.mubr.bf16.mxu0 0
      %5678 = vmatmul.mubr.bf16.gmra.mrb[0].mxu0 %v5528
      %v5679 = vpop.f32.mrb[0].mxu0
      %v5680 = vadd.f32 %v5380, %v5679
      %v5681 = vpop.f32.mrb[0].mxu0
      %v5682 = vpop.f32.mrb[0].mxu0
      %v5683 = vadd.f32 %v5380, %v5682
      %v5684 = vpop.f32.mrb[0].mxu0
      %5685 = vmatprep.mubr.bf16.mxu0 0
      %5686 = vmatmul.mubr.bf16.gmra.mrb[0].mxu0 %v5531
      %v5687 = vpop.f32.mrb[0].mxu0
      %v5688 = vadd.f32 %v5380, %v5687
      %v5689 = vpop.f32.mrb[0].mxu0
      %v5690 = vpop.f32.mrb[0].mxu0
      %v5691 = vadd.f32 %v5380, %v5690
      %v5692 = vpop.f32.mrb[0].mxu0
      %5693 = vdwg.mxu0
      %v5694 = vmax.f32 %v5568, 0.0
      %v5695 = vmax.f32 %v5571, 0.0
      %v5696 = vmax.f32 %v5576, 0.0
      %v5697 = vmax.f32 %v5579, 0.0
      %v5698 = vmax.f32 %v5584, 0.0
      %v5699 = vmax.f32 %v5587, 0.0
      %v5700 = vmax.f32 %v5592, 0.0
      %v5701 = vmax.f32 %v5595, 0.0
      %v5702 = vmax.f32 %v5600, 0.0
      %v5703 = vmax.f32 %v5603, 0.0
      %v5704 = vmax.f32 %v5608, 0.0
      %v5705 = vmax.f32 %v5611, 0.0
      %v5706 = vmax.f32 %v5616, 0.0
      %v5707 = vmax.f32 %v5619, 0.0
      %v5708 = vmax.f32 %v5624, 0.0
      %v5709 = vmax.f32 %v5627, 0.0
      %v5710 = vmax.f32 %v5632, 0.0
      %v5711 = vmax.f32 %v5635, 0.0
      %v5712 = vmax.f32 %v5640, 0.0
      %v5713 = vmax.f32 %v5643, 0.0
      %v5714 = vmax.f32 %v5648, 0.0
      %v5715 = vmax.f32 %v5651, 0.0
      %v5716 = vmax.f32 %v5656, 0.0
      %v5717 = vmax.f32 %v5659, 0.0
      %v5718 = vmax.f32 %v5664, 0.0
      %v5719 = vmax.f32 %v5667, 0.0
      %v5720 = vmax.f32 %v5672, 0.0
      %v5721 = vmax.f32 %v5675, 0.0
      %v5722 = vmax.f32 %v5680, 0.0
      %v5723 = vmax.f32 %v5683, 0.0
      %v5724 = vmax.f32 %v5688, 0.0
      %v5725 = vmax.f32 %v5691, 0.0
      %v5726 = vpack.c.bf16 %v5695, %v5694
      %v5727 = vpack.c.bf16 %v5697, %v5696
      %v5728 = vpack.c.bf16 %v5699, %v5698
      %v5729 = vpack.c.bf16 %v5701, %v5700
      %v5730 = vpack.c.bf16 %v5703, %v5702
      %v5731 = vpack.c.bf16 %v5705, %v5704
      %v5732 = vpack.c.bf16 %v5707, %v5706
      %v5733 = vpack.c.bf16 %v5709, %v5708
      %v5734 = vpack.c.bf16 %v5711, %v5710
      %v5735 = vpack.c.bf16 %v5713, %v5712
      %v5736 = vpack.c.bf16 %v5715, %v5714
      %v5737 = vpack.c.bf16 %v5717, %v5716
      %v5738 = vpack.c.bf16 %v5719, %v5718
      %v5739 = vpack.c.bf16 %v5721, %v5720
      %v5740 = vpack.c.bf16 %v5723, %v5722
      %v5741 = vpack.c.bf16 %v5725, %v5724
      %v5742 = vlaneseq
      %v5743 = vshrl.u32 %v5742, 7
      %v5744 = vsub.s32 5, %v5743
      %v5745 = vrot.slane %v266, %v5744
      %v5750 = vunpack.c.l.b16 %v262
      %v5751 = vunpack.c.l.b16 %v263
      %v5752 = vunpack.c.l.b16 %v264
      %v5753 = vunpack.c.l.b16 %v265
      %v5754 = vpack.c.b16 %v5751, %v5750
      %v5755 = vpack.c.b16 %v5753, %v5752
      %v5759 = vsel %vm4353, %v5726, 0
      %v5762 = vsel %vm4353, %v5727, 0
      %v5765 = vsel %vm4353, %v5728, 0
      %v5768 = vsel %vm4353, %v5729, 0
      %v5771 = vsel %vm4353, %v5730, 0
      %v5774 = vsel %vm4353, %v5731, 0
      %v5777 = vsel %vm4353, %v5732, 0
      %v5780 = vsel %vm4353, %v5733, 0
      %v5783 = vsel %vm4353, %v5734, 0
      %v5786 = vsel %vm4353, %v5735, 0
      %v5789 = vsel %vm4353, %v5736, 0
      %v5792 = vsel %vm4353, %v5737, 0
      %v5795 = vsel %vm4353, %v5738, 0
      %v5798 = vsel %vm4353, %v5739, 0
      %v5801 = vsel %vm4353, %v5740, 0
      %v5804 = vsel %vm4353, %v5741, 0
      %5806 = vmatprep.subr.bf16.mxu0 0
      %5807 = vmatpush1.bf16.msra.mxu0 %v5754
      %5808 = vmatprep.subr.bf16.mxu0 0
      %5809 = vmatpush1.bf16.msra.mxu0 %v5755
      %5810 = vmatprep.subr.bf16.mxu0 0
      %5811 = vmatpush1.bf16.msra.mxu0 0
      %5812 = vmatprep.subr.bf16.mxu0 0
      %5813 = vmatpush1.bf16.msra.mxu0 0
      %5814 = vmatprep.subr.bf16.mxu0 0
      %5815 = vmatpush1.bf16.msra.mxu0 0
      %5816 = vmatprep.subr.bf16.mxu0 0
      %5817 = vmatpush1.bf16.msra.mxu0 0
      %5818 = vmatprep.subr.bf16.mxu0 0
      %5819 = vmatpush1.bf16.msra.mxu0 0
      %5820 = vmatprep.subr.bf16.mxu0 0
      %5821 = vmatpush1.bf16.msra.mxu0 0
      %5822 = vmatprep.subr.bf16.mxu0 0
      %5823 = vmatpush1.bf16.msra.mxu0 0
      %5824 = vmatprep.subr.bf16.mxu0 0
      %5825 = vmatpush1.bf16.msra.mxu0 0
      %5826 = vmatprep.subr.bf16.mxu0 0
      %5827 = vmatpush1.bf16.msra.mxu0 0
      %5828 = vmatprep.subr.bf16.mxu0 0
      %5829 = vmatpush1.bf16.msra.mxu0 0
      %5830 = vmatprep.subr.bf16.mxu0 0
      %5831 = vmatpush1.bf16.msra.mxu0 0
      %5832 = vmatprep.subr.bf16.mxu0 0
      %5833 = vmatpush1.bf16.msra.mxu0 0
      %5834 = vmatprep.subr.bf16.mxu0 0
      %5835 = vmatpush1.bf16.msra.mxu0 0
      %5836 = vmatprep.subr.bf16.mxu0 0
      %5837 = vmatpush1.bf16.msra.mxu0 0
      %5838 = vmatprep.mubr.bf16.mxu0 0
      %5839 = vmatmul.mubr.bf16.gmra.mrb[0].mxu0 %v5759
      %v5840 = vpop.f32.mrb[0].mxu0
      %v5841 = vadd.f32 %v5745, %v5840
      %v5842 = vpop.f32.mrb[0].mxu0
      %v5843 = vpop.f32.mrb[0].mxu0
      %v5844 = vadd.f32 %v5745, %v5843
      %v5845 = vpop.f32.mrb[0].mxu0
      %5846 = vmatprep.mubr.bf16.mxu0 0
      %5847 = vmatmul.mubr.bf16.gmra.mrb[0].mxu0 %v5762
      %v5848 = vpop.f32.mrb[0].mxu0
      %v5849 = vadd.f32 %v5745, %v5848
      %v5850 = vpop.f32.mrb[0].mxu0
      %v5851 = vpop.f32.mrb[0].mxu0
      %v5852 = vadd.f32 %v5745, %v5851
      %v5853 = vpop.f32.mrb[0].mxu0
      %5854 = vmatprep.mubr.bf16.mxu0 0
      %5855 = vmatmul.mubr.bf16.gmra.mrb[0].mxu0 %v5765
      %v5856 = vpop.f32.mrb[0].mxu0
      %v5857 = vadd.f32 %v5745, %v5856
      %v5858 = vpop.f32.mrb[0].mxu0
      %v5859 = vpop.f32.mrb[0].mxu0
      %v5860 = vadd.f32 %v5745, %v5859
      %v5861 = vpop.f32.mrb[0].mxu0
      %5862 = vmatprep.mubr.bf16.mxu0 0
      %5863 = vmatmul.mubr.bf16.gmra.mrb[0].mxu0 %v5768
      %v5864 = vpop.f32.mrb[0].mxu0
      %v5865 = vadd.f32 %v5745, %v5864
      %v5866 = vpop.f32.mrb[0].mxu0
      %v5867 = vpop.f32.mrb[0].mxu0
      %v5868 = vadd.f32 %v5745, %v5867
      %v5869 = vpop.f32.mrb[0].mxu0
      %5870 = vmatprep.mubr.bf16.mxu0 0
      %5871 = vmatmul.mubr.bf16.gmra.mrb[0].mxu0 %v5771
      %v5872 = vpop.f32.mrb[0].mxu0
      %v5873 = vadd.f32 %v5745, %v5872
      %v5874 = vpop.f32.mrb[0].mxu0
      %v5875 = vpop.f32.mrb[0].mxu0
      %v5876 = vadd.f32 %v5745, %v5875
      %v5877 = vpop.f32.mrb[0].mxu0
      %5878 = vmatprep.mubr.bf16.mxu0 0
      %5879 = vmatmul.mubr.bf16.gmra.mrb[0].mxu0 %v5774
      %v5880 = vpop.f32.mrb[0].mxu0
      %v5881 = vadd.f32 %v5745, %v5880
      %v5882 = vpop.f32.mrb[0].mxu0
      %v5883 = vpop.f32.mrb[0].mxu0
      %v5884 = vadd.f32 %v5745, %v5883
      %v5885 = vpop.f32.mrb[0].mxu0
      %5886 = vmatprep.mubr.bf16.mxu0 0
      %5887 = vmatmul.mubr.bf16.gmra.mrb[0].mxu0 %v5777
      %v5888 = vpop.f32.mrb[0].mxu0
      %v5889 = vadd.f32 %v5745, %v5888
      %v5890 = vpop.f32.mrb[0].mxu0
      %v5891 = vpop.f32.mrb[0].mxu0
      %v5892 = vadd.f32 %v5745, %v5891
      %v5893 = vpop.f32.mrb[0].mxu0
      %5894 = vmatprep.mubr.bf16.mxu0 0
      %5895 = vmatmul.mubr.bf16.gmra.mrb[0].mxu0 %v5780
      %v5896 = vpop.f32.mrb[0].mxu0
      %v5897 = vadd.f32 %v5745, %v5896
      %v5898 = vpop.f32.mrb[0].mxu0
      %v5899 = vpop.f32.mrb[0].mxu0
      %v5900 = vadd.f32 %v5745, %v5899
      %v5901 = vpop.f32.mrb[0].mxu0
      %5902 = vmatprep.mubr.bf16.mxu0 0
      %5903 = vmatmul.mubr.bf16.gmra.mrb[0].mxu0 %v5783
      %v5904 = vpop.f32.mrb[0].mxu0
      %v5905 = vadd.f32 %v5745, %v5904
      %v5906 = vpop.f32.mrb[0].mxu0
      %v5907 = vpop.f32.mrb[0].mxu0
      %v5908 = vadd.f32 %v5745, %v5907
      %v5909 = vpop.f32.mrb[0].mxu0
      %5910 = vmatprep.mubr.bf16.mxu0 0
      %5911 = vmatmul.mubr.bf16.gmra.mrb[0].mxu0 %v5786
      %v5912 = vpop.f32.mrb[0].mxu0
      %v5913 = vadd.f32 %v5745, %v5912
      %v5914 = vpop.f32.mrb[0].mxu0
      %v5915 = vpop.f32.mrb[0].mxu0
      %v5916 = vadd.f32 %v5745, %v5915
      %v5917 = vpop.f32.mrb[0].mxu0
      %5918 = vmatprep.mubr.bf16.mxu0 0
      %5919 = vmatmul.mubr.bf16.gmra.mrb[0].mxu0 %v5789
      %v5920 = vpop.f32.mrb[0].mxu0
      %v5921 = vadd.f32 %v5745, %v5920
      %v5922 = vpop.f32.mrb[0].mxu0
      %v5923 = vpop.f32.mrb[0].mxu0
      %v5924 = vadd.f32 %v5745, %v5923
      %v5925 = vpop.f32.mrb[0].mxu0
      %5926 = vmatprep.mubr.bf16.mxu0 0
      %5927 = vmatmul.mubr.bf16.gmra.mrb[0].mxu0 %v5792
      %v5928 = vpop.f32.mrb[0].mxu0
      %v5929 = vadd.f32 %v5745, %v5928
      %v5930 = vpop.f32.mrb[0].mxu0
      %v5931 = vpop.f32.mrb[0].mxu0
      %v5932 = vadd.f32 %v5745, %v5931
      %v5933 = vpop.f32.mrb[0].mxu0
      %5934 = vmatprep.mubr.bf16.mxu0 0
      %5935 = vmatmul.mubr.bf16.gmra.mrb[0].mxu0 %v5795
      %v5936 = vpop.f32.mrb[0].mxu0
      %v5937 = vadd.f32 %v5745, %v5936
      %v5938 = vpop.f32.mrb[0].mxu0
      %v5939 = vpop.f32.mrb[0].mxu0
      %v5940 = vadd.f32 %v5745, %v5939
      %v5941 = vpop.f32.mrb[0].mxu0
      %5942 = vmatprep.mubr.bf16.mxu0 0
      %5943 = vmatmul.mubr.bf16.gmra.mrb[0].mxu0 %v5798
      %v5944 = vpop.f32.mrb[0].mxu0
      %v5945 = vadd.f32 %v5745, %v5944
      %v5946 = vpop.f32.mrb[0].mxu0
      %v5947 = vpop.f32.mrb[0].mxu0
      %v5948 = vadd.f32 %v5745, %v5947
      %v5949 = vpop.f32.mrb[0].mxu0
      %5950 = vmatprep.mubr.bf16.mxu0 0
      %5951 = vmatmul.mubr.bf16.gmra.mrb[0].mxu0 %v5801
      %v5952 = vpop.f32.mrb[0].mxu0
      %v5953 = vadd.f32 %v5745, %v5952
      %v5954 = vpop.f32.mrb[0].mxu0
      %v5955 = vpop.f32.mrb[0].mxu0
      %v5956 = vadd.f32 %v5745, %v5955
      %v5957 = vpop.f32.mrb[0].mxu0
      %5958 = vmatprep.mubr.bf16.mxu0 0
      %5959 = vmatmul.mubr.bf16.gmra.mrb[0].mxu0 %v5804
      %v5960 = vpop.f32.mrb[0].mxu0
      %v5961 = vadd.f32 %v5745, %v5960
      %v5962 = vpop.f32.mrb[0].mxu0
      %v5963 = vpop.f32.mrb[0].mxu0
      %v5964 = vadd.f32 %v5745, %v5963
      %v5965 = vpop.f32.mrb[0].mxu0
      %5966 = vdwg.mxu0
      %v5967 = vmax.f32 %v5841, 0.0
      %v5968 = vmax.f32 %v5844, 0.0
      %v5969 = vmax.f32 %v5849, 0.0
      %v5970 = vmax.f32 %v5852, 0.0
      %v5971 = vmax.f32 %v5857, 0.0
      %v5972 = vmax.f32 %v5860, 0.0
      %v5973 = vmax.f32 %v5865, 0.0
      %v5974 = vmax.f32 %v5868, 0.0
      %v5975 = vmax.f32 %v5873, 0.0
      %v5976 = vmax.f32 %v5876, 0.0
      %v5977 = vmax.f32 %v5881, 0.0
      %v5978 = vmax.f32 %v5884, 0.0
      %v5979 = vmax.f32 %v5889, 0.0
      %v5980 = vmax.f32 %v5892, 0.0
      %v5981 = vmax.f32 %v5897, 0.0
      %v5982 = vmax.f32 %v5900, 0.0
      %v5983 = vmax.f32 %v5905, 0.0
      %v5984 = vmax.f32 %v5908, 0.0
      %v5985 = vmax.f32 %v5913, 0.0
      %v5986 = vmax.f32 %v5916, 0.0
      %v5987 = vmax.f32 %v5921, 0.0
      %v5988 = vmax.f32 %v5924, 0.0
      %v5989 = vmax.f32 %v5929, 0.0
      %v5990 = vmax.f32 %v5932, 0.0
      %v5991 = vmax.f32 %v5937, 0.0
      %v5992 = vmax.f32 %v5940, 0.0
      %v5993 = vmax.f32 %v5945, 0.0
      %v5994 = vmax.f32 %v5948, 0.0
      %v5995 = vmax.f32 %v5953, 0.0
      %v5996 = vmax.f32 %v5956, 0.0
      %v5997 = vmax.f32 %v5961, 0.0
      %v5998 = vmax.f32 %v5964, 0.0
      %5999 = vxpose.xlu0.b32.start [1/16] %v5281, 128
      %6000 = vxpose.xlu0.b32.cont [2/16] %v5282, 128
      %6001 = vxpose.xlu0.b32.cont [3/16] 0.0, 128
      %6002 = vxpose.xlu0.b32.cont [4/16] 0.0, 128
      %6003 = vxpose.xlu0.b32.cont [5/16] 0.0, 128
      %6004 = vxpose.xlu0.b32.cont [6/16] 0.0, 128
      %6005 = vxpose.xlu0.b32.cont [7/16] 0.0, 128
      %6006 = vxpose.xlu0.b32.cont [8/16] 0.0, 128
      %6007 = vxpose.xlu0.b32.cont [9/16] 0.0, 128
      %6008 = vxpose.xlu0.b32.cont [10/16] 0.0, 128
      %6009 = vxpose.xlu0.b32.cont [11/16] 0.0, 128
      %6010 = vxpose.xlu0.b32.cont [12/16] 0.0, 128
      %6011 = vxpose.xlu0.b32.cont [13/16] 0.0, 128
      %6012 = vxpose.xlu0.b32.cont [14/16] 0.0, 128
      %6013 = vxpose.xlu0.b32.cont [15/16] 0.0, 128
      %6014 = vxpose.xlu0.b32.end [16/16] 0.0, 128
      %v6015 = vpop.trf.xlu0
      %v6016 = vpop.trf.xlu0
      %v6017 = vpop.trf.xlu0
      %v6018 = vpop.trf.xlu0
      %v6019 = vpop.trf.xlu0
      %v6020 = vpop.trf.xlu0
      %v6021 = vpop.trf.xlu0
      %v6022 = vpop.trf.xlu0
      %v6023 = vpop.trf.xlu0
      %v6024 = vpop.trf.xlu0
      %v6025 = vpop.trf.xlu0
      %v6026 = vpop.trf.xlu0
      %v6027 = vpop.trf.xlu0
      %v6028 = vpop.trf.xlu0
      %v6029 = vpop.trf.xlu0
      %v6030 = vpop.trf.xlu0
      %6031 = vxpose.xlu0.b32.start [1/16] %v5283, 128
      %6032 = vxpose.xlu0.b32.cont [2/16] %v5284, 128
      %6033 = vxpose.xlu0.b32.cont [3/16] 0.0, 128
      %6034 = vxpose.xlu0.b32.cont [4/16] 0.0, 128
      %6035 = vxpose.xlu0.b32.cont [5/16] 0.0, 128
      %6036 = vxpose.xlu0.b32.cont [6/16] 0.0, 128
      %6037 = vxpose.xlu0.b32.cont [7/16] 0.0, 128
      %6038 = vxpose.xlu0.b32.cont [8/16] 0.0, 128
      %6039 = vxpose.xlu0.b32.cont [9/16] 0.0, 128
      %6040 = vxpose.xlu0.b32.cont [10/16] 0.0, 128
      %6041 = vxpose.xlu0.b32.cont [11/16] 0.0, 128
      %6042 = vxpose.xlu0.b32.cont [12/16] 0.0, 128
      %6043 = vxpose.xlu0.b32.cont [13/16] 0.0, 128
      %6044 = vxpose.xlu0.b32.cont [14/16] 0.0, 128
      %6045 = vxpose.xlu0.b32.cont [15/16] 0.0, 128
      %6046 = vxpose.xlu0.b32.end [16/16] 0.0, 128
      %v6047 = vpop.trf.xlu0
      %v6048 = vpop.trf.xlu0
      %v6049 = vpop.trf.xlu0
      %v6050 = vpop.trf.xlu0
      %v6051 = vpop.trf.xlu0
      %v6052 = vpop.trf.xlu0
      %v6053 = vpop.trf.xlu0
      %v6054 = vpop.trf.xlu0
      %v6055 = vpop.trf.xlu0
      %v6056 = vpop.trf.xlu0
      %v6057 = vpop.trf.xlu0
      %v6058 = vpop.trf.xlu0
      %v6059 = vpop.trf.xlu0
      %v6060 = vpop.trf.xlu0
      %v6061 = vpop.trf.xlu0
      %v6062 = vpop.trf.xlu0
      %6063 = vxpose.xlu0.b32.start [1/16] %v5285, 128
      %6064 = vxpose.xlu0.b32.cont [2/16] %v5286, 128
      %6065 = vxpose.xlu0.b32.cont [3/16] 0.0, 128
      %6066 = vxpose.xlu0.b32.cont [4/16] 0.0, 128
      %6067 = vxpose.xlu0.b32.cont [5/16] 0.0, 128
      %6068 = vxpose.xlu0.b32.cont [6/16] 0.0, 128
      %6069 = vxpose.xlu0.b32.cont [7/16] 0.0, 128
      %6070 = vxpose.xlu0.b32.cont [8/16] 0.0, 128
      %6071 = vxpose.xlu0.b32.cont [9/16] 0.0, 128
      %6072 = vxpose.xlu0.b32.cont [10/16] 0.0, 128
      %6073 = vxpose.xlu0.b32.cont [11/16] 0.0, 128
      %6074 = vxpose.xlu0.b32.cont [12/16] 0.0, 128
      %6075 = vxpose.xlu0.b32.cont [13/16] 0.0, 128
      %6076 = vxpose.xlu0.b32.cont [14/16] 0.0, 128
      %6077 = vxpose.xlu0.b32.cont [15/16] 0.0, 128
      %6078 = vxpose.xlu0.b32.end [16/16] 0.0, 128
      %v6079 = vpop.trf.xlu0
      %v6080 = vpop.trf.xlu0
      %v6081 = vpop.trf.xlu0
      %v6082 = vpop.trf.xlu0
      %v6083 = vpop.trf.xlu0
      %v6084 = vpop.trf.xlu0
      %v6085 = vpop.trf.xlu0
      %v6086 = vpop.trf.xlu0
      %v6087 = vpop.trf.xlu0
      %v6088 = vpop.trf.xlu0
      %v6089 = vpop.trf.xlu0
      %v6090 = vpop.trf.xlu0
      %v6091 = vpop.trf.xlu0
      %v6092 = vpop.trf.xlu0
      %v6093 = vpop.trf.xlu0
      %v6094 = vpop.trf.xlu0
      %6095 = vxpose.xlu0.b32.start [1/16] %v5287, 128
      %6096 = vxpose.xlu0.b32.cont [2/16] %v5288, 128
      %6097 = vxpose.xlu0.b32.cont [3/16] 0.0, 128
      %6098 = vxpose.xlu0.b32.cont [4/16] 0.0, 128
      %6099 = vxpose.xlu0.b32.cont [5/16] 0.0, 128
      %6100 = vxpose.xlu0.b32.cont [6/16] 0.0, 128
      %6101 = vxpose.xlu0.b32.cont [7/16] 0.0, 128
      %6102 = vxpose.xlu0.b32.cont [8/16] 0.0, 128
      %6103 = vxpose.xlu0.b32.cont [9/16] 0.0, 128
      %6104 = vxpose.xlu0.b32.cont [10/16] 0.0, 128
      %6105 = vxpose.xlu0.b32.cont [11/16] 0.0, 128
      %6106 = vxpose.xlu0.b32.cont [12/16] 0.0, 128
      %6107 = vxpose.xlu0.b32.cont [13/16] 0.0, 128
      %6108 = vxpose.xlu0.b32.cont [14/16] 0.0, 128
      %6109 = vxpose.xlu0.b32.cont [15/16] 0.0, 128
      %6110 = vxpose.xlu0.b32.end [16/16] 0.0, 128
      %v6111 = vpop.trf.xlu0
      %v6112 = vpop.trf.xlu0
      %v6113 = vpop.trf.xlu0
      %v6114 = vpop.trf.xlu0
      %v6115 = vpop.trf.xlu0
      %v6116 = vpop.trf.xlu0
      %v6117 = vpop.trf.xlu0
      %v6118 = vpop.trf.xlu0
      %v6119 = vpop.trf.xlu0
      %v6120 = vpop.trf.xlu0
      %v6121 = vpop.trf.xlu0
      %v6122 = vpop.trf.xlu0
      %v6123 = vpop.trf.xlu0
      %v6124 = vpop.trf.xlu0
      %v6125 = vpop.trf.xlu0
      %v6126 = vpop.trf.xlu0
      %6127 = vxpose.xlu0.b32.start [1/16] %v5289, 128
      %6128 = vxpose.xlu0.b32.cont [2/16] %v5290, 128
      %6129 = vxpose.xlu0.b32.cont [3/16] 0.0, 128
      %6130 = vxpose.xlu0.b32.cont [4/16] 0.0, 128
      %6131 = vxpose.xlu0.b32.cont [5/16] 0.0, 128
      %6132 = vxpose.xlu0.b32.cont [6/16] 0.0, 128
      %6133 = vxpose.xlu0.b32.cont [7/16] 0.0, 128
      %6134 = vxpose.xlu0.b32.cont [8/16] 0.0, 128
      %6135 = vxpose.xlu0.b32.cont [9/16] 0.0, 128
      %6136 = vxpose.xlu0.b32.cont [10/16] 0.0, 128
      %6137 = vxpose.xlu0.b32.cont [11/16] 0.0, 128
      %6138 = vxpose.xlu0.b32.cont [12/16] 0.0, 128
      %6139 = vxpose.xlu0.b32.cont [13/16] 0.0, 128
      %6140 = vxpose.xlu0.b32.cont [14/16] 0.0, 128
      %6141 = vxpose.xlu0.b32.cont [15/16] 0.0, 128
      %6142 = vxpose.xlu0.b32.end [16/16] 0.0, 128
      %v6143 = vpop.trf.xlu0
      %v6144 = vpop.trf.xlu0
      %v6145 = vpop.trf.xlu0
      %v6146 = vpop.trf.xlu0
      %v6147 = vpop.trf.xlu0
      %v6148 = vpop.trf.xlu0
      %v6149 = vpop.trf.xlu0
      %v6150 = vpop.trf.xlu0
      %v6151 = vpop.trf.xlu0
      %v6152 = vpop.trf.xlu0
      %v6153 = vpop.trf.xlu0
      %v6154 = vpop.trf.xlu0
      %v6155 = vpop.trf.xlu0
      %v6156 = vpop.trf.xlu0
      %v6157 = vpop.trf.xlu0
      %v6158 = vpop.trf.xlu0
      %6159 = vxpose.xlu0.b32.start [1/16] %v5291, 128
      %6160 = vxpose.xlu0.b32.cont [2/16] %v5292, 128
      %6161 = vxpose.xlu0.b32.cont [3/16] 0.0, 128
      %6162 = vxpose.xlu0.b32.cont [4/16] 0.0, 128
      %6163 = vxpose.xlu0.b32.cont [5/16] 0.0, 128
      %6164 = vxpose.xlu0.b32.cont [6/16] 0.0, 128
      %6165 = vxpose.xlu0.b32.cont [7/16] 0.0, 128
      %6166 = vxpose.xlu0.b32.cont [8/16] 0.0, 128
      %6167 = vxpose.xlu0.b32.cont [9/16] 0.0, 128
      %6168 = vxpose.xlu0.b32.cont [10/16] 0.0, 128
      %6169 = vxpose.xlu0.b32.cont [11/16] 0.0, 128
      %6170 = vxpose.xlu0.b32.cont [12/16] 0.0, 128
      %6171 = vxpose.xlu0.b32.cont [13/16] 0.0, 128
      %6172 = vxpose.xlu0.b32.cont [14/16] 0.0, 128
      %6173 = vxpose.xlu0.b32.cont [15/16] 0.0, 128
      %6174 = vxpose.xlu0.b32.end [16/16] 0.0, 128
      %v6175 = vpop.trf.xlu0
      %v6176 = vpop.trf.xlu0
      %v6177 = vpop.trf.xlu0
      %v6178 = vpop.trf.xlu0
      %v6179 = vpop.trf.xlu0
      %v6180 = vpop.trf.xlu0
      %v6181 = vpop.trf.xlu0
      %v6182 = vpop.trf.xlu0
      %v6183 = vpop.trf.xlu0
      %v6184 = vpop.trf.xlu0
      %v6185 = vpop.trf.xlu0
      %v6186 = vpop.trf.xlu0
      %v6187 = vpop.trf.xlu0
      %v6188 = vpop.trf.xlu0
      %v6189 = vpop.trf.xlu0
      %v6190 = vpop.trf.xlu0
      %6191 = vxpose.xlu0.b32.start [1/16] %v5293, 128
      %6192 = vxpose.xlu0.b32.cont [2/16] %v5294, 128
      %6193 = vxpose.xlu0.b32.cont [3/16] 0.0, 128
      %6194 = vxpose.xlu0.b32.cont [4/16] 0.0, 128
      %6195 = vxpose.xlu0.b32.cont [5/16] 0.0, 128
      %6196 = vxpose.xlu0.b32.cont [6/16] 0.0, 128
      %6197 = vxpose.xlu0.b32.cont [7/16] 0.0, 128
      %6198 = vxpose.xlu0.b32.cont [8/16] 0.0, 128
      %6199 = vxpose.xlu0.b32.cont [9/16] 0.0, 128
      %6200 = vxpose.xlu0.b32.cont [10/16] 0.0, 128
      %6201 = vxpose.xlu0.b32.cont [11/16] 0.0, 128
      %6202 = vxpose.xlu0.b32.cont [12/16] 0.0, 128
      %6203 = vxpose.xlu0.b32.cont [13/16] 0.0, 128
      %6204 = vxpose.xlu0.b32.cont [14/16] 0.0, 128
      %6205 = vxpose.xlu0.b32.cont [15/16] 0.0, 128
      %6206 = vxpose.xlu0.b32.end [16/16] 0.0, 128
      %v6207 = vpop.trf.xlu0
      %v6208 = vpop.trf.xlu0
      %v6209 = vpop.trf.xlu0
      %v6210 = vpop.trf.xlu0
      %v6211 = vpop.trf.xlu0
      %v6212 = vpop.trf.xlu0
      %v6213 = vpop.trf.xlu0
      %v6214 = vpop.trf.xlu0
      %v6215 = vpop.trf.xlu0
      %v6216 = vpop.trf.xlu0
      %v6217 = vpop.trf.xlu0
      %v6218 = vpop.trf.xlu0
      %v6219 = vpop.trf.xlu0
      %v6220 = vpop.trf.xlu0
      %v6221 = vpop.trf.xlu0
      %v6222 = vpop.trf.xlu0
      %6223 = vxpose.xlu0.b32.start [1/16] %v5295, 128
      %6224 = vxpose.xlu0.b32.cont [2/16] %v5296, 128
      %6225 = vxpose.xlu0.b32.cont [3/16] 0.0, 128
      %6226 = vxpose.xlu0.b32.cont [4/16] 0.0, 128
      %6227 = vxpose.xlu0.b32.cont [5/16] 0.0, 128
      %6228 = vxpose.xlu0.b32.cont [6/16] 0.0, 128
      %6229 = vxpose.xlu0.b32.cont [7/16] 0.0, 128
      %6230 = vxpose.xlu0.b32.cont [8/16] 0.0, 128
      %6231 = vxpose.xlu0.b32.cont [9/16] 0.0, 128
      %6232 = vxpose.xlu0.b32.cont [10/16] 0.0, 128
      %6233 = vxpose.xlu0.b32.cont [11/16] 0.0, 128
      %6234 = vxpose.xlu0.b32.cont [12/16] 0.0, 128
      %6235 = vxpose.xlu0.b32.cont [13/16] 0.0, 128
      %6236 = vxpose.xlu0.b32.cont [14/16] 0.0, 128
      %6237 = vxpose.xlu0.b32.cont [15/16] 0.0, 128
      %6238 = vxpose.xlu0.b32.end [16/16] 0.0, 128
      %v6239 = vpop.trf.xlu0
      %v6240 = vpop.trf.xlu0
      %v6241 = vpop.trf.xlu0
      %v6242 = vpop.trf.xlu0
      %v6243 = vpop.trf.xlu0
      %v6244 = vpop.trf.xlu0
      %v6245 = vpop.trf.xlu0
      %v6246 = vpop.trf.xlu0
      %v6247 = vpop.trf.xlu0
      %v6248 = vpop.trf.xlu0
      %v6249 = vpop.trf.xlu0
      %v6250 = vpop.trf.xlu0
      %v6251 = vpop.trf.xlu0
      %v6252 = vpop.trf.xlu0
      %v6253 = vpop.trf.xlu0
      %v6254 = vpop.trf.xlu0
      %6255 = vxpose.xlu0.b32.start [1/16] %v5297, 128
      %6256 = vxpose.xlu0.b32.cont [2/16] %v5298, 128
      %6257 = vxpose.xlu0.b32.cont [3/16] 0.0, 128
      %6258 = vxpose.xlu0.b32.cont [4/16] 0.0, 128
      %6259 = vxpose.xlu0.b32.cont [5/16] 0.0, 128
      %6260 = vxpose.xlu0.b32.cont [6/16] 0.0, 128
      %6261 = vxpose.xlu0.b32.cont [7/16] 0.0, 128
      %6262 = vxpose.xlu0.b32.cont [8/16] 0.0, 128
      %6263 = vxpose.xlu0.b32.cont [9/16] 0.0, 128
      %6264 = vxpose.xlu0.b32.cont [10/16] 0.0, 128
      %6265 = vxpose.xlu0.b32.cont [11/16] 0.0, 128
      %6266 = vxpose.xlu0.b32.cont [12/16] 0.0, 128
      %6267 = vxpose.xlu0.b32.cont [13/16] 0.0, 128
      %6268 = vxpose.xlu0.b32.cont [14/16] 0.0, 128
      %6269 = vxpose.xlu0.b32.cont [15/16] 0.0, 128
      %6270 = vxpose.xlu0.b32.end [16/16] 0.0, 128
      %v6271 = vpop.trf.xlu0
      %v6272 = vpop.trf.xlu0
      %v6273 = vpop.trf.xlu0
      %v6274 = vpop.trf.xlu0
      %v6275 = vpop.trf.xlu0
      %v6276 = vpop.trf.xlu0
      %v6277 = vpop.trf.xlu0
      %v6278 = vpop.trf.xlu0
      %v6279 = vpop.trf.xlu0
      %v6280 = vpop.trf.xlu0
      %v6281 = vpop.trf.xlu0
      %v6282 = vpop.trf.xlu0
      %v6283 = vpop.trf.xlu0
      %v6284 = vpop.trf.xlu0
      %v6285 = vpop.trf.xlu0
      %v6286 = vpop.trf.xlu0
      %6287 = vxpose.xlu0.b32.start [1/16] %v5299, 128
      %6288 = vxpose.xlu0.b32.cont [2/16] %v5300, 128
      %6289 = vxpose.xlu0.b32.cont [3/16] 0.0, 128
      %6290 = vxpose.xlu0.b32.cont [4/16] 0.0, 128
      %6291 = vxpose.xlu0.b32.cont [5/16] 0.0, 128
      %6292 = vxpose.xlu0.b32.cont [6/16] 0.0, 128
      %6293 = vxpose.xlu0.b32.cont [7/16] 0.0, 128
      %6294 = vxpose.xlu0.b32.cont [8/16] 0.0, 128
      %6295 = vxpose.xlu0.b32.cont [9/16] 0.0, 128
      %6296 = vxpose.xlu0.b32.cont [10/16] 0.0, 128
      %6297 = vxpose.xlu0.b32.cont [11/16] 0.0, 128
      %6298 = vxpose.xlu0.b32.cont [12/16] 0.0, 128
      %6299 = vxpose.xlu0.b32.cont [13/16] 0.0, 128
      %6300 = vxpose.xlu0.b32.cont [14/16] 0.0, 128
      %6301 = vxpose.xlu0.b32.cont [15/16] 0.0, 128
      %6302 = vxpose.xlu0.b32.end [16/16] 0.0, 128
      %v6303 = vpop.trf.xlu0
      %v6304 = vpop.trf.xlu0
      %v6305 = vpop.trf.xlu0
      %v6306 = vpop.trf.xlu0
      %v6307 = vpop.trf.xlu0
      %v6308 = vpop.trf.xlu0
      %v6309 = vpop.trf.xlu0
      %v6310 = vpop.trf.xlu0
      %v6311 = vpop.trf.xlu0
      %v6312 = vpop.trf.xlu0
      %v6313 = vpop.trf.xlu0
      %v6314 = vpop.trf.xlu0
      %v6315 = vpop.trf.xlu0
      %v6316 = vpop.trf.xlu0
      %v6317 = vpop.trf.xlu0
      %v6318 = vpop.trf.xlu0
      %6319 = vxpose.xlu0.b32.start [1/16] %v5301, 128
      %6320 = vxpose.xlu0.b32.cont [2/16] %v5302, 128
      %6321 = vxpose.xlu0.b32.cont [3/16] 0.0, 128
      %6322 = vxpose.xlu0.b32.cont [4/16] 0.0, 128
      %6323 = vxpose.xlu0.b32.cont [5/16] 0.0, 128
      %6324 = vxpose.xlu0.b32.cont [6/16] 0.0, 128
      %6325 = vxpose.xlu0.b32.cont [7/16] 0.0, 128
      %6326 = vxpose.xlu0.b32.cont [8/16] 0.0, 128
      %6327 = vxpose.xlu0.b32.cont [9/16] 0.0, 128
      %6328 = vxpose.xlu0.b32.cont [10/16] 0.0, 128
      %6329 = vxpose.xlu0.b32.cont [11/16] 0.0, 128
      %6330 = vxpose.xlu0.b32.cont [12/16] 0.0, 128
      %6331 = vxpose.xlu0.b32.cont [13/16] 0.0, 128
      %6332 = vxpose.xlu0.b32.cont [14/16] 0.0, 128
      %6333 = vxpose.xlu0.b32.cont [15/16] 0.0, 128
      %6334 = vxpose.xlu0.b32.end [16/16] 0.0, 128
      %v6335 = vpop.trf.xlu0
      %v6336 = vpop.trf.xlu0
      %v6337 = vpop.trf.xlu0
      %v6338 = vpop.trf.xlu0
      %v6339 = vpop.trf.xlu0
      %v6340 = vpop.trf.xlu0
      %v6341 = vpop.trf.xlu0
      %v6342 = vpop.trf.xlu0
      %v6343 = vpop.trf.xlu0
      %v6344 = vpop.trf.xlu0
      %v6345 = vpop.trf.xlu0
      %v6346 = vpop.trf.xlu0
      %v6347 = vpop.trf.xlu0
      %v6348 = vpop.trf.xlu0
      %v6349 = vpop.trf.xlu0
      %v6350 = vpop.trf.xlu0
      %6351 = vxpose.xlu0.b32.start [1/16] %v5303, 128
      %6352 = vxpose.xlu0.b32.cont [2/16] %v5304, 128
      %6353 = vxpose.xlu0.b32.cont [3/16] 0.0, 128
      %6354 = vxpose.xlu0.b32.cont [4/16] 0.0, 128
      %6355 = vxpose.xlu0.b32.cont [5/16] 0.0, 128
      %6356 = vxpose.xlu0.b32.cont [6/16] 0.0, 128
      %6357 = vxpose.xlu0.b32.cont [7/16] 0.0, 128
      %6358 = vxpose.xlu0.b32.cont [8/16] 0.0, 128
      %6359 = vxpose.xlu0.b32.cont [9/16] 0.0, 128
      %6360 = vxpose.xlu0.b32.cont [10/16] 0.0, 128
      %6361 = vxpose.xlu0.b32.cont [11/16] 0.0, 128
      %6362 = vxpose.xlu0.b32.cont [12/16] 0.0, 128
      %6363 = vxpose.xlu0.b32.cont [13/16] 0.0, 128
      %6364 = vxpose.xlu0.b32.cont [14/16] 0.0, 128
      %6365 = vxpose.xlu0.b32.cont [15/16] 0.0, 128
      %6366 = vxpose.xlu0.b32.end [16/16] 0.0, 128
      %v6367 = vpop.trf.xlu0
      %v6368 = vpop.trf.xlu0
      %v6369 = vpop.trf.xlu0
      %v6370 = vpop.trf.xlu0
      %v6371 = vpop.trf.xlu0
      %v6372 = vpop.trf.xlu0
      %v6373 = vpop.trf.xlu0
      %v6374 = vpop.trf.xlu0
      %v6375 = vpop.trf.xlu0
      %v6376 = vpop.trf.xlu0
      %v6377 = vpop.trf.xlu0
      %v6378 = vpop.trf.xlu0
      %v6379 = vpop.trf.xlu0
      %v6380 = vpop.trf.xlu0
      %v6381 = vpop.trf.xlu0
      %v6382 = vpop.trf.xlu0
      %6383 = vxpose.xlu0.b32.start [1/16] %v5305, 128
      %6384 = vxpose.xlu0.b32.cont [2/16] %v5306, 128
      %6385 = vxpose.xlu0.b32.cont [3/16] 0.0, 128
      %6386 = vxpose.xlu0.b32.cont [4/16] 0.0, 128
      %6387 = vxpose.xlu0.b32.cont [5/16] 0.0, 128
      %6388 = vxpose.xlu0.b32.cont [6/16] 0.0, 128
      %6389 = vxpose.xlu0.b32.cont [7/16] 0.0, 128
      %6390 = vxpose.xlu0.b32.cont [8/16] 0.0, 128
      %6391 = vxpose.xlu0.b32.cont [9/16] 0.0, 128
      %6392 = vxpose.xlu0.b32.cont [10/16] 0.0, 128
      %6393 = vxpose.xlu0.b32.cont [11/16] 0.0, 128
      %6394 = vxpose.xlu0.b32.cont [12/16] 0.0, 128
      %6395 = vxpose.xlu0.b32.cont [13/16] 0.0, 128
      %6396 = vxpose.xlu0.b32.cont [14/16] 0.0, 128
      %6397 = vxpose.xlu0.b32.cont [15/16] 0.0, 128
      %6398 = vxpose.xlu0.b32.end [16/16] 0.0, 128
      %v6399 = vpop.trf.xlu0
      %v6400 = vpop.trf.xlu0
      %v6401 = vpop.trf.xlu0
      %v6402 = vpop.trf.xlu0
      %v6403 = vpop.trf.xlu0
      %v6404 = vpop.trf.xlu0
      %v6405 = vpop.trf.xlu0
      %v6406 = vpop.trf.xlu0
      %v6407 = vpop.trf.xlu0
      %v6408 = vpop.trf.xlu0
      %v6409 = vpop.trf.xlu0
      %v6410 = vpop.trf.xlu0
      %v6411 = vpop.trf.xlu0
      %v6412 = vpop.trf.xlu0
      %v6413 = vpop.trf.xlu0
      %v6414 = vpop.trf.xlu0
      %6415 = vxpose.xlu0.b32.start [1/16] %v5307, 128
      %6416 = vxpose.xlu0.b32.cont [2/16] %v5308, 128
      %6417 = vxpose.xlu0.b32.cont [3/16] 0.0, 128
      %6418 = vxpose.xlu0.b32.cont [4/16] 0.0, 128
      %6419 = vxpose.xlu0.b32.cont [5/16] 0.0, 128
      %6420 = vxpose.xlu0.b32.cont [6/16] 0.0, 128
      %6421 = vxpose.xlu0.b32.cont [7/16] 0.0, 128
      %6422 = vxpose.xlu0.b32.cont [8/16] 0.0, 128
      %6423 = vxpose.xlu0.b32.cont [9/16] 0.0, 128
      %6424 = vxpose.xlu0.b32.cont [10/16] 0.0, 128
      %6425 = vxpose.xlu0.b32.cont [11/16] 0.0, 128
      %6426 = vxpose.xlu0.b32.cont [12/16] 0.0, 128
      %6427 = vxpose.xlu0.b32.cont [13/16] 0.0, 128
      %6428 = vxpose.xlu0.b32.cont [14/16] 0.0, 128
      %6429 = vxpose.xlu0.b32.cont [15/16] 0.0, 128
      %6430 = vxpose.xlu0.b32.end [16/16] 0.0, 128
      %v6431 = vpop.trf.xlu0
      %v6432 = vpop.trf.xlu0
      %v6433 = vpop.trf.xlu0
      %v6434 = vpop.trf.xlu0
      %v6435 = vpop.trf.xlu0
      %v6436 = vpop.trf.xlu0
      %v6437 = vpop.trf.xlu0
      %v6438 = vpop.trf.xlu0
      %v6439 = vpop.trf.xlu0
      %v6440 = vpop.trf.xlu0
      %v6441 = vpop.trf.xlu0
      %v6442 = vpop.trf.xlu0
      %v6443 = vpop.trf.xlu0
      %v6444 = vpop.trf.xlu0
      %v6445 = vpop.trf.xlu0
      %v6446 = vpop.trf.xlu0
      %6447 = vxpose.xlu0.b32.start [1/16] %v5309, 128
      %6448 = vxpose.xlu0.b32.cont [2/16] %v5310, 128
      %6449 = vxpose.xlu0.b32.cont [3/16] 0.0, 128
      %6450 = vxpose.xlu0.b32.cont [4/16] 0.0, 128
      %6451 = vxpose.xlu0.b32.cont [5/16] 0.0, 128
      %6452 = vxpose.xlu0.b32.cont [6/16] 0.0, 128
      %6453 = vxpose.xlu0.b32.cont [7/16] 0.0, 128
      %6454 = vxpose.xlu0.b32.cont [8/16] 0.0, 128
      %6455 = vxpose.xlu0.b32.cont [9/16] 0.0, 128
      %6456 = vxpose.xlu0.b32.cont [10/16] 0.0, 128
      %6457 = vxpose.xlu0.b32.cont [11/16] 0.0, 128
      %6458 = vxpose.xlu0.b32.cont [12/16] 0.0, 128
      %6459 = vxpose.xlu0.b32.cont [13/16] 0.0, 128
      %6460 = vxpose.xlu0.b32.cont [14/16] 0.0, 128
      %6461 = vxpose.xlu0.b32.cont [15/16] 0.0, 128
      %6462 = vxpose.xlu0.b32.end [16/16] 0.0, 128
      %v6463 = vpop.trf.xlu0
      %v6464 = vpop.trf.xlu0
      %v6465 = vpop.trf.xlu0
      %v6466 = vpop.trf.xlu0
      %v6467 = vpop.trf.xlu0
      %v6468 = vpop.trf.xlu0
      %v6469 = vpop.trf.xlu0
      %v6470 = vpop.trf.xlu0
      %v6471 = vpop.trf.xlu0
      %v6472 = vpop.trf.xlu0
      %v6473 = vpop.trf.xlu0
      %v6474 = vpop.trf.xlu0
      %v6475 = vpop.trf.xlu0
      %v6476 = vpop.trf.xlu0
      %v6477 = vpop.trf.xlu0
      %v6478 = vpop.trf.xlu0
      %6479 = vxpose.xlu0.b32.start [1/16] %v5311, 128
      %6480 = vxpose.xlu0.b32.cont [2/16] %v5312, 128
      %6481 = vxpose.xlu0.b32.cont [3/16] 0.0, 128
      %6482 = vxpose.xlu0.b32.cont [4/16] 0.0, 128
      %6483 = vxpose.xlu0.b32.cont [5/16] 0.0, 128
      %6484 = vxpose.xlu0.b32.cont [6/16] 0.0, 128
      %6485 = vxpose.xlu0.b32.cont [7/16] 0.0, 128
      %6486 = vxpose.xlu0.b32.cont [8/16] 0.0, 128
      %6487 = vxpose.xlu0.b32.cont [9/16] 0.0, 128
      %6488 = vxpose.xlu0.b32.cont [10/16] 0.0, 128
      %6489 = vxpose.xlu0.b32.cont [11/16] 0.0, 128
      %6490 = vxpose.xlu0.b32.cont [12/16] 0.0, 128
      %6491 = vxpose.xlu0.b32.cont [13/16] 0.0, 128
      %6492 = vxpose.xlu0.b32.cont [14/16] 0.0, 128
      %6493 = vxpose.xlu0.b32.cont [15/16] 0.0, 128
      %6494 = vxpose.xlu0.b32.end [16/16] 0.0, 128
      %v6495 = vpop.trf.xlu0
      %v6496 = vpop.trf.xlu0
      %v6497 = vpop.trf.xlu0
      %v6498 = vpop.trf.xlu0
      %v6499 = vpop.trf.xlu0
      %v6500 = vpop.trf.xlu0
      %v6501 = vpop.trf.xlu0
      %v6502 = vpop.trf.xlu0
      %v6503 = vpop.trf.xlu0
      %v6504 = vpop.trf.xlu0
      %v6505 = vpop.trf.xlu0
      %v6506 = vpop.trf.xlu0
      %v6507 = vpop.trf.xlu0
      %v6508 = vpop.trf.xlu0
      %v6509 = vpop.trf.xlu0
      %v6510 = vpop.trf.xlu0
      %6511 = vxpose.xlu0.b32.start [1/16] %v5313, 128
      %6512 = vxpose.xlu0.b32.cont [2/16] %v5314, 128
      %6513 = vxpose.xlu0.b32.cont [3/16] 0.0, 128
      %6514 = vxpose.xlu0.b32.cont [4/16] 0.0, 128
      %6515 = vxpose.xlu0.b32.cont [5/16] 0.0, 128
      %6516 = vxpose.xlu0.b32.cont [6/16] 0.0, 128
      %6517 = vxpose.xlu0.b32.cont [7/16] 0.0, 128
      %6518 = vxpose.xlu0.b32.cont [8/16] 0.0, 128
      %6519 = vxpose.xlu0.b32.cont [9/16] 0.0, 128
      %6520 = vxpose.xlu0.b32.cont [10/16] 0.0, 128
      %6521 = vxpose.xlu0.b32.cont [11/16] 0.0, 128
      %6522 = vxpose.xlu0.b32.cont [12/16] 0.0, 128
      %6523 = vxpose.xlu0.b32.cont [13/16] 0.0, 128
      %6524 = vxpose.xlu0.b32.cont [14/16] 0.0, 128
      %6525 = vxpose.xlu0.b32.cont [15/16] 0.0, 128
      %6526 = vxpose.xlu0.b32.end [16/16] 0.0, 128
      %v6527 = vpop.trf.xlu0
      %v6528 = vpop.trf.xlu0
      %v6529 = vpop.trf.xlu0
      %v6530 = vpop.trf.xlu0
      %v6531 = vpop.trf.xlu0
      %v6532 = vpop.trf.xlu0
      %v6533 = vpop.trf.xlu0
      %v6534 = vpop.trf.xlu0
      %v6535 = vpop.trf.xlu0
      %v6536 = vpop.trf.xlu0
      %v6537 = vpop.trf.xlu0
      %v6538 = vpop.trf.xlu0
      %v6539 = vpop.trf.xlu0
      %v6540 = vpop.trf.xlu0
      %v6541 = vpop.trf.xlu0
      %v6542 = vpop.trf.xlu0
      %6543 = vxpose.xlu0.b32.start [1/16] %v5315, 128
      %6544 = vxpose.xlu0.b32.cont [2/16] %v5316, 128
      %6545 = vxpose.xlu0.b32.cont [3/16] 0.0, 128
      %6546 = vxpose.xlu0.b32.cont [4/16] 0.0, 128
      %6547 = vxpose.xlu0.b32.cont [5/16] 0.0, 128
      %6548 = vxpose.xlu0.b32.cont [6/16] 0.0, 128
      %6549 = vxpose.xlu0.b32.cont [7/16] 0.0, 128
      %6550 = vxpose.xlu0.b32.cont [8/16] 0.0, 128
      %6551 = vxpose.xlu0.b32.cont [9/16] 0.0, 128
      %6552 = vxpose.xlu0.b32.cont [10/16] 0.0, 128
      %6553 = vxpose.xlu0.b32.cont [11/16] 0.0, 128
      %6554 = vxpose.xlu0.b32.cont [12/16] 0.0, 128
      %6555 = vxpose.xlu0.b32.cont [13/16] 0.0, 128
      %6556 = vxpose.xlu0.b32.cont [14/16] 0.0, 128
      %6557 = vxpose.xlu0.b32.cont [15/16] 0.0, 128
      %6558 = vxpose.xlu0.b32.end [16/16] 0.0, 128
      %v6559 = vpop.trf.xlu0
      %v6560 = vpop.trf.xlu0
      %v6561 = vpop.trf.xlu0
      %v6562 = vpop.trf.xlu0
      %v6563 = vpop.trf.xlu0
      %v6564 = vpop.trf.xlu0
      %v6565 = vpop.trf.xlu0
      %v6566 = vpop.trf.xlu0
      %v6567 = vpop.trf.xlu0
      %v6568 = vpop.trf.xlu0
      %v6569 = vpop.trf.xlu0
      %v6570 = vpop.trf.xlu0
      %v6571 = vpop.trf.xlu0
      %v6572 = vpop.trf.xlu0
      %v6573 = vpop.trf.xlu0
      %v6574 = vpop.trf.xlu0
      %6575 = vxpose.xlu0.b32.start [1/16] %v5317, 128
      %6576 = vxpose.xlu0.b32.cont [2/16] %v5318, 128
      %6577 = vxpose.xlu0.b32.cont [3/16] 0.0, 128
      %6578 = vxpose.xlu0.b32.cont [4/16] 0.0, 128
      %6579 = vxpose.xlu0.b32.cont [5/16] 0.0, 128
      %6580 = vxpose.xlu0.b32.cont [6/16] 0.0, 128
      %6581 = vxpose.xlu0.b32.cont [7/16] 0.0, 128
      %6582 = vxpose.xlu0.b32.cont [8/16] 0.0, 128
      %6583 = vxpose.xlu0.b32.cont [9/16] 0.0, 128
      %6584 = vxpose.xlu0.b32.cont [10/16] 0.0, 128
      %6585 = vxpose.xlu0.b32.cont [11/16] 0.0, 128
      %6586 = vxpose.xlu0.b32.cont [12/16] 0.0, 128
      %6587 = vxpose.xlu0.b32.cont [13/16] 0.0, 128
      %6588 = vxpose.xlu0.b32.cont [14/16] 0.0, 128
      %6589 = vxpose.xlu0.b32.cont [15/16] 0.0, 128
      %6590 = vxpose.xlu0.b32.end [16/16] 0.0, 128
      %v6591 = vpop.trf.xlu0
      %v6592 = vpop.trf.xlu0
      %v6593 = vpop.trf.xlu0
      %v6594 = vpop.trf.xlu0
      %v6595 = vpop.trf.xlu0
      %v6596 = vpop.trf.xlu0
      %v6597 = vpop.trf.xlu0
      %v6598 = vpop.trf.xlu0
      %v6599 = vpop.trf.xlu0
      %v6600 = vpop.trf.xlu0
      %v6601 = vpop.trf.xlu0
      %v6602 = vpop.trf.xlu0
      %v6603 = vpop.trf.xlu0
      %v6604 = vpop.trf.xlu0
      %v6605 = vpop.trf.xlu0
      %v6606 = vpop.trf.xlu0
      %6607 = vxpose.xlu0.b32.start [1/16] %v5319, 128
      %6608 = vxpose.xlu0.b32.cont [2/16] %v5320, 128
      %6609 = vxpose.xlu0.b32.cont [3/16] 0.0, 128
      %6610 = vxpose.xlu0.b32.cont [4/16] 0.0, 128
      %6611 = vxpose.xlu0.b32.cont [5/16] 0.0, 128
      %6612 = vxpose.xlu0.b32.cont [6/16] 0.0, 128
      %6613 = vxpose.xlu0.b32.cont [7/16] 0.0, 128
      %6614 = vxpose.xlu0.b32.cont [8/16] 0.0, 128
      %6615 = vxpose.xlu0.b32.cont [9/16] 0.0, 128
      %6616 = vxpose.xlu0.b32.cont [10/16] 0.0, 128
      %6617 = vxpose.xlu0.b32.cont [11/16] 0.0, 128
      %6618 = vxpose.xlu0.b32.cont [12/16] 0.0, 128
      %6619 = vxpose.xlu0.b32.cont [13/16] 0.0, 128
      %6620 = vxpose.xlu0.b32.cont [14/16] 0.0, 128
      %6621 = vxpose.xlu0.b32.cont [15/16] 0.0, 128
      %6622 = vxpose.xlu0.b32.end [16/16] 0.0, 128
      %v6623 = vpop.trf.xlu0
      %v6624 = vpop.trf.xlu0
      %v6625 = vpop.trf.xlu0
      %v6626 = vpop.trf.xlu0
      %v6627 = vpop.trf.xlu0
      %v6628 = vpop.trf.xlu0
      %v6629 = vpop.trf.xlu0
      %v6630 = vpop.trf.xlu0
      %v6631 = vpop.trf.xlu0
      %v6632 = vpop.trf.xlu0
      %v6633 = vpop.trf.xlu0
      %v6634 = vpop.trf.xlu0
      %v6635 = vpop.trf.xlu0
      %v6636 = vpop.trf.xlu0
      %v6637 = vpop.trf.xlu0
      %v6638 = vpop.trf.xlu0
      %6639 = vxpose.xlu0.b32.start [1/16] %v5321, 128
      %6640 = vxpose.xlu0.b32.cont [2/16] %v5322, 128
      %6641 = vxpose.xlu0.b32.cont [3/16] 0.0, 128
      %6642 = vxpose.xlu0.b32.cont [4/16] 0.0, 128
      %6643 = vxpose.xlu0.b32.cont [5/16] 0.0, 128
      %6644 = vxpose.xlu0.b32.cont [6/16] 0.0, 128
      %6645 = vxpose.xlu0.b32.cont [7/16] 0.0, 128
      %6646 = vxpose.xlu0.b32.cont [8/16] 0.0, 128
      %6647 = vxpose.xlu0.b32.cont [9/16] 0.0, 128
      %6648 = vxpose.xlu0.b32.cont [10/16] 0.0, 128
      %6649 = vxpose.xlu0.b32.cont [11/16] 0.0, 128
      %6650 = vxpose.xlu0.b32.cont [12/16] 0.0, 128
      %6651 = vxpose.xlu0.b32.cont [13/16] 0.0, 128
      %6652 = vxpose.xlu0.b32.cont [14/16] 0.0, 128
      %6653 = vxpose.xlu0.b32.cont [15/16] 0.0, 128
      %6654 = vxpose.xlu0.b32.end [16/16] 0.0, 128
      %v6655 = vpop.trf.xlu0
      %v6656 = vpop.trf.xlu0
      %v6657 = vpop.trf.xlu0
      %v6658 = vpop.trf.xlu0
      %v6659 = vpop.trf.xlu0
      %v6660 = vpop.trf.xlu0
      %v6661 = vpop.trf.xlu0
      %v6662 = vpop.trf.xlu0
      %v6663 = vpop.trf.xlu0
      %v6664 = vpop.trf.xlu0
      %v6665 = vpop.trf.xlu0
      %v6666 = vpop.trf.xlu0
      %v6667 = vpop.trf.xlu0
      %v6668 = vpop.trf.xlu0
      %v6669 = vpop.trf.xlu0
      %v6670 = vpop.trf.xlu0
      %6671 = vxpose.xlu0.b32.start [1/16] %v5323, 128
      %6672 = vxpose.xlu0.b32.cont [2/16] %v5324, 128
      %6673 = vxpose.xlu0.b32.cont [3/16] 0.0, 128
      %6674 = vxpose.xlu0.b32.cont [4/16] 0.0, 128
      %6675 = vxpose.xlu0.b32.cont [5/16] 0.0, 128
      %6676 = vxpose.xlu0.b32.cont [6/16] 0.0, 128
      %6677 = vxpose.xlu0.b32.cont [7/16] 0.0, 128
      %6678 = vxpose.xlu0.b32.cont [8/16] 0.0, 128
      %6679 = vxpose.xlu0.b32.cont [9/16] 0.0, 128
      %6680 = vxpose.xlu0.b32.cont [10/16] 0.0, 128
      %6681 = vxpose.xlu0.b32.cont [11/16] 0.0, 128
      %6682 = vxpose.xlu0.b32.cont [12/16] 0.0, 128
      %6683 = vxpose.xlu0.b32.cont [13/16] 0.0, 128
      %6684 = vxpose.xlu0.b32.cont [14/16] 0.0, 128
      %6685 = vxpose.xlu0.b32.cont [15/16] 0.0, 128
      %6686 = vxpose.xlu0.b32.end [16/16] 0.0, 128
      %v6687 = vpop.trf.xlu0
      %v6688 = vpop.trf.xlu0
      %v6689 = vpop.trf.xlu0
      %v6690 = vpop.trf.xlu0
      %v6691 = vpop.trf.xlu0
      %v6692 = vpop.trf.xlu0
      %v6693 = vpop.trf.xlu0
      %v6694 = vpop.trf.xlu0
      %v6695 = vpop.trf.xlu0
      %v6696 = vpop.trf.xlu0
      %v6697 = vpop.trf.xlu0
      %v6698 = vpop.trf.xlu0
      %v6699 = vpop.trf.xlu0
      %v6700 = vpop.trf.xlu0
      %v6701 = vpop.trf.xlu0
      %v6702 = vpop.trf.xlu0
      %6703 = vxpose.xlu0.b32.start [1/16] %v5325, 128
      %6704 = vxpose.xlu0.b32.cont [2/16] %v5326, 128
      %6705 = vxpose.xlu0.b32.cont [3/16] 0.0, 128
      %6706 = vxpose.xlu0.b32.cont [4/16] 0.0, 128
      %6707 = vxpose.xlu0.b32.cont [5/16] 0.0, 128
      %6708 = vxpose.xlu0.b32.cont [6/16] 0.0, 128
      %6709 = vxpose.xlu0.b32.cont [7/16] 0.0, 128
      %6710 = vxpose.xlu0.b32.cont [8/16] 0.0, 128
      %6711 = vxpose.xlu0.b32.cont [9/16] 0.0, 128
      %6712 = vxpose.xlu0.b32.cont [10/16] 0.0, 128
      %6713 = vxpose.xlu0.b32.cont [11/16] 0.0, 128
      %6714 = vxpose.xlu0.b32.cont [12/16] 0.0, 128
      %6715 = vxpose.xlu0.b32.cont [13/16] 0.0, 128
      %6716 = vxpose.xlu0.b32.cont [14/16] 0.0, 128
      %6717 = vxpose.xlu0.b32.cont [15/16] 0.0, 128
      %6718 = vxpose.xlu0.b32.end [16/16] 0.0, 128
      %v6719 = vpop.trf.xlu0
      %v6720 = vpop.trf.xlu0
      %v6721 = vpop.trf.xlu0
      %v6722 = vpop.trf.xlu0
      %v6723 = vpop.trf.xlu0
      %v6724 = vpop.trf.xlu0
      %v6725 = vpop.trf.xlu0
      %v6726 = vpop.trf.xlu0
      %v6727 = vpop.trf.xlu0
      %v6728 = vpop.trf.xlu0
      %v6729 = vpop.trf.xlu0
      %v6730 = vpop.trf.xlu0
      %v6731 = vpop.trf.xlu0
      %v6732 = vpop.trf.xlu0
      %v6733 = vpop.trf.xlu0
      %v6734 = vpop.trf.xlu0
      %6735 = vxpose.xlu0.b32.start [1/16] %v5327, 128
      %6736 = vxpose.xlu0.b32.cont [2/16] %v5328, 128
      %6737 = vxpose.xlu0.b32.cont [3/16] 0.0, 128
      %6738 = vxpose.xlu0.b32.cont [4/16] 0.0, 128
      %6739 = vxpose.xlu0.b32.cont [5/16] 0.0, 128
      %6740 = vxpose.xlu0.b32.cont [6/16] 0.0, 128
      %6741 = vxpose.xlu0.b32.cont [7/16] 0.0, 128
      %6742 = vxpose.xlu0.b32.cont [8/16] 0.0, 128
      %6743 = vxpose.xlu0.b32.cont [9/16] 0.0, 128
      %6744 = vxpose.xlu0.b32.cont [10/16] 0.0, 128
      %6745 = vxpose.xlu0.b32.cont [11/16] 0.0, 128
      %6746 = vxpose.xlu0.b32.cont [12/16] 0.0, 128
      %6747 = vxpose.xlu0.b32.cont [13/16] 0.0, 128
      %6748 = vxpose.xlu0.b32.cont [14/16] 0.0, 128
      %6749 = vxpose.xlu0.b32.cont [15/16] 0.0, 128
      %6750 = vxpose.xlu0.b32.end [16/16] 0.0, 128
      %v6751 = vpop.trf.xlu0
      %v6752 = vpop.trf.xlu0
      %v6753 = vpop.trf.xlu0
      %v6754 = vpop.trf.xlu0
      %v6755 = vpop.trf.xlu0
      %v6756 = vpop.trf.xlu0
      %v6757 = vpop.trf.xlu0
      %v6758 = vpop.trf.xlu0
      %v6759 = vpop.trf.xlu0
      %v6760 = vpop.trf.xlu0
      %v6761 = vpop.trf.xlu0
      %v6762 = vpop.trf.xlu0
      %v6763 = vpop.trf.xlu0
      %v6764 = vpop.trf.xlu0
      %v6765 = vpop.trf.xlu0
      %v6766 = vpop.trf.xlu0
      %6767 = vxpose.xlu0.b32.start [1/16] %v5329, 128
      %6768 = vxpose.xlu0.b32.cont [2/16] %v5330, 128
      %6769 = vxpose.xlu0.b32.cont [3/16] 0.0, 128
      %6770 = vxpose.xlu0.b32.cont [4/16] 0.0, 128
      %6771 = vxpose.xlu0.b32.cont [5/16] 0.0, 128
      %6772 = vxpose.xlu0.b32.cont [6/16] 0.0, 128
      %6773 = vxpose.xlu0.b32.cont [7/16] 0.0, 128
      %6774 = vxpose.xlu0.b32.cont [8/16] 0.0, 128
      %6775 = vxpose.xlu0.b32.cont [9/16] 0.0, 128
      %6776 = vxpose.xlu0.b32.cont [10/16] 0.0, 128
      %6777 = vxpose.xlu0.b32.cont [11/16] 0.0, 128
      %6778 = vxpose.xlu0.b32.cont [12/16] 0.0, 128
      %6779 = vxpose.xlu0.b32.cont [13/16] 0.0, 128
      %6780 = vxpose.xlu0.b32.cont [14/16] 0.0, 128
      %6781 = vxpose.xlu0.b32.cont [15/16] 0.0, 128
      %6782 = vxpose.xlu0.b32.end [16/16] 0.0, 128
      %v6783 = vpop.trf.xlu0
      %v6784 = vpop.trf.xlu0
      %v6785 = vpop.trf.xlu0
      %v6786 = vpop.trf.xlu0
      %v6787 = vpop.trf.xlu0
      %v6788 = vpop.trf.xlu0
      %v6789 = vpop.trf.xlu0
      %v6790 = vpop.trf.xlu0
      %v6791 = vpop.trf.xlu0
      %v6792 = vpop.trf.xlu0
      %v6793 = vpop.trf.xlu0
      %v6794 = vpop.trf.xlu0
      %v6795 = vpop.trf.xlu0
      %v6796 = vpop.trf.xlu0
      %v6797 = vpop.trf.xlu0
      %v6798 = vpop.trf.xlu0
      %6799 = vxpose.xlu0.b32.start [1/16] %v5331, 128
      %6800 = vxpose.xlu0.b32.cont [2/16] %v5332, 128
      %6801 = vxpose.xlu0.b32.cont [3/16] 0.0, 128
      %6802 = vxpose.xlu0.b32.cont [4/16] 0.0, 128
      %6803 = vxpose.xlu0.b32.cont [5/16] 0.0, 128
      %6804 = vxpose.xlu0.b32.cont [6/16] 0.0, 128
      %6805 = vxpose.xlu0.b32.cont [7/16] 0.0, 128
      %6806 = vxpose.xlu0.b32.cont [8/16] 0.0, 128
      %6807 = vxpose.xlu0.b32.cont [9/16] 0.0, 128
      %6808 = vxpose.xlu0.b32.cont [10/16] 0.0, 128
      %6809 = vxpose.xlu0.b32.cont [11/16] 0.0, 128
      %6810 = vxpose.xlu0.b32.cont [12/16] 0.0, 128
      %6811 = vxpose.xlu0.b32.cont [13/16] 0.0, 128
      %6812 = vxpose.xlu0.b32.cont [14/16] 0.0, 128
      %6813 = vxpose.xlu0.b32.cont [15/16] 0.0, 128
      %6814 = vxpose.xlu0.b32.end [16/16] 0.0, 128
      %v6815 = vpop.trf.xlu0
      %v6816 = vpop.trf.xlu0
      %v6817 = vpop.trf.xlu0
      %v6818 = vpop.trf.xlu0
      %v6819 = vpop.trf.xlu0
      %v6820 = vpop.trf.xlu0
      %v6821 = vpop.trf.xlu0
      %v6822 = vpop.trf.xlu0
      %v6823 = vpop.trf.xlu0
      %v6824 = vpop.trf.xlu0
      %v6825 = vpop.trf.xlu0
      %v6826 = vpop.trf.xlu0
      %v6827 = vpop.trf.xlu0
      %v6828 = vpop.trf.xlu0
      %v6829 = vpop.trf.xlu0
      %v6830 = vpop.trf.xlu0
      %6831 = vxpose.xlu0.b32.start [1/16] %v5333, 128
      %6832 = vxpose.xlu0.b32.cont [2/16] %v5334, 128
      %6833 = vxpose.xlu0.b32.cont [3/16] 0.0, 128
      %6834 = vxpose.xlu0.b32.cont [4/16] 0.0, 128
      %6835 = vxpose.xlu0.b32.cont [5/16] 0.0, 128
      %6836 = vxpose.xlu0.b32.cont [6/16] 0.0, 128
      %6837 = vxpose.xlu0.b32.cont [7/16] 0.0, 128
      %6838 = vxpose.xlu0.b32.cont [8/16] 0.0, 128
      %6839 = vxpose.xlu0.b32.cont [9/16] 0.0, 128
      %6840 = vxpose.xlu0.b32.cont [10/16] 0.0, 128
      %6841 = vxpose.xlu0.b32.cont [11/16] 0.0, 128
      %6842 = vxpose.xlu0.b32.cont [12/16] 0.0, 128
      %6843 = vxpose.xlu0.b32.cont [13/16] 0.0, 128
      %6844 = vxpose.xlu0.b32.cont [14/16] 0.0, 128
      %6845 = vxpose.xlu0.b32.cont [15/16] 0.0, 128
      %6846 = vxpose.xlu0.b32.end [16/16] 0.0, 128
      %v6847 = vpop.trf.xlu0
      %v6848 = vpop.trf.xlu0
      %v6849 = vpop.trf.xlu0
      %v6850 = vpop.trf.xlu0
      %v6851 = vpop.trf.xlu0
      %v6852 = vpop.trf.xlu0
      %v6853 = vpop.trf.xlu0
      %v6854 = vpop.trf.xlu0
      %v6855 = vpop.trf.xlu0
      %v6856 = vpop.trf.xlu0
      %v6857 = vpop.trf.xlu0
      %v6858 = vpop.trf.xlu0
      %v6859 = vpop.trf.xlu0
      %v6860 = vpop.trf.xlu0
      %v6861 = vpop.trf.xlu0
      %v6862 = vpop.trf.xlu0
      %6863 = vxpose.xlu0.b32.start [1/16] %v5335, 128
      %6864 = vxpose.xlu0.b32.cont [2/16] %v5336, 128
      %6865 = vxpose.xlu0.b32.cont [3/16] 0.0, 128
      %6866 = vxpose.xlu0.b32.cont [4/16] 0.0, 128
      %6867 = vxpose.xlu0.b32.cont [5/16] 0.0, 128
      %6868 = vxpose.xlu0.b32.cont [6/16] 0.0, 128
      %6869 = vxpose.xlu0.b32.cont [7/16] 0.0, 128
      %6870 = vxpose.xlu0.b32.cont [8/16] 0.0, 128
      %6871 = vxpose.xlu0.b32.cont [9/16] 0.0, 128
      %6872 = vxpose.xlu0.b32.cont [10/16] 0.0, 128
      %6873 = vxpose.xlu0.b32.cont [11/16] 0.0, 128
      %6874 = vxpose.xlu0.b32.cont [12/16] 0.0, 128
      %6875 = vxpose.xlu0.b32.cont [13/16] 0.0, 128
      %6876 = vxpose.xlu0.b32.cont [14/16] 0.0, 128
      %6877 = vxpose.xlu0.b32.cont [15/16] 0.0, 128
      %6878 = vxpose.xlu0.b32.end [16/16] 0.0, 128
      %v6879 = vpop.trf.xlu0
      %v6880 = vpop.trf.xlu0
      %v6881 = vpop.trf.xlu0
      %v6882 = vpop.trf.xlu0
      %v6883 = vpop.trf.xlu0
      %v6884 = vpop.trf.xlu0
      %v6885 = vpop.trf.xlu0
      %v6886 = vpop.trf.xlu0
      %v6887 = vpop.trf.xlu0
      %v6888 = vpop.trf.xlu0
      %v6889 = vpop.trf.xlu0
      %v6890 = vpop.trf.xlu0
      %v6891 = vpop.trf.xlu0
      %v6892 = vpop.trf.xlu0
      %v6893 = vpop.trf.xlu0
      %v6894 = vpop.trf.xlu0
      %6895 = vxpose.xlu0.b32.start [1/16] %v5337, 128
      %6896 = vxpose.xlu0.b32.cont [2/16] %v5338, 128
      %6897 = vxpose.xlu0.b32.cont [3/16] 0.0, 128
      %6898 = vxpose.xlu0.b32.cont [4/16] 0.0, 128
      %6899 = vxpose.xlu0.b32.cont [5/16] 0.0, 128
      %6900 = vxpose.xlu0.b32.cont [6/16] 0.0, 128
      %6901 = vxpose.xlu0.b32.cont [7/16] 0.0, 128
      %6902 = vxpose.xlu0.b32.cont [8/16] 0.0, 128
      %6903 = vxpose.xlu0.b32.cont [9/16] 0.0, 128
      %6904 = vxpose.xlu0.b32.cont [10/16] 0.0, 128
      %6905 = vxpose.xlu0.b32.cont [11/16] 0.0, 128
      %6906 = vxpose.xlu0.b32.cont [12/16] 0.0, 128
      %6907 = vxpose.xlu0.b32.cont [13/16] 0.0, 128
      %6908 = vxpose.xlu0.b32.cont [14/16] 0.0, 128
      %6909 = vxpose.xlu0.b32.cont [15/16] 0.0, 128
      %6910 = vxpose.xlu0.b32.end [16/16] 0.0, 128
      %v6911 = vpop.trf.xlu0
      %v6912 = vpop.trf.xlu0
      %v6913 = vpop.trf.xlu0
      %v6914 = vpop.trf.xlu0
      %v6915 = vpop.trf.xlu0
      %v6916 = vpop.trf.xlu0
      %v6917 = vpop.trf.xlu0
      %v6918 = vpop.trf.xlu0
      %v6919 = vpop.trf.xlu0
      %v6920 = vpop.trf.xlu0
      %v6921 = vpop.trf.xlu0
      %v6922 = vpop.trf.xlu0
      %v6923 = vpop.trf.xlu0
      %v6924 = vpop.trf.xlu0
      %v6925 = vpop.trf.xlu0
      %v6926 = vpop.trf.xlu0
      %6927 = vxpose.xlu0.b32.start [1/16] %v5339, 128
      %6928 = vxpose.xlu0.b32.cont [2/16] %v5340, 128
      %6929 = vxpose.xlu0.b32.cont [3/16] 0.0, 128
      %6930 = vxpose.xlu0.b32.cont [4/16] 0.0, 128
      %6931 = vxpose.xlu0.b32.cont [5/16] 0.0, 128
      %6932 = vxpose.xlu0.b32.cont [6/16] 0.0, 128
      %6933 = vxpose.xlu0.b32.cont [7/16] 0.0, 128
      %6934 = vxpose.xlu0.b32.cont [8/16] 0.0, 128
      %6935 = vxpose.xlu0.b32.cont [9/16] 0.0, 128
      %6936 = vxpose.xlu0.b32.cont [10/16] 0.0, 128
      %6937 = vxpose.xlu0.b32.cont [11/16] 0.0, 128
      %6938 = vxpose.xlu0.b32.cont [12/16] 0.0, 128
      %6939 = vxpose.xlu0.b32.cont [13/16] 0.0, 128
      %6940 = vxpose.xlu0.b32.cont [14/16] 0.0, 128
      %6941 = vxpose.xlu0.b32.cont [15/16] 0.0, 128
      %6942 = vxpose.xlu0.b32.end [16/16] 0.0, 128
      %v6943 = vpop.trf.xlu0
      %v6944 = vpop.trf.xlu0
      %v6945 = vpop.trf.xlu0
      %v6946 = vpop.trf.xlu0
      %v6947 = vpop.trf.xlu0
      %v6948 = vpop.trf.xlu0
      %v6949 = vpop.trf.xlu0
      %v6950 = vpop.trf.xlu0
      %v6951 = vpop.trf.xlu0
      %v6952 = vpop.trf.xlu0
      %v6953 = vpop.trf.xlu0
      %v6954 = vpop.trf.xlu0
      %v6955 = vpop.trf.xlu0
      %v6956 = vpop.trf.xlu0
      %v6957 = vpop.trf.xlu0
      %v6958 = vpop.trf.xlu0
      %6959 = vxpose.xlu0.b32.start [1/16] %v5341, 128
      %6960 = vxpose.xlu0.b32.cont [2/16] %v5342, 128
      %6961 = vxpose.xlu0.b32.cont [3/16] 0.0, 128
      %6962 = vxpose.xlu0.b32.cont [4/16] 0.0, 128
      %6963 = vxpose.xlu0.b32.cont [5/16] 0.0, 128
      %6964 = vxpose.xlu0.b32.cont [6/16] 0.0, 128
      %6965 = vxpose.xlu0.b32.cont [7/16] 0.0, 128
      %6966 = vxpose.xlu0.b32.cont [8/16] 0.0, 128
      %6967 = vxpose.xlu0.b32.cont [9/16] 0.0, 128
      %6968 = vxpose.xlu0.b32.cont [10/16] 0.0, 128
      %6969 = vxpose.xlu0.b32.cont [11/16] 0.0, 128
      %6970 = vxpose.xlu0.b32.cont [12/16] 0.0, 128
      %6971 = vxpose.xlu0.b32.cont [13/16] 0.0, 128
      %6972 = vxpose.xlu0.b32.cont [14/16] 0.0, 128
      %6973 = vxpose.xlu0.b32.cont [15/16] 0.0, 128
      %6974 = vxpose.xlu0.b32.end [16/16] 0.0, 128
      %v6975 = vpop.trf.xlu0
      %v6976 = vpop.trf.xlu0
      %v6977 = vpop.trf.xlu0
      %v6978 = vpop.trf.xlu0
      %v6979 = vpop.trf.xlu0
      %v6980 = vpop.trf.xlu0
      %v6981 = vpop.trf.xlu0
      %v6982 = vpop.trf.xlu0
      %v6983 = vpop.trf.xlu0
      %v6984 = vpop.trf.xlu0
      %v6985 = vpop.trf.xlu0
      %v6986 = vpop.trf.xlu0
      %v6987 = vpop.trf.xlu0
      %v6988 = vpop.trf.xlu0
      %v6989 = vpop.trf.xlu0
      %v6990 = vpop.trf.xlu0
      %6991 = vxpose.xlu0.b32.start [1/16] %v5343, 128
      %6992 = vxpose.xlu0.b32.cont [2/16] %v5344, 128
      %6993 = vxpose.xlu0.b32.cont [3/16] 0.0, 128
      %6994 = vxpose.xlu0.b32.cont [4/16] 0.0, 128
      %6995 = vxpose.xlu0.b32.cont [5/16] 0.0, 128
      %6996 = vxpose.xlu0.b32.cont [6/16] 0.0, 128
      %6997 = vxpose.xlu0.b32.cont [7/16] 0.0, 128
      %6998 = vxpose.xlu0.b32.cont [8/16] 0.0, 128
      %6999 = vxpose.xlu0.b32.cont [9/16] 0.0, 128
      %7000 = vxpose.xlu0.b32.cont [10/16] 0.0, 128
      %7001 = vxpose.xlu0.b32.cont [11/16] 0.0, 128
      %7002 = vxpose.xlu0.b32.cont [12/16] 0.0, 128
      %7003 = vxpose.xlu0.b32.cont [13/16] 0.0, 128
      %7004 = vxpose.xlu0.b32.cont [14/16] 0.0, 128
      %7005 = vxpose.xlu0.b32.cont [15/16] 0.0, 128
      %7006 = vxpose.xlu0.b32.end [16/16] 0.0, 128
      %v7007 = vpop.trf.xlu0
      %v7008 = vpop.trf.xlu0
      %v7009 = vpop.trf.xlu0
      %v7010 = vpop.trf.xlu0
      %v7011 = vpop.trf.xlu0
      %v7012 = vpop.trf.xlu0
      %v7013 = vpop.trf.xlu0
      %v7014 = vpop.trf.xlu0
      %v7015 = vpop.trf.xlu0
      %v7016 = vpop.trf.xlu0
      %v7017 = vpop.trf.xlu0
      %v7018 = vpop.trf.xlu0
      %v7019 = vpop.trf.xlu0
      %v7020 = vpop.trf.xlu0
      %v7021 = vpop.trf.xlu0
      %v7022 = vpop.trf.xlu0
      %v7023 = vpack.c.bf16 %v6015, %v6015
      %v7024 = vpack.c.bf16 %v6047, %v6047
      %v7025 = vpack.c.bf16 %v6079, %v6079
      %v7026 = vpack.c.bf16 %v6111, %v6111
      %v7027 = vpack.c.bf16 %v6143, %v6143
      %v7028 = vpack.c.bf16 %v6175, %v6175
      %v7029 = vpack.c.bf16 %v6207, %v6207
      %v7030 = vpack.c.bf16 %v6239, %v6239
      %v7031 = vpack.c.bf16 %v6271, %v6271
      %v7032 = vpack.c.bf16 %v6303, %v6303
      %v7033 = vpack.c.bf16 %v6335, %v6335
      %v7034 = vpack.c.bf16 %v6367, %v6367
      %v7035 = vpack.c.bf16 %v6399, %v6399
      %v7036 = vpack.c.bf16 %v6431, %v6431
      %v7037 = vpack.c.bf16 %v6463, %v6463
      %v7038 = vpack.c.bf16 %v6495, %v6495
      %v7039 = vpack.c.bf16 %v6527, %v6527
      %v7040 = vpack.c.bf16 %v6559, %v6559
      %v7041 = vpack.c.bf16 %v6591, %v6591
      %v7042 = vpack.c.bf16 %v6623, %v6623
      %v7043 = vpack.c.bf16 %v6655, %v6655
      %v7044 = vpack.c.bf16 %v6687, %v6687
      %v7045 = vpack.c.bf16 %v6719, %v6719
      %v7046 = vpack.c.bf16 %v6751, %v6751
      %v7047 = vpack.c.bf16 %v6783, %v6783
      %v7048 = vpack.c.bf16 %v6815, %v6815
      %v7049 = vpack.c.bf16 %v6847, %v6847
      %v7050 = vpack.c.bf16 %v6879, %v6879
      %v7051 = vpack.c.bf16 %v6911, %v6911
      %v7052 = vpack.c.bf16 %v6943, %v6943
      %v7053 = vpack.c.bf16 %v6975, %v6975
      %v7054 = vpack.c.bf16 %v7007, %v7007
      %v7055 = vpack.c.bf16 %v6016, %v6016
      %v7056 = vpack.c.bf16 %v6048, %v6048
      %v7057 = vpack.c.bf16 %v6080, %v6080
      %v7058 = vpack.c.bf16 %v6112, %v6112
      %v7059 = vpack.c.bf16 %v6144, %v6144
      %v7060 = vpack.c.bf16 %v6176, %v6176
      %v7061 = vpack.c.bf16 %v6208, %v6208
      %v7062 = vpack.c.bf16 %v6240, %v6240
      %v7063 = vpack.c.bf16 %v6272, %v6272
      %v7064 = vpack.c.bf16 %v6304, %v6304
      %v7065 = vpack.c.bf16 %v6336, %v6336
      %v7066 = vpack.c.bf16 %v6368, %v6368
      %v7067 = vpack.c.bf16 %v6400, %v6400
      %v7068 = vpack.c.bf16 %v6432, %v6432
      %v7069 = vpack.c.bf16 %v6464, %v6464
      %v7070 = vpack.c.bf16 %v6496, %v6496
      %v7071 = vpack.c.bf16 %v6528, %v6528
      %v7072 = vpack.c.bf16 %v6560, %v6560
      %v7073 = vpack.c.bf16 %v6592, %v6592
      %v7074 = vpack.c.bf16 %v6624, %v6624
      %v7075 = vpack.c.bf16 %v6656, %v6656
      %v7076 = vpack.c.bf16 %v6688, %v6688
      %v7077 = vpack.c.bf16 %v6720, %v6720
      %v7078 = vpack.c.bf16 %v6752, %v6752
      %v7079 = vpack.c.bf16 %v6784, %v6784
      %v7080 = vpack.c.bf16 %v6816, %v6816
      %v7081 = vpack.c.bf16 %v6848, %v6848
      %v7082 = vpack.c.bf16 %v6880, %v6880
      %v7083 = vpack.c.bf16 %v6912, %v6912
      %v7084 = vpack.c.bf16 %v6944, %v6944
      %v7085 = vpack.c.bf16 %v6976, %v6976
      %v7086 = vpack.c.bf16 %v7008, %v7008
      %v7089 = vsel %vm331, %v7055, 0
      %7091 = vmatprep.subr.bf16.mxu0 0
      %7092 = vmatpush1.bf16.msra.mxu0 %v4290
      %7093 = vmatprep.subr.bf16.mxu0 0
      %7094 = vmatpush1.bf16.msra.mxu0 0
      %7095 = vmatprep.subr.bf16.mxu0 0
      %7096 = vmatpush1.bf16.msra.mxu0 0
      %7097 = vmatprep.subr.bf16.mxu0 0
      %7098 = vmatpush1.bf16.msra.mxu0 0
      %7099 = vmatprep.subr.bf16.mxu0 0
      %7100 = vmatpush1.bf16.msra.mxu0 0
      %7101 = vmatprep.subr.bf16.mxu0 0
      %7102 = vmatpush1.bf16.msra.mxu0 0
      %7103 = vmatprep.subr.bf16.mxu0 0
      %7104 = vmatpush1.bf16.msra.mxu0 0
      %7105 = vmatprep.subr.bf16.mxu0 0
      %7106 = vmatpush1.bf16.msra.mxu0 0
      %7107 = vmatprep.subr.bf16.mxu0 0
      %7108 = vmatpush1.bf16.msra.mxu0 0
      %7109 = vmatprep.subr.bf16.mxu0 0
      %7110 = vmatpush1.bf16.msra.mxu0 0
      %7111 = vmatprep.subr.bf16.mxu0 0
      %7112 = vmatpush1.bf16.msra.mxu0 0
      %7113 = vmatprep.subr.bf16.mxu0 0
      %7114 = vmatpush1.bf16.msra.mxu0 0
      %7115 = vmatprep.subr.bf16.mxu0 0
      %7116 = vmatpush1.bf16.msra.mxu0 0
      %7117 = vmatprep.subr.bf16.mxu0 0
      %7118 = vmatpush1.bf16.msra.mxu0 0
      %7119 = vmatprep.subr.bf16.mxu0 0
      %7120 = vmatpush1.bf16.msra.mxu0 0
      %7121 = vmatprep.subr.bf16.mxu0 0
      %7122 = vmatpush1.bf16.msra.mxu0 0
      %7123 = vmatprep.mubr.bf16.mxu0 0
      %7124 = vmatmul.mubr.bf16.gmra.mrb[0].mxu0 %v7089
      %v7125 = vpop.f32.mrb[0].mxu0
      %v7126 = vadd.f32 0.0, %v7125
      %v7127 = vpop.f32.mrb[0].mxu0
      %v7128 = vpop.f32.mrb[0].mxu0
      %v7129 = vpop.f32.mrb[0].mxu0
      %7130 = vdwg.mxu0
      %v7133 = vsel %vm331, %v7056, 0
      %7135 = vmatprep.subr.bf16.mxu0 0
      %7136 = vmatpush1.bf16.msra.mxu0 %v4292
      %7137 = vmatprep.subr.bf16.mxu0 0
      %7138 = vmatpush1.bf16.msra.mxu0 0
      %7139 = vmatprep.subr.bf16.mxu0 0
      %7140 = vmatpush1.bf16.msra.mxu0 0
      %7141 = vmatprep.subr.bf16.mxu0 0
      %7142 = vmatpush1.bf16.msra.mxu0 0
      %7143 = vmatprep.subr.bf16.mxu0 0
      %7144 = vmatpush1.bf16.msra.mxu0 0
      %7145 = vmatprep.subr.bf16.mxu0 0
      %7146 = vmatpush1.bf16.msra.mxu0 0
      %7147 = vmatprep.subr.bf16.mxu0 0
      %7148 = vmatpush1.bf16.msra.mxu0 0
      %7149 = vmatprep.subr.bf16.mxu0 0
      %7150 = vmatpush1.bf16.msra.mxu0 0
      %7151 = vmatprep.subr.bf16.mxu0 0
      %7152 = vmatpush1.bf16.msra.mxu0 0
      %7153 = vmatprep.subr.bf16.mxu0 0
      %7154 = vmatpush1.bf16.msra.mxu0 0
      %7155 = vmatprep.subr.bf16.mxu0 0
      %7156 = vmatpush1.bf16.msra.mxu0 0
      %7157 = vmatprep.subr.bf16.mxu0 0
      %7158 = vmatpush1.bf16.msra.mxu0 0
      %7159 = vmatprep.subr.bf16.mxu0 0
      %7160 = vmatpush1.bf16.msra.mxu0 0
      %7161 = vmatprep.subr.bf16.mxu0 0
      %7162 = vmatpush1.bf16.msra.mxu0 0
      %7163 = vmatprep.subr.bf16.mxu0 0
      %7164 = vmatpush1.bf16.msra.mxu0 0
      %7165 = vmatprep.subr.bf16.mxu0 0
      %7166 = vmatpush1.bf16.msra.mxu0 0
      %7167 = vmatprep.mubr.bf16.mxu0 0
      %7168 = vmatmul.mubr.bf16.gmra.mrb[0].mxu0 %v7133
      %v7169 = vpop.f32.mrb[0].mxu0
      %v7170 = vadd.f32 0.0, %v7169
      %v7171 = vpop.f32.mrb[0].mxu0
      %v7172 = vpop.f32.mrb[0].mxu0
      %v7173 = vpop.f32.mrb[0].mxu0
      %7174 = vdwg.mxu0
      %v7177 = vsel %vm331, %v7057, 0
      %7179 = vmatprep.subr.bf16.mxu0 0
      %7180 = vmatpush1.bf16.msra.mxu0 %v4294
      %7181 = vmatprep.subr.bf16.mxu0 0
      %7182 = vmatpush1.bf16.msra.mxu0 0
      %7183 = vmatprep.subr.bf16.mxu0 0
      %7184 = vmatpush1.bf16.msra.mxu0 0
      %7185 = vmatprep.subr.bf16.mxu0 0
      %7186 = vmatpush1.bf16.msra.mxu0 0
      %7187 = vmatprep.subr.bf16.mxu0 0
      %7188 = vmatpush1.bf16.msra.mxu0 0
      %7189 = vmatprep.subr.bf16.mxu0 0
      %7190 = vmatpush1.bf16.msra.mxu0 0
      %7191 = vmatprep.subr.bf16.mxu0 0
      %7192 = vmatpush1.bf16.msra.mxu0 0
      %7193 = vmatprep.subr.bf16.mxu0 0
      %7194 = vmatpush1.bf16.msra.mxu0 0
      %7195 = vmatprep.subr.bf16.mxu0 0
      %7196 = vmatpush1.bf16.msra.mxu0 0
      %7197 = vmatprep.subr.bf16.mxu0 0
      %7198 = vmatpush1.bf16.msra.mxu0 0
      %7199 = vmatprep.subr.bf16.mxu0 0
      %7200 = vmatpush1.bf16.msra.mxu0 0
      %7201 = vmatprep.subr.bf16.mxu0 0
      %7202 = vmatpush1.bf16.msra.mxu0 0
      %7203 = vmatprep.subr.bf16.mxu0 0
      %7204 = vmatpush1.bf16.msra.mxu0 0
      %7205 = vmatprep.subr.bf16.mxu0 0
      %7206 = vmatpush1.bf16.msra.mxu0 0
      %7207 = vmatprep.subr.bf16.mxu0 0
      %7208 = vmatpush1.bf16.msra.mxu0 0
      %7209 = vmatprep.subr.bf16.mxu0 0
      %7210 = vmatpush1.bf16.msra.mxu0 0
      %7211 = vmatprep.mubr.bf16.mxu0 0
      %7212 = vmatmul.mubr.bf16.gmra.mrb[0].mxu0 %v7177
      %v7213 = vpop.f32.mrb[0].mxu0
      %v7214 = vadd.f32 0.0, %v7213
      %v7215 = vpop.f32.mrb[0].mxu0
      %v7216 = vpop.f32.mrb[0].mxu0
      %v7217 = vpop.f32.mrb[0].mxu0
      %7218 = vdwg.mxu0
      %v7221 = vsel %vm331, %v7058, 0
      %7223 = vmatprep.subr.bf16.mxu0 0
      %7224 = vmatpush1.bf16.msra.mxu0 %v4296
      %7225 = vmatprep.subr.bf16.mxu0 0
      %7226 = vmatpush1.bf16.msra.mxu0 0
      %7227 = vmatprep.subr.bf16.mxu0 0
      %7228 = vmatpush1.bf16.msra.mxu0 0
      %7229 = vmatprep.subr.bf16.mxu0 0
      %7230 = vmatpush1.bf16.msra.mxu0 0
      %7231 = vmatprep.subr.bf16.mxu0 0
      %7232 = vmatpush1.bf16.msra.mxu0 0
      %7233 = vmatprep.subr.bf16.mxu0 0
      %7234 = vmatpush1.bf16.msra.mxu0 0
      %7235 = vmatprep.subr.bf16.mxu0 0
      %7236 = vmatpush1.bf16.msra.mxu0 0
      %7237 = vmatprep.subr.bf16.mxu0 0
      %7238 = vmatpush1.bf16.msra.mxu0 0
      %7239 = vmatprep.subr.bf16.mxu0 0
      %7240 = vmatpush1.bf16.msra.mxu0 0
      %7241 = vmatprep.subr.bf16.mxu0 0
      %7242 = vmatpush1.bf16.msra.mxu0 0
      %7243 = vmatprep.subr.bf16.mxu0 0
      %7244 = vmatpush1.bf16.msra.mxu0 0
      %7245 = vmatprep.subr.bf16.mxu0 0
      %7246 = vmatpush1.bf16.msra.mxu0 0
      %7247 = vmatprep.subr.bf16.mxu0 0
      %7248 = vmatpush1.bf16.msra.mxu0 0
      %7249 = vmatprep.subr.bf16.mxu0 0
      %7250 = vmatpush1.bf16.msra.mxu0 0
      %7251 = vmatprep.subr.bf16.mxu0 0
      %7252 = vmatpush1.bf16.msra.mxu0 0
      %7253 = vmatprep.subr.bf16.mxu0 0
      %7254 = vmatpush1.bf16.msra.mxu0 0
      %7255 = vmatprep.mubr.bf16.mxu0 0
      %7256 = vmatmul.mubr.bf16.gmra.mrb[0].mxu0 %v7221
      %v7257 = vpop.f32.mrb[0].mxu0
      %v7258 = vadd.f32 0.0, %v7257
      %v7259 = vpop.f32.mrb[0].mxu0
      %v7260 = vpop.f32.mrb[0].mxu0
      %v7261 = vpop.f32.mrb[0].mxu0
      %7262 = vdwg.mxu0
      %v7265 = vsel %vm331, %v7059, 0
      %7267 = vmatprep.subr.bf16.mxu0 0
      %7268 = vmatpush1.bf16.msra.mxu0 %v4298
      %7269 = vmatprep.subr.bf16.mxu0 0
      %7270 = vmatpush1.bf16.msra.mxu0 0
      %7271 = vmatprep.subr.bf16.mxu0 0
      %7272 = vmatpush1.bf16.msra.mxu0 0
      %7273 = vmatprep.subr.bf16.mxu0 0
      %7274 = vmatpush1.bf16.msra.mxu0 0
      %7275 = vmatprep.subr.bf16.mxu0 0
      %7276 = vmatpush1.bf16.msra.mxu0 0
      %7277 = vmatprep.subr.bf16.mxu0 0
      %7278 = vmatpush1.bf16.msra.mxu0 0
      %7279 = vmatprep.subr.bf16.mxu0 0
      %7280 = vmatpush1.bf16.msra.mxu0 0
      %7281 = vmatprep.subr.bf16.mxu0 0
      %7282 = vmatpush1.bf16.msra.mxu0 0
      %7283 = vmatprep.subr.bf16.mxu0 0
      %7284 = vmatpush1.bf16.msra.mxu0 0
      %7285 = vmatprep.subr.bf16.mxu0 0
      %7286 = vmatpush1.bf16.msra.mxu0 0
      %7287 = vmatprep.subr.bf16.mxu0 0
      %7288 = vmatpush1.bf16.msra.mxu0 0
      %7289 = vmatprep.subr.bf16.mxu0 0
      %7290 = vmatpush1.bf16.msra.mxu0 0
      %7291 = vmatprep.subr.bf16.mxu0 0
      %7292 = vmatpush1.bf16.msra.mxu0 0
      %7293 = vmatprep.subr.bf16.mxu0 0
      %7294 = vmatpush1.bf16.msra.mxu0 0
      %7295 = vmatprep.subr.bf16.mxu0 0
      %7296 = vmatpush1.bf16.msra.mxu0 0
      %7297 = vmatprep.subr.bf16.mxu0 0
      %7298 = vmatpush1.bf16.msra.mxu0 0
      %7299 = vmatprep.mubr.bf16.mxu0 0
      %7300 = vmatmul.mubr.bf16.gmra.mrb[0].mxu0 %v7265
      %v7301 = vpop.f32.mrb[0].mxu0
      %v7302 = vadd.f32 0.0, %v7301
      %v7303 = vpop.f32.mrb[0].mxu0
      %v7304 = vpop.f32.mrb[0].mxu0
      %v7305 = vpop.f32.mrb[0].mxu0
      %7306 = vdwg.mxu0
      %v7309 = vsel %vm331, %v7060, 0
      %7311 = vmatprep.subr.bf16.mxu0 0
      %7312 = vmatpush1.bf16.msra.mxu0 %v4300
      %7313 = vmatprep.subr.bf16.mxu0 0
      %7314 = vmatpush1.bf16.msra.mxu0 0
      %7315 = vmatprep.subr.bf16.mxu0 0
      %7316 = vmatpush1.bf16.msra.mxu0 0
      %7317 = vmatprep.subr.bf16.mxu0 0
      %7318 = vmatpush1.bf16.msra.mxu0 0
      %7319 = vmatprep.subr.bf16.mxu0 0
      %7320 = vmatpush1.bf16.msra.mxu0 0
      %7321 = vmatprep.subr.bf16.mxu0 0
      %7322 = vmatpush1.bf16.msra.mxu0 0
      %7323 = vmatprep.subr.bf16.mxu0 0
      %7324 = vmatpush1.bf16.msra.mxu0 0
      %7325 = vmatprep.subr.bf16.mxu0 0
      %7326 = vmatpush1.bf16.msra.mxu0 0
      %7327 = vmatprep.subr.bf16.mxu0 0
      %7328 = vmatpush1.bf16.msra.mxu0 0
      %7329 = vmatprep.subr.bf16.mxu0 0
      %7330 = vmatpush1.bf16.msra.mxu0 0
      %7331 = vmatprep.subr.bf16.mxu0 0
      %7332 = vmatpush1.bf16.msra.mxu0 0
      %7333 = vmatprep.subr.bf16.mxu0 0
      %7334 = vmatpush1.bf16.msra.mxu0 0
      %7335 = vmatprep.subr.bf16.mxu0 0
      %7336 = vmatpush1.bf16.msra.mxu0 0
      %7337 = vmatprep.subr.bf16.mxu0 0
      %7338 = vmatpush1.bf16.msra.mxu0 0
      %7339 = vmatprep.subr.bf16.mxu0 0
      %7340 = vmatpush1.bf16.msra.mxu0 0
      %7341 = vmatprep.subr.bf16.mxu0 0
      %7342 = vmatpush1.bf16.msra.mxu0 0
      %7343 = vmatprep.mubr.bf16.mxu0 0
      %7344 = vmatmul.mubr.bf16.gmra.mrb[0].mxu0 %v7309
      %v7345 = vpop.f32.mrb[0].mxu0
      %v7346 = vadd.f32 0.0, %v7345
      %v7347 = vpop.f32.mrb[0].mxu0
      %v7348 = vpop.f32.mrb[0].mxu0
      %v7349 = vpop.f32.mrb[0].mxu0
      %7350 = vdwg.mxu0
      %v7353 = vsel %vm331, %v7061, 0
      %7355 = vmatprep.subr.bf16.mxu0 0
      %7356 = vmatpush1.bf16.msra.mxu0 %v4302
      %7357 = vmatprep.subr.bf16.mxu0 0
      %7358 = vmatpush1.bf16.msra.mxu0 0
      %7359 = vmatprep.subr.bf16.mxu0 0
      %7360 = vmatpush1.bf16.msra.mxu0 0
      %7361 = vmatprep.subr.bf16.mxu0 0
      %7362 = vmatpush1.bf16.msra.mxu0 0
      %7363 = vmatprep.subr.bf16.mxu0 0
      %7364 = vmatpush1.bf16.msra.mxu0 0
      %7365 = vmatprep.subr.bf16.mxu0 0
      %7366 = vmatpush1.bf16.msra.mxu0 0
      %7367 = vmatprep.subr.bf16.mxu0 0
      %7368 = vmatpush1.bf16.msra.mxu0 0
      %7369 = vmatprep.subr.bf16.mxu0 0
      %7370 = vmatpush1.bf16.msra.mxu0 0
      %7371 = vmatprep.subr.bf16.mxu0 0
      %7372 = vmatpush1.bf16.msra.mxu0 0
      %7373 = vmatprep.subr.bf16.mxu0 0
      %7374 = vmatpush1.bf16.msra.mxu0 0
      %7375 = vmatprep.subr.bf16.mxu0 0
      %7376 = vmatpush1.bf16.msra.mxu0 0
      %7377 = vmatprep.subr.bf16.mxu0 0
      %7378 = vmatpush1.bf16.msra.mxu0 0
      %7379 = vmatprep.subr.bf16.mxu0 0
      %7380 = vmatpush1.bf16.msra.mxu0 0
      %7381 = vmatprep.subr.bf16.mxu0 0
      %7382 = vmatpush1.bf16.msra.mxu0 0
      %7383 = vmatprep.subr.bf16.mxu0 0
      %7384 = vmatpush1.bf16.msra.mxu0 0
      %7385 = vmatprep.subr.bf16.mxu0 0
      %7386 = vmatpush1.bf16.msra.mxu0 0
      %7387 = vmatprep.mubr.bf16.mxu0 0
      %7388 = vmatmul.mubr.bf16.gmra.mrb[0].mxu0 %v7353
      %v7389 = vpop.f32.mrb[0].mxu0
      %v7390 = vadd.f32 0.0, %v7389
      %v7391 = vpop.f32.mrb[0].mxu0
      %v7392 = vpop.f32.mrb[0].mxu0
      %v7393 = vpop.f32.mrb[0].mxu0
      %7394 = vdwg.mxu0
      %v7397 = vsel %vm331, %v7062, 0
      %7399 = vmatprep.subr.bf16.mxu0 0
      %7400 = vmatpush1.bf16.msra.mxu0 %v4304
      %7401 = vmatprep.subr.bf16.mxu0 0
      %7402 = vmatpush1.bf16.msra.mxu0 0
      %7403 = vmatprep.subr.bf16.mxu0 0
      %7404 = vmatpush1.bf16.msra.mxu0 0
      %7405 = vmatprep.subr.bf16.mxu0 0
      %7406 = vmatpush1.bf16.msra.mxu0 0
      %7407 = vmatprep.subr.bf16.mxu0 0
      %7408 = vmatpush1.bf16.msra.mxu0 0
      %7409 = vmatprep.subr.bf16.mxu0 0
      %7410 = vmatpush1.bf16.msra.mxu0 0
      %7411 = vmatprep.subr.bf16.mxu0 0
      %7412 = vmatpush1.bf16.msra.mxu0 0
      %7413 = vmatprep.subr.bf16.mxu0 0
      %7414 = vmatpush1.bf16.msra.mxu0 0
      %7415 = vmatprep.subr.bf16.mxu0 0
      %7416 = vmatpush1.bf16.msra.mxu0 0
      %7417 = vmatprep.subr.bf16.mxu0 0
      %7418 = vmatpush1.bf16.msra.mxu0 0
      %7419 = vmatprep.subr.bf16.mxu0 0
      %7420 = vmatpush1.bf16.msra.mxu0 0
      %7421 = vmatprep.subr.bf16.mxu0 0
      %7422 = vmatpush1.bf16.msra.mxu0 0
      %7423 = vmatprep.subr.bf16.mxu0 0
      %7424 = vmatpush1.bf16.msra.mxu0 0
      %7425 = vmatprep.subr.bf16.mxu0 0
      %7426 = vmatpush1.bf16.msra.mxu0 0
      %7427 = vmatprep.subr.bf16.mxu0 0
      %7428 = vmatpush1.bf16.msra.mxu0 0
      %7429 = vmatprep.subr.bf16.mxu0 0
      %7430 = vmatpush1.bf16.msra.mxu0 0
      %7431 = vmatprep.mubr.bf16.mxu0 0
      %7432 = vmatmul.mubr.bf16.gmra.mrb[0].mxu0 %v7397
      %v7433 = vpop.f32.mrb[0].mxu0
      %v7434 = vadd.f32 0.0, %v7433
      %v7435 = vpop.f32.mrb[0].mxu0
      %v7436 = vpop.f32.mrb[0].mxu0
      %v7437 = vpop.f32.mrb[0].mxu0
      %7438 = vdwg.mxu0
      %v7441 = vsel %vm331, %v7063, 0
      %7443 = vmatprep.subr.bf16.mxu0 0
      %7444 = vmatpush1.bf16.msra.mxu0 %v4306
      %7445 = vmatprep.subr.bf16.mxu0 0
      %7446 = vmatpush1.bf16.msra.mxu0 0
      %7447 = vmatprep.subr.bf16.mxu0 0
      %7448 = vmatpush1.bf16.msra.mxu0 0
      %7449 = vmatprep.subr.bf16.mxu0 0
      %7450 = vmatpush1.bf16.msra.mxu0 0
      %7451 = vmatprep.subr.bf16.mxu0 0
      %7452 = vmatpush1.bf16.msra.mxu0 0
      %7453 = vmatprep.subr.bf16.mxu0 0
      %7454 = vmatpush1.bf16.msra.mxu0 0
      %7455 = vmatprep.subr.bf16.mxu0 0
      %7456 = vmatpush1.bf16.msra.mxu0 0
      %7457 = vmatprep.subr.bf16.mxu0 0
      %7458 = vmatpush1.bf16.msra.mxu0 0
      %7459 = vmatprep.subr.bf16.mxu0 0
      %7460 = vmatpush1.bf16.msra.mxu0 0
      %7461 = vmatprep.subr.bf16.mxu0 0
      %7462 = vmatpush1.bf16.msra.mxu0 0
      %7463 = vmatprep.subr.bf16.mxu0 0
      %7464 = vmatpush1.bf16.msra.mxu0 0
      %7465 = vmatprep.subr.bf16.mxu0 0
      %7466 = vmatpush1.bf16.msra.mxu0 0
      %7467 = vmatprep.subr.bf16.mxu0 0
      %7468 = vmatpush1.bf16.msra.mxu0 0
      %7469 = vmatprep.subr.bf16.mxu0 0
      %7470 = vmatpush1.bf16.msra.mxu0 0
      %7471 = vmatprep.subr.bf16.mxu0 0
      %7472 = vmatpush1.bf16.msra.mxu0 0
      %7473 = vmatprep.subr.bf16.mxu0 0
      %7474 = vmatpush1.bf16.msra.mxu0 0
      %7475 = vmatprep.mubr.bf16.mxu0 0
      %7476 = vmatmul.mubr.bf16.gmra.mrb[0].mxu0 %v7441
      %v7477 = vpop.f32.mrb[0].mxu0
      %v7478 = vadd.f32 0.0, %v7477
      %v7479 = vpop.f32.mrb[0].mxu0
      %v7480 = vpop.f32.mrb[0].mxu0
      %v7481 = vpop.f32.mrb[0].mxu0
      %7482 = vdwg.mxu0
      %v7485 = vsel %vm331, %v7064, 0
      %7487 = vmatprep.subr.bf16.mxu0 0
      %7488 = vmatpush1.bf16.msra.mxu0 %v4308
      %7489 = vmatprep.subr.bf16.mxu0 0
      %7490 = vmatpush1.bf16.msra.mxu0 0
      %7491 = vmatprep.subr.bf16.mxu0 0
      %7492 = vmatpush1.bf16.msra.mxu0 0
      %7493 = vmatprep.subr.bf16.mxu0 0
      %7494 = vmatpush1.bf16.msra.mxu0 0
      %7495 = vmatprep.subr.bf16.mxu0 0
      %7496 = vmatpush1.bf16.msra.mxu0 0
      %7497 = vmatprep.subr.bf16.mxu0 0
      %7498 = vmatpush1.bf16.msra.mxu0 0
      %7499 = vmatprep.subr.bf16.mxu0 0
      %7500 = vmatpush1.bf16.msra.mxu0 0
      %7501 = vmatprep.subr.bf16.mxu0 0
      %7502 = vmatpush1.bf16.msra.mxu0 0
      %7503 = vmatprep.subr.bf16.mxu0 0
      %7504 = vmatpush1.bf16.msra.mxu0 0
      %7505 = vmatprep.subr.bf16.mxu0 0
      %7506 = vmatpush1.bf16.msra.mxu0 0
      %7507 = vmatprep.subr.bf16.mxu0 0
      %7508 = vmatpush1.bf16.msra.mxu0 0
      %7509 = vmatprep.subr.bf16.mxu0 0
      %7510 = vmatpush1.bf16.msra.mxu0 0
      %7511 = vmatprep.subr.bf16.mxu0 0
      %7512 = vmatpush1.bf16.msra.mxu0 0
      %7513 = vmatprep.subr.bf16.mxu0 0
      %7514 = vmatpush1.bf16.msra.mxu0 0
      %7515 = vmatprep.subr.bf16.mxu0 0
      %7516 = vmatpush1.bf16.msra.mxu0 0
      %7517 = vmatprep.subr.bf16.mxu0 0
      %7518 = vmatpush1.bf16.msra.mxu0 0
      %7519 = vmatprep.mubr.bf16.mxu0 0
      %7520 = vmatmul.mubr.bf16.gmra.mrb[0].mxu0 %v7485
      %v7521 = vpop.f32.mrb[0].mxu0
      %v7522 = vadd.f32 0.0, %v7521
      %v7523 = vpop.f32.mrb[0].mxu0
      %v7524 = vpop.f32.mrb[0].mxu0
      %v7525 = vpop.f32.mrb[0].mxu0
      %7526 = vdwg.mxu0
      %v7529 = vsel %vm331, %v7065, 0
      %7531 = vmatprep.subr.bf16.mxu0 0
      %7532 = vmatpush1.bf16.msra.mxu0 %v4310
      %7533 = vmatprep.subr.bf16.mxu0 0
      %7534 = vmatpush1.bf16.msra.mxu0 0
      %7535 = vmatprep.subr.bf16.mxu0 0
      %7536 = vmatpush1.bf16.msra.mxu0 0
      %7537 = vmatprep.subr.bf16.mxu0 0
      %7538 = vmatpush1.bf16.msra.mxu0 0
      %7539 = vmatprep.subr.bf16.mxu0 0
      %7540 = vmatpush1.bf16.msra.mxu0 0
      %7541 = vmatprep.subr.bf16.mxu0 0
      %7542 = vmatpush1.bf16.msra.mxu0 0
      %7543 = vmatprep.subr.bf16.mxu0 0
      %7544 = vmatpush1.bf16.msra.mxu0 0
      %7545 = vmatprep.subr.bf16.mxu0 0
      %7546 = vmatpush1.bf16.msra.mxu0 0
      %7547 = vmatprep.subr.bf16.mxu0 0
      %7548 = vmatpush1.bf16.msra.mxu0 0
      %7549 = vmatprep.subr.bf16.mxu0 0
      %7550 = vmatpush1.bf16.msra.mxu0 0
      %7551 = vmatprep.subr.bf16.mxu0 0
      %7552 = vmatpush1.bf16.msra.mxu0 0
      %7553 = vmatprep.subr.bf16.mxu0 0
      %7554 = vmatpush1.bf16.msra.mxu0 0
      %7555 = vmatprep.subr.bf16.mxu0 0
      %7556 = vmatpush1.bf16.msra.mxu0 0
      %7557 = vmatprep.subr.bf16.mxu0 0
      %7558 = vmatpush1.bf16.msra.mxu0 0
      %7559 = vmatprep.subr.bf16.mxu0 0
      %7560 = vmatpush1.bf16.msra.mxu0 0
      %7561 = vmatprep.subr.bf16.mxu0 0
      %7562 = vmatpush1.bf16.msra.mxu0 0
      %7563 = vmatprep.mubr.bf16.mxu0 0
      %7564 = vmatmul.mubr.bf16.gmra.mrb[0].mxu0 %v7529
      %v7565 = vpop.f32.mrb[0].mxu0
      %v7566 = vadd.f32 0.0, %v7565
      %v7567 = vpop.f32.mrb[0].mxu0
      %v7568 = vpop.f32.mrb[0].mxu0
      %v7569 = vpop.f32.mrb[0].mxu0
      %7570 = vdwg.mxu0
      %v7573 = vsel %vm331, %v7066, 0
      %7575 = vmatprep.subr.bf16.mxu0 0
      %7576 = vmatpush1.bf16.msra.mxu0 %v4312
      %7577 = vmatprep.subr.bf16.mxu0 0
      %7578 = vmatpush1.bf16.msra.mxu0 0
      %7579 = vmatprep.subr.bf16.mxu0 0
      %7580 = vmatpush1.bf16.msra.mxu0 0
      %7581 = vmatprep.subr.bf16.mxu0 0
      %7582 = vmatpush1.bf16.msra.mxu0 0
      %7583 = vmatprep.subr.bf16.mxu0 0
      %7584 = vmatpush1.bf16.msra.mxu0 0
      %7585 = vmatprep.subr.bf16.mxu0 0
      %7586 = vmatpush1.bf16.msra.mxu0 0
      %7587 = vmatprep.subr.bf16.mxu0 0
      %7588 = vmatpush1.bf16.msra.mxu0 0
      %7589 = vmatprep.subr.bf16.mxu0 0
      %7590 = vmatpush1.bf16.msra.mxu0 0
      %7591 = vmatprep.subr.bf16.mxu0 0
      %7592 = vmatpush1.bf16.msra.mxu0 0
      %7593 = vmatprep.subr.bf16.mxu0 0
      %7594 = vmatpush1.bf16.msra.mxu0 0
      %7595 = vmatprep.subr.bf16.mxu0 0
      %7596 = vmatpush1.bf16.msra.mxu0 0
      %7597 = vmatprep.subr.bf16.mxu0 0
      %7598 = vmatpush1.bf16.msra.mxu0 0
      %7599 = vmatprep.subr.bf16.mxu0 0
      %7600 = vmatpush1.bf16.msra.mxu0 0
      %7601 = vmatprep.subr.bf16.mxu0 0
      %7602 = vmatpush1.bf16.msra.mxu0 0
      %7603 = vmatprep.subr.bf16.mxu0 0
      %7604 = vmatpush1.bf16.msra.mxu0 0
      %7605 = vmatprep.subr.bf16.mxu0 0
      %7606 = vmatpush1.bf16.msra.mxu0 0
      %7607 = vmatprep.mubr.bf16.mxu0 0
      %7608 = vmatmul.mubr.bf16.gmra.mrb[0].mxu0 %v7573
      %v7609 = vpop.f32.mrb[0].mxu0
      %v7610 = vadd.f32 0.0, %v7609
      %v7611 = vpop.f32.mrb[0].mxu0
      %v7612 = vpop.f32.mrb[0].mxu0
      %v7613 = vpop.f32.mrb[0].mxu0
      %7614 = vdwg.mxu0
      %v7617 = vsel %vm331, %v7067, 0
      %7619 = vmatprep.subr.bf16.mxu0 0
      %7620 = vmatpush1.bf16.msra.mxu0 %v4314
      %7621 = vmatprep.subr.bf16.mxu0 0
      %7622 = vmatpush1.bf16.msra.mxu0 0
      %7623 = vmatprep.subr.bf16.mxu0 0
      %7624 = vmatpush1.bf16.msra.mxu0 0
      %7625 = vmatprep.subr.bf16.mxu0 0
      %7626 = vmatpush1.bf16.msra.mxu0 0
      %7627 = vmatprep.subr.bf16.mxu0 0
      %7628 = vmatpush1.bf16.msra.mxu0 0
      %7629 = vmatprep.subr.bf16.mxu0 0
      %7630 = vmatpush1.bf16.msra.mxu0 0
      %7631 = vmatprep.subr.bf16.mxu0 0
      %7632 = vmatpush1.bf16.msra.mxu0 0
      %7633 = vmatprep.subr.bf16.mxu0 0
      %7634 = vmatpush1.bf16.msra.mxu0 0
      %7635 = vmatprep.subr.bf16.mxu0 0
      %7636 = vmatpush1.bf16.msra.mxu0 0
      %7637 = vmatprep.subr.bf16.mxu0 0
      %7638 = vmatpush1.bf16.msra.mxu0 0
      %7639 = vmatprep.subr.bf16.mxu0 0
      %7640 = vmatpush1.bf16.msra.mxu0 0
      %7641 = vmatprep.subr.bf16.mxu0 0
      %7642 = vmatpush1.bf16.msra.mxu0 0
      %7643 = vmatprep.subr.bf16.mxu0 0
      %7644 = vmatpush1.bf16.msra.mxu0 0
      %7645 = vmatprep.subr.bf16.mxu0 0
      %7646 = vmatpush1.bf16.msra.mxu0 0
      %7647 = vmatprep.subr.bf16.mxu0 0
      %7648 = vmatpush1.bf16.msra.mxu0 0
      %7649 = vmatprep.subr.bf16.mxu0 0
      %7650 = vmatpush1.bf16.msra.mxu0 0
      %7651 = vmatprep.mubr.bf16.mxu0 0
      %7652 = vmatmul.mubr.bf16.gmra.mrb[0].mxu0 %v7617
      %v7653 = vpop.f32.mrb[0].mxu0
      %v7654 = vadd.f32 0.0, %v7653
      %v7655 = vpop.f32.mrb[0].mxu0
      %v7656 = vpop.f32.mrb[0].mxu0
      %v7657 = vpop.f32.mrb[0].mxu0
      %7658 = vdwg.mxu0
      %v7661 = vsel %vm331, %v7068, 0
      %7663 = vmatprep.subr.bf16.mxu0 0
      %7664 = vmatpush1.bf16.msra.mxu0 %v4316
      %7665 = vmatprep.subr.bf16.mxu0 0
      %7666 = vmatpush1.bf16.msra.mxu0 0
      %7667 = vmatprep.subr.bf16.mxu0 0
      %7668 = vmatpush1.bf16.msra.mxu0 0
      %7669 = vmatprep.subr.bf16.mxu0 0
      %7670 = vmatpush1.bf16.msra.mxu0 0
      %7671 = vmatprep.subr.bf16.mxu0 0
      %7672 = vmatpush1.bf16.msra.mxu0 0
      %7673 = vmatprep.subr.bf16.mxu0 0
      %7674 = vmatpush1.bf16.msra.mxu0 0
      %7675 = vmatprep.subr.bf16.mxu0 0
      %7676 = vmatpush1.bf16.msra.mxu0 0
      %7677 = vmatprep.subr.bf16.mxu0 0
      %7678 = vmatpush1.bf16.msra.mxu0 0
      %7679 = vmatprep.subr.bf16.mxu0 0
      %7680 = vmatpush1.bf16.msra.mxu0 0
      %7681 = vmatprep.subr.bf16.mxu0 0
      %7682 = vmatpush1.bf16.msra.mxu0 0
      %7683 = vmatprep.subr.bf16.mxu0 0
      %7684 = vmatpush1.bf16.msra.mxu0 0
      %7685 = vmatprep.subr.bf16.mxu0 0
      %7686 = vmatpush1.bf16.msra.mxu0 0
      %7687 = vmatprep.subr.bf16.mxu0 0
      %7688 = vmatpush1.bf16.msra.mxu0 0
      %7689 = vmatprep.subr.bf16.mxu0 0
      %7690 = vmatpush1.bf16.msra.mxu0 0
      %7691 = vmatprep.subr.bf16.mxu0 0
      %7692 = vmatpush1.bf16.msra.mxu0 0
      %7693 = vmatprep.subr.bf16.mxu0 0
      %7694 = vmatpush1.bf16.msra.mxu0 0
      %7695 = vmatprep.mubr.bf16.mxu0 0
      %7696 = vmatmul.mubr.bf16.gmra.mrb[0].mxu0 %v7661
      %v7697 = vpop.f32.mrb[0].mxu0
      %v7698 = vadd.f32 0.0, %v7697
      %v7699 = vpop.f32.mrb[0].mxu0
      %v7700 = vpop.f32.mrb[0].mxu0
      %v7701 = vpop.f32.mrb[0].mxu0
      %7702 = vdwg.mxu0
      %v7705 = vsel %vm331, %v7069, 0
      %7707 = vmatprep.subr.bf16.mxu0 0
      %7708 = vmatpush1.bf16.msra.mxu0 %v4318
      %7709 = vmatprep.subr.bf16.mxu0 0
      %7710 = vmatpush1.bf16.msra.mxu0 0
      %7711 = vmatprep.subr.bf16.mxu0 0
      %7712 = vmatpush1.bf16.msra.mxu0 0
      %7713 = vmatprep.subr.bf16.mxu0 0
      %7714 = vmatpush1.bf16.msra.mxu0 0
      %7715 = vmatprep.subr.bf16.mxu0 0
      %7716 = vmatpush1.bf16.msra.mxu0 0
      %7717 = vmatprep.subr.bf16.mxu0 0
      %7718 = vmatpush1.bf16.msra.mxu0 0
      %7719 = vmatprep.subr.bf16.mxu0 0
      %7720 = vmatpush1.bf16.msra.mxu0 0
      %7721 = vmatprep.subr.bf16.mxu0 0
      %7722 = vmatpush1.bf16.msra.mxu0 0
      %7723 = vmatprep.subr.bf16.mxu0 0
      %7724 = vmatpush1.bf16.msra.mxu0 0
      %7725 = vmatprep.subr.bf16.mxu0 0
      %7726 = vmatpush1.bf16.msra.mxu0 0
      %7727 = vmatprep.subr.bf16.mxu0 0
      %7728 = vmatpush1.bf16.msra.mxu0 0
      %7729 = vmatprep.subr.bf16.mxu0 0
      %7730 = vmatpush1.bf16.msra.mxu0 0
      %7731 = vmatprep.subr.bf16.mxu0 0
      %7732 = vmatpush1.bf16.msra.mxu0 0
      %7733 = vmatprep.subr.bf16.mxu0 0
      %7734 = vmatpush1.bf16.msra.mxu0 0
      %7735 = vmatprep.subr.bf16.mxu0 0
      %7736 = vmatpush1.bf16.msra.mxu0 0
      %7737 = vmatprep.subr.bf16.mxu0 0
      %7738 = vmatpush1.bf16.msra.mxu0 0
      %7739 = vmatprep.mubr.bf16.mxu0 0
      %7740 = vmatmul.mubr.bf16.gmra.mrb[0].mxu0 %v7705
      %v7741 = vpop.f32.mrb[0].mxu0
      %v7742 = vadd.f32 0.0, %v7741
      %v7743 = vpop.f32.mrb[0].mxu0
      %v7744 = vpop.f32.mrb[0].mxu0
      %v7745 = vpop.f32.mrb[0].mxu0
      %7746 = vdwg.mxu0
      %v7749 = vsel %vm331, %v7070, 0
      %7751 = vmatprep.subr.bf16.mxu0 0
      %7752 = vmatpush1.bf16.msra.mxu0 %v4320
      %7753 = vmatprep.subr.bf16.mxu0 0
      %7754 = vmatpush1.bf16.msra.mxu0 0
      %7755 = vmatprep.subr.bf16.mxu0 0
      %7756 = vmatpush1.bf16.msra.mxu0 0
      %7757 = vmatprep.subr.bf16.mxu0 0
      %7758 = vmatpush1.bf16.msra.mxu0 0
      %7759 = vmatprep.subr.bf16.mxu0 0
      %7760 = vmatpush1.bf16.msra.mxu0 0
      %7761 = vmatprep.subr.bf16.mxu0 0
      %7762 = vmatpush1.bf16.msra.mxu0 0
      %7763 = vmatprep.subr.bf16.mxu0 0
      %7764 = vmatpush1.bf16.msra.mxu0 0
      %7765 = vmatprep.subr.bf16.mxu0 0
      %7766 = vmatpush1.bf16.msra.mxu0 0
      %7767 = vmatprep.subr.bf16.mxu0 0
      %7768 = vmatpush1.bf16.msra.mxu0 0
      %7769 = vmatprep.subr.bf16.mxu0 0
      %7770 = vmatpush1.bf16.msra.mxu0 0
      %7771 = vmatprep.subr.bf16.mxu0 0
      %7772 = vmatpush1.bf16.msra.mxu0 0
      %7773 = vmatprep.subr.bf16.mxu0 0
      %7774 = vmatpush1.bf16.msra.mxu0 0
      %7775 = vmatprep.subr.bf16.mxu0 0
      %7776 = vmatpush1.bf16.msra.mxu0 0
      %7777 = vmatprep.subr.bf16.mxu0 0
      %7778 = vmatpush1.bf16.msra.mxu0 0
      %7779 = vmatprep.subr.bf16.mxu0 0
      %7780 = vmatpush1.bf16.msra.mxu0 0
      %7781 = vmatprep.subr.bf16.mxu0 0
      %7782 = vmatpush1.bf16.msra.mxu0 0
      %7783 = vmatprep.mubr.bf16.mxu0 0
      %7784 = vmatmul.mubr.bf16.gmra.mrb[0].mxu0 %v7749
      %v7785 = vpop.f32.mrb[0].mxu0
      %v7786 = vadd.f32 0.0, %v7785
      %v7787 = vpop.f32.mrb[0].mxu0
      %v7788 = vpop.f32.mrb[0].mxu0
      %v7789 = vpop.f32.mrb[0].mxu0
      %7790 = vdwg.mxu0
      %v7793 = vsel %vm331, %v7071, 0
      %7795 = vmatprep.subr.bf16.mxu0 0
      %7796 = vmatpush1.bf16.msra.mxu0 %v4322
      %7797 = vmatprep.subr.bf16.mxu0 0
      %7798 = vmatpush1.bf16.msra.mxu0 0
      %7799 = vmatprep.subr.bf16.mxu0 0
      %7800 = vmatpush1.bf16.msra.mxu0 0
      %7801 = vmatprep.subr.bf16.mxu0 0
      %7802 = vmatpush1.bf16.msra.mxu0 0
      %7803 = vmatprep.subr.bf16.mxu0 0
      %7804 = vmatpush1.bf16.msra.mxu0 0
      %7805 = vmatprep.subr.bf16.mxu0 0
      %7806 = vmatpush1.bf16.msra.mxu0 0
      %7807 = vmatprep.subr.bf16.mxu0 0
      %7808 = vmatpush1.bf16.msra.mxu0 0
      %7809 = vmatprep.subr.bf16.mxu0 0
      %7810 = vmatpush1.bf16.msra.mxu0 0
      %7811 = vmatprep.subr.bf16.mxu0 0
      %7812 = vmatpush1.bf16.msra.mxu0 0
      %7813 = vmatprep.subr.bf16.mxu0 0
      %7814 = vmatpush1.bf16.msra.mxu0 0
      %7815 = vmatprep.subr.bf16.mxu0 0
      %7816 = vmatpush1.bf16.msra.mxu0 0
      %7817 = vmatprep.subr.bf16.mxu0 0
      %7818 = vmatpush1.bf16.msra.mxu0 0
      %7819 = vmatprep.subr.bf16.mxu0 0
      %7820 = vmatpush1.bf16.msra.mxu0 0
      %7821 = vmatprep.subr.bf16.mxu0 0
      %7822 = vmatpush1.bf16.msra.mxu0 0
      %7823 = vmatprep.subr.bf16.mxu0 0
      %7824 = vmatpush1.bf16.msra.mxu0 0
      %7825 = vmatprep.subr.bf16.mxu0 0
      %7826 = vmatpush1.bf16.msra.mxu0 0
      %7827 = vmatprep.mubr.bf16.mxu0 0
      %7828 = vmatmul.mubr.bf16.gmra.mrb[0].mxu0 %v7793
      %v7829 = vpop.f32.mrb[0].mxu0
      %v7830 = vadd.f32 0.0, %v7829
      %v7831 = vpop.f32.mrb[0].mxu0
      %v7832 = vpop.f32.mrb[0].mxu0
      %v7833 = vpop.f32.mrb[0].mxu0
      %7834 = vdwg.mxu0
      %v7837 = vsel %vm331, %v7072, 0
      %7839 = vmatprep.subr.bf16.mxu0 0
      %7840 = vmatpush1.bf16.msra.mxu0 %v4324
      %7841 = vmatprep.subr.bf16.mxu0 0
      %7842 = vmatpush1.bf16.msra.mxu0 0
      %7843 = vmatprep.subr.bf16.mxu0 0
      %7844 = vmatpush1.bf16.msra.mxu0 0
      %7845 = vmatprep.subr.bf16.mxu0 0
      %7846 = vmatpush1.bf16.msra.mxu0 0
      %7847 = vmatprep.subr.bf16.mxu0 0
      %7848 = vmatpush1.bf16.msra.mxu0 0
      %7849 = vmatprep.subr.bf16.mxu0 0
      %7850 = vmatpush1.bf16.msra.mxu0 0
      %7851 = vmatprep.subr.bf16.mxu0 0
      %7852 = vmatpush1.bf16.msra.mxu0 0
      %7853 = vmatprep.subr.bf16.mxu0 0
      %7854 = vmatpush1.bf16.msra.mxu0 0
      %7855 = vmatprep.subr.bf16.mxu0 0
      %7856 = vmatpush1.bf16.msra.mxu0 0
      %7857 = vmatprep.subr.bf16.mxu0 0
      %7858 = vmatpush1.bf16.msra.mxu0 0
      %7859 = vmatprep.subr.bf16.mxu0 0
      %7860 = vmatpush1.bf16.msra.mxu0 0
      %7861 = vmatprep.subr.bf16.mxu0 0
      %7862 = vmatpush1.bf16.msra.mxu0 0
      %7863 = vmatprep.subr.bf16.mxu0 0
      %7864 = vmatpush1.bf16.msra.mxu0 0
      %7865 = vmatprep.subr.bf16.mxu0 0
      %7866 = vmatpush1.bf16.msra.mxu0 0
      %7867 = vmatprep.subr.bf16.mxu0 0
      %7868 = vmatpush1.bf16.msra.mxu0 0
      %7869 = vmatprep.subr.bf16.mxu0 0
      %7870 = vmatpush1.bf16.msra.mxu0 0
      %7871 = vmatprep.mubr.bf16.mxu0 0
      %7872 = vmatmul.mubr.bf16.gmra.mrb[0].mxu0 %v7837
      %v7873 = vpop.f32.mrb[0].mxu0
      %v7874 = vadd.f32 0.0, %v7873
      %v7875 = vpop.f32.mrb[0].mxu0
      %v7876 = vpop.f32.mrb[0].mxu0
      %v7877 = vpop.f32.mrb[0].mxu0
      %7878 = vdwg.mxu0
      %v7881 = vsel %vm331, %v7073, 0
      %7883 = vmatprep.subr.bf16.mxu0 0
      %7884 = vmatpush1.bf16.msra.mxu0 %v4326
      %7885 = vmatprep.subr.bf16.mxu0 0
      %7886 = vmatpush1.bf16.msra.mxu0 0
      %7887 = vmatprep.subr.bf16.mxu0 0
      %7888 = vmatpush1.bf16.msra.mxu0 0
      %7889 = vmatprep.subr.bf16.mxu0 0
      %7890 = vmatpush1.bf16.msra.mxu0 0
      %7891 = vmatprep.subr.bf16.mxu0 0
      %7892 = vmatpush1.bf16.msra.mxu0 0
      %7893 = vmatprep.subr.bf16.mxu0 0
      %7894 = vmatpush1.bf16.msra.mxu0 0
      %7895 = vmatprep.subr.bf16.mxu0 0
      %7896 = vmatpush1.bf16.msra.mxu0 0
      %7897 = vmatprep.subr.bf16.mxu0 0
      %7898 = vmatpush1.bf16.msra.mxu0 0
      %7899 = vmatprep.subr.bf16.mxu0 0
      %7900 = vmatpush1.bf16.msra.mxu0 0
      %7901 = vmatprep.subr.bf16.mxu0 0
      %7902 = vmatpush1.bf16.msra.mxu0 0
      %7903 = vmatprep.subr.bf16.mxu0 0
      %7904 = vmatpush1.bf16.msra.mxu0 0
      %7905 = vmatprep.subr.bf16.mxu0 0
      %7906 = vmatpush1.bf16.msra.mxu0 0
      %7907 = vmatprep.subr.bf16.mxu0 0
      %7908 = vmatpush1.bf16.msra.mxu0 0
      %7909 = vmatprep.subr.bf16.mxu0 0
      %7910 = vmatpush1.bf16.msra.mxu0 0
      %7911 = vmatprep.subr.bf16.mxu0 0
      %7912 = vmatpush1.bf16.msra.mxu0 0
      %7913 = vmatprep.subr.bf16.mxu0 0
      %7914 = vmatpush1.bf16.msra.mxu0 0
      %7915 = vmatprep.mubr.bf16.mxu0 0
      %7916 = vmatmul.mubr.bf16.gmra.mrb[0].mxu0 %v7881
      %v7917 = vpop.f32.mrb[0].mxu0
      %v7918 = vadd.f32 0.0, %v7917
      %v7919 = vpop.f32.mrb[0].mxu0
      %v7920 = vpop.f32.mrb[0].mxu0
      %v7921 = vpop.f32.mrb[0].mxu0
      %7922 = vdwg.mxu0
      %v7925 = vsel %vm331, %v7074, 0
      %7927 = vmatprep.subr.bf16.mxu0 0
      %7928 = vmatpush1.bf16.msra.mxu0 %v4328
      %7929 = vmatprep.subr.bf16.mxu0 0
      %7930 = vmatpush1.bf16.msra.mxu0 0
      %7931 = vmatprep.subr.bf16.mxu0 0
      %7932 = vmatpush1.bf16.msra.mxu0 0
      %7933 = vmatprep.subr.bf16.mxu0 0
      %7934 = vmatpush1.bf16.msra.mxu0 0
      %7935 = vmatprep.subr.bf16.mxu0 0
      %7936 = vmatpush1.bf16.msra.mxu0 0
      %7937 = vmatprep.subr.bf16.mxu0 0
      %7938 = vmatpush1.bf16.msra.mxu0 0
      %7939 = vmatprep.subr.bf16.mxu0 0
      %7940 = vmatpush1.bf16.msra.mxu0 0
      %7941 = vmatprep.subr.bf16.mxu0 0
      %7942 = vmatpush1.bf16.msra.mxu0 0
      %7943 = vmatprep.subr.bf16.mxu0 0
      %7944 = vmatpush1.bf16.msra.mxu0 0
      %7945 = vmatprep.subr.bf16.mxu0 0
      %7946 = vmatpush1.bf16.msra.mxu0 0
      %7947 = vmatprep.subr.bf16.mxu0 0
      %7948 = vmatpush1.bf16.msra.mxu0 0
      %7949 = vmatprep.subr.bf16.mxu0 0
      %7950 = vmatpush1.bf16.msra.mxu0 0
      %7951 = vmatprep.subr.bf16.mxu0 0
      %7952 = vmatpush1.bf16.msra.mxu0 0
      %7953 = vmatprep.subr.bf16.mxu0 0
      %7954 = vmatpush1.bf16.msra.mxu0 0
      %7955 = vmatprep.subr.bf16.mxu0 0
      %7956 = vmatpush1.bf16.msra.mxu0 0
      %7957 = vmatprep.subr.bf16.mxu0 0
      %7958 = vmatpush1.bf16.msra.mxu0 0
      %7959 = vmatprep.mubr.bf16.mxu0 0
      %7960 = vmatmul.mubr.bf16.gmra.mrb[0].mxu0 %v7925
      %v7961 = vpop.f32.mrb[0].mxu0
      %v7962 = vadd.f32 0.0, %v7961
      %v7963 = vpop.f32.mrb[0].mxu0
      %v7964 = vpop.f32.mrb[0].mxu0
      %v7965 = vpop.f32.mrb[0].mxu0
      %7966 = vdwg.mxu0
      %v7969 = vsel %vm331, %v7075, 0
      %7971 = vmatprep.subr.bf16.mxu0 0
      %7972 = vmatpush1.bf16.msra.mxu0 %v4330
      %7973 = vmatprep.subr.bf16.mxu0 0
      %7974 = vmatpush1.bf16.msra.mxu0 0
      %7975 = vmatprep.subr.bf16.mxu0 0
      %7976 = vmatpush1.bf16.msra.mxu0 0
      %7977 = vmatprep.subr.bf16.mxu0 0
      %7978 = vmatpush1.bf16.msra.mxu0 0
      %7979 = vmatprep.subr.bf16.mxu0 0
      %7980 = vmatpush1.bf16.msra.mxu0 0
      %7981 = vmatprep.subr.bf16.mxu0 0
      %7982 = vmatpush1.bf16.msra.mxu0 0
      %7983 = vmatprep.subr.bf16.mxu0 0
      %7984 = vmatpush1.bf16.msra.mxu0 0
      %7985 = vmatprep.subr.bf16.mxu0 0
      %7986 = vmatpush1.bf16.msra.mxu0 0
      %7987 = vmatprep.subr.bf16.mxu0 0
      %7988 = vmatpush1.bf16.msra.mxu0 0
      %7989 = vmatprep.subr.bf16.mxu0 0
      %7990 = vmatpush1.bf16.msra.mxu0 0
      %7991 = vmatprep.subr.bf16.mxu0 0
      %7992 = vmatpush1.bf16.msra.mxu0 0
      %7993 = vmatprep.subr.bf16.mxu0 0
      %7994 = vmatpush1.bf16.msra.mxu0 0
      %7995 = vmatprep.subr.bf16.mxu0 0
      %7996 = vmatpush1.bf16.msra.mxu0 0
      %7997 = vmatprep.subr.bf16.mxu0 0
      %7998 = vmatpush1.bf16.msra.mxu0 0
      %7999 = vmatprep.subr.bf16.mxu0 0
      %8000 = vmatpush1.bf16.msra.mxu0 0
      %8001 = vmatprep.subr.bf16.mxu0 0
      %8002 = vmatpush1.bf16.msra.mxu0 0
      %8003 = vmatprep.mubr.bf16.mxu0 0
      %8004 = vmatmul.mubr.bf16.gmra.mrb[0].mxu0 %v7969
      %v8005 = vpop.f32.mrb[0].mxu0
      %v8006 = vadd.f32 0.0, %v8005
      %v8007 = vpop.f32.mrb[0].mxu0
      %v8008 = vpop.f32.mrb[0].mxu0
      %v8009 = vpop.f32.mrb[0].mxu0
      %8010 = vdwg.mxu0
      %v8013 = vsel %vm331, %v7076, 0
      %8015 = vmatprep.subr.bf16.mxu0 0
      %8016 = vmatpush1.bf16.msra.mxu0 %v4332
      %8017 = vmatprep.subr.bf16.mxu0 0
      %8018 = vmatpush1.bf16.msra.mxu0 0
      %8019 = vmatprep.subr.bf16.mxu0 0
      %8020 = vmatpush1.bf16.msra.mxu0 0
      %8021 = vmatprep.subr.bf16.mxu0 0
      %8022 = vmatpush1.bf16.msra.mxu0 0
      %8023 = vmatprep.subr.bf16.mxu0 0
      %8024 = vmatpush1.bf16.msra.mxu0 0
      %8025 = vmatprep.subr.bf16.mxu0 0
      %8026 = vmatpush1.bf16.msra.mxu0 0
      %8027 = vmatprep.subr.bf16.mxu0 0
      %8028 = vmatpush1.bf16.msra.mxu0 0
      %8029 = vmatprep.subr.bf16.mxu0 0
      %8030 = vmatpush1.bf16.msra.mxu0 0
      %8031 = vmatprep.subr.bf16.mxu0 0
      %8032 = vmatpush1.bf16.msra.mxu0 0
      %8033 = vmatprep.subr.bf16.mxu0 0
      %8034 = vmatpush1.bf16.msra.mxu0 0
      %8035 = vmatprep.subr.bf16.mxu0 0
      %8036 = vmatpush1.bf16.msra.mxu0 0
      %8037 = vmatprep.subr.bf16.mxu0 0
      %8038 = vmatpush1.bf16.msra.mxu0 0
      %8039 = vmatprep.subr.bf16.mxu0 0
      %8040 = vmatpush1.bf16.msra.mxu0 0
      %8041 = vmatprep.subr.bf16.mxu0 0
      %8042 = vmatpush1.bf16.msra.mxu0 0
      %8043 = vmatprep.subr.bf16.mxu0 0
      %8044 = vmatpush1.bf16.msra.mxu0 0
      %8045 = vmatprep.subr.bf16.mxu0 0
      %8046 = vmatpush1.bf16.msra.mxu0 0
      %8047 = vmatprep.mubr.bf16.mxu0 0
      %8048 = vmatmul.mubr.bf16.gmra.mrb[0].mxu0 %v8013
      %v8049 = vpop.f32.mrb[0].mxu0
      %v8050 = vadd.f32 0.0, %v8049
      %v8051 = vpop.f32.mrb[0].mxu0
      %v8052 = vpop.f32.mrb[0].mxu0
      %v8053 = vpop.f32.mrb[0].mxu0
      %8054 = vdwg.mxu0
      %v8057 = vsel %vm331, %v7077, 0
      %8059 = vmatprep.subr.bf16.mxu0 0
      %8060 = vmatpush1.bf16.msra.mxu0 %v4334
      %8061 = vmatprep.subr.bf16.mxu0 0
      %8062 = vmatpush1.bf16.msra.mxu0 0
      %8063 = vmatprep.subr.bf16.mxu0 0
      %8064 = vmatpush1.bf16.msra.mxu0 0
      %8065 = vmatprep.subr.bf16.mxu0 0
      %8066 = vmatpush1.bf16.msra.mxu0 0
      %8067 = vmatprep.subr.bf16.mxu0 0
      %8068 = vmatpush1.bf16.msra.mxu0 0
      %8069 = vmatprep.subr.bf16.mxu0 0
      %8070 = vmatpush1.bf16.msra.mxu0 0
      %8071 = vmatprep.subr.bf16.mxu0 0
      %8072 = vmatpush1.bf16.msra.mxu0 0
      %8073 = vmatprep.subr.bf16.mxu0 0
      %8074 = vmatpush1.bf16.msra.mxu0 0
      %8075 = vmatprep.subr.bf16.mxu0 0
      %8076 = vmatpush1.bf16.msra.mxu0 0
      %8077 = vmatprep.subr.bf16.mxu0 0
      %8078 = vmatpush1.bf16.msra.mxu0 0
      %8079 = vmatprep.subr.bf16.mxu0 0
      %8080 = vmatpush1.bf16.msra.mxu0 0
      %8081 = vmatprep.subr.bf16.mxu0 0
      %8082 = vmatpush1.bf16.msra.mxu0 0
      %8083 = vmatprep.subr.bf16.mxu0 0
      %8084 = vmatpush1.bf16.msra.mxu0 0
      %8085 = vmatprep.subr.bf16.mxu0 0
      %8086 = vmatpush1.bf16.msra.mxu0 0
      %8087 = vmatprep.subr.bf16.mxu0 0
      %8088 = vmatpush1.bf16.msra.mxu0 0
      %8089 = vmatprep.subr.bf16.mxu0 0
      %8090 = vmatpush1.bf16.msra.mxu0 0
      %8091 = vmatprep.mubr.bf16.mxu0 0
      %8092 = vmatmul.mubr.bf16.gmra.mrb[0].mxu0 %v8057
      %v8093 = vpop.f32.mrb[0].mxu0
      %v8094 = vadd.f32 0.0, %v8093
      %v8095 = vpop.f32.mrb[0].mxu0
      %v8096 = vpop.f32.mrb[0].mxu0
      %v8097 = vpop.f32.mrb[0].mxu0
      %8098 = vdwg.mxu0
      %v8101 = vsel %vm331, %v7078, 0
      %8103 = vmatprep.subr.bf16.mxu0 0
      %8104 = vmatpush1.bf16.msra.mxu0 %v4336
      %8105 = vmatprep.subr.bf16.mxu0 0
      %8106 = vmatpush1.bf16.msra.mxu0 0
      %8107 = vmatprep.subr.bf16.mxu0 0
      %8108 = vmatpush1.bf16.msra.mxu0 0
      %8109 = vmatprep.subr.bf16.mxu0 0
      %8110 = vmatpush1.bf16.msra.mxu0 0
      %8111 = vmatprep.subr.bf16.mxu0 0
      %8112 = vmatpush1.bf16.msra.mxu0 0
      %8113 = vmatprep.subr.bf16.mxu0 0
      %8114 = vmatpush1.bf16.msra.mxu0 0
      %8115 = vmatprep.subr.bf16.mxu0 0
      %8116 = vmatpush1.bf16.msra.mxu0 0
      %8117 = vmatprep.subr.bf16.mxu0 0
      %8118 = vmatpush1.bf16.msra.mxu0 0
      %8119 = vmatprep.subr.bf16.mxu0 0
      %8120 = vmatpush1.bf16.msra.mxu0 0
      %8121 = vmatprep.subr.bf16.mxu0 0
      %8122 = vmatpush1.bf16.msra.mxu0 0
      %8123 = vmatprep.subr.bf16.mxu0 0
      %8124 = vmatpush1.bf16.msra.mxu0 0
      %8125 = vmatprep.subr.bf16.mxu0 0
      %8126 = vmatpush1.bf16.msra.mxu0 0
      %8127 = vmatprep.subr.bf16.mxu0 0
      %8128 = vmatpush1.bf16.msra.mxu0 0
      %8129 = vmatprep.subr.bf16.mxu0 0
      %8130 = vmatpush1.bf16.msra.mxu0 0
      %8131 = vmatprep.subr.bf16.mxu0 0
      %8132 = vmatpush1.bf16.msra.mxu0 0
      %8133 = vmatprep.subr.bf16.mxu0 0
      %8134 = vmatpush1.bf16.msra.mxu0 0
      %8135 = vmatprep.mubr.bf16.mxu0 0
      %8136 = vmatmul.mubr.bf16.gmra.mrb[0].mxu0 %v8101
      %v8137 = vpop.f32.mrb[0].mxu0
      %v8138 = vadd.f32 0.0, %v8137
      %v8139 = vpop.f32.mrb[0].mxu0
      %v8140 = vpop.f32.mrb[0].mxu0
      %v8141 = vpop.f32.mrb[0].mxu0
      %8142 = vdwg.mxu0
      %v8145 = vsel %vm331, %v7079, 0
      %8147 = vmatprep.subr.bf16.mxu0 0
      %8148 = vmatpush1.bf16.msra.mxu0 %v4338
      %8149 = vmatprep.subr.bf16.mxu0 0
      %8150 = vmatpush1.bf16.msra.mxu0 0
      %8151 = vmatprep.subr.bf16.mxu0 0
      %8152 = vmatpush1.bf16.msra.mxu0 0
      %8153 = vmatprep.subr.bf16.mxu0 0
      %8154 = vmatpush1.bf16.msra.mxu0 0
      %8155 = vmatprep.subr.bf16.mxu0 0
      %8156 = vmatpush1.bf16.msra.mxu0 0
      %8157 = vmatprep.subr.bf16.mxu0 0
      %8158 = vmatpush1.bf16.msra.mxu0 0
      %8159 = vmatprep.subr.bf16.mxu0 0
      %8160 = vmatpush1.bf16.msra.mxu0 0
      %8161 = vmatprep.subr.bf16.mxu0 0
      %8162 = vmatpush1.bf16.msra.mxu0 0
      %8163 = vmatprep.subr.bf16.mxu0 0
      %8164 = vmatpush1.bf16.msra.mxu0 0
      %8165 = vmatprep.subr.bf16.mxu0 0
      %8166 = vmatpush1.bf16.msra.mxu0 0
      %8167 = vmatprep.subr.bf16.mxu0 0
      %8168 = vmatpush1.bf16.msra.mxu0 0
      %8169 = vmatprep.subr.bf16.mxu0 0
      %8170 = vmatpush1.bf16.msra.mxu0 0
      %8171 = vmatprep.subr.bf16.mxu0 0
      %8172 = vmatpush1.bf16.msra.mxu0 0
      %8173 = vmatprep.subr.bf16.mxu0 0
      %8174 = vmatpush1.bf16.msra.mxu0 0
      %8175 = vmatprep.subr.bf16.mxu0 0
      %8176 = vmatpush1.bf16.msra.mxu0 0
      %8177 = vmatprep.subr.bf16.mxu0 0
      %8178 = vmatpush1.bf16.msra.mxu0 0
      %8179 = vmatprep.mubr.bf16.mxu0 0
      %8180 = vmatmul.mubr.bf16.gmra.mrb[0].mxu0 %v8145
      %v8181 = vpop.f32.mrb[0].mxu0
      %v8182 = vadd.f32 0.0, %v8181
      %v8183 = vpop.f32.mrb[0].mxu0
      %v8184 = vpop.f32.mrb[0].mxu0
      %v8185 = vpop.f32.mrb[0].mxu0
      %8186 = vdwg.mxu0
      %v8189 = vsel %vm331, %v7080, 0
      %8191 = vmatprep.subr.bf16.mxu0 0
      %8192 = vmatpush1.bf16.msra.mxu0 %v4340
      %8193 = vmatprep.subr.bf16.mxu0 0
      %8194 = vmatpush1.bf16.msra.mxu0 0
      %8195 = vmatprep.subr.bf16.mxu0 0
      %8196 = vmatpush1.bf16.msra.mxu0 0
      %8197 = vmatprep.subr.bf16.mxu0 0
      %8198 = vmatpush1.bf16.msra.mxu0 0
      %8199 = vmatprep.subr.bf16.mxu0 0
      %8200 = vmatpush1.bf16.msra.mxu0 0
      %8201 = vmatprep.subr.bf16.mxu0 0
      %8202 = vmatpush1.bf16.msra.mxu0 0
      %8203 = vmatprep.subr.bf16.mxu0 0
      %8204 = vmatpush1.bf16.msra.mxu0 0
      %8205 = vmatprep.subr.bf16.mxu0 0
      %8206 = vmatpush1.bf16.msra.mxu0 0
      %8207 = vmatprep.subr.bf16.mxu0 0
      %8208 = vmatpush1.bf16.msra.mxu0 0
      %8209 = vmatprep.subr.bf16.mxu0 0
      %8210 = vmatpush1.bf16.msra.mxu0 0
      %8211 = vmatprep.subr.bf16.mxu0 0
      %8212 = vmatpush1.bf16.msra.mxu0 0
      %8213 = vmatprep.subr.bf16.mxu0 0
      %8214 = vmatpush1.bf16.msra.mxu0 0
      %8215 = vmatprep.subr.bf16.mxu0 0
      %8216 = vmatpush1.bf16.msra.mxu0 0
      %8217 = vmatprep.subr.bf16.mxu0 0
      %8218 = vmatpush1.bf16.msra.mxu0 0
      %8219 = vmatprep.subr.bf16.mxu0 0
      %8220 = vmatpush1.bf16.msra.mxu0 0
      %8221 = vmatprep.subr.bf16.mxu0 0
      %8222 = vmatpush1.bf16.msra.mxu0 0
      %8223 = vmatprep.mubr.bf16.mxu0 0
      %8224 = vmatmul.mubr.bf16.gmra.mrb[0].mxu0 %v8189
      %v8225 = vpop.f32.mrb[0].mxu0
      %v8226 = vadd.f32 0.0, %v8225
      %v8227 = vpop.f32.mrb[0].mxu0
      %v8228 = vpop.f32.mrb[0].mxu0
      %v8229 = vpop.f32.mrb[0].mxu0
      %8230 = vdwg.mxu0
      %v8233 = vsel %vm331, %v7081, 0
      %8235 = vmatprep.subr.bf16.mxu0 0
      %8236 = vmatpush1.bf16.msra.mxu0 %v4342
      %8237 = vmatprep.subr.bf16.mxu0 0
      %8238 = vmatpush1.bf16.msra.mxu0 0
      %8239 = vmatprep.subr.bf16.mxu0 0
      %8240 = vmatpush1.bf16.msra.mxu0 0
      %8241 = vmatprep.subr.bf16.mxu0 0
      %8242 = vmatpush1.bf16.msra.mxu0 0
      %8243 = vmatprep.subr.bf16.mxu0 0
      %8244 = vmatpush1.bf16.msra.mxu0 0
      %8245 = vmatprep.subr.bf16.mxu0 0
      %8246 = vmatpush1.bf16.msra.mxu0 0
      %8247 = vmatprep.subr.bf16.mxu0 0
      %8248 = vmatpush1.bf16.msra.mxu0 0
      %8249 = vmatprep.subr.bf16.mxu0 0
      %8250 = vmatpush1.bf16.msra.mxu0 0
      %8251 = vmatprep.subr.bf16.mxu0 0
      %8252 = vmatpush1.bf16.msra.mxu0 0
      %8253 = vmatprep.subr.bf16.mxu0 0
      %8254 = vmatpush1.bf16.msra.mxu0 0
      %8255 = vmatprep.subr.bf16.mxu0 0
      %8256 = vmatpush1.bf16.msra.mxu0 0
      %8257 = vmatprep.subr.bf16.mxu0 0
      %8258 = vmatpush1.bf16.msra.mxu0 0
      %8259 = vmatprep.subr.bf16.mxu0 0
      %8260 = vmatpush1.bf16.msra.mxu0 0
      %8261 = vmatprep.subr.bf16.mxu0 0
      %8262 = vmatpush1.bf16.msra.mxu0 0
      %8263 = vmatprep.subr.bf16.mxu0 0
      %8264 = vmatpush1.bf16.msra.mxu0 0
      %8265 = vmatprep.subr.bf16.mxu0 0
      %8266 = vmatpush1.bf16.msra.mxu0 0
      %8267 = vmatprep.mubr.bf16.mxu0 0
      %8268 = vmatmul.mubr.bf16.gmra.mrb[0].mxu0 %v8233
      %v8269 = vpop.f32.mrb[0].mxu0
      %v8270 = vadd.f32 0.0, %v8269
      %v8271 = vpop.f32.mrb[0].mxu0
      %v8272 = vpop.f32.mrb[0].mxu0
      %v8273 = vpop.f32.mrb[0].mxu0
      %8274 = vdwg.mxu0
      %v8277 = vsel %vm331, %v7082, 0
      %8279 = vmatprep.subr.bf16.mxu0 0
      %8280 = vmatpush1.bf16.msra.mxu0 %v4344
      %8281 = vmatprep.subr.bf16.mxu0 0
      %8282 = vmatpush1.bf16.msra.mxu0 0
      %8283 = vmatprep.subr.bf16.mxu0 0
      %8284 = vmatpush1.bf16.msra.mxu0 0
      %8285 = vmatprep.subr.bf16.mxu0 0
      %8286 = vmatpush1.bf16.msra.mxu0 0
      %8287 = vmatprep.subr.bf16.mxu0 0
      %8288 = vmatpush1.bf16.msra.mxu0 0
      %8289 = vmatprep.subr.bf16.mxu0 0
      %8290 = vmatpush1.bf16.msra.mxu0 0
      %8291 = vmatprep.subr.bf16.mxu0 0
      %8292 = vmatpush1.bf16.msra.mxu0 0
      %8293 = vmatprep.subr.bf16.mxu0 0
      %8294 = vmatpush1.bf16.msra.mxu0 0
      %8295 = vmatprep.subr.bf16.mxu0 0
      %8296 = vmatpush1.bf16.msra.mxu0 0
      %8297 = vmatprep.subr.bf16.mxu0 0
      %8298 = vmatpush1.bf16.msra.mxu0 0
      %8299 = vmatprep.subr.bf16.mxu0 0
      %8300 = vmatpush1.bf16.msra.mxu0 0
      %8301 = vmatprep.subr.bf16.mxu0 0
      %8302 = vmatpush1.bf16.msra.mxu0 0
      %8303 = vmatprep.subr.bf16.mxu0 0
      %8304 = vmatpush1.bf16.msra.mxu0 0
      %8305 = vmatprep.subr.bf16.mxu0 0
      %8306 = vmatpush1.bf16.msra.mxu0 0
      %8307 = vmatprep.subr.bf16.mxu0 0
      %8308 = vmatpush1.bf16.msra.mxu0 0
      %8309 = vmatprep.subr.bf16.mxu0 0
      %8310 = vmatpush1.bf16.msra.mxu0 0
      %8311 = vmatprep.mubr.bf16.mxu0 0
      %8312 = vmatmul.mubr.bf16.gmra.mrb[0].mxu0 %v8277
      %v8313 = vpop.f32.mrb[0].mxu0
      %v8314 = vadd.f32 0.0, %v8313
      %v8315 = vpop.f32.mrb[0].mxu0
      %v8316 = vpop.f32.mrb[0].mxu0
      %v8317 = vpop.f32.mrb[0].mxu0
      %8318 = vdwg.mxu0
      %v8321 = vsel %vm331, %v7083, 0
      %8323 = vmatprep.subr.bf16.mxu0 0
      %8324 = vmatpush1.bf16.msra.mxu0 %v4346
      %8325 = vmatprep.subr.bf16.mxu0 0
      %8326 = vmatpush1.bf16.msra.mxu0 0
      %8327 = vmatprep.subr.bf16.mxu0 0
      %8328 = vmatpush1.bf16.msra.mxu0 0
      %8329 = vmatprep.subr.bf16.mxu0 0
      %8330 = vmatpush1.bf16.msra.mxu0 0
      %8331 = vmatprep.subr.bf16.mxu0 0
      %8332 = vmatpush1.bf16.msra.mxu0 0
      %8333 = vmatprep.subr.bf16.mxu0 0
      %8334 = vmatpush1.bf16.msra.mxu0 0
      %8335 = vmatprep.subr.bf16.mxu0 0
      %8336 = vmatpush1.bf16.msra.mxu0 0
      %8337 = vmatprep.subr.bf16.mxu0 0
      %8338 = vmatpush1.bf16.msra.mxu0 0
      %8339 = vmatprep.subr.bf16.mxu0 0
      %8340 = vmatpush1.bf16.msra.mxu0 0
      %8341 = vmatprep.subr.bf16.mxu0 0
      %8342 = vmatpush1.bf16.msra.mxu0 0
      %8343 = vmatprep.subr.bf16.mxu0 0
      %8344 = vmatpush1.bf16.msra.mxu0 0
      %8345 = vmatprep.subr.bf16.mxu0 0
      %8346 = vmatpush1.bf16.msra.mxu0 0
      %8347 = vmatprep.subr.bf16.mxu0 0
      %8348 = vmatpush1.bf16.msra.mxu0 0
      %8349 = vmatprep.subr.bf16.mxu0 0
      %8350 = vmatpush1.bf16.msra.mxu0 0
      %8351 = vmatprep.subr.bf16.mxu0 0
      %8352 = vmatpush1.bf16.msra.mxu0 0
      %8353 = vmatprep.subr.bf16.mxu0 0
      %8354 = vmatpush1.bf16.msra.mxu0 0
      %8355 = vmatprep.mubr.bf16.mxu0 0
      %8356 = vmatmul.mubr.bf16.gmra.mrb[0].mxu0 %v8321
      %v8357 = vpop.f32.mrb[0].mxu0
      %v8358 = vadd.f32 0.0, %v8357
      %v8359 = vpop.f32.mrb[0].mxu0
      %v8360 = vpop.f32.mrb[0].mxu0
      %v8361 = vpop.f32.mrb[0].mxu0
      %8362 = vdwg.mxu0
      %v8365 = vsel %vm331, %v7084, 0
      %8367 = vmatprep.subr.bf16.mxu0 0
      %8368 = vmatpush1.bf16.msra.mxu0 %v4348
      %8369 = vmatprep.subr.bf16.mxu0 0
      %8370 = vmatpush1.bf16.msra.mxu0 0
      %8371 = vmatprep.subr.bf16.mxu0 0
      %8372 = vmatpush1.bf16.msra.mxu0 0
      %8373 = vmatprep.subr.bf16.mxu0 0
      %8374 = vmatpush1.bf16.msra.mxu0 0
      %8375 = vmatprep.subr.bf16.mxu0 0
      %8376 = vmatpush1.bf16.msra.mxu0 0
      %8377 = vmatprep.subr.bf16.mxu0 0
      %8378 = vmatpush1.bf16.msra.mxu0 0
      %8379 = vmatprep.subr.bf16.mxu0 0
      %8380 = vmatpush1.bf16.msra.mxu0 0
      %8381 = vmatprep.subr.bf16.mxu0 0
      %8382 = vmatpush1.bf16.msra.mxu0 0
      %8383 = vmatprep.subr.bf16.mxu0 0
      %8384 = vmatpush1.bf16.msra.mxu0 0
      %8385 = vmatprep.subr.bf16.mxu0 0
      %8386 = vmatpush1.bf16.msra.mxu0 0
      %8387 = vmatprep.subr.bf16.mxu0 0
      %8388 = vmatpush1.bf16.msra.mxu0 0
      %8389 = vmatprep.subr.bf16.mxu0 0
      %8390 = vmatpush1.bf16.msra.mxu0 0
      %8391 = vmatprep.subr.bf16.mxu0 0
      %8392 = vmatpush1.bf16.msra.mxu0 0
      %8393 = vmatprep.subr.bf16.mxu0 0
      %8394 = vmatpush1.bf16.msra.mxu0 0
      %8395 = vmatprep.subr.bf16.mxu0 0
      %8396 = vmatpush1.bf16.msra.mxu0 0
      %8397 = vmatprep.subr.bf16.mxu0 0
      %8398 = vmatpush1.bf16.msra.mxu0 0
      %8399 = vmatprep.mubr.bf16.mxu0 0
      %8400 = vmatmul.mubr.bf16.gmra.mrb[0].mxu0 %v8365
      %v8401 = vpop.f32.mrb[0].mxu0
      %v8402 = vadd.f32 0.0, %v8401
      %v8403 = vpop.f32.mrb[0].mxu0
      %v8404 = vpop.f32.mrb[0].mxu0
      %v8405 = vpop.f32.mrb[0].mxu0
      %8406 = vdwg.mxu0
      %v8409 = vsel %vm331, %v7085, 0
      %8411 = vmatprep.subr.bf16.mxu0 0
      %8412 = vmatpush1.bf16.msra.mxu0 %v4350
      %8413 = vmatprep.subr.bf16.mxu0 0
      %8414 = vmatpush1.bf16.msra.mxu0 0
      %8415 = vmatprep.subr.bf16.mxu0 0
      %8416 = vmatpush1.bf16.msra.mxu0 0
      %8417 = vmatprep.subr.bf16.mxu0 0
      %8418 = vmatpush1.bf16.msra.mxu0 0
      %8419 = vmatprep.subr.bf16.mxu0 0
      %8420 = vmatpush1.bf16.msra.mxu0 0
      %8421 = vmatprep.subr.bf16.mxu0 0
      %8422 = vmatpush1.bf16.msra.mxu0 0
      %8423 = vmatprep.subr.bf16.mxu0 0
      %8424 = vmatpush1.bf16.msra.mxu0 0
      %8425 = vmatprep.subr.bf16.mxu0 0
      %8426 = vmatpush1.bf16.msra.mxu0 0
      %8427 = vmatprep.subr.bf16.mxu0 0
      %8428 = vmatpush1.bf16.msra.mxu0 0
      %8429 = vmatprep.subr.bf16.mxu0 0
      %8430 = vmatpush1.bf16.msra.mxu0 0
      %8431 = vmatprep.subr.bf16.mxu0 0
      %8432 = vmatpush1.bf16.msra.mxu0 0
      %8433 = vmatprep.subr.bf16.mxu0 0
      %8434 = vmatpush1.bf16.msra.mxu0 0
      %8435 = vmatprep.subr.bf16.mxu0 0
      %8436 = vmatpush1.bf16.msra.mxu0 0
      %8437 = vmatprep.subr.bf16.mxu0 0
      %8438 = vmatpush1.bf16.msra.mxu0 0
      %8439 = vmatprep.subr.bf16.mxu0 0
      %8440 = vmatpush1.bf16.msra.mxu0 0
      %8441 = vmatprep.subr.bf16.mxu0 0
      %8442 = vmatpush1.bf16.msra.mxu0 0
      %8443 = vmatprep.mubr.bf16.mxu0 0
      %8444 = vmatmul.mubr.bf16.gmra.mrb[0].mxu0 %v8409
      %v8445 = vpop.f32.mrb[0].mxu0
      %v8446 = vadd.f32 0.0, %v8445
      %v8447 = vpop.f32.mrb[0].mxu0
      %v8448 = vpop.f32.mrb[0].mxu0
      %v8449 = vpop.f32.mrb[0].mxu0
      %8450 = vdwg.mxu0
      %v8453 = vsel %vm331, %v7086, 0
      %8455 = vmatprep.subr.bf16.mxu0 0
      %8456 = vmatpush1.bf16.msra.mxu0 %v4352
      %8457 = vmatprep.subr.bf16.mxu0 0
      %8458 = vmatpush1.bf16.msra.mxu0 0
      %8459 = vmatprep.subr.bf16.mxu0 0
      %8460 = vmatpush1.bf16.msra.mxu0 0
      %8461 = vmatprep.subr.bf16.mxu0 0
      %8462 = vmatpush1.bf16.msra.mxu0 0
      %8463 = vmatprep.subr.bf16.mxu0 0
      %8464 = vmatpush1.bf16.msra.mxu0 0
      %8465 = vmatprep.subr.bf16.mxu0 0
      %8466 = vmatpush1.bf16.msra.mxu0 0
      %8467 = vmatprep.subr.bf16.mxu0 0
      %8468 = vmatpush1.bf16.msra.mxu0 0
      %8469 = vmatprep.subr.bf16.mxu0 0
      %8470 = vmatpush1.bf16.msra.mxu0 0
      %8471 = vmatprep.subr.bf16.mxu0 0
      %8472 = vmatpush1.bf16.msra.mxu0 0
      %8473 = vmatprep.subr.bf16.mxu0 0
      %8474 = vmatpush1.bf16.msra.mxu0 0
      %8475 = vmatprep.subr.bf16.mxu0 0
      %8476 = vmatpush1.bf16.msra.mxu0 0
      %8477 = vmatprep.subr.bf16.mxu0 0
      %8478 = vmatpush1.bf16.msra.mxu0 0
      %8479 = vmatprep.subr.bf16.mxu0 0
      %8480 = vmatpush1.bf16.msra.mxu0 0
      %8481 = vmatprep.subr.bf16.mxu0 0
      %8482 = vmatpush1.bf16.msra.mxu0 0
      %8483 = vmatprep.subr.bf16.mxu0 0
      %8484 = vmatpush1.bf16.msra.mxu0 0
      %8485 = vmatprep.subr.bf16.mxu0 0
      %8486 = vmatpush1.bf16.msra.mxu0 0
      %8487 = vmatprep.mubr.bf16.mxu0 0
      %8488 = vmatmul.mubr.bf16.gmra.mrb[0].mxu0 %v8453
      %v8489 = vpop.f32.mrb[0].mxu0
      %v8490 = vadd.f32 0.0, %v8489
      %v8491 = vpop.f32.mrb[0].mxu0
      %v8492 = vpop.f32.mrb[0].mxu0
      %v8493 = vpop.f32.mrb[0].mxu0
      %8494 = vdwg.mxu0
      %v8496 = vsel %vm331, %v7023, 0
      %8498 = vmatprep.subr.bf16.mxu0 0
      %8499 = vmatpush1.bf16.msra.mxu0 %v1656
      %8500 = vmatprep.subr.bf16.mxu0 0
      %8501 = vmatpush1.bf16.msra.mxu0 0
      %8502 = vmatprep.subr.bf16.mxu0 0
      %8503 = vmatpush1.bf16.msra.mxu0 0
      %8504 = vmatprep.subr.bf16.mxu0 0
      %8505 = vmatpush1.bf16.msra.mxu0 0
      %8506 = vmatprep.subr.bf16.mxu0 0
      %8507 = vmatpush1.bf16.msra.mxu0 0
      %8508 = vmatprep.subr.bf16.mxu0 0
      %8509 = vmatpush1.bf16.msra.mxu0 0
      %8510 = vmatprep.subr.bf16.mxu0 0
      %8511 = vmatpush1.bf16.msra.mxu0 0
      %8512 = vmatprep.subr.bf16.mxu0 0
      %8513 = vmatpush1.bf16.msra.mxu0 0
      %8514 = vmatprep.subr.bf16.mxu0 0
      %8515 = vmatpush1.bf16.msra.mxu0 0
      %8516 = vmatprep.subr.bf16.mxu0 0
      %8517 = vmatpush1.bf16.msra.mxu0 0
      %8518 = vmatprep.subr.bf16.mxu0 0
      %8519 = vmatpush1.bf16.msra.mxu0 0
      %8520 = vmatprep.subr.bf16.mxu0 0
      %8521 = vmatpush1.bf16.msra.mxu0 0
      %8522 = vmatprep.subr.bf16.mxu0 0
      %8523 = vmatpush1.bf16.msra.mxu0 0
      %8524 = vmatprep.subr.bf16.mxu0 0
      %8525 = vmatpush1.bf16.msra.mxu0 0
      %8526 = vmatprep.subr.bf16.mxu0 0
      %8527 = vmatpush1.bf16.msra.mxu0 0
      %8528 = vmatprep.subr.bf16.mxu0 0
      %8529 = vmatpush1.bf16.msra.mxu0 0
      %8530 = vmatprep.mubr.bf16.mxu0 0
      %8531 = vmatmul.mubr.bf16.gmra.mrb[0].mxu0 %v8496
      %v8532 = vpop.f32.mrb[0].mxu0
      %v8533 = vadd.f32 %v7126, %v8532
      %v8534 = vpop.f32.mrb[0].mxu0
      %v8535 = vpop.f32.mrb[0].mxu0
      %v8536 = vpop.f32.mrb[0].mxu0
      %8537 = vdwg.mxu0
      %v8539 = vsel %vm331, %v7024, 0
      %8541 = vmatprep.subr.bf16.mxu0 0
      %8542 = vmatpush1.bf16.msra.mxu0 %v1657
      %8543 = vmatprep.subr.bf16.mxu0 0
      %8544 = vmatpush1.bf16.msra.mxu0 0
      %8545 = vmatprep.subr.bf16.mxu0 0
      %8546 = vmatpush1.bf16.msra.mxu0 0
      %8547 = vmatprep.subr.bf16.mxu0 0
      %8548 = vmatpush1.bf16.msra.mxu0 0
      %8549 = vmatprep.subr.bf16.mxu0 0
      %8550 = vmatpush1.bf16.msra.mxu0 0
      %8551 = vmatprep.subr.bf16.mxu0 0
      %8552 = vmatpush1.bf16.msra.mxu0 0
      %8553 = vmatprep.subr.bf16.mxu0 0
      %8554 = vmatpush1.bf16.msra.mxu0 0
      %8555 = vmatprep.subr.bf16.mxu0 0
      %8556 = vmatpush1.bf16.msra.mxu0 0
      %8557 = vmatprep.subr.bf16.mxu0 0
      %8558 = vmatpush1.bf16.msra.mxu0 0
      %8559 = vmatprep.subr.bf16.mxu0 0
      %8560 = vmatpush1.bf16.msra.mxu0 0
      %8561 = vmatprep.subr.bf16.mxu0 0
      %8562 = vmatpush1.bf16.msra.mxu0 0
      %8563 = vmatprep.subr.bf16.mxu0 0
      %8564 = vmatpush1.bf16.msra.mxu0 0
      %8565 = vmatprep.subr.bf16.mxu0 0
      %8566 = vmatpush1.bf16.msra.mxu0 0
      %8567 = vmatprep.subr.bf16.mxu0 0
      %8568 = vmatpush1.bf16.msra.mxu0 0
      %8569 = vmatprep.subr.bf16.mxu0 0
      %8570 = vmatpush1.bf16.msra.mxu0 0
      %8571 = vmatprep.subr.bf16.mxu0 0
      %8572 = vmatpush1.bf16.msra.mxu0 0
      %8573 = vmatprep.mubr.bf16.mxu0 0
      %8574 = vmatmul.mubr.bf16.gmra.mrb[0].mxu0 %v8539
      %v8575 = vpop.f32.mrb[0].mxu0
      %v8576 = vadd.f32 %v7170, %v8575
      %v8577 = vpop.f32.mrb[0].mxu0
      %v8578 = vpop.f32.mrb[0].mxu0
      %v8579 = vpop.f32.mrb[0].mxu0
      %8580 = vdwg.mxu0
      %v8582 = vsel %vm331, %v7025, 0
      %8584 = vmatprep.subr.bf16.mxu0 0
      %8585 = vmatpush1.bf16.msra.mxu0 %v1658
      %8586 = vmatprep.subr.bf16.mxu0 0
      %8587 = vmatpush1.bf16.msra.mxu0 0
      %8588 = vmatprep.subr.bf16.mxu0 0
      %8589 = vmatpush1.bf16.msra.mxu0 0
      %8590 = vmatprep.subr.bf16.mxu0 0
      %8591 = vmatpush1.bf16.msra.mxu0 0
      %8592 = vmatprep.subr.bf16.mxu0 0
      %8593 = vmatpush1.bf16.msra.mxu0 0
      %8594 = vmatprep.subr.bf16.mxu0 0
      %8595 = vmatpush1.bf16.msra.mxu0 0
      %8596 = vmatprep.subr.bf16.mxu0 0
      %8597 = vmatpush1.bf16.msra.mxu0 0
      %8598 = vmatprep.subr.bf16.mxu0 0
      %8599 = vmatpush1.bf16.msra.mxu0 0
      %8600 = vmatprep.subr.bf16.mxu0 0
      %8601 = vmatpush1.bf16.msra.mxu0 0
      %8602 = vmatprep.subr.bf16.mxu0 0
      %8603 = vmatpush1.bf16.msra.mxu0 0
      %8604 = vmatprep.subr.bf16.mxu0 0
      %8605 = vmatpush1.bf16.msra.mxu0 0
      %8606 = vmatprep.subr.bf16.mxu0 0
      %8607 = vmatpush1.bf16.msra.mxu0 0
      %8608 = vmatprep.subr.bf16.mxu0 0
      %8609 = vmatpush1.bf16.msra.mxu0 0
      %8610 = vmatprep.subr.bf16.mxu0 0
      %8611 = vmatpush1.bf16.msra.mxu0 0
      %8612 = vmatprep.subr.bf16.mxu0 0
      %8613 = vmatpush1.bf16.msra.mxu0 0
      %8614 = vmatprep.subr.bf16.mxu0 0
      %8615 = vmatpush1.bf16.msra.mxu0 0
      %8616 = vmatprep.mubr.bf16.mxu0 0
      %8617 = vmatmul.mubr.bf16.gmra.mrb[0].mxu0 %v8582
      %v8618 = vpop.f32.mrb[0].mxu0
      %v8619 = vadd.f32 %v7214, %v8618
      %v8620 = vpop.f32.mrb[0].mxu0
      %v8621 = vpop.f32.mrb[0].mxu0
      %v8622 = vpop.f32.mrb[0].mxu0
      %8623 = vdwg.mxu0
      %v8625 = vsel %vm331, %v7026, 0
      %8627 = vmatprep.subr.bf16.mxu0 0
      %8628 = vmatpush1.bf16.msra.mxu0 %v1659
      %8629 = vmatprep.subr.bf16.mxu0 0
      %8630 = vmatpush1.bf16.msra.mxu0 0
      %8631 = vmatprep.subr.bf16.mxu0 0
      %8632 = vmatpush1.bf16.msra.mxu0 0
      %8633 = vmatprep.subr.bf16.mxu0 0
      %8634 = vmatpush1.bf16.msra.mxu0 0
      %8635 = vmatprep.subr.bf16.mxu0 0
      %8636 = vmatpush1.bf16.msra.mxu0 0
      %8637 = vmatprep.subr.bf16.mxu0 0
      %8638 = vmatpush1.bf16.msra.mxu0 0
      %8639 = vmatprep.subr.bf16.mxu0 0
      %8640 = vmatpush1.bf16.msra.mxu0 0
      %8641 = vmatprep.subr.bf16.mxu0 0
      %8642 = vmatpush1.bf16.msra.mxu0 0
      %8643 = vmatprep.subr.bf16.mxu0 0
      %8644 = vmatpush1.bf16.msra.mxu0 0
      %8645 = vmatprep.subr.bf16.mxu0 0
      %8646 = vmatpush1.bf16.msra.mxu0 0
      %8647 = vmatprep.subr.bf16.mxu0 0
      %8648 = vmatpush1.bf16.msra.mxu0 0
      %8649 = vmatprep.subr.bf16.mxu0 0
      %8650 = vmatpush1.bf16.msra.mxu0 0
      %8651 = vmatprep.subr.bf16.mxu0 0
      %8652 = vmatpush1.bf16.msra.mxu0 0
      %8653 = vmatprep.subr.bf16.mxu0 0
      %8654 = vmatpush1.bf16.msra.mxu0 0
      %8655 = vmatprep.subr.bf16.mxu0 0
      %8656 = vmatpush1.bf16.msra.mxu0 0
      %8657 = vmatprep.subr.bf16.mxu0 0
      %8658 = vmatpush1.bf16.msra.mxu0 0
      %8659 = vmatprep.mubr.bf16.mxu0 0
      %8660 = vmatmul.mubr.bf16.gmra.mrb[0].mxu0 %v8625
      %v8661 = vpop.f32.mrb[0].mxu0
      %v8662 = vadd.f32 %v7258, %v8661
      %v8663 = vpop.f32.mrb[0].mxu0
      %v8664 = vpop.f32.mrb[0].mxu0
      %v8665 = vpop.f32.mrb[0].mxu0
      %8666 = vdwg.mxu0
      %v8668 = vsel %vm331, %v7027, 0
      %8670 = vmatprep.subr.bf16.mxu0 0
      %8671 = vmatpush1.bf16.msra.mxu0 %v1660
      %8672 = vmatprep.subr.bf16.mxu0 0
      %8673 = vmatpush1.bf16.msra.mxu0 0
      %8674 = vmatprep.subr.bf16.mxu0 0
      %8675 = vmatpush1.bf16.msra.mxu0 0
      %8676 = vmatprep.subr.bf16.mxu0 0
      %8677 = vmatpush1.bf16.msra.mxu0 0
      %8678 = vmatprep.subr.bf16.mxu0 0
      %8679 = vmatpush1.bf16.msra.mxu0 0
      %8680 = vmatprep.subr.bf16.mxu0 0
      %8681 = vmatpush1.bf16.msra.mxu0 0
      %8682 = vmatprep.subr.bf16.mxu0 0
      %8683 = vmatpush1.bf16.msra.mxu0 0
      %8684 = vmatprep.subr.bf16.mxu0 0
      %8685 = vmatpush1.bf16.msra.mxu0 0
      %8686 = vmatprep.subr.bf16.mxu0 0
      %8687 = vmatpush1.bf16.msra.mxu0 0
      %8688 = vmatprep.subr.bf16.mxu0 0
      %8689 = vmatpush1.bf16.msra.mxu0 0
      %8690 = vmatprep.subr.bf16.mxu0 0
      %8691 = vmatpush1.bf16.msra.mxu0 0
      %8692 = vmatprep.subr.bf16.mxu0 0
      %8693 = vmatpush1.bf16.msra.mxu0 0
      %8694 = vmatprep.subr.bf16.mxu0 0
      %8695 = vmatpush1.bf16.msra.mxu0 0
      %8696 = vmatprep.subr.bf16.mxu0 0
      %8697 = vmatpush1.bf16.msra.mxu0 0
      %8698 = vmatprep.subr.bf16.mxu0 0
      %8699 = vmatpush1.bf16.msra.mxu0 0
      %8700 = vmatprep.subr.bf16.mxu0 0
      %8701 = vmatpush1.bf16.msra.mxu0 0
      %8702 = vmatprep.mubr.bf16.mxu0 0
      %8703 = vmatmul.mubr.bf16.gmra.mrb[0].mxu0 %v8668
      %v8704 = vpop.f32.mrb[0].mxu0
      %v8705 = vadd.f32 %v7302, %v8704
      %v8706 = vpop.f32.mrb[0].mxu0
      %v8707 = vpop.f32.mrb[0].mxu0
      %v8708 = vpop.f32.mrb[0].mxu0
      %8709 = vdwg.mxu0
      %v8711 = vsel %vm331, %v7028, 0
      %8713 = vmatprep.subr.bf16.mxu0 0
      %8714 = vmatpush1.bf16.msra.mxu0 %v1661
      %8715 = vmatprep.subr.bf16.mxu0 0
      %8716 = vmatpush1.bf16.msra.mxu0 0
      %8717 = vmatprep.subr.bf16.mxu0 0
      %8718 = vmatpush1.bf16.msra.mxu0 0
      %8719 = vmatprep.subr.bf16.mxu0 0
      %8720 = vmatpush1.bf16.msra.mxu0 0
      %8721 = vmatprep.subr.bf16.mxu0 0
      %8722 = vmatpush1.bf16.msra.mxu0 0
      %8723 = vmatprep.subr.bf16.mxu0 0
      %8724 = vmatpush1.bf16.msra.mxu0 0
      %8725 = vmatprep.subr.bf16.mxu0 0
      %8726 = vmatpush1.bf16.msra.mxu0 0
      %8727 = vmatprep.subr.bf16.mxu0 0
      %8728 = vmatpush1.bf16.msra.mxu0 0
      %8729 = vmatprep.subr.bf16.mxu0 0
      %8730 = vmatpush1.bf16.msra.mxu0 0
      %8731 = vmatprep.subr.bf16.mxu0 0
      %8732 = vmatpush1.bf16.msra.mxu0 0
      %8733 = vmatprep.subr.bf16.mxu0 0
      %8734 = vmatpush1.bf16.msra.mxu0 0
      %8735 = vmatprep.subr.bf16.mxu0 0
      %8736 = vmatpush1.bf16.msra.mxu0 0
      %8737 = vmatprep.subr.bf16.mxu0 0
      %8738 = vmatpush1.bf16.msra.mxu0 0
      %8739 = vmatprep.subr.bf16.mxu0 0
      %8740 = vmatpush1.bf16.msra.mxu0 0
      %8741 = vmatprep.subr.bf16.mxu0 0
      %8742 = vmatpush1.bf16.msra.mxu0 0
      %8743 = vmatprep.subr.bf16.mxu0 0
      %8744 = vmatpush1.bf16.msra.mxu0 0
      %8745 = vmatprep.mubr.bf16.mxu0 0
      %8746 = vmatmul.mubr.bf16.gmra.mrb[0].mxu0 %v8711
      %v8747 = vpop.f32.mrb[0].mxu0
      %v8748 = vadd.f32 %v7346, %v8747
      %v8749 = vpop.f32.mrb[0].mxu0
      %v8750 = vpop.f32.mrb[0].mxu0
      %v8751 = vpop.f32.mrb[0].mxu0
      %8752 = vdwg.mxu0
      %v8754 = vsel %vm331, %v7029, 0
      %8756 = vmatprep.subr.bf16.mxu0 0
      %8757 = vmatpush1.bf16.msra.mxu0 %v1662
      %8758 = vmatprep.subr.bf16.mxu0 0
      %8759 = vmatpush1.bf16.msra.mxu0 0
      %8760 = vmatprep.subr.bf16.mxu0 0
      %8761 = vmatpush1.bf16.msra.mxu0 0
      %8762 = vmatprep.subr.bf16.mxu0 0
      %8763 = vmatpush1.bf16.msra.mxu0 0
      %8764 = vmatprep.subr.bf16.mxu0 0
      %8765 = vmatpush1.bf16.msra.mxu0 0
      %8766 = vmatprep.subr.bf16.mxu0 0
      %8767 = vmatpush1.bf16.msra.mxu0 0
      %8768 = vmatprep.subr.bf16.mxu0 0
      %8769 = vmatpush1.bf16.msra.mxu0 0
      %8770 = vmatprep.subr.bf16.mxu0 0
      %8771 = vmatpush1.bf16.msra.mxu0 0
      %8772 = vmatprep.subr.bf16.mxu0 0
      %8773 = vmatpush1.bf16.msra.mxu0 0
      %8774 = vmatprep.subr.bf16.mxu0 0
      %8775 = vmatpush1.bf16.msra.mxu0 0
      %8776 = vmatprep.subr.bf16.mxu0 0
      %8777 = vmatpush1.bf16.msra.mxu0 0
      %8778 = vmatprep.subr.bf16.mxu0 0
      %8779 = vmatpush1.bf16.msra.mxu0 0
      %8780 = vmatprep.subr.bf16.mxu0 0
      %8781 = vmatpush1.bf16.msra.mxu0 0
      %8782 = vmatprep.subr.bf16.mxu0 0
      %8783 = vmatpush1.bf16.msra.mxu0 0
      %8784 = vmatprep.subr.bf16.mxu0 0
      %8785 = vmatpush1.bf16.msra.mxu0 0
      %8786 = vmatprep.subr.bf16.mxu0 0
      %8787 = vmatpush1.bf16.msra.mxu0 0
      %8788 = vmatprep.mubr.bf16.mxu0 0
      %8789 = vmatmul.mubr.bf16.gmra.mrb[0].mxu0 %v8754
      %v8790 = vpop.f32.mrb[0].mxu0
      %v8791 = vadd.f32 %v7390, %v8790
      %v8792 = vpop.f32.mrb[0].mxu0
      %v8793 = vpop.f32.mrb[0].mxu0
      %v8794 = vpop.f32.mrb[0].mxu0
      %8795 = vdwg.mxu0
      %v8797 = vsel %vm331, %v7030, 0
      %8799 = vmatprep.subr.bf16.mxu0 0
      %8800 = vmatpush1.bf16.msra.mxu0 %v1663
      %8801 = vmatprep.subr.bf16.mxu0 0
      %8802 = vmatpush1.bf16.msra.mxu0 0
      %8803 = vmatprep.subr.bf16.mxu0 0
      %8804 = vmatpush1.bf16.msra.mxu0 0
      %8805 = vmatprep.subr.bf16.mxu0 0
      %8806 = vmatpush1.bf16.msra.mxu0 0
      %8807 = vmatprep.subr.bf16.mxu0 0
      %8808 = vmatpush1.bf16.msra.mxu0 0
      %8809 = vmatprep.subr.bf16.mxu0 0
      %8810 = vmatpush1.bf16.msra.mxu0 0
      %8811 = vmatprep.subr.bf16.mxu0 0
      %8812 = vmatpush1.bf16.msra.mxu0 0
      %8813 = vmatprep.subr.bf16.mxu0 0
      %8814 = vmatpush1.bf16.msra.mxu0 0
      %8815 = vmatprep.subr.bf16.mxu0 0
      %8816 = vmatpush1.bf16.msra.mxu0 0
      %8817 = vmatprep.subr.bf16.mxu0 0
      %8818 = vmatpush1.bf16.msra.mxu0 0
      %8819 = vmatprep.subr.bf16.mxu0 0
      %8820 = vmatpush1.bf16.msra.mxu0 0
      %8821 = vmatprep.subr.bf16.mxu0 0
      %8822 = vmatpush1.bf16.msra.mxu0 0
      %8823 = vmatprep.subr.bf16.mxu0 0
      %8824 = vmatpush1.bf16.msra.mxu0 0
      %8825 = vmatprep.subr.bf16.mxu0 0
      %8826 = vmatpush1.bf16.msra.mxu0 0
      %8827 = vmatprep.subr.bf16.mxu0 0
      %8828 = vmatpush1.bf16.msra.mxu0 0
      %8829 = vmatprep.subr.bf16.mxu0 0
      %8830 = vmatpush1.bf16.msra.mxu0 0
      %8831 = vmatprep.mubr.bf16.mxu0 0
      %8832 = vmatmul.mubr.bf16.gmra.mrb[0].mxu0 %v8797
      %v8833 = vpop.f32.mrb[0].mxu0
      %v8834 = vadd.f32 %v7434, %v8833
      %v8835 = vpop.f32.mrb[0].mxu0
      %v8836 = vpop.f32.mrb[0].mxu0
      %v8837 = vpop.f32.mrb[0].mxu0
      %8838 = vdwg.mxu0
      %v8840 = vsel %vm331, %v7031, 0
      %8842 = vmatprep.subr.bf16.mxu0 0
      %8843 = vmatpush1.bf16.msra.mxu0 %v1664
      %8844 = vmatprep.subr.bf16.mxu0 0
      %8845 = vmatpush1.bf16.msra.mxu0 0
      %8846 = vmatprep.subr.bf16.mxu0 0
      %8847 = vmatpush1.bf16.msra.mxu0 0
      %8848 = vmatprep.subr.bf16.mxu0 0
      %8849 = vmatpush1.bf16.msra.mxu0 0
      %8850 = vmatprep.subr.bf16.mxu0 0
      %8851 = vmatpush1.bf16.msra.mxu0 0
      %8852 = vmatprep.subr.bf16.mxu0 0
      %8853 = vmatpush1.bf16.msra.mxu0 0
      %8854 = vmatprep.subr.bf16.mxu0 0
      %8855 = vmatpush1.bf16.msra.mxu0 0
      %8856 = vmatprep.subr.bf16.mxu0 0
      %8857 = vmatpush1.bf16.msra.mxu0 0
      %8858 = vmatprep.subr.bf16.mxu0 0
      %8859 = vmatpush1.bf16.msra.mxu0 0
      %8860 = vmatprep.subr.bf16.mxu0 0
      %8861 = vmatpush1.bf16.msra.mxu0 0
      %8862 = vmatprep.subr.bf16.mxu0 0
      %8863 = vmatpush1.bf16.msra.mxu0 0
      %8864 = vmatprep.subr.bf16.mxu0 0
      %8865 = vmatpush1.bf16.msra.mxu0 0
      %8866 = vmatprep.subr.bf16.mxu0 0
      %8867 = vmatpush1.bf16.msra.mxu0 0
      %8868 = vmatprep.subr.bf16.mxu0 0
      %8869 = vmatpush1.bf16.msra.mxu0 0
      %8870 = vmatprep.subr.bf16.mxu0 0
      %8871 = vmatpush1.bf16.msra.mxu0 0
      %8872 = vmatprep.subr.bf16.mxu0 0
      %8873 = vmatpush1.bf16.msra.mxu0 0
      %8874 = vmatprep.mubr.bf16.mxu0 0
      %8875 = vmatmul.mubr.bf16.gmra.mrb[0].mxu0 %v8840
      %v8876 = vpop.f32.mrb[0].mxu0
      %v8877 = vadd.f32 %v7478, %v8876
      %v8878 = vpop.f32.mrb[0].mxu0
      %v8879 = vpop.f32.mrb[0].mxu0
      %v8880 = vpop.f32.mrb[0].mxu0
      %8881 = vdwg.mxu0
      %v8883 = vsel %vm331, %v7032, 0
      %8885 = vmatprep.subr.bf16.mxu0 0
      %8886 = vmatpush1.bf16.msra.mxu0 %v1665
      %8887 = vmatprep.subr.bf16.mxu0 0
      %8888 = vmatpush1.bf16.msra.mxu0 0
      %8889 = vmatprep.subr.bf16.mxu0 0
      %8890 = vmatpush1.bf16.msra.mxu0 0
      %8891 = vmatprep.subr.bf16.mxu0 0
      %8892 = vmatpush1.bf16.msra.mxu0 0
      %8893 = vmatprep.subr.bf16.mxu0 0
      %8894 = vmatpush1.bf16.msra.mxu0 0
      %8895 = vmatprep.subr.bf16.mxu0 0
      %8896 = vmatpush1.bf16.msra.mxu0 0
      %8897 = vmatprep.subr.bf16.mxu0 0
      %8898 = vmatpush1.bf16.msra.mxu0 0
      %8899 = vmatprep.subr.bf16.mxu0 0
      %8900 = vmatpush1.bf16.msra.mxu0 0
      %8901 = vmatprep.subr.bf16.mxu0 0
      %8902 = vmatpush1.bf16.msra.mxu0 0
      %8903 = vmatprep.subr.bf16.mxu0 0
      %8904 = vmatpush1.bf16.msra.mxu0 0
      %8905 = vmatprep.subr.bf16.mxu0 0
      %8906 = vmatpush1.bf16.msra.mxu0 0
      %8907 = vmatprep.subr.bf16.mxu0 0
      %8908 = vmatpush1.bf16.msra.mxu0 0
      %8909 = vmatprep.subr.bf16.mxu0 0
      %8910 = vmatpush1.bf16.msra.mxu0 0
      %8911 = vmatprep.subr.bf16.mxu0 0
      %8912 = vmatpush1.bf16.msra.mxu0 0
      %8913 = vmatprep.subr.bf16.mxu0 0
      %8914 = vmatpush1.bf16.msra.mxu0 0
      %8915 = vmatprep.subr.bf16.mxu0 0
      %8916 = vmatpush1.bf16.msra.mxu0 0
      %8917 = vmatprep.mubr.bf16.mxu0 0
      %8918 = vmatmul.mubr.bf16.gmra.mrb[0].mxu0 %v8883
      %v8919 = vpop.f32.mrb[0].mxu0
      %v8920 = vadd.f32 %v7522, %v8919
      %v8921 = vpop.f32.mrb[0].mxu0
      %v8922 = vpop.f32.mrb[0].mxu0
      %v8923 = vpop.f32.mrb[0].mxu0
      %8924 = vdwg.mxu0
      %v8926 = vsel %vm331, %v7033, 0
      %8928 = vmatprep.subr.bf16.mxu0 0
      %8929 = vmatpush1.bf16.msra.mxu0 %v1666
      %8930 = vmatprep.subr.bf16.mxu0 0
      %8931 = vmatpush1.bf16.msra.mxu0 0
      %8932 = vmatprep.subr.bf16.mxu0 0
      %8933 = vmatpush1.bf16.msra.mxu0 0
      %8934 = vmatprep.subr.bf16.mxu0 0
      %8935 = vmatpush1.bf16.msra.mxu0 0
      %8936 = vmatprep.subr.bf16.mxu0 0
      %8937 = vmatpush1.bf16.msra.mxu0 0
      %8938 = vmatprep.subr.bf16.mxu0 0
      %8939 = vmatpush1.bf16.msra.mxu0 0
      %8940 = vmatprep.subr.bf16.mxu0 0
      %8941 = vmatpush1.bf16.msra.mxu0 0
      %8942 = vmatprep.subr.bf16.mxu0 0
      %8943 = vmatpush1.bf16.msra.mxu0 0
      %8944 = vmatprep.subr.bf16.mxu0 0
      %8945 = vmatpush1.bf16.msra.mxu0 0
      %8946 = vmatprep.subr.bf16.mxu0 0
      %8947 = vmatpush1.bf16.msra.mxu0 0
      %8948 = vmatprep.subr.bf16.mxu0 0
      %8949 = vmatpush1.bf16.msra.mxu0 0
      %8950 = vmatprep.subr.bf16.mxu0 0
      %8951 = vmatpush1.bf16.msra.mxu0 0
      %8952 = vmatprep.subr.bf16.mxu0 0
      %8953 = vmatpush1.bf16.msra.mxu0 0
      %8954 = vmatprep.subr.bf16.mxu0 0
      %8955 = vmatpush1.bf16.msra.mxu0 0
      %8956 = vmatprep.subr.bf16.mxu0 0
      %8957 = vmatpush1.bf16.msra.mxu0 0
      %8958 = vmatprep.subr.bf16.mxu0 0
      %8959 = vmatpush1.bf16.msra.mxu0 0
      %8960 = vmatprep.mubr.bf16.mxu0 0
      %8961 = vmatmul.mubr.bf16.gmra.mrb[0].mxu0 %v8926
      %v8962 = vpop.f32.mrb[0].mxu0
      %v8963 = vadd.f32 %v7566, %v8962
      %v8964 = vpop.f32.mrb[0].mxu0
      %v8965 = vpop.f32.mrb[0].mxu0
      %v8966 = vpop.f32.mrb[0].mxu0
      %8967 = vdwg.mxu0
      %v8969 = vsel %vm331, %v7034, 0
      %8971 = vmatprep.subr.bf16.mxu0 0
      %8972 = vmatpush1.bf16.msra.mxu0 %v1667
      %8973 = vmatprep.subr.bf16.mxu0 0
      %8974 = vmatpush1.bf16.msra.mxu0 0
      %8975 = vmatprep.subr.bf16.mxu0 0
      %8976 = vmatpush1.bf16.msra.mxu0 0
      %8977 = vmatprep.subr.bf16.mxu0 0
      %8978 = vmatpush1.bf16.msra.mxu0 0
      %8979 = vmatprep.subr.bf16.mxu0 0
      %8980 = vmatpush1.bf16.msra.mxu0 0
      %8981 = vmatprep.subr.bf16.mxu0 0
      %8982 = vmatpush1.bf16.msra.mxu0 0
      %8983 = vmatprep.subr.bf16.mxu0 0
      %8984 = vmatpush1.bf16.msra.mxu0 0
      %8985 = vmatprep.subr.bf16.mxu0 0
      %8986 = vmatpush1.bf16.msra.mxu0 0
      %8987 = vmatprep.subr.bf16.mxu0 0
      %8988 = vmatpush1.bf16.msra.mxu0 0
      %8989 = vmatprep.subr.bf16.mxu0 0
      %8990 = vmatpush1.bf16.msra.mxu0 0
      %8991 = vmatprep.subr.bf16.mxu0 0
      %8992 = vmatpush1.bf16.msra.mxu0 0
      %8993 = vmatprep.subr.bf16.mxu0 0
      %8994 = vmatpush1.bf16.msra.mxu0 0
      %8995 = vmatprep.subr.bf16.mxu0 0
      %8996 = vmatpush1.bf16.msra.mxu0 0
      %8997 = vmatprep.subr.bf16.mxu0 0
      %8998 = vmatpush1.bf16.msra.mxu0 0
      %8999 = vmatprep.subr.bf16.mxu0 0
      %9000 = vmatpush1.bf16.msra.mxu0 0
      %9001 = vmatprep.subr.bf16.mxu0 0
      %9002 = vmatpush1.bf16.msra.mxu0 0
      %9003 = vmatprep.mubr.bf16.mxu0 0
      %9004 = vmatmul.mubr.bf16.gmra.mrb[0].mxu0 %v8969
      %v9005 = vpop.f32.mrb[0].mxu0
      %v9006 = vadd.f32 %v7610, %v9005
      %v9007 = vpop.f32.mrb[0].mxu0
      %v9008 = vpop.f32.mrb[0].mxu0
      %v9009 = vpop.f32.mrb[0].mxu0
      %9010 = vdwg.mxu0
      %v9012 = vsel %vm331, %v7035, 0
      %9014 = vmatprep.subr.bf16.mxu0 0
      %9015 = vmatpush1.bf16.msra.mxu0 %v1668
      %9016 = vmatprep.subr.bf16.mxu0 0
      %9017 = vmatpush1.bf16.msra.mxu0 0
      %9018 = vmatprep.subr.bf16.mxu0 0
      %9019 = vmatpush1.bf16.msra.mxu0 0
      %9020 = vmatprep.subr.bf16.mxu0 0
      %9021 = vmatpush1.bf16.msra.mxu0 0
      %9022 = vmatprep.subr.bf16.mxu0 0
      %9023 = vmatpush1.bf16.msra.mxu0 0
      %9024 = vmatprep.subr.bf16.mxu0 0
      %9025 = vmatpush1.bf16.msra.mxu0 0
      %9026 = vmatprep.subr.bf16.mxu0 0
      %9027 = vmatpush1.bf16.msra.mxu0 0
      %9028 = vmatprep.subr.bf16.mxu0 0
      %9029 = vmatpush1.bf16.msra.mxu0 0
      %9030 = vmatprep.subr.bf16.mxu0 0
      %9031 = vmatpush1.bf16.msra.mxu0 0
      %9032 = vmatprep.subr.bf16.mxu0 0
      %9033 = vmatpush1.bf16.msra.mxu0 0
      %9034 = vmatprep.subr.bf16.mxu0 0
      %9035 = vmatpush1.bf16.msra.mxu0 0
      %9036 = vmatprep.subr.bf16.mxu0 0
      %9037 = vmatpush1.bf16.msra.mxu0 0
      %9038 = vmatprep.subr.bf16.mxu0 0
      %9039 = vmatpush1.bf16.msra.mxu0 0
      %9040 = vmatprep.subr.bf16.mxu0 0
      %9041 = vmatpush1.bf16.msra.mxu0 0
      %9042 = vmatprep.subr.bf16.mxu0 0
      %9043 = vmatpush1.bf16.msra.mxu0 0
      %9044 = vmatprep.subr.bf16.mxu0 0
      %9045 = vmatpush1.bf16.msra.mxu0 0
      %9046 = vmatprep.mubr.bf16.mxu0 0
      %9047 = vmatmul.mubr.bf16.gmra.mrb[0].mxu0 %v9012
      %v9048 = vpop.f32.mrb[0].mxu0
      %v9049 = vadd.f32 %v7654, %v9048
      %v9050 = vpop.f32.mrb[0].mxu0
      %v9051 = vpop.f32.mrb[0].mxu0
      %v9052 = vpop.f32.mrb[0].mxu0
      %9053 = vdwg.mxu0
      %v9055 = vsel %vm331, %v7036, 0
      %9057 = vmatprep.subr.bf16.mxu0 0
      %9058 = vmatpush1.bf16.msra.mxu0 %v1669
      %9059 = vmatprep.subr.bf16.mxu0 0
      %9060 = vmatpush1.bf16.msra.mxu0 0
      %9061 = vmatprep.subr.bf16.mxu0 0
      %9062 = vmatpush1.bf16.msra.mxu0 0
      %9063 = vmatprep.subr.bf16.mxu0 0
      %9064 = vmatpush1.bf16.msra.mxu0 0
      %9065 = vmatprep.subr.bf16.mxu0 0
      %9066 = vmatpush1.bf16.msra.mxu0 0
      %9067 = vmatprep.subr.bf16.mxu0 0
      %9068 = vmatpush1.bf16.msra.mxu0 0
      %9069 = vmatprep.subr.bf16.mxu0 0
      %9070 = vmatpush1.bf16.msra.mxu0 0
      %9071 = vmatprep.subr.bf16.mxu0 0
      %9072 = vmatpush1.bf16.msra.mxu0 0
      %9073 = vmatprep.subr.bf16.mxu0 0
      %9074 = vmatpush1.bf16.msra.mxu0 0
      %9075 = vmatprep.subr.bf16.mxu0 0
      %9076 = vmatpush1.bf16.msra.mxu0 0
      %9077 = vmatprep.subr.bf16.mxu0 0
      %9078 = vmatpush1.bf16.msra.mxu0 0
      %9079 = vmatprep.subr.bf16.mxu0 0
      %9080 = vmatpush1.bf16.msra.mxu0 0
      %9081 = vmatprep.subr.bf16.mxu0 0
      %9082 = vmatpush1.bf16.msra.mxu0 0
      %9083 = vmatprep.subr.bf16.mxu0 0
      %9084 = vmatpush1.bf16.msra.mxu0 0
      %9085 = vmatprep.subr.bf16.mxu0 0
      %9086 = vmatpush1.bf16.msra.mxu0 0
      %9087 = vmatprep.subr.bf16.mxu0 0
      %9088 = vmatpush1.bf16.msra.mxu0 0
      %9089 = vmatprep.mubr.bf16.mxu0 0
      %9090 = vmatmul.mubr.bf16.gmra.mrb[0].mxu0 %v9055
      %v9091 = vpop.f32.mrb[0].mxu0
      %v9092 = vadd.f32 %v7698, %v9091
      %v9093 = vpop.f32.mrb[0].mxu0
      %v9094 = vpop.f32.mrb[0].mxu0
      %v9095 = vpop.f32.mrb[0].mxu0
      %9096 = vdwg.mxu0
      %v9098 = vsel %vm331, %v7037, 0
      %9100 = vmatprep.subr.bf16.mxu0 0
      %9101 = vmatpush1.bf16.msra.mxu0 %v1670
      %9102 = vmatprep.subr.bf16.mxu0 0
      %9103 = vmatpush1.bf16.msra.mxu0 0
      %9104 = vmatprep.subr.bf16.mxu0 0
      %9105 = vmatpush1.bf16.msra.mxu0 0
      %9106 = vmatprep.subr.bf16.mxu0 0
      %9107 = vmatpush1.bf16.msra.mxu0 0
      %9108 = vmatprep.subr.bf16.mxu0 0
      %9109 = vmatpush1.bf16.msra.mxu0 0
      %9110 = vmatprep.subr.bf16.mxu0 0
      %9111 = vmatpush1.bf16.msra.mxu0 0
      %9112 = vmatprep.subr.bf16.mxu0 0
      %9113 = vmatpush1.bf16.msra.mxu0 0
      %9114 = vmatprep.subr.bf16.mxu0 0
      %9115 = vmatpush1.bf16.msra.mxu0 0
      %9116 = vmatprep.subr.bf16.mxu0 0
      %9117 = vmatpush1.bf16.msra.mxu0 0
      %9118 = vmatprep.subr.bf16.mxu0 0
      %9119 = vmatpush1.bf16.msra.mxu0 0
      %9120 = vmatprep.subr.bf16.mxu0 0
      %9121 = vmatpush1.bf16.msra.mxu0 0
      %9122 = vmatprep.subr.bf16.mxu0 0
      %9123 = vmatpush1.bf16.msra.mxu0 0
      %9124 = vmatprep.subr.bf16.mxu0 0
      %9125 = vmatpush1.bf16.msra.mxu0 0
      %9126 = vmatprep.subr.bf16.mxu0 0
      %9127 = vmatpush1.bf16.msra.mxu0 0
      %9128 = vmatprep.subr.bf16.mxu0 0
      %9129 = vmatpush1.bf16.msra.mxu0 0
      %9130 = vmatprep.subr.bf16.mxu0 0
      %9131 = vmatpush1.bf16.msra.mxu0 0
      %9132 = vmatprep.mubr.bf16.mxu0 0
      %9133 = vmatmul.mubr.bf16.gmra.mrb[0].mxu0 %v9098
      %v9134 = vpop.f32.mrb[0].mxu0
      %v9135 = vadd.f32 %v7742, %v9134
      %v9136 = vpop.f32.mrb[0].mxu0
      %v9137 = vpop.f32.mrb[0].mxu0
      %v9138 = vpop.f32.mrb[0].mxu0
      %9139 = vdwg.mxu0
      %v9141 = vsel %vm331, %v7038, 0
      %9143 = vmatprep.subr.bf16.mxu0 0
      %9144 = vmatpush1.bf16.msra.mxu0 %v1671
      %9145 = vmatprep.subr.bf16.mxu0 0
      %9146 = vmatpush1.bf16.msra.mxu0 0
      %9147 = vmatprep.subr.bf16.mxu0 0
      %9148 = vmatpush1.bf16.msra.mxu0 0
      %9149 = vmatprep.subr.bf16.mxu0 0
      %9150 = vmatpush1.bf16.msra.mxu0 0
      %9151 = vmatprep.subr.bf16.mxu0 0
      %9152 = vmatpush1.bf16.msra.mxu0 0
      %9153 = vmatprep.subr.bf16.mxu0 0
      %9154 = vmatpush1.bf16.msra.mxu0 0
      %9155 = vmatprep.subr.bf16.mxu0 0
      %9156 = vmatpush1.bf16.msra.mxu0 0
      %9157 = vmatprep.subr.bf16.mxu0 0
      %9158 = vmatpush1.bf16.msra.mxu0 0
      %9159 = vmatprep.subr.bf16.mxu0 0
      %9160 = vmatpush1.bf16.msra.mxu0 0
      %9161 = vmatprep.subr.bf16.mxu0 0
      %9162 = vmatpush1.bf16.msra.mxu0 0
      %9163 = vmatprep.subr.bf16.mxu0 0
      %9164 = vmatpush1.bf16.msra.mxu0 0
      %9165 = vmatprep.subr.bf16.mxu0 0
      %9166 = vmatpush1.bf16.msra.mxu0 0
      %9167 = vmatprep.subr.bf16.mxu0 0
      %9168 = vmatpush1.bf16.msra.mxu0 0
      %9169 = vmatprep.subr.bf16.mxu0 0
      %9170 = vmatpush1.bf16.msra.mxu0 0
      %9171 = vmatprep.subr.bf16.mxu0 0
      %9172 = vmatpush1.bf16.msra.mxu0 0
      %9173 = vmatprep.subr.bf16.mxu0 0
      %9174 = vmatpush1.bf16.msra.mxu0 0
      %9175 = vmatprep.mubr.bf16.mxu0 0
      %9176 = vmatmul.mubr.bf16.gmra.mrb[0].mxu0 %v9141
      %v9177 = vpop.f32.mrb[0].mxu0
      %v9178 = vadd.f32 %v7786, %v9177
      %v9179 = vpop.f32.mrb[0].mxu0
      %v9180 = vpop.f32.mrb[0].mxu0
      %v9181 = vpop.f32.mrb[0].mxu0
      %9182 = vdwg.mxu0
      %v9184 = vsel %vm331, %v7039, 0
      %9186 = vmatprep.subr.bf16.mxu0 0
      %9187 = vmatpush1.bf16.msra.mxu0 %v1672
      %9188 = vmatprep.subr.bf16.mxu0 0
      %9189 = vmatpush1.bf16.msra.mxu0 0
      %9190 = vmatprep.subr.bf16.mxu0 0
      %9191 = vmatpush1.bf16.msra.mxu0 0
      %9192 = vmatprep.subr.bf16.mxu0 0
      %9193 = vmatpush1.bf16.msra.mxu0 0
      %9194 = vmatprep.subr.bf16.mxu0 0
      %9195 = vmatpush1.bf16.msra.mxu0 0
      %9196 = vmatprep.subr.bf16.mxu0 0
      %9197 = vmatpush1.bf16.msra.mxu0 0
      %9198 = vmatprep.subr.bf16.mxu0 0
      %9199 = vmatpush1.bf16.msra.mxu0 0
      %9200 = vmatprep.subr.bf16.mxu0 0
      %9201 = vmatpush1.bf16.msra.mxu0 0
      %9202 = vmatprep.subr.bf16.mxu0 0
      %9203 = vmatpush1.bf16.msra.mxu0 0
      %9204 = vmatprep.subr.bf16.mxu0 0
      %9205 = vmatpush1.bf16.msra.mxu0 0
      %9206 = vmatprep.subr.bf16.mxu0 0
      %9207 = vmatpush1.bf16.msra.mxu0 0
      %9208 = vmatprep.subr.bf16.mxu0 0
      %9209 = vmatpush1.bf16.msra.mxu0 0
      %9210 = vmatprep.subr.bf16.mxu0 0
      %9211 = vmatpush1.bf16.msra.mxu0 0
      %9212 = vmatprep.subr.bf16.mxu0 0
      %9213 = vmatpush1.bf16.msra.mxu0 0
      %9214 = vmatprep.subr.bf16.mxu0 0
      %9215 = vmatpush1.bf16.msra.mxu0 0
      %9216 = vmatprep.subr.bf16.mxu0 0
      %9217 = vmatpush1.bf16.msra.mxu0 0
      %9218 = vmatprep.mubr.bf16.mxu0 0
      %9219 = vmatmul.mubr.bf16.gmra.mrb[0].mxu0 %v9184
      %v9220 = vpop.f32.mrb[0].mxu0
      %v9221 = vadd.f32 %v7830, %v9220
      %v9222 = vpop.f32.mrb[0].mxu0
      %v9223 = vpop.f32.mrb[0].mxu0
      %v9224 = vpop.f32.mrb[0].mxu0
      %9225 = vdwg.mxu0
      %v9227 = vsel %vm331, %v7040, 0
      %9229 = vmatprep.subr.bf16.mxu0 0
      %9230 = vmatpush1.bf16.msra.mxu0 %v1673
      %9231 = vmatprep.subr.bf16.mxu0 0
      %9232 = vmatpush1.bf16.msra.mxu0 0
      %9233 = vmatprep.subr.bf16.mxu0 0
      %9234 = vmatpush1.bf16.msra.mxu0 0
      %9235 = vmatprep.subr.bf16.mxu0 0
      %9236 = vmatpush1.bf16.msra.mxu0 0
      %9237 = vmatprep.subr.bf16.mxu0 0
      %9238 = vmatpush1.bf16.msra.mxu0 0
      %9239 = vmatprep.subr.bf16.mxu0 0
      %9240 = vmatpush1.bf16.msra.mxu0 0
      %9241 = vmatprep.subr.bf16.mxu0 0
      %9242 = vmatpush1.bf16.msra.mxu0 0
      %9243 = vmatprep.subr.bf16.mxu0 0
      %9244 = vmatpush1.bf16.msra.mxu0 0
      %9245 = vmatprep.subr.bf16.mxu0 0
      %9246 = vmatpush1.bf16.msra.mxu0 0
      %9247 = vmatprep.subr.bf16.mxu0 0
      %9248 = vmatpush1.bf16.msra.mxu0 0
      %9249 = vmatprep.subr.bf16.mxu0 0
      %9250 = vmatpush1.bf16.msra.mxu0 0
      %9251 = vmatprep.subr.bf16.mxu0 0
      %9252 = vmatpush1.bf16.msra.mxu0 0
      %9253 = vmatprep.subr.bf16.mxu0 0
      %9254 = vmatpush1.bf16.msra.mxu0 0
      %9255 = vmatprep.subr.bf16.mxu0 0
      %9256 = vmatpush1.bf16.msra.mxu0 0
      %9257 = vmatprep.subr.bf16.mxu0 0
      %9258 = vmatpush1.bf16.msra.mxu0 0
      %9259 = vmatprep.subr.bf16.mxu0 0
      %9260 = vmatpush1.bf16.msra.mxu0 0
      %9261 = vmatprep.mubr.bf16.mxu0 0
      %9262 = vmatmul.mubr.bf16.gmra.mrb[0].mxu0 %v9227
      %v9263 = vpop.f32.mrb[0].mxu0
      %v9264 = vadd.f32 %v7874, %v9263
      %v9265 = vpop.f32.mrb[0].mxu0
      %v9266 = vpop.f32.mrb[0].mxu0
      %v9267 = vpop.f32.mrb[0].mxu0
      %9268 = vdwg.mxu0
      %v9270 = vsel %vm331, %v7041, 0
      %9272 = vmatprep.subr.bf16.mxu0 0
      %9273 = vmatpush1.bf16.msra.mxu0 %v1674
      %9274 = vmatprep.subr.bf16.mxu0 0
      %9275 = vmatpush1.bf16.msra.mxu0 0
      %9276 = vmatprep.subr.bf16.mxu0 0
      %9277 = vmatpush1.bf16.msra.mxu0 0
      %9278 = vmatprep.subr.bf16.mxu0 0
      %9279 = vmatpush1.bf16.msra.mxu0 0
      %9280 = vmatprep.subr.bf16.mxu0 0
      %9281 = vmatpush1.bf16.msra.mxu0 0
      %9282 = vmatprep.subr.bf16.mxu0 0
      %9283 = vmatpush1.bf16.msra.mxu0 0
      %9284 = vmatprep.subr.bf16.mxu0 0
      %9285 = vmatpush1.bf16.msra.mxu0 0
      %9286 = vmatprep.subr.bf16.mxu0 0
      %9287 = vmatpush1.bf16.msra.mxu0 0
      %9288 = vmatprep.subr.bf16.mxu0 0
      %9289 = vmatpush1.bf16.msra.mxu0 0
      %9290 = vmatprep.subr.bf16.mxu0 0
      %9291 = vmatpush1.bf16.msra.mxu0 0
      %9292 = vmatprep.subr.bf16.mxu0 0
      %9293 = vmatpush1.bf16.msra.mxu0 0
      %9294 = vmatprep.subr.bf16.mxu0 0
      %9295 = vmatpush1.bf16.msra.mxu0 0
      %9296 = vmatprep.subr.bf16.mxu0 0
      %9297 = vmatpush1.bf16.msra.mxu0 0
      %9298 = vmatprep.subr.bf16.mxu0 0
      %9299 = vmatpush1.bf16.msra.mxu0 0
      %9300 = vmatprep.subr.bf16.mxu0 0
      %9301 = vmatpush1.bf16.msra.mxu0 0
      %9302 = vmatprep.subr.bf16.mxu0 0
      %9303 = vmatpush1.bf16.msra.mxu0 0
      %9304 = vmatprep.mubr.bf16.mxu0 0
      %9305 = vmatmul.mubr.bf16.gmra.mrb[0].mxu0 %v9270
      %v9306 = vpop.f32.mrb[0].mxu0
      %v9307 = vadd.f32 %v7918, %v9306
      %v9308 = vpop.f32.mrb[0].mxu0
      %v9309 = vpop.f32.mrb[0].mxu0
      %v9310 = vpop.f32.mrb[0].mxu0
      %9311 = vdwg.mxu0
      %v9313 = vsel %vm331, %v7042, 0
      %9315 = vmatprep.subr.bf16.mxu0 0
      %9316 = vmatpush1.bf16.msra.mxu0 %v1675
      %9317 = vmatprep.subr.bf16.mxu0 0
      %9318 = vmatpush1.bf16.msra.mxu0 0
      %9319 = vmatprep.subr.bf16.mxu0 0
      %9320 = vmatpush1.bf16.msra.mxu0 0
      %9321 = vmatprep.subr.bf16.mxu0 0
      %9322 = vmatpush1.bf16.msra.mxu0 0
      %9323 = vmatprep.subr.bf16.mxu0 0
      %9324 = vmatpush1.bf16.msra.mxu0 0
      %9325 = vmatprep.subr.bf16.mxu0 0
      %9326 = vmatpush1.bf16.msra.mxu0 0
      %9327 = vmatprep.subr.bf16.mxu0 0
      %9328 = vmatpush1.bf16.msra.mxu0 0
      %9329 = vmatprep.subr.bf16.mxu0 0
      %9330 = vmatpush1.bf16.msra.mxu0 0
      %9331 = vmatprep.subr.bf16.mxu0 0
      %9332 = vmatpush1.bf16.msra.mxu0 0
      %9333 = vmatprep.subr.bf16.mxu0 0
      %9334 = vmatpush1.bf16.msra.mxu0 0
      %9335 = vmatprep.subr.bf16.mxu0 0
      %9336 = vmatpush1.bf16.msra.mxu0 0
      %9337 = vmatprep.subr.bf16.mxu0 0
      %9338 = vmatpush1.bf16.msra.mxu0 0
      %9339 = vmatprep.subr.bf16.mxu0 0
      %9340 = vmatpush1.bf16.msra.mxu0 0
      %9341 = vmatprep.subr.bf16.mxu0 0
      %9342 = vmatpush1.bf16.msra.mxu0 0
      %9343 = vmatprep.subr.bf16.mxu0 0
      %9344 = vmatpush1.bf16.msra.mxu0 0
      %9345 = vmatprep.subr.bf16.mxu0 0
      %9346 = vmatpush1.bf16.msra.mxu0 0
      %9347 = vmatprep.mubr.bf16.mxu0 0
      %9348 = vmatmul.mubr.bf16.gmra.mrb[0].mxu0 %v9313
      %v9349 = vpop.f32.mrb[0].mxu0
      %v9350 = vadd.f32 %v7962, %v9349
      %v9351 = vpop.f32.mrb[0].mxu0
      %v9352 = vpop.f32.mrb[0].mxu0
      %v9353 = vpop.f32.mrb[0].mxu0
      %9354 = vdwg.mxu0
      %v9356 = vsel %vm331, %v7043, 0
      %9358 = vmatprep.subr.bf16.mxu0 0
      %9359 = vmatpush1.bf16.msra.mxu0 %v1676
      %9360 = vmatprep.subr.bf16.mxu0 0
      %9361 = vmatpush1.bf16.msra.mxu0 0
      %9362 = vmatprep.subr.bf16.mxu0 0
      %9363 = vmatpush1.bf16.msra.mxu0 0
      %9364 = vmatprep.subr.bf16.mxu0 0
      %9365 = vmatpush1.bf16.msra.mxu0 0
      %9366 = vmatprep.subr.bf16.mxu0 0
      %9367 = vmatpush1.bf16.msra.mxu0 0
      %9368 = vmatprep.subr.bf16.mxu0 0
      %9369 = vmatpush1.bf16.msra.mxu0 0
      %9370 = vmatprep.subr.bf16.mxu0 0
      %9371 = vmatpush1.bf16.msra.mxu0 0
      %9372 = vmatprep.subr.bf16.mxu0 0
      %9373 = vmatpush1.bf16.msra.mxu0 0
      %9374 = vmatprep.subr.bf16.mxu0 0
      %9375 = vmatpush1.bf16.msra.mxu0 0
      %9376 = vmatprep.subr.bf16.mxu0 0
      %9377 = vmatpush1.bf16.msra.mxu0 0
      %9378 = vmatprep.subr.bf16.mxu0 0
      %9379 = vmatpush1.bf16.msra.mxu0 0
      %9380 = vmatprep.subr.bf16.mxu0 0
      %9381 = vmatpush1.bf16.msra.mxu0 0
      %9382 = vmatprep.subr.bf16.mxu0 0
      %9383 = vmatpush1.bf16.msra.mxu0 0
      %9384 = vmatprep.subr.bf16.mxu0 0
      %9385 = vmatpush1.bf16.msra.mxu0 0
      %9386 = vmatprep.subr.bf16.mxu0 0
      %9387 = vmatpush1.bf16.msra.mxu0 0
      %9388 = vmatprep.subr.bf16.mxu0 0
      %9389 = vmatpush1.bf16.msra.mxu0 0
      %9390 = vmatprep.mubr.bf16.mxu0 0
      %9391 = vmatmul.mubr.bf16.gmra.mrb[0].mxu0 %v9356
      %v9392 = vpop.f32.mrb[0].mxu0
      %v9393 = vadd.f32 %v8006, %v9392
      %v9394 = vpop.f32.mrb[0].mxu0
      %v9395 = vpop.f32.mrb[0].mxu0
      %v9396 = vpop.f32.mrb[0].mxu0
      %9397 = vdwg.mxu0
      %v9399 = vsel %vm331, %v7044, 0
      %9401 = vmatprep.subr.bf16.mxu0 0
      %9402 = vmatpush1.bf16.msra.mxu0 %v1677
      %9403 = vmatprep.subr.bf16.mxu0 0
      %9404 = vmatpush1.bf16.msra.mxu0 0
      %9405 = vmatprep.subr.bf16.mxu0 0
      %9406 = vmatpush1.bf16.msra.mxu0 0
      %9407 = vmatprep.subr.bf16.mxu0 0
      %9408 = vmatpush1.bf16.msra.mxu0 0
      %9409 = vmatprep.subr.bf16.mxu0 0
      %9410 = vmatpush1.bf16.msra.mxu0 0
      %9411 = vmatprep.subr.bf16.mxu0 0
      %9412 = vmatpush1.bf16.msra.mxu0 0
      %9413 = vmatprep.subr.bf16.mxu0 0
      %9414 = vmatpush1.bf16.msra.mxu0 0
      %9415 = vmatprep.subr.bf16.mxu0 0
      %9416 = vmatpush1.bf16.msra.mxu0 0
      %9417 = vmatprep.subr.bf16.mxu0 0
      %9418 = vmatpush1.bf16.msra.mxu0 0
      %9419 = vmatprep.subr.bf16.mxu0 0
      %9420 = vmatpush1.bf16.msra.mxu0 0
      %9421 = vmatprep.subr.bf16.mxu0 0
      %9422 = vmatpush1.bf16.msra.mxu0 0
      %9423 = vmatprep.subr.bf16.mxu0 0
      %9424 = vmatpush1.bf16.msra.mxu0 0
      %9425 = vmatprep.subr.bf16.mxu0 0
      %9426 = vmatpush1.bf16.msra.mxu0 0
      %9427 = vmatprep.subr.bf16.mxu0 0
      %9428 = vmatpush1.bf16.msra.mxu0 0
      %9429 = vmatprep.subr.bf16.mxu0 0
      %9430 = vmatpush1.bf16.msra.mxu0 0
      %9431 = vmatprep.subr.bf16.mxu0 0
      %9432 = vmatpush1.bf16.msra.mxu0 0
      %9433 = vmatprep.mubr.bf16.mxu0 0
      %9434 = vmatmul.mubr.bf16.gmra.mrb[0].mxu0 %v9399
      %v9435 = vpop.f32.mrb[0].mxu0
      %v9436 = vadd.f32 %v8050, %v9435
      %v9437 = vpop.f32.mrb[0].mxu0
      %v9438 = vpop.f32.mrb[0].mxu0
      %v9439 = vpop.f32.mrb[0].mxu0
      %9440 = vdwg.mxu0
      %v9442 = vsel %vm331, %v7045, 0
      %9444 = vmatprep.subr.bf16.mxu0 0
      %9445 = vmatpush1.bf16.msra.mxu0 %v1678
      %9446 = vmatprep.subr.bf16.mxu0 0
      %9447 = vmatpush1.bf16.msra.mxu0 0
      %9448 = vmatprep.subr.bf16.mxu0 0
      %9449 = vmatpush1.bf16.msra.mxu0 0
      %9450 = vmatprep.subr.bf16.mxu0 0
      %9451 = vmatpush1.bf16.msra.mxu0 0
      %9452 = vmatprep.subr.bf16.mxu0 0
      %9453 = vmatpush1.bf16.msra.mxu0 0
      %9454 = vmatprep.subr.bf16.mxu0 0
      %9455 = vmatpush1.bf16.msra.mxu0 0
      %9456 = vmatprep.subr.bf16.mxu0 0
      %9457 = vmatpush1.bf16.msra.mxu0 0
      %9458 = vmatprep.subr.bf16.mxu0 0
      %9459 = vmatpush1.bf16.msra.mxu0 0
      %9460 = vmatprep.subr.bf16.mxu0 0
      %9461 = vmatpush1.bf16.msra.mxu0 0
      %9462 = vmatprep.subr.bf16.mxu0 0
      %9463 = vmatpush1.bf16.msra.mxu0 0
      %9464 = vmatprep.subr.bf16.mxu0 0
      %9465 = vmatpush1.bf16.msra.mxu0 0
      %9466 = vmatprep.subr.bf16.mxu0 0
      %9467 = vmatpush1.bf16.msra.mxu0 0
      %9468 = vmatprep.subr.bf16.mxu0 0
      %9469 = vmatpush1.bf16.msra.mxu0 0
      %9470 = vmatprep.subr.bf16.mxu0 0
      %9471 = vmatpush1.bf16.msra.mxu0 0
      %9472 = vmatprep.subr.bf16.mxu0 0
      %9473 = vmatpush1.bf16.msra.mxu0 0
      %9474 = vmatprep.subr.bf16.mxu0 0
      %9475 = vmatpush1.bf16.msra.mxu0 0
      %9476 = vmatprep.mubr.bf16.mxu0 0
      %9477 = vmatmul.mubr.bf16.gmra.mrb[0].mxu0 %v9442
      %v9478 = vpop.f32.mrb[0].mxu0
      %v9479 = vadd.f32 %v8094, %v9478
      %v9480 = vpop.f32.mrb[0].mxu0
      %v9481 = vpop.f32.mrb[0].mxu0
      %v9482 = vpop.f32.mrb[0].mxu0
      %9483 = vdwg.mxu0
      %v9485 = vsel %vm331, %v7046, 0
      %9487 = vmatprep.subr.bf16.mxu0 0
      %9488 = vmatpush1.bf16.msra.mxu0 %v1679
      %9489 = vmatprep.subr.bf16.mxu0 0
      %9490 = vmatpush1.bf16.msra.mxu0 0
      %9491 = vmatprep.subr.bf16.mxu0 0
      %9492 = vmatpush1.bf16.msra.mxu0 0
      %9493 = vmatprep.subr.bf16.mxu0 0
      %9494 = vmatpush1.bf16.msra.mxu0 0
      %9495 = vmatprep.subr.bf16.mxu0 0
      %9496 = vmatpush1.bf16.msra.mxu0 0
      %9497 = vmatprep.subr.bf16.mxu0 0
      %9498 = vmatpush1.bf16.msra.mxu0 0
      %9499 = vmatprep.subr.bf16.mxu0 0
      %9500 = vmatpush1.bf16.msra.mxu0 0
      %9501 = vmatprep.subr.bf16.mxu0 0
      %9502 = vmatpush1.bf16.msra.mxu0 0
      %9503 = vmatprep.subr.bf16.mxu0 0
      %9504 = vmatpush1.bf16.msra.mxu0 0
      %9505 = vmatprep.subr.bf16.mxu0 0
      %9506 = vmatpush1.bf16.msra.mxu0 0
      %9507 = vmatprep.subr.bf16.mxu0 0
      %9508 = vmatpush1.bf16.msra.mxu0 0
      %9509 = vmatprep.subr.bf16.mxu0 0
      %9510 = vmatpush1.bf16.msra.mxu0 0
      %9511 = vmatprep.subr.bf16.mxu0 0
      %9512 = vmatpush1.bf16.msra.mxu0 0
      %9513 = vmatprep.subr.bf16.mxu0 0
      %9514 = vmatpush1.bf16.msra.mxu0 0
      %9515 = vmatprep.subr.bf16.mxu0 0
      %9516 = vmatpush1.bf16.msra.mxu0 0
      %9517 = vmatprep.subr.bf16.mxu0 0
      %9518 = vmatpush1.bf16.msra.mxu0 0
      %9519 = vmatprep.mubr.bf16.mxu0 0
      %9520 = vmatmul.mubr.bf16.gmra.mrb[0].mxu0 %v9485
      %v9521 = vpop.f32.mrb[0].mxu0
      %v9522 = vadd.f32 %v8138, %v9521
      %v9523 = vpop.f32.mrb[0].mxu0
      %v9524 = vpop.f32.mrb[0].mxu0
      %v9525 = vpop.f32.mrb[0].mxu0
      %9526 = vdwg.mxu0
      %v9528 = vsel %vm331, %v7047, 0
      %9530 = vmatprep.subr.bf16.mxu0 0
      %9531 = vmatpush1.bf16.msra.mxu0 %v1680
      %9532 = vmatprep.subr.bf16.mxu0 0
      %9533 = vmatpush1.bf16.msra.mxu0 0
      %9534 = vmatprep.subr.bf16.mxu0 0
      %9535 = vmatpush1.bf16.msra.mxu0 0
      %9536 = vmatprep.subr.bf16.mxu0 0
      %9537 = vmatpush1.bf16.msra.mxu0 0
      %9538 = vmatprep.subr.bf16.mxu0 0
      %9539 = vmatpush1.bf16.msra.mxu0 0
      %9540 = vmatprep.subr.bf16.mxu0 0
      %9541 = vmatpush1.bf16.msra.mxu0 0
      %9542 = vmatprep.subr.bf16.mxu0 0
      %9543 = vmatpush1.bf16.msra.mxu0 0
      %9544 = vmatprep.subr.bf16.mxu0 0
      %9545 = vmatpush1.bf16.msra.mxu0 0
      %9546 = vmatprep.subr.bf16.mxu0 0
      %9547 = vmatpush1.bf16.msra.mxu0 0
      %9548 = vmatprep.subr.bf16.mxu0 0
      %9549 = vmatpush1.bf16.msra.mxu0 0
      %9550 = vmatprep.subr.bf16.mxu0 0
      %9551 = vmatpush1.bf16.msra.mxu0 0
      %9552 = vmatprep.subr.bf16.mxu0 0
      %9553 = vmatpush1.bf16.msra.mxu0 0
      %9554 = vmatprep.subr.bf16.mxu0 0
      %9555 = vmatpush1.bf16.msra.mxu0 0
      %9556 = vmatprep.subr.bf16.mxu0 0
      %9557 = vmatpush1.bf16.msra.mxu0 0
      %9558 = vmatprep.subr.bf16.mxu0 0
      %9559 = vmatpush1.bf16.msra.mxu0 0
      %9560 = vmatprep.subr.bf16.mxu0 0
      %9561 = vmatpush1.bf16.msra.mxu0 0
      %9562 = vmatprep.mubr.bf16.mxu0 0
      %9563 = vmatmul.mubr.bf16.gmra.mrb[0].mxu0 %v9528
      %v9564 = vpop.f32.mrb[0].mxu0
      %v9565 = vadd.f32 %v8182, %v9564
      %v9566 = vpop.f32.mrb[0].mxu0
      %v9567 = vpop.f32.mrb[0].mxu0
      %v9568 = vpop.f32.mrb[0].mxu0
      %9569 = vdwg.mxu0
      %v9571 = vsel %vm331, %v7048, 0
      %9573 = vmatprep.subr.bf16.mxu0 0
      %9574 = vmatpush1.bf16.msra.mxu0 %v1681
      %9575 = vmatprep.subr.bf16.mxu0 0
      %9576 = vmatpush1.bf16.msra.mxu0 0
      %9577 = vmatprep.subr.bf16.mxu0 0
      %9578 = vmatpush1.bf16.msra.mxu0 0
      %9579 = vmatprep.subr.bf16.mxu0 0
      %9580 = vmatpush1.bf16.msra.mxu0 0
      %9581 = vmatprep.subr.bf16.mxu0 0
      %9582 = vmatpush1.bf16.msra.mxu0 0
      %9583 = vmatprep.subr.bf16.mxu0 0
      %9584 = vmatpush1.bf16.msra.mxu0 0
      %9585 = vmatprep.subr.bf16.mxu0 0
      %9586 = vmatpush1.bf16.msra.mxu0 0
      %9587 = vmatprep.subr.bf16.mxu0 0
      %9588 = vmatpush1.bf16.msra.mxu0 0
      %9589 = vmatprep.subr.bf16.mxu0 0
      %9590 = vmatpush1.bf16.msra.mxu0 0
      %9591 = vmatprep.subr.bf16.mxu0 0
      %9592 = vmatpush1.bf16.msra.mxu0 0
      %9593 = vmatprep.subr.bf16.mxu0 0
      %9594 = vmatpush1.bf16.msra.mxu0 0
      %9595 = vmatprep.subr.bf16.mxu0 0
      %9596 = vmatpush1.bf16.msra.mxu0 0
      %9597 = vmatprep.subr.bf16.mxu0 0
      %9598 = vmatpush1.bf16.msra.mxu0 0
      %9599 = vmatprep.subr.bf16.mxu0 0
      %9600 = vmatpush1.bf16.msra.mxu0 0
      %9601 = vmatprep.subr.bf16.mxu0 0
      %9602 = vmatpush1.bf16.msra.mxu0 0
      %9603 = vmatprep.subr.bf16.mxu0 0
      %9604 = vmatpush1.bf16.msra.mxu0 0
      %9605 = vmatprep.mubr.bf16.mxu0 0
      %9606 = vmatmul.mubr.bf16.gmra.mrb[0].mxu0 %v9571
      %v9607 = vpop.f32.mrb[0].mxu0
      %v9608 = vadd.f32 %v8226, %v9607
      %v9609 = vpop.f32.mrb[0].mxu0
      %v9610 = vpop.f32.mrb[0].mxu0
      %v9611 = vpop.f32.mrb[0].mxu0
      %9612 = vdwg.mxu0
      %v9614 = vsel %vm331, %v7049, 0
      %9616 = vmatprep.subr.bf16.mxu0 0
      %9617 = vmatpush1.bf16.msra.mxu0 %v1682
      %9618 = vmatprep.subr.bf16.mxu0 0
      %9619 = vmatpush1.bf16.msra.mxu0 0
      %9620 = vmatprep.subr.bf16.mxu0 0
      %9621 = vmatpush1.bf16.msra.mxu0 0
      %9622 = vmatprep.subr.bf16.mxu0 0
      %9623 = vmatpush1.bf16.msra.mxu0 0
      %9624 = vmatprep.subr.bf16.mxu0 0
      %9625 = vmatpush1.bf16.msra.mxu0 0
      %9626 = vmatprep.subr.bf16.mxu0 0
      %9627 = vmatpush1.bf16.msra.mxu0 0
      %9628 = vmatprep.subr.bf16.mxu0 0
      %9629 = vmatpush1.bf16.msra.mxu0 0
      %9630 = vmatprep.subr.bf16.mxu0 0
      %9631 = vmatpush1.bf16.msra.mxu0 0
      %9632 = vmatprep.subr.bf16.mxu0 0
      %9633 = vmatpush1.bf16.msra.mxu0 0
      %9634 = vmatprep.subr.bf16.mxu0 0
      %9635 = vmatpush1.bf16.msra.mxu0 0
      %9636 = vmatprep.subr.bf16.mxu0 0
      %9637 = vmatpush1.bf16.msra.mxu0 0
      %9638 = vmatprep.subr.bf16.mxu0 0
      %9639 = vmatpush1.bf16.msra.mxu0 0
      %9640 = vmatprep.subr.bf16.mxu0 0
      %9641 = vmatpush1.bf16.msra.mxu0 0
      %9642 = vmatprep.subr.bf16.mxu0 0
      %9643 = vmatpush1.bf16.msra.mxu0 0
      %9644 = vmatprep.subr.bf16.mxu0 0
      %9645 = vmatpush1.bf16.msra.mxu0 0
      %9646 = vmatprep.subr.bf16.mxu0 0
      %9647 = vmatpush1.bf16.msra.mxu0 0
      %9648 = vmatprep.mubr.bf16.mxu0 0
      %9649 = vmatmul.mubr.bf16.gmra.mrb[0].mxu0 %v9614
      %v9650 = vpop.f32.mrb[0].mxu0
      %v9651 = vadd.f32 %v8270, %v9650
      %v9652 = vpop.f32.mrb[0].mxu0
      %v9653 = vpop.f32.mrb[0].mxu0
      %v9654 = vpop.f32.mrb[0].mxu0
      %9655 = vdwg.mxu0
      %v9657 = vsel %vm331, %v7050, 0
      %9659 = vmatprep.subr.bf16.mxu0 0
      %9660 = vmatpush1.bf16.msra.mxu0 %v1683
      %9661 = vmatprep.subr.bf16.mxu0 0
      %9662 = vmatpush1.bf16.msra.mxu0 0
      %9663 = vmatprep.subr.bf16.mxu0 0
      %9664 = vmatpush1.bf16.msra.mxu0 0
      %9665 = vmatprep.subr.bf16.mxu0 0
      %9666 = vmatpush1.bf16.msra.mxu0 0
      %9667 = vmatprep.subr.bf16.mxu0 0
      %9668 = vmatpush1.bf16.msra.mxu0 0
      %9669 = vmatprep.subr.bf16.mxu0 0
      %9670 = vmatpush1.bf16.msra.mxu0 0
      %9671 = vmatprep.subr.bf16.mxu0 0
      %9672 = vmatpush1.bf16.msra.mxu0 0
      %9673 = vmatprep.subr.bf16.mxu0 0
      %9674 = vmatpush1.bf16.msra.mxu0 0
      %9675 = vmatprep.subr.bf16.mxu0 0
      %9676 = vmatpush1.bf16.msra.mxu0 0
      %9677 = vmatprep.subr.bf16.mxu0 0
      %9678 = vmatpush1.bf16.msra.mxu0 0
      %9679 = vmatprep.subr.bf16.mxu0 0
      %9680 = vmatpush1.bf16.msra.mxu0 0
      %9681 = vmatprep.subr.bf16.mxu0 0
      %9682 = vmatpush1.bf16.msra.mxu0 0
      %9683 = vmatprep.subr.bf16.mxu0 0
      %9684 = vmatpush1.bf16.msra.mxu0 0
      %9685 = vmatprep.subr.bf16.mxu0 0
      %9686 = vmatpush1.bf16.msra.mxu0 0
      %9687 = vmatprep.subr.bf16.mxu0 0
      %9688 = vmatpush1.bf16.msra.mxu0 0
      %9689 = vmatprep.subr.bf16.mxu0 0
      %9690 = vmatpush1.bf16.msra.mxu0 0
      %9691 = vmatprep.mubr.bf16.mxu0 0
      %9692 = vmatmul.mubr.bf16.gmra.mrb[0].mxu0 %v9657
      %v9693 = vpop.f32.mrb[0].mxu0
      %v9694 = vadd.f32 %v8314, %v9693
      %v9695 = vpop.f32.mrb[0].mxu0
      %v9696 = vpop.f32.mrb[0].mxu0
      %v9697 = vpop.f32.mrb[0].mxu0
      %9698 = vdwg.mxu0
      %v9700 = vsel %vm331, %v7051, 0
      %9702 = vmatprep.subr.bf16.mxu0 0
      %9703 = vmatpush1.bf16.msra.mxu0 %v1684
      %9704 = vmatprep.subr.bf16.mxu0 0
      %9705 = vmatpush1.bf16.msra.mxu0 0
      %9706 = vmatprep.subr.bf16.mxu0 0
      %9707 = vmatpush1.bf16.msra.mxu0 0
      %9708 = vmatprep.subr.bf16.mxu0 0
      %9709 = vmatpush1.bf16.msra.mxu0 0
      %9710 = vmatprep.subr.bf16.mxu0 0
      %9711 = vmatpush1.bf16.msra.mxu0 0
      %9712 = vmatprep.subr.bf16.mxu0 0
      %9713 = vmatpush1.bf16.msra.mxu0 0
      %9714 = vmatprep.subr.bf16.mxu0 0
      %9715 = vmatpush1.bf16.msra.mxu0 0
      %9716 = vmatprep.subr.bf16.mxu0 0
      %9717 = vmatpush1.bf16.msra.mxu0 0
      %9718 = vmatprep.subr.bf16.mxu0 0
      %9719 = vmatpush1.bf16.msra.mxu0 0
      %9720 = vmatprep.subr.bf16.mxu0 0
      %9721 = vmatpush1.bf16.msra.mxu0 0
      %9722 = vmatprep.subr.bf16.mxu0 0
      %9723 = vmatpush1.bf16.msra.mxu0 0
      %9724 = vmatprep.subr.bf16.mxu0 0
      %9725 = vmatpush1.bf16.msra.mxu0 0
      %9726 = vmatprep.subr.bf16.mxu0 0
      %9727 = vmatpush1.bf16.msra.mxu0 0
      %9728 = vmatprep.subr.bf16.mxu0 0
      %9729 = vmatpush1.bf16.msra.mxu0 0
      %9730 = vmatprep.subr.bf16.mxu0 0
      %9731 = vmatpush1.bf16.msra.mxu0 0
      %9732 = vmatprep.subr.bf16.mxu0 0
      %9733 = vmatpush1.bf16.msra.mxu0 0
      %9734 = vmatprep.mubr.bf16.mxu0 0
      %9735 = vmatmul.mubr.bf16.gmra.mrb[0].mxu0 %v9700
      %v9736 = vpop.f32.mrb[0].mxu0
      %v9737 = vadd.f32 %v8358, %v9736
      %v9738 = vpop.f32.mrb[0].mxu0
      %v9739 = vpop.f32.mrb[0].mxu0
      %v9740 = vpop.f32.mrb[0].mxu0
      %9741 = vdwg.mxu0
      %v9743 = vsel %vm331, %v7052, 0
      %9745 = vmatprep.subr.bf16.mxu0 0
      %9746 = vmatpush1.bf16.msra.mxu0 %v1685
      %9747 = vmatprep.subr.bf16.mxu0 0
      %9748 = vmatpush1.bf16.msra.mxu0 0
      %9749 = vmatprep.subr.bf16.mxu0 0
      %9750 = vmatpush1.bf16.msra.mxu0 0
      %9751 = vmatprep.subr.bf16.mxu0 0
      %9752 = vmatpush1.bf16.msra.mxu0 0
      %9753 = vmatprep.subr.bf16.mxu0 0
      %9754 = vmatpush1.bf16.msra.mxu0 0
      %9755 = vmatprep.subr.bf16.mxu0 0
      %9756 = vmatpush1.bf16.msra.mxu0 0
      %9757 = vmatprep.subr.bf16.mxu0 0
      %9758 = vmatpush1.bf16.msra.mxu0 0
      %9759 = vmatprep.subr.bf16.mxu0 0
      %9760 = vmatpush1.bf16.msra.mxu0 0
      %9761 = vmatprep.subr.bf16.mxu0 0
      %9762 = vmatpush1.bf16.msra.mxu0 0
      %9763 = vmatprep.subr.bf16.mxu0 0
      %9764 = vmatpush1.bf16.msra.mxu0 0
      %9765 = vmatprep.subr.bf16.mxu0 0
      %9766 = vmatpush1.bf16.msra.mxu0 0
      %9767 = vmatprep.subr.bf16.mxu0 0
      %9768 = vmatpush1.bf16.msra.mxu0 0
      %9769 = vmatprep.subr.bf16.mxu0 0
      %9770 = vmatpush1.bf16.msra.mxu0 0
      %9771 = vmatprep.subr.bf16.mxu0 0
      %9772 = vmatpush1.bf16.msra.mxu0 0
      %9773 = vmatprep.subr.bf16.mxu0 0
      %9774 = vmatpush1.bf16.msra.mxu0 0
      %9775 = vmatprep.subr.bf16.mxu0 0
      %9776 = vmatpush1.bf16.msra.mxu0 0
      %9777 = vmatprep.mubr.bf16.mxu0 0
      %9778 = vmatmul.mubr.bf16.gmra.mrb[0].mxu0 %v9743
      %v9779 = vpop.f32.mrb[0].mxu0
      %v9780 = vadd.f32 %v8402, %v9779
      %v9781 = vpop.f32.mrb[0].mxu0
      %v9782 = vpop.f32.mrb[0].mxu0
      %v9783 = vpop.f32.mrb[0].mxu0
      %9784 = vdwg.mxu0
      %v9786 = vsel %vm331, %v7053, 0
      %9788 = vmatprep.subr.bf16.mxu0 0
      %9789 = vmatpush1.bf16.msra.mxu0 %v1686
      %9790 = vmatprep.subr.bf16.mxu0 0
      %9791 = vmatpush1.bf16.msra.mxu0 0
      %9792 = vmatprep.subr.bf16.mxu0 0
      %9793 = vmatpush1.bf16.msra.mxu0 0
      %9794 = vmatprep.subr.bf16.mxu0 0
      %9795 = vmatpush1.bf16.msra.mxu0 0
      %9796 = vmatprep.subr.bf16.mxu0 0
      %9797 = vmatpush1.bf16.msra.mxu0 0
      %9798 = vmatprep.subr.bf16.mxu0 0
      %9799 = vmatpush1.bf16.msra.mxu0 0
      %9800 = vmatprep.subr.bf16.mxu0 0
      %9801 = vmatpush1.bf16.msra.mxu0 0
      %9802 = vmatprep.subr.bf16.mxu0 0
      %9803 = vmatpush1.bf16.msra.mxu0 0
      %9804 = vmatprep.subr.bf16.mxu0 0
      %9805 = vmatpush1.bf16.msra.mxu0 0
      %9806 = vmatprep.subr.bf16.mxu0 0
      %9807 = vmatpush1.bf16.msra.mxu0 0
      %9808 = vmatprep.subr.bf16.mxu0 0
      %9809 = vmatpush1.bf16.msra.mxu0 0
      %9810 = vmatprep.subr.bf16.mxu0 0
      %9811 = vmatpush1.bf16.msra.mxu0 0
      %9812 = vmatprep.subr.bf16.mxu0 0
      %9813 = vmatpush1.bf16.msra.mxu0 0
      %9814 = vmatprep.subr.bf16.mxu0 0
      %9815 = vmatpush1.bf16.msra.mxu0 0
      %9816 = vmatprep.subr.bf16.mxu0 0
      %9817 = vmatpush1.bf16.msra.mxu0 0
      %9818 = vmatprep.subr.bf16.mxu0 0
      %9819 = vmatpush1.bf16.msra.mxu0 0
      %9820 = vmatprep.mubr.bf16.mxu0 0
      %9821 = vmatmul.mubr.bf16.gmra.mrb[0].mxu0 %v9786
      %v9822 = vpop.f32.mrb[0].mxu0
      %v9823 = vadd.f32 %v8446, %v9822
      %v9824 = vpop.f32.mrb[0].mxu0
      %v9825 = vpop.f32.mrb[0].mxu0
      %v9826 = vpop.f32.mrb[0].mxu0
      %9827 = vdwg.mxu0
      %v9829 = vsel %vm331, %v7054, 0
      %9831 = vmatprep.subr.bf16.mxu0 0
      %9832 = vmatpush1.bf16.msra.mxu0 %v1687
      %9833 = vmatprep.subr.bf16.mxu0 0
      %9834 = vmatpush1.bf16.msra.mxu0 0
      %9835 = vmatprep.subr.bf16.mxu0 0
      %9836 = vmatpush1.bf16.msra.mxu0 0
      %9837 = vmatprep.subr.bf16.mxu0 0
      %9838 = vmatpush1.bf16.msra.mxu0 0
      %9839 = vmatprep.subr.bf16.mxu0 0
      %9840 = vmatpush1.bf16.msra.mxu0 0
      %9841 = vmatprep.subr.bf16.mxu0 0
      %9842 = vmatpush1.bf16.msra.mxu0 0
      %9843 = vmatprep.subr.bf16.mxu0 0
      %9844 = vmatpush1.bf16.msra.mxu0 0
      %9845 = vmatprep.subr.bf16.mxu0 0
      %9846 = vmatpush1.bf16.msra.mxu0 0
      %9847 = vmatprep.subr.bf16.mxu0 0
      %9848 = vmatpush1.bf16.msra.mxu0 0
      %9849 = vmatprep.subr.bf16.mxu0 0
      %9850 = vmatpush1.bf16.msra.mxu0 0
      %9851 = vmatprep.subr.bf16.mxu0 0
      %9852 = vmatpush1.bf16.msra.mxu0 0
      %9853 = vmatprep.subr.bf16.mxu0 0
      %9854 = vmatpush1.bf16.msra.mxu0 0
      %9855 = vmatprep.subr.bf16.mxu0 0
      %9856 = vmatpush1.bf16.msra.mxu0 0
      %9857 = vmatprep.subr.bf16.mxu0 0
      %9858 = vmatpush1.bf16.msra.mxu0 0
      %9859 = vmatprep.subr.bf16.mxu0 0
      %9860 = vmatpush1.bf16.msra.mxu0 0
      %9861 = vmatprep.subr.bf16.mxu0 0
      %9862 = vmatpush1.bf16.msra.mxu0 0
      %9863 = vmatprep.mubr.bf16.mxu0 0
      %9864 = vmatmul.mubr.bf16.gmra.mrb[0].mxu0 %v9829
      %v9865 = vpop.f32.mrb[0].mxu0
      %v9866 = vadd.f32 %v8490, %v9865
      %v9867 = vpop.f32.mrb[0].mxu0
      %v9868 = vpop.f32.mrb[0].mxu0
      %v9869 = vpop.f32.mrb[0].mxu0
      %9870 = vdwg.mxu0
      %v9871 = vpack.c.bf16 %v6017, %v6017
      %v9872 = vpack.c.bf16 %v6049, %v6049
      %v9873 = vpack.c.bf16 %v6081, %v6081
      %v9874 = vpack.c.bf16 %v6113, %v6113
      %v9875 = vpack.c.bf16 %v6145, %v6145
      %v9876 = vpack.c.bf16 %v6177, %v6177
      %v9877 = vpack.c.bf16 %v6209, %v6209
      %v9878 = vpack.c.bf16 %v6241, %v6241
      %v9879 = vpack.c.bf16 %v6273, %v6273
      %v9880 = vpack.c.bf16 %v6305, %v6305
      %v9881 = vpack.c.bf16 %v6337, %v6337
      %v9882 = vpack.c.bf16 %v6369, %v6369
      %v9883 = vpack.c.bf16 %v6401, %v6401
      %v9884 = vpack.c.bf16 %v6433, %v6433
      %v9885 = vpack.c.bf16 %v6465, %v6465
      %v9886 = vpack.c.bf16 %v6497, %v6497
      %v9887 = vpack.c.bf16 %v6529, %v6529
      %v9888 = vpack.c.bf16 %v6561, %v6561
      %v9889 = vpack.c.bf16 %v6593, %v6593
      %v9890 = vpack.c.bf16 %v6625, %v6625
      %v9891 = vpack.c.bf16 %v6657, %v6657
      %v9892 = vpack.c.bf16 %v6689, %v6689
      %v9893 = vpack.c.bf16 %v6721, %v6721
      %v9894 = vpack.c.bf16 %v6753, %v6753
      %v9895 = vpack.c.bf16 %v6785, %v6785
      %v9896 = vpack.c.bf16 %v6817, %v6817
      %v9897 = vpack.c.bf16 %v6849, %v6849
      %v9898 = vpack.c.bf16 %v6881, %v6881
      %v9899 = vpack.c.bf16 %v6913, %v6913
      %v9900 = vpack.c.bf16 %v6945, %v6945
      %v9901 = vpack.c.bf16 %v6977, %v6977
      %v9902 = vpack.c.bf16 %v7009, %v7009
      %9903 = vrot.lane.b32.xlu0 %v1656, 64
      %v9904 = vpop.permute.xlu0 %9903
      %v9907 = vsel %vm331, %v9871, 0
      %9909 = vmatprep.subr.bf16.mxu0 0
      %9910 = vmatpush1.bf16.msra.mxu0 %v9904
      %9911 = vmatprep.subr.bf16.mxu0 0
      %9912 = vmatpush1.bf16.msra.mxu0 0
      %9913 = vmatprep.subr.bf16.mxu0 0
      %9914 = vmatpush1.bf16.msra.mxu0 0
      %9915 = vmatprep.subr.bf16.mxu0 0
      %9916 = vmatpush1.bf16.msra.mxu0 0
      %9917 = vmatprep.subr.bf16.mxu0 0
      %9918 = vmatpush1.bf16.msra.mxu0 0
      %9919 = vmatprep.subr.bf16.mxu0 0
      %9920 = vmatpush1.bf16.msra.mxu0 0
      %9921 = vmatprep.subr.bf16.mxu0 0
      %9922 = vmatpush1.bf16.msra.mxu0 0
      %9923 = vmatprep.subr.bf16.mxu0 0
      %9924 = vmatpush1.bf16.msra.mxu0 0
      %9925 = vmatprep.subr.bf16.mxu0 0
      %9926 = vmatpush1.bf16.msra.mxu0 0
      %9927 = vmatprep.subr.bf16.mxu0 0
      %9928 = vmatpush1.bf16.msra.mxu0 0
      %9929 = vmatprep.subr.bf16.mxu0 0
      %9930 = vmatpush1.bf16.msra.mxu0 0
      %9931 = vmatprep.subr.bf16.mxu0 0
      %9932 = vmatpush1.bf16.msra.mxu0 0
      %9933 = vmatprep.subr.bf16.mxu0 0
      %9934 = vmatpush1.bf16.msra.mxu0 0
      %9935 = vmatprep.subr.bf16.mxu0 0
      %9936 = vmatpush1.bf16.msra.mxu0 0
      %9937 = vmatprep.subr.bf16.mxu0 0
      %9938 = vmatpush1.bf16.msra.mxu0 0
      %9939 = vmatprep.subr.bf16.mxu0 0
      %9940 = vmatpush1.bf16.msra.mxu0 0
      %9941 = vmatprep.mubr.bf16.mxu0 0
      %9942 = vmatmul.mubr.bf16.gmra.mrb[0].mxu0 %v9907
      %v9943 = vpop.f32.mrb[0].mxu0
      %v9944 = vadd.f32 0.0, %v9943
      %v9945 = vpop.f32.mrb[0].mxu0
      %v9946 = vpop.f32.mrb[0].mxu0
      %v9947 = vpop.f32.mrb[0].mxu0
      %9948 = vdwg.mxu0
      %9949 = vrot.lane.b32.xlu0 %v1657, 64
      %v9950 = vpop.permute.xlu0 %9949
      %v9953 = vsel %vm331, %v9872, 0
      %9955 = vmatprep.subr.bf16.mxu0 0
      %9956 = vmatpush1.bf16.msra.mxu0 %v9950
      %9957 = vmatprep.subr.bf16.mxu0 0
      %9958 = vmatpush1.bf16.msra.mxu0 0
      %9959 = vmatprep.subr.bf16.mxu0 0
      %9960 = vmatpush1.bf16.msra.mxu0 0
      %9961 = vmatprep.subr.bf16.mxu0 0
      %9962 = vmatpush1.bf16.msra.mxu0 0
      %9963 = vmatprep.subr.bf16.mxu0 0
      %9964 = vmatpush1.bf16.msra.mxu0 0
      %9965 = vmatprep.subr.bf16.mxu0 0
      %9966 = vmatpush1.bf16.msra.mxu0 0
      %9967 = vmatprep.subr.bf16.mxu0 0
      %9968 = vmatpush1.bf16.msra.mxu0 0
      %9969 = vmatprep.subr.bf16.mxu0 0
      %9970 = vmatpush1.bf16.msra.mxu0 0
      %9971 = vmatprep.subr.bf16.mxu0 0
      %9972 = vmatpush1.bf16.msra.mxu0 0
      %9973 = vmatprep.subr.bf16.mxu0 0
      %9974 = vmatpush1.bf16.msra.mxu0 0
      %9975 = vmatprep.subr.bf16.mxu0 0
      %9976 = vmatpush1.bf16.msra.mxu0 0
      %9977 = vmatprep.subr.bf16.mxu0 0
      %9978 = vmatpush1.bf16.msra.mxu0 0
      %9979 = vmatprep.subr.bf16.mxu0 0
      %9980 = vmatpush1.bf16.msra.mxu0 0
      %9981 = vmatprep.subr.bf16.mxu0 0
      %9982 = vmatpush1.bf16.msra.mxu0 0
      %9983 = vmatprep.subr.bf16.mxu0 0
      %9984 = vmatpush1.bf16.msra.mxu0 0
      %9985 = vmatprep.subr.bf16.mxu0 0
      %9986 = vmatpush1.bf16.msra.mxu0 0
      %9987 = vmatprep.mubr.bf16.mxu0 0
      %9988 = vmatmul.mubr.bf16.gmra.mrb[0].mxu0 %v9953
      %v9989 = vpop.f32.mrb[0].mxu0
      %v9990 = vadd.f32 0.0, %v9989
      %v9991 = vpop.f32.mrb[0].mxu0
      %v9992 = vpop.f32.mrb[0].mxu0
      %v9993 = vpop.f32.mrb[0].mxu0
      %9994 = vdwg.mxu0
      %9995 = vrot.lane.b32.xlu0 %v1658, 64
      %v9996 = vpop.permute.xlu0 %9995
      %v9999 = vsel %vm331, %v9873, 0
      %10001 = vmatprep.subr.bf16.mxu0 0
      %10002 = vmatpush1.bf16.msra.mxu0 %v9996
      %10003 = vmatprep.subr.bf16.mxu0 0
      %10004 = vmatpush1.bf16.msra.mxu0 0
      %10005 = vmatprep.subr.bf16.mxu0 0
      %10006 = vmatpush1.bf16.msra.mxu0 0
      %10007 = vmatprep.subr.bf16.mxu0 0
      %10008 = vmatpush1.bf16.msra.mxu0 0
      %10009 = vmatprep.subr.bf16.mxu0 0
      %10010 = vmatpush1.bf16.msra.mxu0 0
      %10011 = vmatprep.subr.bf16.mxu0 0
      %10012 = vmatpush1.bf16.msra.mxu0 0
      %10013 = vmatprep.subr.bf16.mxu0 0
      %10014 = vmatpush1.bf16.msra.mxu0 0
      %10015 = vmatprep.subr.bf16.mxu0 0
      %10016 = vmatpush1.bf16.msra.mxu0 0
      %10017 = vmatprep.subr.bf16.mxu0 0
      %10018 = vmatpush1.bf16.msra.mxu0 0
      %10019 = vmatprep.subr.bf16.mxu0 0
      %10020 = vmatpush1.bf16.msra.mxu0 0
      %10021 = vmatprep.subr.bf16.mxu0 0
      %10022 = vmatpush1.bf16.msra.mxu0 0
      %10023 = vmatprep.subr.bf16.mxu0 0
      %10024 = vmatpush1.bf16.msra.mxu0 0
      %10025 = vmatprep.subr.bf16.mxu0 0
      %10026 = vmatpush1.bf16.msra.mxu0 0
      %10027 = vmatprep.subr.bf16.mxu0 0
      %10028 = vmatpush1.bf16.msra.mxu0 0
      %10029 = vmatprep.subr.bf16.mxu0 0
      %10030 = vmatpush1.bf16.msra.mxu0 0
      %10031 = vmatprep.subr.bf16.mxu0 0
      %10032 = vmatpush1.bf16.msra.mxu0 0
      %10033 = vmatprep.mubr.bf16.mxu0 0
      %10034 = vmatmul.mubr.bf16.gmra.mrb[0].mxu0 %v9999
      %v10035 = vpop.f32.mrb[0].mxu0
      %v10036 = vadd.f32 0.0, %v10035
      %v10037 = vpop.f32.mrb[0].mxu0
      %v10038 = vpop.f32.mrb[0].mxu0
      %v10039 = vpop.f32.mrb[0].mxu0
      %10040 = vdwg.mxu0
      %10041 = vrot.lane.b32.xlu0 %v1659, 64
      %v10042 = vpop.permute.xlu0 %10041
      %v10045 = vsel %vm331, %v9874, 0
      %10047 = vmatprep.subr.bf16.mxu0 0
      %10048 = vmatpush1.bf16.msra.mxu0 %v10042
      %10049 = vmatprep.subr.bf16.mxu0 0
      %10050 = vmatpush1.bf16.msra.mxu0 0
      %10051 = vmatprep.subr.bf16.mxu0 0
      %10052 = vmatpush1.bf16.msra.mxu0 0
      %10053 = vmatprep.subr.bf16.mxu0 0
      %10054 = vmatpush1.bf16.msra.mxu0 0
      %10055 = vmatprep.subr.bf16.mxu0 0
      %10056 = vmatpush1.bf16.msra.mxu0 0
      %10057 = vmatprep.subr.bf16.mxu0 0
      %10058 = vmatpush1.bf16.msra.mxu0 0
      %10059 = vmatprep.subr.bf16.mxu0 0
      %10060 = vmatpush1.bf16.msra.mxu0 0
      %10061 = vmatprep.subr.bf16.mxu0 0
      %10062 = vmatpush1.bf16.msra.mxu0 0
      %10063 = vmatprep.subr.bf16.mxu0 0
      %10064 = vmatpush1.bf16.msra.mxu0 0
      %10065 = vmatprep.subr.bf16.mxu0 0
      %10066 = vmatpush1.bf16.msra.mxu0 0
      %10067 = vmatprep.subr.bf16.mxu0 0
      %10068 = vmatpush1.bf16.msra.mxu0 0
      %10069 = vmatprep.subr.bf16.mxu0 0
      %10070 = vmatpush1.bf16.msra.mxu0 0
      %10071 = vmatprep.subr.bf16.mxu0 0
      %10072 = vmatpush1.bf16.msra.mxu0 0
      %10073 = vmatprep.subr.bf16.mxu0 0
      %10074 = vmatpush1.bf16.msra.mxu0 0
      %10075 = vmatprep.subr.bf16.mxu0 0
      %10076 = vmatpush1.bf16.msra.mxu0 0
      %10077 = vmatprep.subr.bf16.mxu0 0
      %10078 = vmatpush1.bf16.msra.mxu0 0
      %10079 = vmatprep.mubr.bf16.mxu0 0
      %10080 = vmatmul.mubr.bf16.gmra.mrb[0].mxu0 %v10045
      %v10081 = vpop.f32.mrb[0].mxu0
      %v10082 = vadd.f32 0.0, %v10081
      %v10083 = vpop.f32.mrb[0].mxu0
      %v10084 = vpop.f32.mrb[0].mxu0
      %v10085 = vpop.f32.mrb[0].mxu0
      %10086 = vdwg.mxu0
      %10087 = vrot.lane.b32.xlu0 %v1660, 64
      %v10088 = vpop.permute.xlu0 %10087
      %v10091 = vsel %vm331, %v9875, 0
      %10093 = vmatprep.subr.bf16.mxu0 0
      %10094 = vmatpush1.bf16.msra.mxu0 %v10088
      %10095 = vmatprep.subr.bf16.mxu0 0
      %10096 = vmatpush1.bf16.msra.mxu0 0
      %10097 = vmatprep.subr.bf16.mxu0 0
      %10098 = vmatpush1.bf16.msra.mxu0 0
      %10099 = vmatprep.subr.bf16.mxu0 0
      %10100 = vmatpush1.bf16.msra.mxu0 0
      %10101 = vmatprep.subr.bf16.mxu0 0
      %10102 = vmatpush1.bf16.msra.mxu0 0
      %10103 = vmatprep.subr.bf16.mxu0 0
      %10104 = vmatpush1.bf16.msra.mxu0 0
      %10105 = vmatprep.subr.bf16.mxu0 0
      %10106 = vmatpush1.bf16.msra.mxu0 0
      %10107 = vmatprep.subr.bf16.mxu0 0
      %10108 = vmatpush1.bf16.msra.mxu0 0
      %10109 = vmatprep.subr.bf16.mxu0 0
      %10110 = vmatpush1.bf16.msra.mxu0 0
      %10111 = vmatprep.subr.bf16.mxu0 0
      %10112 = vmatpush1.bf16.msra.mxu0 0
      %10113 = vmatprep.subr.bf16.mxu0 0
      %10114 = vmatpush1.bf16.msra.mxu0 0
      %10115 = vmatprep.subr.bf16.mxu0 0
      %10116 = vmatpush1.bf16.msra.mxu0 0
      %10117 = vmatprep.subr.bf16.mxu0 0
      %10118 = vmatpush1.bf16.msra.mxu0 0
      %10119 = vmatprep.subr.bf16.mxu0 0
      %10120 = vmatpush1.bf16.msra.mxu0 0
      %10121 = vmatprep.subr.bf16.mxu0 0
      %10122 = vmatpush1.bf16.msra.mxu0 0
      %10123 = vmatprep.subr.bf16.mxu0 0
      %10124 = vmatpush1.bf16.msra.mxu0 0
      %10125 = vmatprep.mubr.bf16.mxu0 0
      %10126 = vmatmul.mubr.bf16.gmra.mrb[0].mxu0 %v10091
      %v10127 = vpop.f32.mrb[0].mxu0
      %v10128 = vadd.f32 0.0, %v10127
      %v10129 = vpop.f32.mrb[0].mxu0
      %v10130 = vpop.f32.mrb[0].mxu0
      %v10131 = vpop.f32.mrb[0].mxu0
      %10132 = vdwg.mxu0
      %10133 = vrot.lane.b32.xlu0 %v1661, 64
      %v10134 = vpop.permute.xlu0 %10133
      %v10137 = vsel %vm331, %v9876, 0
      %10139 = vmatprep.subr.bf16.mxu0 0
      %10140 = vmatpush1.bf16.msra.mxu0 %v10134
      %10141 = vmatprep.subr.bf16.mxu0 0
      %10142 = vmatpush1.bf16.msra.mxu0 0
      %10143 = vmatprep.subr.bf16.mxu0 0
      %10144 = vmatpush1.bf16.msra.mxu0 0
      %10145 = vmatprep.subr.bf16.mxu0 0
      %10146 = vmatpush1.bf16.msra.mxu0 0
      %10147 = vmatprep.subr.bf16.mxu0 0
      %10148 = vmatpush1.bf16.msra.mxu0 0
      %10149 = vmatprep.subr.bf16.mxu0 0
      %10150 = vmatpush1.bf16.msra.mxu0 0
      %10151 = vmatprep.subr.bf16.mxu0 0
      %10152 = vmatpush1.bf16.msra.mxu0 0
      %10153 = vmatprep.subr.bf16.mxu0 0
      %10154 = vmatpush1.bf16.msra.mxu0 0
      %10155 = vmatprep.subr.bf16.mxu0 0
      %10156 = vmatpush1.bf16.msra.mxu0 0
      %10157 = vmatprep.subr.bf16.mxu0 0
      %10158 = vmatpush1.bf16.msra.mxu0 0
      %10159 = vmatprep.subr.bf16.mxu0 0
      %10160 = vmatpush1.bf16.msra.mxu0 0
      %10161 = vmatprep.subr.bf16.mxu0 0
      %10162 = vmatpush1.bf16.msra.mxu0 0
      %10163 = vmatprep.subr.bf16.mxu0 0
      %10164 = vmatpush1.bf16.msra.mxu0 0
      %10165 = vmatprep.subr.bf16.mxu0 0
      %10166 = vmatpush1.bf16.msra.mxu0 0
      %10167 = vmatprep.subr.bf16.mxu0 0
      %10168 = vmatpush1.bf16.msra.mxu0 0
      %10169 = vmatprep.subr.bf16.mxu0 0
      %10170 = vmatpush1.bf16.msra.mxu0 0
      %10171 = vmatprep.mubr.bf16.mxu0 0
      %10172 = vmatmul.mubr.bf16.gmra.mrb[0].mxu0 %v10137
      %v10173 = vpop.f32.mrb[0].mxu0
      %v10174 = vadd.f32 0.0, %v10173
      %v10175 = vpop.f32.mrb[0].mxu0
      %v10176 = vpop.f32.mrb[0].mxu0
      %v10177 = vpop.f32.mrb[0].mxu0
      %10178 = vdwg.mxu0
      %10179 = vrot.lane.b32.xlu0 %v1662, 64
      %v10180 = vpop.permute.xlu0 %10179
      %v10183 = vsel %vm331, %v9877, 0
      %10185 = vmatprep.subr.bf16.mxu0 0
      %10186 = vmatpush1.bf16.msra.mxu0 %v10180
      %10187 = vmatprep.subr.bf16.mxu0 0
      %10188 = vmatpush1.bf16.msra.mxu0 0
      %10189 = vmatprep.subr.bf16.mxu0 0
      %10190 = vmatpush1.bf16.msra.mxu0 0
      %10191 = vmatprep.subr.bf16.mxu0 0
      %10192 = vmatpush1.bf16.msra.mxu0 0
      %10193 = vmatprep.subr.bf16.mxu0 0
      %10194 = vmatpush1.bf16.msra.mxu0 0
      %10195 = vmatprep.subr.bf16.mxu0 0
      %10196 = vmatpush1.bf16.msra.mxu0 0
      %10197 = vmatprep.subr.bf16.mxu0 0
      %10198 = vmatpush1.bf16.msra.mxu0 0
      %10199 = vmatprep.subr.bf16.mxu0 0
      %10200 = vmatpush1.bf16.msra.mxu0 0
      %10201 = vmatprep.subr.bf16.mxu0 0
      %10202 = vmatpush1.bf16.msra.mxu0 0
      %10203 = vmatprep.subr.bf16.mxu0 0
      %10204 = vmatpush1.bf16.msra.mxu0 0
      %10205 = vmatprep.subr.bf16.mxu0 0
      %10206 = vmatpush1.bf16.msra.mxu0 0
      %10207 = vmatprep.subr.bf16.mxu0 0
      %10208 = vmatpush1.bf16.msra.mxu0 0
      %10209 = vmatprep.subr.bf16.mxu0 0
      %10210 = vmatpush1.bf16.msra.mxu0 0
      %10211 = vmatprep.subr.bf16.mxu0 0
      %10212 = vmatpush1.bf16.msra.mxu0 0
      %10213 = vmatprep.subr.bf16.mxu0 0
      %10214 = vmatpush1.bf16.msra.mxu0 0
      %10215 = vmatprep.subr.bf16.mxu0 0
      %10216 = vmatpush1.bf16.msra.mxu0 0
      %10217 = vmatprep.mubr.bf16.mxu0 0
      %10218 = vmatmul.mubr.bf16.gmra.mrb[0].mxu0 %v10183
      %v10219 = vpop.f32.mrb[0].mxu0
      %v10220 = vadd.f32 0.0, %v10219
      %v10221 = vpop.f32.mrb[0].mxu0
      %v10222 = vpop.f32.mrb[0].mxu0
      %v10223 = vpop.f32.mrb[0].mxu0
      %10224 = vdwg.mxu0
      %10225 = vrot.lane.b32.xlu0 %v1663, 64
      %v10226 = vpop.permute.xlu0 %10225
      %v10229 = vsel %vm331, %v9878, 0
      %10231 = vmatprep.subr.bf16.mxu0 0
      %10232 = vmatpush1.bf16.msra.mxu0 %v10226
      %10233 = vmatprep.subr.bf16.mxu0 0
      %10234 = vmatpush1.bf16.msra.mxu0 0
      %10235 = vmatprep.subr.bf16.mxu0 0
      %10236 = vmatpush1.bf16.msra.mxu0 0
      %10237 = vmatprep.subr.bf16.mxu0 0
      %10238 = vmatpush1.bf16.msra.mxu0 0
      %10239 = vmatprep.subr.bf16.mxu0 0
      %10240 = vmatpush1.bf16.msra.mxu0 0
      %10241 = vmatprep.subr.bf16.mxu0 0
      %10242 = vmatpush1.bf16.msra.mxu0 0
      %10243 = vmatprep.subr.bf16.mxu0 0
      %10244 = vmatpush1.bf16.msra.mxu0 0
      %10245 = vmatprep.subr.bf16.mxu0 0
      %10246 = vmatpush1.bf16.msra.mxu0 0
      %10247 = vmatprep.subr.bf16.mxu0 0
      %10248 = vmatpush1.bf16.msra.mxu0 0
      %10249 = vmatprep.subr.bf16.mxu0 0
      %10250 = vmatpush1.bf16.msra.mxu0 0
      %10251 = vmatprep.subr.bf16.mxu0 0
      %10252 = vmatpush1.bf16.msra.mxu0 0
      %10253 = vmatprep.subr.bf16.mxu0 0
      %10254 = vmatpush1.bf16.msra.mxu0 0
      %10255 = vmatprep.subr.bf16.mxu0 0
      %10256 = vmatpush1.bf16.msra.mxu0 0
      %10257 = vmatprep.subr.bf16.mxu0 0
      %10258 = vmatpush1.bf16.msra.mxu0 0
      %10259 = vmatprep.subr.bf16.mxu0 0
      %10260 = vmatpush1.bf16.msra.mxu0 0
      %10261 = vmatprep.subr.bf16.mxu0 0
      %10262 = vmatpush1.bf16.msra.mxu0 0
      %10263 = vmatprep.mubr.bf16.mxu0 0
      %10264 = vmatmul.mubr.bf16.gmra.mrb[0].mxu0 %v10229
      %v10265 = vpop.f32.mrb[0].mxu0
      %v10266 = vadd.f32 0.0, %v10265
      %v10267 = vpop.f32.mrb[0].mxu0
      %v10268 = vpop.f32.mrb[0].mxu0
      %v10269 = vpop.f32.mrb[0].mxu0
      %10270 = vdwg.mxu0
      %10271 = vrot.lane.b32.xlu0 %v1664, 64
      %v10272 = vpop.permute.xlu0 %10271
      %v10275 = vsel %vm331, %v9879, 0
      %10277 = vmatprep.subr.bf16.mxu0 0
      %10278 = vmatpush1.bf16.msra.mxu0 %v10272
      %10279 = vmatprep.subr.bf16.mxu0 0
      %10280 = vmatpush1.bf16.msra.mxu0 0
      %10281 = vmatprep.subr.bf16.mxu0 0
      %10282 = vmatpush1.bf16.msra.mxu0 0
      %10283 = vmatprep.subr.bf16.mxu0 0
      %10284 = vmatpush1.bf16.msra.mxu0 0
      %10285 = vmatprep.subr.bf16.mxu0 0
      %10286 = vmatpush1.bf16.msra.mxu0 0
      %10287 = vmatprep.subr.bf16.mxu0 0
      %10288 = vmatpush1.bf16.msra.mxu0 0
      %10289 = vmatprep.subr.bf16.mxu0 0
      %10290 = vmatpush1.bf16.msra.mxu0 0
      %10291 = vmatprep.subr.bf16.mxu0 0
      %10292 = vmatpush1.bf16.msra.mxu0 0
      %10293 = vmatprep.subr.bf16.mxu0 0
      %10294 = vmatpush1.bf16.msra.mxu0 0
      %10295 = vmatprep.subr.bf16.mxu0 0
      %10296 = vmatpush1.bf16.msra.mxu0 0
      %10297 = vmatprep.subr.bf16.mxu0 0
      %10298 = vmatpush1.bf16.msra.mxu0 0
      %10299 = vmatprep.subr.bf16.mxu0 0
      %10300 = vmatpush1.bf16.msra.mxu0 0
      %10301 = vmatprep.subr.bf16.mxu0 0
      %10302 = vmatpush1.bf16.msra.mxu0 0
      %10303 = vmatprep.subr.bf16.mxu0 0
      %10304 = vmatpush1.bf16.msra.mxu0 0
      %10305 = vmatprep.subr.bf16.mxu0 0
      %10306 = vmatpush1.bf16.msra.mxu0 0
      %10307 = vmatprep.subr.bf16.mxu0 0
      %10308 = vmatpush1.bf16.msra.mxu0 0
      %10309 = vmatprep.mubr.bf16.mxu0 0
      %10310 = vmatmul.mubr.bf16.gmra.mrb[0].mxu0 %v10275
      %v10311 = vpop.f32.mrb[0].mxu0
      %v10312 = vadd.f32 0.0, %v10311
      %v10313 = vpop.f32.mrb[0].mxu0
      %v10314 = vpop.f32.mrb[0].mxu0
      %v10315 = vpop.f32.mrb[0].mxu0
      %10316 = vdwg.mxu0
      %10317 = vrot.lane.b32.xlu0 %v1665, 64
      %v10318 = vpop.permute.xlu0 %10317
      %v10321 = vsel %vm331, %v9880, 0
      %10323 = vmatprep.subr.bf16.mxu0 0
      %10324 = vmatpush1.bf16.msra.mxu0 %v10318
      %10325 = vmatprep.subr.bf16.mxu0 0
      %10326 = vmatpush1.bf16.msra.mxu0 0
      %10327 = vmatprep.subr.bf16.mxu0 0
      %10328 = vmatpush1.bf16.msra.mxu0 0
      %10329 = vmatprep.subr.bf16.mxu0 0
      %10330 = vmatpush1.bf16.msra.mxu0 0
      %10331 = vmatprep.subr.bf16.mxu0 0
      %10332 = vmatpush1.bf16.msra.mxu0 0
      %10333 = vmatprep.subr.bf16.mxu0 0
      %10334 = vmatpush1.bf16.msra.mxu0 0
      %10335 = vmatprep.subr.bf16.mxu0 0
      %10336 = vmatpush1.bf16.msra.mxu0 0
      %10337 = vmatprep.subr.bf16.mxu0 0
      %10338 = vmatpush1.bf16.msra.mxu0 0
      %10339 = vmatprep.subr.bf16.mxu0 0
      %10340 = vmatpush1.bf16.msra.mxu0 0
      %10341 = vmatprep.subr.bf16.mxu0 0
      %10342 = vmatpush1.bf16.msra.mxu0 0
      %10343 = vmatprep.subr.bf16.mxu0 0
      %10344 = vmatpush1.bf16.msra.mxu0 0
      %10345 = vmatprep.subr.bf16.mxu0 0
      %10346 = vmatpush1.bf16.msra.mxu0 0
      %10347 = vmatprep.subr.bf16.mxu0 0
      %10348 = vmatpush1.bf16.msra.mxu0 0
      %10349 = vmatprep.subr.bf16.mxu0 0
      %10350 = vmatpush1.bf16.msra.mxu0 0
      %10351 = vmatprep.subr.bf16.mxu0 0
      %10352 = vmatpush1.bf16.msra.mxu0 0
      %10353 = vmatprep.subr.bf16.mxu0 0
      %10354 = vmatpush1.bf16.msra.mxu0 0
      %10355 = vmatprep.mubr.bf16.mxu0 0
      %10356 = vmatmul.mubr.bf16.gmra.mrb[0].mxu0 %v10321
      %v10357 = vpop.f32.mrb[0].mxu0
      %v10358 = vadd.f32 0.0, %v10357
      %v10359 = vpop.f32.mrb[0].mxu0
      %v10360 = vpop.f32.mrb[0].mxu0
      %v10361 = vpop.f32.mrb[0].mxu0
      %10362 = vdwg.mxu0
      %10363 = vrot.lane.b32.xlu0 %v1666, 64
      %v10364 = vpop.permute.xlu0 %10363
      %v10367 = vsel %vm331, %v9881, 0
      %10369 = vmatprep.subr.bf16.mxu0 0
      %10370 = vmatpush1.bf16.msra.mxu0 %v10364
      %10371 = vmatprep.subr.bf16.mxu0 0
      %10372 = vmatpush1.bf16.msra.mxu0 0
      %10373 = vmatprep.subr.bf16.mxu0 0
      %10374 = vmatpush1.bf16.msra.mxu0 0
      %10375 = vmatprep.subr.bf16.mxu0 0
      %10376 = vmatpush1.bf16.msra.mxu0 0
      %10377 = vmatprep.subr.bf16.mxu0 0
      %10378 = vmatpush1.bf16.msra.mxu0 0
      %10379 = vmatprep.subr.bf16.mxu0 0
      %10380 = vmatpush1.bf16.msra.mxu0 0
      %10381 = vmatprep.subr.bf16.mxu0 0
      %10382 = vmatpush1.bf16.msra.mxu0 0
      %10383 = vmatprep.subr.bf16.mxu0 0
      %10384 = vmatpush1.bf16.msra.mxu0 0
      %10385 = vmatprep.subr.bf16.mxu0 0
      %10386 = vmatpush1.bf16.msra.mxu0 0
      %10387 = vmatprep.subr.bf16.mxu0 0
      %10388 = vmatpush1.bf16.msra.mxu0 0
      %10389 = vmatprep.subr.bf16.mxu0 0
      %10390 = vmatpush1.bf16.msra.mxu0 0
      %10391 = vmatprep.subr.bf16.mxu0 0
      %10392 = vmatpush1.bf16.msra.mxu0 0
      %10393 = vmatprep.subr.bf16.mxu0 0
      %10394 = vmatpush1.bf16.msra.mxu0 0
      %10395 = vmatprep.subr.bf16.mxu0 0
      %10396 = vmatpush1.bf16.msra.mxu0 0
      %10397 = vmatprep.subr.bf16.mxu0 0
      %10398 = vmatpush1.bf16.msra.mxu0 0
      %10399 = vmatprep.subr.bf16.mxu0 0
      %10400 = vmatpush1.bf16.msra.mxu0 0
      %10401 = vmatprep.mubr.bf16.mxu0 0
      %10402 = vmatmul.mubr.bf16.gmra.mrb[0].mxu0 %v10367
      %v10403 = vpop.f32.mrb[0].mxu0
      %v10404 = vadd.f32 0.0, %v10403
      %v10405 = vpop.f32.mrb[0].mxu0
      %v10406 = vpop.f32.mrb[0].mxu0
      %v10407 = vpop.f32.mrb[0].mxu0
      %10408 = vdwg.mxu0
      %10409 = vrot.lane.b32.xlu0 %v1667, 64
      %v10410 = vpop.permute.xlu0 %10409
      %v10413 = vsel %vm331, %v9882, 0
      %10415 = vmatprep.subr.bf16.mxu0 0
      %10416 = vmatpush1.bf16.msra.mxu0 %v10410
      %10417 = vmatprep.subr.bf16.mxu0 0
      %10418 = vmatpush1.bf16.msra.mxu0 0
      %10419 = vmatprep.subr.bf16.mxu0 0
      %10420 = vmatpush1.bf16.msra.mxu0 0
      %10421 = vmatprep.subr.bf16.mxu0 0
      %10422 = vmatpush1.bf16.msra.mxu0 0
      %10423 = vmatprep.subr.bf16.mxu0 0
      %10424 = vmatpush1.bf16.msra.mxu0 0
      %10425 = vmatprep.subr.bf16.mxu0 0
      %10426 = vmatpush1.bf16.msra.mxu0 0
      %10427 = vmatprep.subr.bf16.mxu0 0
      %10428 = vmatpush1.bf16.msra.mxu0 0
      %10429 = vmatprep.subr.bf16.mxu0 0
      %10430 = vmatpush1.bf16.msra.mxu0 0
      %10431 = vmatprep.subr.bf16.mxu0 0
      %10432 = vmatpush1.bf16.msra.mxu0 0
      %10433 = vmatprep.subr.bf16.mxu0 0
      %10434 = vmatpush1.bf16.msra.mxu0 0
      %10435 = vmatprep.subr.bf16.mxu0 0
      %10436 = vmatpush1.bf16.msra.mxu0 0
      %10437 = vmatprep.subr.bf16.mxu0 0
      %10438 = vmatpush1.bf16.msra.mxu0 0
      %10439 = vmatprep.subr.bf16.mxu0 0
      %10440 = vmatpush1.bf16.msra.mxu0 0
      %10441 = vmatprep.subr.bf16.mxu0 0
      %10442 = vmatpush1.bf16.msra.mxu0 0
      %10443 = vmatprep.subr.bf16.mxu0 0
      %10444 = vmatpush1.bf16.msra.mxu0 0
      %10445 = vmatprep.subr.bf16.mxu0 0
      %10446 = vmatpush1.bf16.msra.mxu0 0
      %10447 = vmatprep.mubr.bf16.mxu0 0
      %10448 = vmatmul.mubr.bf16.gmra.mrb[0].mxu0 %v10413
      %v10449 = vpop.f32.mrb[0].mxu0
      %v10450 = vadd.f32 0.0, %v10449
      %v10451 = vpop.f32.mrb[0].mxu0
      %v10452 = vpop.f32.mrb[0].mxu0
      %v10453 = vpop.f32.mrb[0].mxu0
      %10454 = vdwg.mxu0
      %10455 = vrot.lane.b32.xlu0 %v1668, 64
      %v10456 = vpop.permute.xlu0 %10455
      %v10459 = vsel %vm331, %v9883, 0
      %10461 = vmatprep.subr.bf16.mxu0 0
      %10462 = vmatpush1.bf16.msra.mxu0 %v10456
      %10463 = vmatprep.subr.bf16.mxu0 0
      %10464 = vmatpush1.bf16.msra.mxu0 0
      %10465 = vmatprep.subr.bf16.mxu0 0
      %10466 = vmatpush1.bf16.msra.mxu0 0
      %10467 = vmatprep.subr.bf16.mxu0 0
      %10468 = vmatpush1.bf16.msra.mxu0 0
      %10469 = vmatprep.subr.bf16.mxu0 0
      %10470 = vmatpush1.bf16.msra.mxu0 0
      %10471 = vmatprep.subr.bf16.mxu0 0
      %10472 = vmatpush1.bf16.msra.mxu0 0
      %10473 = vmatprep.subr.bf16.mxu0 0
      %10474 = vmatpush1.bf16.msra.mxu0 0
      %10475 = vmatprep.subr.bf16.mxu0 0
      %10476 = vmatpush1.bf16.msra.mxu0 0
      %10477 = vmatprep.subr.bf16.mxu0 0
      %10478 = vmatpush1.bf16.msra.mxu0 0
      %10479 = vmatprep.subr.bf16.mxu0 0
      %10480 = vmatpush1.bf16.msra.mxu0 0
      %10481 = vmatprep.subr.bf16.mxu0 0
      %10482 = vmatpush1.bf16.msra.mxu0 0
      %10483 = vmatprep.subr.bf16.mxu0 0
      %10484 = vmatpush1.bf16.msra.mxu0 0
      %10485 = vmatprep.subr.bf16.mxu0 0
      %10486 = vmatpush1.bf16.msra.mxu0 0
      %10487 = vmatprep.subr.bf16.mxu0 0
      %10488 = vmatpush1.bf16.msra.mxu0 0
      %10489 = vmatprep.subr.bf16.mxu0 0
      %10490 = vmatpush1.bf16.msra.mxu0 0
      %10491 = vmatprep.subr.bf16.mxu0 0
      %10492 = vmatpush1.bf16.msra.mxu0 0
      %10493 = vmatprep.mubr.bf16.mxu0 0
      %10494 = vmatmul.mubr.bf16.gmra.mrb[0].mxu0 %v10459
      %v10495 = vpop.f32.mrb[0].mxu0
      %v10496 = vadd.f32 0.0, %v10495
      %v10497 = vpop.f32.mrb[0].mxu0
      %v10498 = vpop.f32.mrb[0].mxu0
      %v10499 = vpop.f32.mrb[0].mxu0
      %10500 = vdwg.mxu0
      %10501 = vrot.lane.b32.xlu0 %v1669, 64
      %v10502 = vpop.permute.xlu0 %10501
      %v10505 = vsel %vm331, %v9884, 0
      %10507 = vmatprep.subr.bf16.mxu0 0
      %10508 = vmatpush1.bf16.msra.mxu0 %v10502
      %10509 = vmatprep.subr.bf16.mxu0 0
      %10510 = vmatpush1.bf16.msra.mxu0 0
      %10511 = vmatprep.subr.bf16.mxu0 0
      %10512 = vmatpush1.bf16.msra.mxu0 0
      %10513 = vmatprep.subr.bf16.mxu0 0
      %10514 = vmatpush1.bf16.msra.mxu0 0
      %10515 = vmatprep.subr.bf16.mxu0 0
      %10516 = vmatpush1.bf16.msra.mxu0 0
      %10517 = vmatprep.subr.bf16.mxu0 0
      %10518 = vmatpush1.bf16.msra.mxu0 0
      %10519 = vmatprep.subr.bf16.mxu0 0
      %10520 = vmatpush1.bf16.msra.mxu0 0
      %10521 = vmatprep.subr.bf16.mxu0 0
      %10522 = vmatpush1.bf16.msra.mxu0 0
      %10523 = vmatprep.subr.bf16.mxu0 0
      %10524 = vmatpush1.bf16.msra.mxu0 0
      %10525 = vmatprep.subr.bf16.mxu0 0
      %10526 = vmatpush1.bf16.msra.mxu0 0
      %10527 = vmatprep.subr.bf16.mxu0 0
      %10528 = vmatpush1.bf16.msra.mxu0 0
      %10529 = vmatprep.subr.bf16.mxu0 0
      %10530 = vmatpush1.bf16.msra.mxu0 0
      %10531 = vmatprep.subr.bf16.mxu0 0
      %10532 = vmatpush1.bf16.msra.mxu0 0
      %10533 = vmatprep.subr.bf16.mxu0 0
      %10534 = vmatpush1.bf16.msra.mxu0 0
      %10535 = vmatprep.subr.bf16.mxu0 0
      %10536 = vmatpush1.bf16.msra.mxu0 0
      %10537 = vmatprep.subr.bf16.mxu0 0
      %10538 = vmatpush1.bf16.msra.mxu0 0
      %10539 = vmatprep.mubr.bf16.mxu0 0
      %10540 = vmatmul.mubr.bf16.gmra.mrb[0].mxu0 %v10505
      %v10541 = vpop.f32.mrb[0].mxu0
      %v10542 = vadd.f32 0.0, %v10541
      %v10543 = vpop.f32.mrb[0].mxu0
      %v10544 = vpop.f32.mrb[0].mxu0
      %v10545 = vpop.f32.mrb[0].mxu0
      %10546 = vdwg.mxu0
      %10547 = vrot.lane.b32.xlu0 %v1670, 64
      %v10548 = vpop.permute.xlu0 %10547
      %v10551 = vsel %vm331, %v9885, 0
      %10553 = vmatprep.subr.bf16.mxu0 0
      %10554 = vmatpush1.bf16.msra.mxu0 %v10548
      %10555 = vmatprep.subr.bf16.mxu0 0
      %10556 = vmatpush1.bf16.msra.mxu0 0
      %10557 = vmatprep.subr.bf16.mxu0 0
      %10558 = vmatpush1.bf16.msra.mxu0 0
      %10559 = vmatprep.subr.bf16.mxu0 0
      %10560 = vmatpush1.bf16.msra.mxu0 0
      %10561 = vmatprep.subr.bf16.mxu0 0
      %10562 = vmatpush1.bf16.msra.mxu0 0
      %10563 = vmatprep.subr.bf16.mxu0 0
      %10564 = vmatpush1.bf16.msra.mxu0 0
      %10565 = vmatprep.subr.bf16.mxu0 0
      %10566 = vmatpush1.bf16.msra.mxu0 0
      %10567 = vmatprep.subr.bf16.mxu0 0
      %10568 = vmatpush1.bf16.msra.mxu0 0
      %10569 = vmatprep.subr.bf16.mxu0 0
      %10570 = vmatpush1.bf16.msra.mxu0 0
      %10571 = vmatprep.subr.bf16.mxu0 0
      %10572 = vmatpush1.bf16.msra.mxu0 0
      %10573 = vmatprep.subr.bf16.mxu0 0
      %10574 = vmatpush1.bf16.msra.mxu0 0
      %10575 = vmatprep.subr.bf16.mxu0 0
      %10576 = vmatpush1.bf16.msra.mxu0 0
      %10577 = vmatprep.subr.bf16.mxu0 0
      %10578 = vmatpush1.bf16.msra.mxu0 0
      %10579 = vmatprep.subr.bf16.mxu0 0
      %10580 = vmatpush1.bf16.msra.mxu0 0
      %10581 = vmatprep.subr.bf16.mxu0 0
      %10582 = vmatpush1.bf16.msra.mxu0 0
      %10583 = vmatprep.subr.bf16.mxu0 0
      %10584 = vmatpush1.bf16.msra.mxu0 0
      %10585 = vmatprep.mubr.bf16.mxu0 0
      %10586 = vmatmul.mubr.bf16.gmra.mrb[0].mxu0 %v10551
      %v10587 = vpop.f32.mrb[0].mxu0
      %v10588 = vadd.f32 0.0, %v10587
      %v10589 = vpop.f32.mrb[0].mxu0
      %v10590 = vpop.f32.mrb[0].mxu0
      %v10591 = vpop.f32.mrb[0].mxu0
      %10592 = vdwg.mxu0
      %10593 = vrot.lane.b32.xlu0 %v1671, 64
      %v10594 = vpop.permute.xlu0 %10593
      %v10597 = vsel %vm331, %v9886, 0
      %10599 = vmatprep.subr.bf16.mxu0 0
      %10600 = vmatpush1.bf16.msra.mxu0 %v10594
      %10601 = vmatprep.subr.bf16.mxu0 0
      %10602 = vmatpush1.bf16.msra.mxu0 0
      %10603 = vmatprep.subr.bf16.mxu0 0
      %10604 = vmatpush1.bf16.msra.mxu0 0
      %10605 = vmatprep.subr.bf16.mxu0 0
      %10606 = vmatpush1.bf16.msra.mxu0 0
      %10607 = vmatprep.subr.bf16.mxu0 0
      %10608 = vmatpush1.bf16.msra.mxu0 0
      %10609 = vmatprep.subr.bf16.mxu0 0
      %10610 = vmatpush1.bf16.msra.mxu0 0
      %10611 = vmatprep.subr.bf16.mxu0 0
      %10612 = vmatpush1.bf16.msra.mxu0 0
      %10613 = vmatprep.subr.bf16.mxu0 0
      %10614 = vmatpush1.bf16.msra.mxu0 0
      %10615 = vmatprep.subr.bf16.mxu0 0
      %10616 = vmatpush1.bf16.msra.mxu0 0
      %10617 = vmatprep.subr.bf16.mxu0 0
      %10618 = vmatpush1.bf16.msra.mxu0 0
      %10619 = vmatprep.subr.bf16.mxu0 0
      %10620 = vmatpush1.bf16.msra.mxu0 0
      %10621 = vmatprep.subr.bf16.mxu0 0
      %10622 = vmatpush1.bf16.msra.mxu0 0
      %10623 = vmatprep.subr.bf16.mxu0 0
      %10624 = vmatpush1.bf16.msra.mxu0 0
      %10625 = vmatprep.subr.bf16.mxu0 0
      %10626 = vmatpush1.bf16.msra.mxu0 0
      %10627 = vmatprep.subr.bf16.mxu0 0
      %10628 = vmatpush1.bf16.msra.mxu0 0
      %10629 = vmatprep.subr.bf16.mxu0 0
      %10630 = vmatpush1.bf16.msra.mxu0 0
      %10631 = vmatprep.mubr.bf16.mxu0 0
      %10632 = vmatmul.mubr.bf16.gmra.mrb[0].mxu0 %v10597
      %v10633 = vpop.f32.mrb[0].mxu0
      %v10634 = vadd.f32 0.0, %v10633
      %v10635 = vpop.f32.mrb[0].mxu0
      %v10636 = vpop.f32.mrb[0].mxu0
      %v10637 = vpop.f32.mrb[0].mxu0
      %10638 = vdwg.mxu0
      %10639 = vrot.lane.b32.xlu0 %v1672, 64
      %v10640 = vpop.permute.xlu0 %10639
      %v10643 = vsel %vm331, %v9887, 0
      %10645 = vmatprep.subr.bf16.mxu0 0
      %10646 = vmatpush1.bf16.msra.mxu0 %v10640
      %10647 = vmatprep.subr.bf16.mxu0 0
      %10648 = vmatpush1.bf16.msra.mxu0 0
      %10649 = vmatprep.subr.bf16.mxu0 0
      %10650 = vmatpush1.bf16.msra.mxu0 0
      %10651 = vmatprep.subr.bf16.mxu0 0
      %10652 = vmatpush1.bf16.msra.mxu0 0
      %10653 = vmatprep.subr.bf16.mxu0 0
      %10654 = vmatpush1.bf16.msra.mxu0 0
      %10655 = vmatprep.subr.bf16.mxu0 0
      %10656 = vmatpush1.bf16.msra.mxu0 0
      %10657 = vmatprep.subr.bf16.mxu0 0
      %10658 = vmatpush1.bf16.msra.mxu0 0
      %10659 = vmatprep.subr.bf16.mxu0 0
      %10660 = vmatpush1.bf16.msra.mxu0 0
      %10661 = vmatprep.subr.bf16.mxu0 0
      %10662 = vmatpush1.bf16.msra.mxu0 0
      %10663 = vmatprep.subr.bf16.mxu0 0
      %10664 = vmatpush1.bf16.msra.mxu0 0
      %10665 = vmatprep.subr.bf16.mxu0 0
      %10666 = vmatpush1.bf16.msra.mxu0 0
      %10667 = vmatprep.subr.bf16.mxu0 0
      %10668 = vmatpush1.bf16.msra.mxu0 0
      %10669 = vmatprep.subr.bf16.mxu0 0
      %10670 = vmatpush1.bf16.msra.mxu0 0
      %10671 = vmatprep.subr.bf16.mxu0 0
      %10672 = vmatpush1.bf16.msra.mxu0 0
      %10673 = vmatprep.subr.bf16.mxu0 0
      %10674 = vmatpush1.bf16.msra.mxu0 0
      %10675 = vmatprep.subr.bf16.mxu0 0
      %10676 = vmatpush1.bf16.msra.mxu0 0
      %10677 = vmatprep.mubr.bf16.mxu0 0
      %10678 = vmatmul.mubr.bf16.gmra.mrb[0].mxu0 %v10643
      %v10679 = vpop.f32.mrb[0].mxu0
      %v10680 = vadd.f32 0.0, %v10679
      %v10681 = vpop.f32.mrb[0].mxu0
      %v10682 = vpop.f32.mrb[0].mxu0
      %v10683 = vpop.f32.mrb[0].mxu0
      %10684 = vdwg.mxu0
      %10685 = vrot.lane.b32.xlu0 %v1673, 64
      %v10686 = vpop.permute.xlu0 %10685
      %v10689 = vsel %vm331, %v9888, 0
      %10691 = vmatprep.subr.bf16.mxu0 0
      %10692 = vmatpush1.bf16.msra.mxu0 %v10686
      %10693 = vmatprep.subr.bf16.mxu0 0
      %10694 = vmatpush1.bf16.msra.mxu0 0
      %10695 = vmatprep.subr.bf16.mxu0 0
      %10696 = vmatpush1.bf16.msra.mxu0 0
      %10697 = vmatprep.subr.bf16.mxu0 0
      %10698 = vmatpush1.bf16.msra.mxu0 0
      %10699 = vmatprep.subr.bf16.mxu0 0
      %10700 = vmatpush1.bf16.msra.mxu0 0
      %10701 = vmatprep.subr.bf16.mxu0 0
      %10702 = vmatpush1.bf16.msra.mxu0 0
      %10703 = vmatprep.subr.bf16.mxu0 0
      %10704 = vmatpush1.bf16.msra.mxu0 0
      %10705 = vmatprep.subr.bf16.mxu0 0
      %10706 = vmatpush1.bf16.msra.mxu0 0
      %10707 = vmatprep.subr.bf16.mxu0 0
      %10708 = vmatpush1.bf16.msra.mxu0 0
      %10709 = vmatprep.subr.bf16.mxu0 0
      %10710 = vmatpush1.bf16.msra.mxu0 0
      %10711 = vmatprep.subr.bf16.mxu0 0
      %10712 = vmatpush1.bf16.msra.mxu0 0
      %10713 = vmatprep.subr.bf16.mxu0 0
      %10714 = vmatpush1.bf16.msra.mxu0 0
      %10715 = vmatprep.subr.bf16.mxu0 0
      %10716 = vmatpush1.bf16.msra.mxu0 0
      %10717 = vmatprep.subr.bf16.mxu0 0
      %10718 = vmatpush1.bf16.msra.mxu0 0
      %10719 = vmatprep.subr.bf16.mxu0 0
      %10720 = vmatpush1.bf16.msra.mxu0 0
      %10721 = vmatprep.subr.bf16.mxu0 0
      %10722 = vmatpush1.bf16.msra.mxu0 0
      %10723 = vmatprep.mubr.bf16.mxu0 0
      %10724 = vmatmul.mubr.bf16.gmra.mrb[0].mxu0 %v10689
      %v10725 = vpop.f32.mrb[0].mxu0
      %v10726 = vadd.f32 0.0, %v10725
      %v10727 = vpop.f32.mrb[0].mxu0
      %v10728 = vpop.f32.mrb[0].mxu0
      %v10729 = vpop.f32.mrb[0].mxu0
      %10730 = vdwg.mxu0
      %10731 = vrot.lane.b32.xlu0 %v1674, 64
      %v10732 = vpop.permute.xlu0 %10731
      %v10735 = vsel %vm331, %v9889, 0
      %10737 = vmatprep.subr.bf16.mxu0 0
      %10738 = vmatpush1.bf16.msra.mxu0 %v10732
      %10739 = vmatprep.subr.bf16.mxu0 0
      %10740 = vmatpush1.bf16.msra.mxu0 0
      %10741 = vmatprep.subr.bf16.mxu0 0
      %10742 = vmatpush1.bf16.msra.mxu0 0
      %10743 = vmatprep.subr.bf16.mxu0 0
      %10744 = vmatpush1.bf16.msra.mxu0 0
      %10745 = vmatprep.subr.bf16.mxu0 0
      %10746 = vmatpush1.bf16.msra.mxu0 0
      %10747 = vmatprep.subr.bf16.mxu0 0
      %10748 = vmatpush1.bf16.msra.mxu0 0
      %10749 = vmatprep.subr.bf16.mxu0 0
      %10750 = vmatpush1.bf16.msra.mxu0 0
      %10751 = vmatprep.subr.bf16.mxu0 0
      %10752 = vmatpush1.bf16.msra.mxu0 0
      %10753 = vmatprep.subr.bf16.mxu0 0
      %10754 = vmatpush1.bf16.msra.mxu0 0
      %10755 = vmatprep.subr.bf16.mxu0 0
      %10756 = vmatpush1.bf16.msra.mxu0 0
      %10757 = vmatprep.subr.bf16.mxu0 0
      %10758 = vmatpush1.bf16.msra.mxu0 0
      %10759 = vmatprep.subr.bf16.mxu0 0
      %10760 = vmatpush1.bf16.msra.mxu0 0
      %10761 = vmatprep.subr.bf16.mxu0 0
      %10762 = vmatpush1.bf16.msra.mxu0 0
      %10763 = vmatprep.subr.bf16.mxu0 0
      %10764 = vmatpush1.bf16.msra.mxu0 0
      %10765 = vmatprep.subr.bf16.mxu0 0
      %10766 = vmatpush1.bf16.msra.mxu0 0
      %10767 = vmatprep.subr.bf16.mxu0 0
      %10768 = vmatpush1.bf16.msra.mxu0 0
      %10769 = vmatprep.mubr.bf16.mxu0 0
      %10770 = vmatmul.mubr.bf16.gmra.mrb[0].mxu0 %v10735
      %v10771 = vpop.f32.mrb[0].mxu0
      %v10772 = vadd.f32 0.0, %v10771
      %v10773 = vpop.f32.mrb[0].mxu0
      %v10774 = vpop.f32.mrb[0].mxu0
      %v10775 = vpop.f32.mrb[0].mxu0
      %10776 = vdwg.mxu0
      %10777 = vrot.lane.b32.xlu0 %v1675, 64
      %v10778 = vpop.permute.xlu0 %10777
      %v10781 = vsel %vm331, %v9890, 0
      %10783 = vmatprep.subr.bf16.mxu0 0
      %10784 = vmatpush1.bf16.msra.mxu0 %v10778
      %10785 = vmatprep.subr.bf16.mxu0 0
      %10786 = vmatpush1.bf16.msra.mxu0 0
      %10787 = vmatprep.subr.bf16.mxu0 0
      %10788 = vmatpush1.bf16.msra.mxu0 0
      %10789 = vmatprep.subr.bf16.mxu0 0
      %10790 = vmatpush1.bf16.msra.mxu0 0
      %10791 = vmatprep.subr.bf16.mxu0 0
      %10792 = vmatpush1.bf16.msra.mxu0 0
      %10793 = vmatprep.subr.bf16.mxu0 0
      %10794 = vmatpush1.bf16.msra.mxu0 0
      %10795 = vmatprep.subr.bf16.mxu0 0
      %10796 = vmatpush1.bf16.msra.mxu0 0
      %10797 = vmatprep.subr.bf16.mxu0 0
      %10798 = vmatpush1.bf16.msra.mxu0 0
      %10799 = vmatprep.subr.bf16.mxu0 0
      %10800 = vmatpush1.bf16.msra.mxu0 0
      %10801 = vmatprep.subr.bf16.mxu0 0
      %10802 = vmatpush1.bf16.msra.mxu0 0
      %10803 = vmatprep.subr.bf16.mxu0 0
      %10804 = vmatpush1.bf16.msra.mxu0 0
      %10805 = vmatprep.subr.bf16.mxu0 0
      %10806 = vmatpush1.bf16.msra.mxu0 0
      %10807 = vmatprep.subr.bf16.mxu0 0
      %10808 = vmatpush1.bf16.msra.mxu0 0
      %10809 = vmatprep.subr.bf16.mxu0 0
      %10810 = vmatpush1.bf16.msra.mxu0 0
      %10811 = vmatprep.subr.bf16.mxu0 0
      %10812 = vmatpush1.bf16.msra.mxu0 0
      %10813 = vmatprep.subr.bf16.mxu0 0
      %10814 = vmatpush1.bf16.msra.mxu0 0
      %10815 = vmatprep.mubr.bf16.mxu0 0
      %10816 = vmatmul.mubr.bf16.gmra.mrb[0].mxu0 %v10781
      %v10817 = vpop.f32.mrb[0].mxu0
      %v10818 = vadd.f32 0.0, %v10817
      %v10819 = vpop.f32.mrb[0].mxu0
      %v10820 = vpop.f32.mrb[0].mxu0
      %v10821 = vpop.f32.mrb[0].mxu0
      %10822 = vdwg.mxu0
      %10823 = vrot.lane.b32.xlu0 %v1676, 64
      %v10824 = vpop.permute.xlu0 %10823
      %v10827 = vsel %vm331, %v9891, 0
      %10829 = vmatprep.subr.bf16.mxu0 0
      %10830 = vmatpush1.bf16.msra.mxu0 %v10824
      %10831 = vmatprep.subr.bf16.mxu0 0
      %10832 = vmatpush1.bf16.msra.mxu0 0
      %10833 = vmatprep.subr.bf16.mxu0 0
      %10834 = vmatpush1.bf16.msra.mxu0 0
      %10835 = vmatprep.subr.bf16.mxu0 0
      %10836 = vmatpush1.bf16.msra.mxu0 0
      %10837 = vmatprep.subr.bf16.mxu0 0
      %10838 = vmatpush1.bf16.msra.mxu0 0
      %10839 = vmatprep.subr.bf16.mxu0 0
      %10840 = vmatpush1.bf16.msra.mxu0 0
      %10841 = vmatprep.subr.bf16.mxu0 0
      %10842 = vmatpush1.bf16.msra.mxu0 0
      %10843 = vmatprep.subr.bf16.mxu0 0
      %10844 = vmatpush1.bf16.msra.mxu0 0
      %10845 = vmatprep.subr.bf16.mxu0 0
      %10846 = vmatpush1.bf16.msra.mxu0 0
      %10847 = vmatprep.subr.bf16.mxu0 0
      %10848 = vmatpush1.bf16.msra.mxu0 0
      %10849 = vmatprep.subr.bf16.mxu0 0
      %10850 = vmatpush1.bf16.msra.mxu0 0
      %10851 = vmatprep.subr.bf16.mxu0 0
      %10852 = vmatpush1.bf16.msra.mxu0 0
      %10853 = vmatprep.subr.bf16.mxu0 0
      %10854 = vmatpush1.bf16.msra.mxu0 0
      %10855 = vmatprep.subr.bf16.mxu0 0
      %10856 = vmatpush1.bf16.msra.mxu0 0
      %10857 = vmatprep.subr.bf16.mxu0 0
      %10858 = vmatpush1.bf16.msra.mxu0 0
      %10859 = vmatprep.subr.bf16.mxu0 0
      %10860 = vmatpush1.bf16.msra.mxu0 0
      %10861 = vmatprep.mubr.bf16.mxu0 0
      %10862 = vmatmul.mubr.bf16.gmra.mrb[0].mxu0 %v10827
      %v10863 = vpop.f32.mrb[0].mxu0
      %v10864 = vadd.f32 0.0, %v10863
      %v10865 = vpop.f32.mrb[0].mxu0
      %v10866 = vpop.f32.mrb[0].mxu0
      %v10867 = vpop.f32.mrb[0].mxu0
      %10868 = vdwg.mxu0
      %10869 = vrot.lane.b32.xlu0 %v1677, 64
      %v10870 = vpop.permute.xlu0 %10869
      %v10873 = vsel %vm331, %v9892, 0
      %10875 = vmatprep.subr.bf16.mxu0 0
      %10876 = vmatpush1.bf16.msra.mxu0 %v10870
      %10877 = vmatprep.subr.bf16.mxu0 0
      %10878 = vmatpush1.bf16.msra.mxu0 0
      %10879 = vmatprep.subr.bf16.mxu0 0
      %10880 = vmatpush1.bf16.msra.mxu0 0
      %10881 = vmatprep.subr.bf16.mxu0 0
      %10882 = vmatpush1.bf16.msra.mxu0 0
      %10883 = vmatprep.subr.bf16.mxu0 0
      %10884 = vmatpush1.bf16.msra.mxu0 0
      %10885 = vmatprep.subr.bf16.mxu0 0
      %10886 = vmatpush1.bf16.msra.mxu0 0
      %10887 = vmatprep.subr.bf16.mxu0 0
      %10888 = vmatpush1.bf16.msra.mxu0 0
      %10889 = vmatprep.subr.bf16.mxu0 0
      %10890 = vmatpush1.bf16.msra.mxu0 0
      %10891 = vmatprep.subr.bf16.mxu0 0
      %10892 = vmatpush1.bf16.msra.mxu0 0
      %10893 = vmatprep.subr.bf16.mxu0 0
      %10894 = vmatpush1.bf16.msra.mxu0 0
      %10895 = vmatprep.subr.bf16.mxu0 0
      %10896 = vmatpush1.bf16.msra.mxu0 0
      %10897 = vmatprep.subr.bf16.mxu0 0
      %10898 = vmatpush1.bf16.msra.mxu0 0
      %10899 = vmatprep.subr.bf16.mxu0 0
      %10900 = vmatpush1.bf16.msra.mxu0 0
      %10901 = vmatprep.subr.bf16.mxu0 0
      %10902 = vmatpush1.bf16.msra.mxu0 0
      %10903 = vmatprep.subr.bf16.mxu0 0
      %10904 = vmatpush1.bf16.msra.mxu0 0
      %10905 = vmatprep.subr.bf16.mxu0 0
      %10906 = vmatpush1.bf16.msra.mxu0 0
      %10907 = vmatprep.mubr.bf16.mxu0 0
      %10908 = vmatmul.mubr.bf16.gmra.mrb[0].mxu0 %v10873
      %v10909 = vpop.f32.mrb[0].mxu0
      %v10910 = vadd.f32 0.0, %v10909
      %v10911 = vpop.f32.mrb[0].mxu0
      %v10912 = vpop.f32.mrb[0].mxu0
      %v10913 = vpop.f32.mrb[0].mxu0
      %10914 = vdwg.mxu0
      %10915 = vrot.lane.b32.xlu0 %v1678, 64
      %v10916 = vpop.permute.xlu0 %10915
      %v10919 = vsel %vm331, %v9893, 0
      %10921 = vmatprep.subr.bf16.mxu0 0
      %10922 = vmatpush1.bf16.msra.mxu0 %v10916
      %10923 = vmatprep.subr.bf16.mxu0 0
      %10924 = vmatpush1.bf16.msra.mxu0 0
      %10925 = vmatprep.subr.bf16.mxu0 0
      %10926 = vmatpush1.bf16.msra.mxu0 0
      %10927 = vmatprep.subr.bf16.mxu0 0
      %10928 = vmatpush1.bf16.msra.mxu0 0
      %10929 = vmatprep.subr.bf16.mxu0 0
      %10930 = vmatpush1.bf16.msra.mxu0 0
      %10931 = vmatprep.subr.bf16.mxu0 0
      %10932 = vmatpush1.bf16.msra.mxu0 0
      %10933 = vmatprep.subr.bf16.mxu0 0
      %10934 = vmatpush1.bf16.msra.mxu0 0
      %10935 = vmatprep.subr.bf16.mxu0 0
      %10936 = vmatpush1.bf16.msra.mxu0 0
      %10937 = vmatprep.subr.bf16.mxu0 0
      %10938 = vmatpush1.bf16.msra.mxu0 0
      %10939 = vmatprep.subr.bf16.mxu0 0
      %10940 = vmatpush1.bf16.msra.mxu0 0
      %10941 = vmatprep.subr.bf16.mxu0 0
      %10942 = vmatpush1.bf16.msra.mxu0 0
      %10943 = vmatprep.subr.bf16.mxu0 0
      %10944 = vmatpush1.bf16.msra.mxu0 0
      %10945 = vmatprep.subr.bf16.mxu0 0
      %10946 = vmatpush1.bf16.msra.mxu0 0
      %10947 = vmatprep.subr.bf16.mxu0 0
      %10948 = vmatpush1.bf16.msra.mxu0 0
      %10949 = vmatprep.subr.bf16.mxu0 0
      %10950 = vmatpush1.bf16.msra.mxu0 0
      %10951 = vmatprep.subr.bf16.mxu0 0
      %10952 = vmatpush1.bf16.msra.mxu0 0
      %10953 = vmatprep.mubr.bf16.mxu0 0
      %10954 = vmatmul.mubr.bf16.gmra.mrb[0].mxu0 %v10919
      %v10955 = vpop.f32.mrb[0].mxu0
      %v10956 = vadd.f32 0.0, %v10955
      %v10957 = vpop.f32.mrb[0].mxu0
      %v10958 = vpop.f32.mrb[0].mxu0
      %v10959 = vpop.f32.mrb[0].mxu0
      %10960 = vdwg.mxu0
      %10961 = vrot.lane.b32.xlu0 %v1679, 64
      %v10962 = vpop.permute.xlu0 %10961
      %v10965 = vsel %vm331, %v9894, 0
      %10967 = vmatprep.subr.bf16.mxu0 0
      %10968 = vmatpush1.bf16.msra.mxu0 %v10962
      %10969 = vmatprep.subr.bf16.mxu0 0
      %10970 = vmatpush1.bf16.msra.mxu0 0
      %10971 = vmatprep.subr.bf16.mxu0 0
      %10972 = vmatpush1.bf16.msra.mxu0 0
      %10973 = vmatprep.subr.bf16.mxu0 0
      %10974 = vmatpush1.bf16.msra.mxu0 0
      %10975 = vmatprep.subr.bf16.mxu0 0
      %10976 = vmatpush1.bf16.msra.mxu0 0
      %10977 = vmatprep.subr.bf16.mxu0 0
      %10978 = vmatpush1.bf16.msra.mxu0 0
      %10979 = vmatprep.subr.bf16.mxu0 0
      %10980 = vmatpush1.bf16.msra.mxu0 0
      %10981 = vmatprep.subr.bf16.mxu0 0
      %10982 = vmatpush1.bf16.msra.mxu0 0
      %10983 = vmatprep.subr.bf16.mxu0 0
      %10984 = vmatpush1.bf16.msra.mxu0 0
      %10985 = vmatprep.subr.bf16.mxu0 0
      %10986 = vmatpush1.bf16.msra.mxu0 0
      %10987 = vmatprep.subr.bf16.mxu0 0
      %10988 = vmatpush1.bf16.msra.mxu0 0
      %10989 = vmatprep.subr.bf16.mxu0 0
      %10990 = vmatpush1.bf16.msra.mxu0 0
      %10991 = vmatprep.subr.bf16.mxu0 0
      %10992 = vmatpush1.bf16.msra.mxu0 0
      %10993 = vmatprep.subr.bf16.mxu0 0
      %10994 = vmatpush1.bf16.msra.mxu0 0
      %10995 = vmatprep.subr.bf16.mxu0 0
      %10996 = vmatpush1.bf16.msra.mxu0 0
      %10997 = vmatprep.subr.bf16.mxu0 0
      %10998 = vmatpush1.bf16.msra.mxu0 0
      %10999 = vmatprep.mubr.bf16.mxu0 0
      %11000 = vmatmul.mubr.bf16.gmra.mrb[0].mxu0 %v10965
      %v11001 = vpop.f32.mrb[0].mxu0
      %v11002 = vadd.f32 0.0, %v11001
      %v11003 = vpop.f32.mrb[0].mxu0
      %v11004 = vpop.f32.mrb[0].mxu0
      %v11005 = vpop.f32.mrb[0].mxu0
      %11006 = vdwg.mxu0
      %11007 = vrot.lane.b32.xlu0 %v1680, 64
      %v11008 = vpop.permute.xlu0 %11007
      %v11011 = vsel %vm331, %v9895, 0
      %11013 = vmatprep.subr.bf16.mxu0 0
      %11014 = vmatpush1.bf16.msra.mxu0 %v11008
      %11015 = vmatprep.subr.bf16.mxu0 0
      %11016 = vmatpush1.bf16.msra.mxu0 0
      %11017 = vmatprep.subr.bf16.mxu0 0
      %11018 = vmatpush1.bf16.msra.mxu0 0
      %11019 = vmatprep.subr.bf16.mxu0 0
      %11020 = vmatpush1.bf16.msra.mxu0 0
      %11021 = vmatprep.subr.bf16.mxu0 0
      %11022 = vmatpush1.bf16.msra.mxu0 0
      %11023 = vmatprep.subr.bf16.mxu0 0
      %11024 = vmatpush1.bf16.msra.mxu0 0
      %11025 = vmatprep.subr.bf16.mxu0 0
      %11026 = vmatpush1.bf16.msra.mxu0 0
      %11027 = vmatprep.subr.bf16.mxu0 0
      %11028 = vmatpush1.bf16.msra.mxu0 0
      %11029 = vmatprep.subr.bf16.mxu0 0
      %11030 = vmatpush1.bf16.msra.mxu0 0
      %11031 = vmatprep.subr.bf16.mxu0 0
      %11032 = vmatpush1.bf16.msra.mxu0 0
      %11033 = vmatprep.subr.bf16.mxu0 0
      %11034 = vmatpush1.bf16.msra.mxu0 0
      %11035 = vmatprep.subr.bf16.mxu0 0
      %11036 = vmatpush1.bf16.msra.mxu0 0
      %11037 = vmatprep.subr.bf16.mxu0 0
      %11038 = vmatpush1.bf16.msra.mxu0 0
      %11039 = vmatprep.subr.bf16.mxu0 0
      %11040 = vmatpush1.bf16.msra.mxu0 0
      %11041 = vmatprep.subr.bf16.mxu0 0
      %11042 = vmatpush1.bf16.msra.mxu0 0
      %11043 = vmatprep.subr.bf16.mxu0 0
      %11044 = vmatpush1.bf16.msra.mxu0 0
      %11045 = vmatprep.mubr.bf16.mxu0 0
      %11046 = vmatmul.mubr.bf16.gmra.mrb[0].mxu0 %v11011
      %v11047 = vpop.f32.mrb[0].mxu0
      %v11048 = vadd.f32 0.0, %v11047
      %v11049 = vpop.f32.mrb[0].mxu0
      %v11050 = vpop.f32.mrb[0].mxu0
      %v11051 = vpop.f32.mrb[0].mxu0
      %11052 = vdwg.mxu0
      %11053 = vrot.lane.b32.xlu0 %v1681, 64
      %v11054 = vpop.permute.xlu0 %11053
      %v11057 = vsel %vm331, %v9896, 0
      %11059 = vmatprep.subr.bf16.mxu0 0
      %11060 = vmatpush1.bf16.msra.mxu0 %v11054
      %11061 = vmatprep.subr.bf16.mxu0 0
      %11062 = vmatpush1.bf16.msra.mxu0 0
      %11063 = vmatprep.subr.bf16.mxu0 0
      %11064 = vmatpush1.bf16.msra.mxu0 0
      %11065 = vmatprep.subr.bf16.mxu0 0
      %11066 = vmatpush1.bf16.msra.mxu0 0
      %11067 = vmatprep.subr.bf16.mxu0 0
      %11068 = vmatpush1.bf16.msra.mxu0 0
      %11069 = vmatprep.subr.bf16.mxu0 0
      %11070 = vmatpush1.bf16.msra.mxu0 0
      %11071 = vmatprep.subr.bf16.mxu0 0
      %11072 = vmatpush1.bf16.msra.mxu0 0
      %11073 = vmatprep.subr.bf16.mxu0 0
      %11074 = vmatpush1.bf16.msra.mxu0 0
      %11075 = vmatprep.subr.bf16.mxu0 0
      %11076 = vmatpush1.bf16.msra.mxu0 0
      %11077 = vmatprep.subr.bf16.mxu0 0
      %11078 = vmatpush1.bf16.msra.mxu0 0
      %11079 = vmatprep.subr.bf16.mxu0 0
      %11080 = vmatpush1.bf16.msra.mxu0 0
      %11081 = vmatprep.subr.bf16.mxu0 0
      %11082 = vmatpush1.bf16.msra.mxu0 0
      %11083 = vmatprep.subr.bf16.mxu0 0
      %11084 = vmatpush1.bf16.msra.mxu0 0
      %11085 = vmatprep.subr.bf16.mxu0 0
      %11086 = vmatpush1.bf16.msra.mxu0 0
      %11087 = vmatprep.subr.bf16.mxu0 0
      %11088 = vmatpush1.bf16.msra.mxu0 0
      %11089 = vmatprep.subr.bf16.mxu0 0
      %11090 = vmatpush1.bf16.msra.mxu0 0
      %11091 = vmatprep.mubr.bf16.mxu0 0
      %11092 = vmatmul.mubr.bf16.gmra.mrb[0].mxu0 %v11057
      %v11093 = vpop.f32.mrb[0].mxu0
      %v11094 = vadd.f32 0.0, %v11093
      %v11095 = vpop.f32.mrb[0].mxu0
      %v11096 = vpop.f32.mrb[0].mxu0
      %v11097 = vpop.f32.mrb[0].mxu0
      %11098 = vdwg.mxu0
      %11099 = vrot.lane.b32.xlu0 %v1682, 64
      %v11100 = vpop.permute.xlu0 %11099
      %v11103 = vsel %vm331, %v9897, 0
      %11105 = vmatprep.subr.bf16.mxu0 0
      %11106 = vmatpush1.bf16.msra.mxu0 %v11100
      %11107 = vmatprep.subr.bf16.mxu0 0
      %11108 = vmatpush1.bf16.msra.mxu0 0
      %11109 = vmatprep.subr.bf16.mxu0 0
      %11110 = vmatpush1.bf16.msra.mxu0 0
      %11111 = vmatprep.subr.bf16.mxu0 0
      %11112 = vmatpush1.bf16.msra.mxu0 0
      %11113 = vmatprep.subr.bf16.mxu0 0
      %11114 = vmatpush1.bf16.msra.mxu0 0
      %11115 = vmatprep.subr.bf16.mxu0 0
      %11116 = vmatpush1.bf16.msra.mxu0 0
      %11117 = vmatprep.subr.bf16.mxu0 0
      %11118 = vmatpush1.bf16.msra.mxu0 0
      %11119 = vmatprep.subr.bf16.mxu0 0
      %11120 = vmatpush1.bf16.msra.mxu0 0
      %11121 = vmatprep.subr.bf16.mxu0 0
      %11122 = vmatpush1.bf16.msra.mxu0 0
      %11123 = vmatprep.subr.bf16.mxu0 0
      %11124 = vmatpush1.bf16.msra.mxu0 0
      %11125 = vmatprep.subr.bf16.mxu0 0
      %11126 = vmatpush1.bf16.msra.mxu0 0
      %11127 = vmatprep.subr.bf16.mxu0 0
      %11128 = vmatpush1.bf16.msra.mxu0 0
      %11129 = vmatprep.subr.bf16.mxu0 0
      %11130 = vmatpush1.bf16.msra.mxu0 0
      %11131 = vmatprep.subr.bf16.mxu0 0
      %11132 = vmatpush1.bf16.msra.mxu0 0
      %11133 = vmatprep.subr.bf16.mxu0 0
      %11134 = vmatpush1.bf16.msra.mxu0 0
      %11135 = vmatprep.subr.bf16.mxu0 0
      %11136 = vmatpush1.bf16.msra.mxu0 0
      %11137 = vmatprep.mubr.bf16.mxu0 0
      %11138 = vmatmul.mubr.bf16.gmra.mrb[0].mxu0 %v11103
      %v11139 = vpop.f32.mrb[0].mxu0
      %v11140 = vadd.f32 0.0, %v11139
      %v11141 = vpop.f32.mrb[0].mxu0
      %v11142 = vpop.f32.mrb[0].mxu0
      %v11143 = vpop.f32.mrb[0].mxu0
      %11144 = vdwg.mxu0
      %11145 = vrot.lane.b32.xlu0 %v1683, 64
      %v11146 = vpop.permute.xlu0 %11145
      %v11149 = vsel %vm331, %v9898, 0
      %11151 = vmatprep.subr.bf16.mxu0 0
      %11152 = vmatpush1.bf16.msra.mxu0 %v11146
      %11153 = vmatprep.subr.bf16.mxu0 0
      %11154 = vmatpush1.bf16.msra.mxu0 0
      %11155 = vmatprep.subr.bf16.mxu0 0
      %11156 = vmatpush1.bf16.msra.mxu0 0
      %11157 = vmatprep.subr.bf16.mxu0 0
      %11158 = vmatpush1.bf16.msra.mxu0 0
      %11159 = vmatprep.subr.bf16.mxu0 0
      %11160 = vmatpush1.bf16.msra.mxu0 0
      %11161 = vmatprep.subr.bf16.mxu0 0
      %11162 = vmatpush1.bf16.msra.mxu0 0
      %11163 = vmatprep.subr.bf16.mxu0 0
      %11164 = vmatpush1.bf16.msra.mxu0 0
      %11165 = vmatprep.subr.bf16.mxu0 0
      %11166 = vmatpush1.bf16.msra.mxu0 0
      %11167 = vmatprep.subr.bf16.mxu0 0
      %11168 = vmatpush1.bf16.msra.mxu0 0
      %11169 = vmatprep.subr.bf16.mxu0 0
      %11170 = vmatpush1.bf16.msra.mxu0 0
      %11171 = vmatprep.subr.bf16.mxu0 0
      %11172 = vmatpush1.bf16.msra.mxu0 0
      %11173 = vmatprep.subr.bf16.mxu0 0
      %11174 = vmatpush1.bf16.msra.mxu0 0
      %11175 = vmatprep.subr.bf16.mxu0 0
      %11176 = vmatpush1.bf16.msra.mxu0 0
      %11177 = vmatprep.subr.bf16.mxu0 0
      %11178 = vmatpush1.bf16.msra.mxu0 0
      %11179 = vmatprep.subr.bf16.mxu0 0
      %11180 = vmatpush1.bf16.msra.mxu0 0
      %11181 = vmatprep.subr.bf16.mxu0 0
      %11182 = vmatpush1.bf16.msra.mxu0 0
      %11183 = vmatprep.mubr.bf16.mxu0 0
      %11184 = vmatmul.mubr.bf16.gmra.mrb[0].mxu0 %v11149
      %v11185 = vpop.f32.mrb[0].mxu0
      %v11186 = vadd.f32 0.0, %v11185
      %v11187 = vpop.f32.mrb[0].mxu0
      %v11188 = vpop.f32.mrb[0].mxu0
      %v11189 = vpop.f32.mrb[0].mxu0
      %11190 = vdwg.mxu0
      %11191 = vrot.lane.b32.xlu0 %v1684, 64
      %v11192 = vpop.permute.xlu0 %11191
      %v11195 = vsel %vm331, %v9899, 0
      %11197 = vmatprep.subr.bf16.mxu0 0
      %11198 = vmatpush1.bf16.msra.mxu0 %v11192
      %11199 = vmatprep.subr.bf16.mxu0 0
      %11200 = vmatpush1.bf16.msra.mxu0 0
      %11201 = vmatprep.subr.bf16.mxu0 0
      %11202 = vmatpush1.bf16.msra.mxu0 0
      %11203 = vmatprep.subr.bf16.mxu0 0
      %11204 = vmatpush1.bf16.msra.mxu0 0
      %11205 = vmatprep.subr.bf16.mxu0 0
      %11206 = vmatpush1.bf16.msra.mxu0 0
      %11207 = vmatprep.subr.bf16.mxu0 0
      %11208 = vmatpush1.bf16.msra.mxu0 0
      %11209 = vmatprep.subr.bf16.mxu0 0
      %11210 = vmatpush1.bf16.msra.mxu0 0
      %11211 = vmatprep.subr.bf16.mxu0 0
      %11212 = vmatpush1.bf16.msra.mxu0 0
      %11213 = vmatprep.subr.bf16.mxu0 0
      %11214 = vmatpush1.bf16.msra.mxu0 0
      %11215 = vmatprep.subr.bf16.mxu0 0
      %11216 = vmatpush1.bf16.msra.mxu0 0
      %11217 = vmatprep.subr.bf16.mxu0 0
      %11218 = vmatpush1.bf16.msra.mxu0 0
      %11219 = vmatprep.subr.bf16.mxu0 0
      %11220 = vmatpush1.bf16.msra.mxu0 0
      %11221 = vmatprep.subr.bf16.mxu0 0
      %11222 = vmatpush1.bf16.msra.mxu0 0
      %11223 = vmatprep.subr.bf16.mxu0 0
      %11224 = vmatpush1.bf16.msra.mxu0 0
      %11225 = vmatprep.subr.bf16.mxu0 0
      %11226 = vmatpush1.bf16.msra.mxu0 0
      %11227 = vmatprep.subr.bf16.mxu0 0
      %11228 = vmatpush1.bf16.msra.mxu0 0
      %11229 = vmatprep.mubr.bf16.mxu0 0
      %11230 = vmatmul.mubr.bf16.gmra.mrb[0].mxu0 %v11195
      %v11231 = vpop.f32.mrb[0].mxu0
      %v11232 = vadd.f32 0.0, %v11231
      %v11233 = vpop.f32.mrb[0].mxu0
      %v11234 = vpop.f32.mrb[0].mxu0
      %v11235 = vpop.f32.mrb[0].mxu0
      %11236 = vdwg.mxu0
      %11237 = vrot.lane.b32.xlu0 %v1685, 64
      %v11238 = vpop.permute.xlu0 %11237
      %v11241 = vsel %vm331, %v9900, 0
      %11243 = vmatprep.subr.bf16.mxu0 0
      %11244 = vmatpush1.bf16.msra.mxu0 %v11238
      %11245 = vmatprep.subr.bf16.mxu0 0
      %11246 = vmatpush1.bf16.msra.mxu0 0
      %11247 = vmatprep.subr.bf16.mxu0 0
      %11248 = vmatpush1.bf16.msra.mxu0 0
      %11249 = vmatprep.subr.bf16.mxu0 0
      %11250 = vmatpush1.bf16.msra.mxu0 0
      %11251 = vmatprep.subr.bf16.mxu0 0
      %11252 = vmatpush1.bf16.msra.mxu0 0
      %11253 = vmatprep.subr.bf16.mxu0 0
      %11254 = vmatpush1.bf16.msra.mxu0 0
      %11255 = vmatprep.subr.bf16.mxu0 0
      %11256 = vmatpush1.bf16.msra.mxu0 0
      %11257 = vmatprep.subr.bf16.mxu0 0
      %11258 = vmatpush1.bf16.msra.mxu0 0
      %11259 = vmatprep.subr.bf16.mxu0 0
      %11260 = vmatpush1.bf16.msra.mxu0 0
      %11261 = vmatprep.subr.bf16.mxu0 0
      %11262 = vmatpush1.bf16.msra.mxu0 0
      %11263 = vmatprep.subr.bf16.mxu0 0
      %11264 = vmatpush1.bf16.msra.mxu0 0
      %11265 = vmatprep.subr.bf16.mxu0 0
      %11266 = vmatpush1.bf16.msra.mxu0 0
      %11267 = vmatprep.subr.bf16.mxu0 0
      %11268 = vmatpush1.bf16.msra.mxu0 0
      %11269 = vmatprep.subr.bf16.mxu0 0
      %11270 = vmatpush1.bf16.msra.mxu0 0
      %11271 = vmatprep.subr.bf16.mxu0 0
      %11272 = vmatpush1.bf16.msra.mxu0 0
      %11273 = vmatprep.subr.bf16.mxu0 0
      %11274 = vmatpush1.bf16.msra.mxu0 0
      %11275 = vmatprep.mubr.bf16.mxu0 0
      %11276 = vmatmul.mubr.bf16.gmra.mrb[0].mxu0 %v11241
      %v11277 = vpop.f32.mrb[0].mxu0
      %v11278 = vadd.f32 0.0, %v11277
      %v11279 = vpop.f32.mrb[0].mxu0
      %v11280 = vpop.f32.mrb[0].mxu0
      %v11281 = vpop.f32.mrb[0].mxu0
      %11282 = vdwg.mxu0
      %11283 = vrot.lane.b32.xlu0 %v1686, 64
      %v11284 = vpop.permute.xlu0 %11283
      %v11287 = vsel %vm331, %v9901, 0
      %11289 = vmatprep.subr.bf16.mxu0 0
      %11290 = vmatpush1.bf16.msra.mxu0 %v11284
      %11291 = vmatprep.subr.bf16.mxu0 0
      %11292 = vmatpush1.bf16.msra.mxu0 0
      %11293 = vmatprep.subr.bf16.mxu0 0
      %11294 = vmatpush1.bf16.msra.mxu0 0
      %11295 = vmatprep.subr.bf16.mxu0 0
      %11296 = vmatpush1.bf16.msra.mxu0 0
      %11297 = vmatprep.subr.bf16.mxu0 0
      %11298 = vmatpush1.bf16.msra.mxu0 0
      %11299 = vmatprep.subr.bf16.mxu0 0
      %11300 = vmatpush1.bf16.msra.mxu0 0
      %11301 = vmatprep.subr.bf16.mxu0 0
      %11302 = vmatpush1.bf16.msra.mxu0 0
      %11303 = vmatprep.subr.bf16.mxu0 0
      %11304 = vmatpush1.bf16.msra.mxu0 0
      %11305 = vmatprep.subr.bf16.mxu0 0
      %11306 = vmatpush1.bf16.msra.mxu0 0
      %11307 = vmatprep.subr.bf16.mxu0 0
      %11308 = vmatpush1.bf16.msra.mxu0 0
      %11309 = vmatprep.subr.bf16.mxu0 0
      %11310 = vmatpush1.bf16.msra.mxu0 0
      %11311 = vmatprep.subr.bf16.mxu0 0
      %11312 = vmatpush1.bf16.msra.mxu0 0
      %11313 = vmatprep.subr.bf16.mxu0 0
      %11314 = vmatpush1.bf16.msra.mxu0 0
      %11315 = vmatprep.subr.bf16.mxu0 0
      %11316 = vmatpush1.bf16.msra.mxu0 0
      %11317 = vmatprep.subr.bf16.mxu0 0
      %11318 = vmatpush1.bf16.msra.mxu0 0
      %11319 = vmatprep.subr.bf16.mxu0 0
      %11320 = vmatpush1.bf16.msra.mxu0 0
      %11321 = vmatprep.mubr.bf16.mxu0 0
      %11322 = vmatmul.mubr.bf16.gmra.mrb[0].mxu0 %v11287
      %v11323 = vpop.f32.mrb[0].mxu0
      %v11324 = vadd.f32 0.0, %v11323
      %v11325 = vpop.f32.mrb[0].mxu0
      %v11326 = vpop.f32.mrb[0].mxu0
      %v11327 = vpop.f32.mrb[0].mxu0
      %11328 = vdwg.mxu0
      %11329 = vrot.lane.b32.xlu0 %v1687, 64
      %v11330 = vpop.permute.xlu0 %11329
      %v11333 = vsel %vm331, %v9902, 0
      %11335 = vmatprep.subr.bf16.mxu0 0
      %11336 = vmatpush1.bf16.msra.mxu0 %v11330
      %11337 = vmatprep.subr.bf16.mxu0 0
      %11338 = vmatpush1.bf16.msra.mxu0 0
      %11339 = vmatprep.subr.bf16.mxu0 0
      %11340 = vmatpush1.bf16.msra.mxu0 0
      %11341 = vmatprep.subr.bf16.mxu0 0
      %11342 = vmatpush1.bf16.msra.mxu0 0
      %11343 = vmatprep.subr.bf16.mxu0 0
      %11344 = vmatpush1.bf16.msra.mxu0 0
      %11345 = vmatprep.subr.bf16.mxu0 0
      %11346 = vmatpush1.bf16.msra.mxu0 0
      %11347 = vmatprep.subr.bf16.mxu0 0
      %11348 = vmatpush1.bf16.msra.mxu0 0
      %11349 = vmatprep.subr.bf16.mxu0 0
      %11350 = vmatpush1.bf16.msra.mxu0 0
      %11351 = vmatprep.subr.bf16.mxu0 0
      %11352 = vmatpush1.bf16.msra.mxu0 0
      %11353 = vmatprep.subr.bf16.mxu0 0
      %11354 = vmatpush1.bf16.msra.mxu0 0
      %11355 = vmatprep.subr.bf16.mxu0 0
      %11356 = vmatpush1.bf16.msra.mxu0 0
      %11357 = vmatprep.subr.bf16.mxu0 0
      %11358 = vmatpush1.bf16.msra.mxu0 0
      %11359 = vmatprep.subr.bf16.mxu0 0
      %11360 = vmatpush1.bf16.msra.mxu0 0
      %11361 = vmatprep.subr.bf16.mxu0 0
      %11362 = vmatpush1.bf16.msra.mxu0 0
      %11363 = vmatprep.subr.bf16.mxu0 0
      %11364 = vmatpush1.bf16.msra.mxu0 0
      %11365 = vmatprep.subr.bf16.mxu0 0
      %11366 = vmatpush1.bf16.msra.mxu0 0
      %11367 = vmatprep.mubr.bf16.mxu0 0
      %11368 = vmatmul.mubr.bf16.gmra.mrb[0].mxu0 %v11333
      %v11369 = vpop.f32.mrb[0].mxu0
      %v11370 = vadd.f32 0.0, %v11369
      %v11371 = vpop.f32.mrb[0].mxu0
      %v11372 = vpop.f32.mrb[0].mxu0
      %v11373 = vpop.f32.mrb[0].mxu0
      %11374 = vdwg.mxu0
      %v11375 = vadd.f32 %v8533, %v9944
      %v11376 = vadd.f32 %v8576, %v9990
      %v11377 = vadd.f32 %v8619, %v10036
      %v11378 = vadd.f32 %v8662, %v10082
      %v11379 = vadd.f32 %v8705, %v10128
      %v11380 = vadd.f32 %v8748, %v10174
      %v11381 = vadd.f32 %v8791, %v10220
      %v11382 = vadd.f32 %v8834, %v10266
      %v11383 = vadd.f32 %v8877, %v10312
      %v11384 = vadd.f32 %v8920, %v10358
      %v11385 = vadd.f32 %v8963, %v10404
      %v11386 = vadd.f32 %v9006, %v10450
      %v11387 = vadd.f32 %v9049, %v10496
      %v11388 = vadd.f32 %v9092, %v10542
      %v11389 = vadd.f32 %v9135, %v10588
      %v11390 = vadd.f32 %v9178, %v10634
      %v11391 = vadd.f32 %v9221, %v10680
      %v11392 = vadd.f32 %v9264, %v10726
      %v11393 = vadd.f32 %v9307, %v10772
      %v11394 = vadd.f32 %v9350, %v10818
      %v11395 = vadd.f32 %v9393, %v10864
      %v11396 = vadd.f32 %v9436, %v10910
      %v11397 = vadd.f32 %v9479, %v10956
      %v11398 = vadd.f32 %v9522, %v11002
      %v11399 = vadd.f32 %v9565, %v11048
      %v11400 = vadd.f32 %v9608, %v11094
      %v11401 = vadd.f32 %v9651, %v11140
      %v11402 = vadd.f32 %v9694, %v11186
      %v11403 = vadd.f32 %v9737, %v11232
      %v11404 = vadd.f32 %v9780, %v11278
      %v11405 = vadd.f32 %v9823, %v11324
      %v11406 = vadd.f32 %v9866, %v11370
      %v11407 = vlaneseq
      %v11408 = vshrl.u32 %v11407, 7
      %v11409 = vsub.s32 3, %v11408
      %v11410 = vrot.slane %v266, %v11409
      %v11411 = vadd.f32 %v11375, %v11410
      %v11412 = vadd.f32 %v11376, %v11410
      %v11413 = vadd.f32 %v11377, %v11410
      %v11414 = vadd.f32 %v11378, %v11410
      %v11415 = vadd.f32 %v11379, %v11410
      %v11416 = vadd.f32 %v11380, %v11410
      %v11417 = vadd.f32 %v11381, %v11410
      %v11418 = vadd.f32 %v11382, %v11410
      %v11419 = vadd.f32 %v11383, %v11410
      %v11420 = vadd.f32 %v11384, %v11410
      %v11421 = vadd.f32 %v11385, %v11410
      %v11422 = vadd.f32 %v11386, %v11410
      %v11423 = vadd.f32 %v11387, %v11410
      %v11424 = vadd.f32 %v11388, %v11410
      %v11425 = vadd.f32 %v11389, %v11410
      %v11426 = vadd.f32 %v11390, %v11410
      %v11427 = vadd.f32 %v11391, %v11410
      %v11428 = vadd.f32 %v11392, %v11410
      %v11429 = vadd.f32 %v11393, %v11410
      %v11430 = vadd.f32 %v11394, %v11410
      %v11431 = vadd.f32 %v11395, %v11410
      %v11432 = vadd.f32 %v11396, %v11410
      %v11433 = vadd.f32 %v11397, %v11410
      %v11434 = vadd.f32 %v11398, %v11410
      %v11435 = vadd.f32 %v11399, %v11410
      %v11436 = vadd.f32 %v11400, %v11410
      %v11437 = vadd.f32 %v11401, %v11410
      %v11438 = vadd.f32 %v11402, %v11410
      %v11439 = vadd.f32 %v11403, %v11410
      %v11440 = vadd.f32 %v11404, %v11410
      %v11441 = vadd.f32 %v11405, %v11410
      %v11442 = vadd.f32 %v11406, %v11410
      %v11443 = vmul.f32 %v11411, %v5967
      %v11444 = vmul.f32 %v11412, %v5968
      %v11445 = vmul.f32 %v11413, %v5969
      %v11446 = vmul.f32 %v11414, %v5970
      %v11447 = vmul.f32 %v11415, %v5971
      %v11448 = vmul.f32 %v11416, %v5972
      %v11449 = vmul.f32 %v11417, %v5973
      %v11450 = vmul.f32 %v11418, %v5974
      %v11451 = vmul.f32 %v11419, %v5975
      %v11452 = vmul.f32 %v11420, %v5976
      %v11453 = vmul.f32 %v11421, %v5977
      %v11454 = vmul.f32 %v11422, %v5978
      %v11455 = vmul.f32 %v11423, %v5979
      %v11456 = vmul.f32 %v11424, %v5980
      %v11457 = vmul.f32 %v11425, %v5981
      %v11458 = vmul.f32 %v11426, %v5982
      %v11459 = vmul.f32 %v11427, %v5983
      %v11460 = vmul.f32 %v11428, %v5984
      %v11461 = vmul.f32 %v11429, %v5985
      %v11462 = vmul.f32 %v11430, %v5986
      %v11463 = vmul.f32 %v11431, %v5987
      %v11464 = vmul.f32 %v11432, %v5988
      %v11465 = vmul.f32 %v11433, %v5989
      %v11466 = vmul.f32 %v11434, %v5990
      %v11467 = vmul.f32 %v11435, %v5991
      %v11468 = vmul.f32 %v11436, %v5992
      %v11469 = vmul.f32 %v11437, %v5993
      %v11470 = vmul.f32 %v11438, %v5994
      %v11471 = vmul.f32 %v11439, %v5995
      %v11472 = vmul.f32 %v11440, %v5996
      %v11473 = vmul.f32 %v11441, %v5997
      %v11474 = vmul.f32 %v11442, %v5998
      %11475 = vst.msk [vmem:[%s221] sm:$0xff] %vm4353, %v11443
      %11476 = vst.msk [vmem:[%s221 + $0x8] sm:$0xff] %vm4353, %v11444
      %11477 = vst.msk [vmem:[%s221 + $0x10] sm:$0xff] %vm4353, %v11445
      %11478 = vst.msk [vmem:[%s221 + $0x18] sm:$0xff] %vm4353, %v11446
      %11479 = vst.msk [vmem:[%s221 + $0x20] sm:$0xff] %vm4353, %v11447
      %11480 = vst.msk [vmem:[%s221 + $0x28] sm:$0xff] %vm4353, %v11448
      %11481 = vst.msk [vmem:[%s221 + $0x30] sm:$0xff] %vm4353, %v11449
      %11482 = vst.msk [vmem:[%s221 + $0x38] sm:$0xff] %vm4353, %v11450
      %11483 = vst.msk [vmem:[%s221 + $0x40] sm:$0xff] %vm4353, %v11451
      %11484 = vst.msk [vmem:[%s221 + $0x48] sm:$0xff] %vm4353, %v11452
      %11485 = vst.msk [vmem:[%s221 + $0x50] sm:$0xff] %vm4353, %v11453
      %11486 = vst.msk [vmem:[%s221 + $0x58] sm:$0xff] %vm4353, %v11454
      %11487 = vst.msk [vmem:[%s221 + $0x60] sm:$0xff] %vm4353, %v11455
      %11488 = vst.msk [vmem:[%s221 + $0x68] sm:$0xff] %vm4353, %v11456
      %11489 = vst.msk [vmem:[%s221 + $0x70] sm:$0xff] %vm4353, %v11457
      %11490 = vst.msk [vmem:[%s221 + $0x78] sm:$0xff] %vm4353, %v11458
      %11491 = vst.msk [vmem:[%s221 + $0x80] sm:$0xff] %vm4353, %v11459
      %11492 = vst.msk [vmem:[%s221 + $0x88] sm:$0xff] %vm4353, %v11460
      %11493 = vst.msk [vmem:[%s221 + $0x90] sm:$0xff] %vm4353, %v11461
      %11494 = vst.msk [vmem:[%s221 + $0x98] sm:$0xff] %vm4353, %v11462
      %11495 = vst.msk [vmem:[%s221 + $0xa0] sm:$0xff] %vm4353, %v11463
      %11496 = vst.msk [vmem:[%s221 + $0xa8] sm:$0xff] %vm4353, %v11464
      %11497 = vst.msk [vmem:[%s221 + $0xb0] sm:$0xff] %vm4353, %v11465
      %11498 = vst.msk [vmem:[%s221 + $0xb8] sm:$0xff] %vm4353, %v11466
      %11499 = vst.msk [vmem:[%s221 + $0xc0] sm:$0xff] %vm4353, %v11467
      %11500 = vst.msk [vmem:[%s221 + $0xc8] sm:$0xff] %vm4353, %v11468
      %11501 = vst.msk [vmem:[%s221 + $0xd0] sm:$0xff] %vm4353, %v11469
      %11502 = vst.msk [vmem:[%s221 + $0xd8] sm:$0xff] %vm4353, %v11470
      %11503 = vst.msk [vmem:[%s221 + $0xe0] sm:$0xff] %vm4353, %v11471
      %11504 = vst.msk [vmem:[%s221 + $0xe8] sm:$0xff] %vm4353, %v11472
      %11505 = vst.msk [vmem:[%s221 + $0xf0] sm:$0xff] %vm4353, %v11473
      %11506 = vst.msk [vmem:[%s221 + $0xf8] sm:$0xff] %vm4353, %v11474
      %s11507 = smul.u32 32, %s15
      %p11508 = scmp.lt.s32.totalorder %s11507, 127
      %s11509 = scalar_select %p11508, %s11507, 127
      %s11510 = smul.addr %s11509, 8
      %s11511 = scalar_lea.vmem %s4, %s11510
      // Predicated region
      $region37: #{tasab_forward.1} parent=35 // pred_check
        %p11512 = pneg %p127
      $region38: #{tasab_forward.1} parent=35 // pred_check_branch
        %11514 = sbr.rel (%p11512) target = $region40
      $region39: #{tasab_forward.1} parent=35 // pred_region
        %s11515 = smul.u32 32, %s15
      $region40: #{tasab_forward.1} parent=35 // pred_fallthru
        _
    $region36: #{tasab_forward.1} parent=5 // pred_fallthru
      _
    %p11516 = scmp.le.s32.totalorder 2, %s10
    // Predicated region
    $region41: #{tasab_forward.1} parent=5 // pred_check
      %p11517 = pneg %p11516
    $region42: #{tasab_forward.1} parent=5 // pred_check_branch
      %11519 = sbr.rel (%p11517) target = $region44
    $region43: #{tasab_forward.1} parent=5 // pred_region
      %s11520 = ssub.s32 %s10, 2
      // Predicated region
      $region45: #{tasab_forward.1} parent=43 // pred_check
        %p11521 = pneg %p133
      $region46: #{tasab_forward.1} parent=43 // pred_check_branch
        %11523 = sbr.rel (%p11521) target = $region48
      $region47: #{tasab_forward.1} parent=43 // pred_region
        %s11524 = smul.u32 32, %s16
        %p11525 = scmp.lt.s32.totalorder %s11524, 127
        %s11526 = scalar_select %p11525, %s11524, 127
        %s11527 = smul.addr %s11526, 8
        %s11528 = scalar_lea.vmem %s4, %s11527
      $region48: #{tasab_forward.1} parent=43 // pred_fallthru
        _
    $region44: #{tasab_forward.1} parent=5 // pred_fallthru
      _
  $region6: #{tasab_forward.1} parent=0 // loop_footer
    %s14 = sadd.s32 1, %s10
  $region7: #{tasab_forward.1} parent=0 // loop_footer_branch
    %9 = sbr.rel target = $region3
  $region8: #{tasab_forward.1} parent=0 // loop_exit
    _

</llo_original>
